<compile_context>
chip_gen: v7x
topology: tpu7x:2x2x1
jax: 0.10.0
libtpu: 0.0.40
codegen_flags: <defaults>
</compile_context>

<pallas_src>
import functools

import numpy as np
import jax
import jax.numpy as jnp
from jax.experimental import pallas as pl
from jax.experimental.pallas import tpu as pltpu


# --------------------------------------------------------------------------
# Host-side packing: fold each conv into per-kernel-row dense blocks (once)
# --------------------------------------------------------------------------
def _conv_row_blocks(w_oihw, b, iw, stride):
    """Fold a VALID conv into per-kernel-row matrices.

    Consumes per-sample input rows flattened as lane = xi*ic + c and produces
    output rows flattened as lane = xo*oc + o:
        out_row[yo] = relu( sum_ki in_row[yo*stride + ki] @ blocks[ki] + b_row )
    """
    w = np.asarray(w_oihw, np.float32)
    b = np.asarray(b, np.float32).reshape(-1)
    oc, ic, kh, kw = w.shape
    ow = (iw - kw) // stride + 1
    blocks = np.zeros((kh, iw * ic, ow * oc), np.float32)
    for ki in range(kh):
        for xo in range(ow):
            for kj in range(kw):
                xi = xo * stride + kj
                blocks[ki, xi * ic:(xi + 1) * ic, xo * oc:(xo + 1) * oc] = w[:, :, ki, kj].T
    b_row = np.tile(b[None, :], (ow, 1)).reshape(1, ow * oc)
    return blocks, b_row, ow


def pack_params(p, obs_space, action_space):
    c, h, w = obs_space
    # conv1 (8x8 s4), conv2 (4x4 s2), conv3 (3x3 s1) -> per-row folded blocks.
    w1b, b1r, ow1 = _conv_row_blocks(p["w1"], p["b1"], w, 4)
    oh1 = (h - 8) // 4 + 1
    w2b, b2r, ow2 = _conv_row_blocks(p["w2"], p["b2"], ow1, 2)
    oh2 = (oh1 - 4) // 2 + 1
    w3b, b3r, ow3 = _conv_row_blocks(p["w3"], p["b3"], ow2, 1)
    oh3 = (oh2 - 3) // 1 + 1
    oc3 = int(np.asarray(p["w3"]).shape[0])

    # Fused dueling hidden layer [advantage_hidden || value_hidden]: split per
    # conv3 output row and permuted from PyTorch's NCHW feature-flatten order
    # to the kernel's per-row (x-major, channel-minor) order.
    wh1 = np.concatenate([np.asarray(p["wa1"], np.float32),
                          np.asarray(p["wv1"], np.float32)], axis=1)       # (F, 256)
    idx = np.zeros((oh3, ow3 * oc3), np.int64)
    for y in range(oh3):
        for xpos in range(ow3):
            for o in range(oc3):
                idx[y, xpos * oc3 + o] = o * (oh3 * ow3) + y * ow3 + xpos
    wh1b = wh1[idx, :]                                                     # (oh3, ow3*oc3, 2H)
    bh1 = np.concatenate([np.asarray(p["ba1"], np.float32),
                          np.asarray(p["bv1"], np.float32)], axis=1)       # (1, 2H)

    arrays = {
        "w1b": w1b, "b1r": b1r, "w2b": w2b, "b2r": b2r, "w3b": w3b, "b3r": b3r,
        "wh1b": wh1b, "bh1": bh1,
        "wa2": np.asarray(p["wa2"], np.float32), "ba2": np.asarray(p["ba2"], np.float32),
        "wv2": np.asarray(p["wv2"], np.float32), "bv2": np.asarray(p["bv2"], np.float32),
    }
    packed = {k: jnp.asarray(v) for k, v in arrays.items()}
    packed["dims"] = dict(
        oh1=int(oh1), oh2=int(oh2), oh3=int(oh3),
        num_actions=int(np.asarray(p["wa2"]).shape[1]),
        hidden=int(np.asarray(p["wa1"]).shape[1]))
    return packed


# --------------------------------------------------------------------------
# Fused Pallas kernel: conv1 + conv2 + conv3 + dueling heads + combination
# --------------------------------------------------------------------------
def _cnn_d3qn_kernel(x_ref, w1_ref, b1_ref, w2_ref, b2_ref, w3_ref, b3_ref,
                     wh1_ref, bh1_ref, wa2_ref, ba2_ref, wv2_ref, bv2_ref,
                     o_ref, *, oh1, oh2, oh3, hidden):
    f32 = jnp.float32

    def conv_rows(in_row, n_out_rows, kh, stride, w_ref, b_ref):
        out = []
        for yo in range(n_out_rows):
            acc = None
            for ki in range(kh):
                t = jnp.dot(in_row(yo * stride + ki), w_ref[ki],
                            preferred_element_type=f32)
                acc = t if acc is None else acc + t
            out.append(jnp.maximum(acc + b_ref[...], 0.0))
        return out

    # conv1 consumes raw input rows straight from the VMEM x block (no im2col).
    h1 = conv_rows(lambda i: x_ref[i], oh1, 8, 4, w1_ref, b1_ref)   # oh1 x (TB, ow1*32)
    # conv2 / conv3 on VMEM-resident rows.
    h2 = conv_rows(lambda i: h1[i], oh2, 4, 2, w2_ref, b2_ref)      # oh2 x (TB, ow2*64)
    h3 = conv_rows(lambda i: h2[i], oh3, 3, 1, w3_ref, b3_ref)      # oh3 x (TB, ow3*64)

    # Fused dueling hidden layer: [advantage_hidden || value_hidden].
    acc = None
    for yo in range(oh3):
        t = jnp.dot(h3[yo], wh1_ref[yo], preferred_element_type=f32)
        acc = t if acc is None else acc + t
    hid = jnp.maximum(acc + bh1_ref[...], 0.0)                      # (TB, 2*hidden)

    adv = jnp.dot(hid[:, :hidden], wa2_ref[...], preferred_element_type=f32) + ba2_ref[...]
    val = jnp.dot(hid[:, hidden:], wv2_ref[...], preferred_element_type=f32) + bv2_ref[...]
    o_ref[...] = (val + adv - jnp.mean(adv, axis=-1, keepdims=True)).astype(o_ref.dtype)


def _pick_batch_tile(n, block_b):
    if n <= 8:
        return n
    # >=2 grid blocks when possible (v7x has 2 TensorCores), multiples of 8.
    half = -(-n // 2)
    tb = -(-half // 8) * 8
    return max(8, min(block_b, tb))


def cnn_d3qn_forward(x_nchw, packed, *, block_b=128):
    n, c, h, w = x_nchw.shape
    dims = packed["dims"]
    oh1, oh2, oh3 = dims["oh1"], dims["oh2"], dims["oh3"]
    na, hidden = dims["num_actions"], dims["hidden"]

    # Only host-side data movement: one layout change to (H, N, W*C) so every
    # conv1 input row is a clean leading-dim VMEM load.
    x_rows = jnp.transpose(x_nchw, (2, 0, 3, 1)).reshape(h, n, w * c)

    tb = _pick_batch_tile(n, block_b)
    grid = (pl.cdiv(n, tb),)

    w1b, b1r = packed["w1b"], packed["b1r"]
    w2b, b2r = packed["w2b"], packed["b2r"]
    w3b, b3r = packed["w3b"], packed["b3r"]
    wh1b, bh1 = packed["wh1b"], packed["bh1"]
    wa2, ba2 = packed["wa2"], packed["ba2"]
    wv2, bv2 = packed["wv2"], packed["bv2"]

    def const(shape):
        # Grid-invariant weight/bias blocks (whole array as one block).
        return pl.BlockSpec(shape, lambda i, _n=len(shape): (0,) * _n)

    weights = (w1b, b1r, w2b, b2r, w3b, b3r, wh1b, bh1, wa2, ba2, wv2, bv2)
    weight_elems = sum(int(np.prod(a.shape)) for a in weights)
    flops = 2 * n * (oh1 * 8 * w1b.shape[1] * w1b.shape[2]
                     + oh2 * 4 * w2b.shape[1] * w2b.shape[2]
                     + oh3 * 3 * w3b.shape[1] * w3b.shape[2]
                     + oh3 * wh1b.shape[1] * wh1b.shape[2]
                     + hidden * (na + 1))
    bytes_accessed = 4 * (n * h * w * c + weight_elems + n * na)

    kernel = functools.partial(_cnn_d3qn_kernel, oh1=oh1, oh2=oh2, oh3=oh3,
                               hidden=hidden)

    return pl.pallas_call(
        kernel,
        out_shape=jax.ShapeDtypeStruct((n, na), jnp.float32),
        grid=grid,
        in_specs=[
            pl.BlockSpec((h, tb, w * c), lambda i: (0, i, 0)),
            const(w1b.shape), const(b1r.shape),
            const(w2b.shape), const(b2r.shape),
            const(w3b.shape), const(b3r.shape),
            const(wh1b.shape), const(bh1.shape),
            const(wa2.shape), const(ba2.shape),
            const(wv2.shape), const(bv2.shape),
        ],
        out_specs=pl.BlockSpec((tb, na), lambda i: (i, 0)),
        compiler_params=pltpu.CompilerParams(
            dimension_semantics=("parallel",),
            vmem_limit_bytes=32 * 1024 * 1024),
        cost_estimate=pl.CostEstimate(
            flops=int(flops), transcendentals=0, bytes_accessed=int(bytes_accessed)),
    )(x_rows, w1b, b1r, w2b, b2r, w3b, b3r, wh1b, bh1, wa2, ba2, wv2, bv2)


# --------------------------------------------------------------------------
# Deterministic parameter init + pure-JAX reference
# --------------------------------------------------------------------------
def init_params(key, obs_space, action_space):
    c, h, w = obs_space
    h1 = (h - 8) // 4 + 1
    h2 = (h1 - 4) // 2 + 1
    h3 = (h2 - 3) // 1 + 1
    w1_ = (w - 8) // 4 + 1
    w2_ = (w1_ - 4) // 2 + 1
    w3_ = (w2_ - 3) // 1 + 1
    feature_size = 64 * h3 * w3_

    ks = jax.random.split(key, 14)

    def u(k, shape, fan_in):
        bound = 1.0 / (fan_in ** 0.5)
        return jax.random.uniform(k, shape, jnp.float32, -bound, bound)

    return {
        "w1": u(ks[0], (32, c, 8, 8), c * 64), "b1": u(ks[1], (32,), c * 64),
        "w2": u(ks[2], (64, 32, 4, 4), 32 * 16), "b2": u(ks[3], (64,), 32 * 16),
        "w3": u(ks[4], (64, 64, 3, 3), 64 * 9), "b3": u(ks[5], (64,), 64 * 9),
        "wa1": u(ks[6], (feature_size, 128), feature_size),
        "ba1": u(ks[7], (1, 128), feature_size),
        "wa2": u(ks[8], (128, action_space), 128),
        "ba2": u(ks[9], (1, action_space), 128),
        "wv1": u(ks[10], (feature_size, 128), feature_size),
        "bv1": u(ks[11], (1, 128), feature_size),
        "wv2": u(ks[12], (128, 1), 128),
        "bv2": u(ks[13], (1, 1), 128),
    }


def ref_forward(x, p):
    with jax.default_matmul_precision("highest"):
        def conv(x, w, b, s):
            y = jax.lax.conv_general_dilated(
                x, w, (s, s), "VALID", dimension_numbers=("NCHW", "OIHW", "NCHW"))
            return jax.nn.relu(y + b[None, :, None, None])

        x = conv(x, p["w1"], p["b1"], 4)
        x = conv(x, p["w2"], p["b2"], 2)
        x = conv(x, p["w3"], p["b3"], 1)
        x = x.reshape(x.shape[0], -1)
        ha = jax.nn.relu(x @ p["wa1"] + p["ba1"])
        adv = ha @ p["wa2"] + p["ba2"]
        hv = jax.nn.relu(x @ p["wv1"] + p["bv1"])
        val = hv @ p["wv2"] + p["bv2"]
        return val + adv - adv.mean(axis=-1, keepdims=True)


if __name__ == "__main__":
    obs_space = (4, 36, 36)   # (C, H, W): smallest spatial size the conv stack supports
    action_space = 6

    key = jax.random.PRNGKey(0)
    k_param, k_x1, k_x2 = jax.random.split(key, 3)
    params = init_params(k_param, obs_space, action_space)
    packed = pack_params(params, obs_space, action_space)

    fwd = jax.jit(lambda inp: cnn_d3qn_forward(inp, packed))

    # Small batch: single grid block.
    x = jax.random.normal(k_x1, (2,) + obs_space, dtype=jnp.float32)
    out = jax.block_until_ready(fwd(x))
    ref = jax.block_until_ready(ref_forward(x, params))
    assert out.shape == (2, action_space)
    assert jnp.allclose(out, ref, atol=1e-2, rtol=1e-2), (
        "mismatch vs reference (batch=2): max err "
        f"{float(jnp.max(jnp.abs(out - ref)))}")

    # Multi-block grid with a partial last batch tile (13 = 8 + 5).
    x2 = jax.random.normal(k_x2, (13,) + obs_space, dtype=jnp.float32)
    out2 = jax.block_until_ready(fwd(x2))
    ref2 = jax.block_until_ready(ref_forward(x2, params))
    assert jnp.allclose(out2, ref2, atol=1e-2, rtol=1e-2), (
        "mismatch vs reference (batch=13): max err "
        f"{float(jnp.max(jnp.abs(out2 - ref2)))}")

    print("KERNEL_OK")
</pallas_src>

<mosaic_0001>
module attributes {stable_mosaic.version = 11 : i64} {
  func.func @_cnn_d3qn_kernel(%arg0: i32, %arg1: memref<36x2x144xf32, #tpu.memory_space<vmem>>, %arg2: memref<8x144x256xf32, #tpu.memory_space<vmem>>, %arg3: memref<1x256xf32, #tpu.memory_space<vmem>>, %arg4: memref<4x256x192xf32, #tpu.memory_space<vmem>>, %arg5: memref<1x192xf32, #tpu.memory_space<vmem>>, %arg6: memref<3x192x64xf32, #tpu.memory_space<vmem>>, %arg7: memref<1x64xf32, #tpu.memory_space<vmem>>, %arg8: memref<1x64x256xf32, #tpu.memory_space<vmem>>, %arg9: memref<1x256xf32, #tpu.memory_space<vmem>>, %arg10: memref<128x6xf32, #tpu.memory_space<vmem>>, %arg11: memref<1x6xf32, #tpu.memory_space<vmem>>, %arg12: memref<128x1xf32, #tpu.memory_space<vmem>>, %arg13: memref<1x1xf32, #tpu.memory_space<vmem>>, %arg14: memref<2x6xf32, #tpu.memory_space<vmem>>) attributes {dimension_semantics = [#tpu.dimension_semantics<parallel>], iteration_bounds = array<i64: 1>, scalar_prefetch = 0 : i64, scratch_operands = 0 : i64, tpu.core_type = #tpu.core_type<tc>, window_params = [{transform_indices = @transform_0, window_bounds = array<i64: 36, 2, 144>}, {pipeline_mode = #tpu.pipeline_mode<synchronous>, transform_indices = @transform_1, window_bounds = array<i64: 8, 144, 256>}, {pipeline_mode = #tpu.pipeline_mode<synchronous>, transform_indices = @transform_2, window_bounds = array<i64: 1, 256>}, {pipeline_mode = #tpu.pipeline_mode<synchronous>, transform_indices = @transform_3, window_bounds = array<i64: 4, 256, 192>}, {pipeline_mode = #tpu.pipeline_mode<synchronous>, transform_indices = @transform_4, window_bounds = array<i64: 1, 192>}, {pipeline_mode = #tpu.pipeline_mode<synchronous>, transform_indices = @transform_5, window_bounds = array<i64: 3, 192, 64>}, {pipeline_mode = #tpu.pipeline_mode<synchronous>, transform_indices = @transform_6, window_bounds = array<i64: 1, 64>}, {pipeline_mode = #tpu.pipeline_mode<synchronous>, transform_indices = @transform_7, window_bounds = array<i64: 1, 64, 256>}, {pipeline_mode = #tpu.pipeline_mode<synchronous>, transform_indices = @transform_8, window_bounds = array<i64: 1, 256>}, {pipeline_mode = #tpu.pipeline_mode<synchronous>, transform_indices = @transform_9, window_bounds = array<i64: 128, 6>}, {pipeline_mode = #tpu.pipeline_mode<synchronous>, transform_indices = @transform_10, window_bounds = array<i64: 1, 6>}, {pipeline_mode = #tpu.pipeline_mode<synchronous>, transform_indices = @transform_11, window_bounds = array<i64: 128, 1>}, {pipeline_mode = #tpu.pipeline_mode<synchronous>, transform_indices = @transform_12, window_bounds = array<i64: 1, 1>}, {transform_indices = @transform_13, window_bounds = array<i64: 2, 6>}]} {
    %c0 = arith.constant 0 : index
    %c0_0 = arith.constant 0 : index
    %c0_1 = arith.constant 0 : index
    %0 = vector.load %arg1[%c0, %c0_0, %c0_1] : memref<36x2x144xf32, #tpu.memory_space<vmem>>, vector<1x2x144xf32>
    %1 = vector.shape_cast %0 : vector<1x2x144xf32> to vector<2x144xf32>
    %c0_2 = arith.constant 0 : index
    %c0_3 = arith.constant 0 : index
    %c0_4 = arith.constant 0 : index
    %2 = vector.load %arg2[%c0_2, %c0_3, %c0_4] : memref<8x144x256xf32, #tpu.memory_space<vmem>>, vector<1x144x256xf32>
    %3 = vector.shape_cast %2 : vector<1x144x256xf32> to vector<144x256xf32>
    %cst = arith.constant dense<0.000000e+00> : vector<2x256xf32>
    %4 = tpu.matmul %1, %3, %cst {dimension_numbers = #tpu.dot_dimension_numbers<[1], [0], [0], [1], [0, 0, 1, 1], [], []>} : vector<2x144xf32>, vector<144x256xf32>, vector<2x256xf32> -> vector<2x256xf32>
    %c1 = arith.constant 1 : index
    %c0_5 = arith.constant 0 : index
    %c0_6 = arith.constant 0 : index
    %5 = vector.load %arg1[%c1, %c0_5, %c0_6] : memref<36x2x144xf32, #tpu.memory_space<vmem>>, vector<1x2x144xf32>
    %6 = vector.shape_cast %5 : vector<1x2x144xf32> to vector<2x144xf32>
    %c1_7 = arith.constant 1 : index
    %c0_8 = arith.constant 0 : index
    %c0_9 = arith.constant 0 : index
    %7 = vector.load %arg2[%c1_7, %c0_8, %c0_9] : memref<8x144x256xf32, #tpu.memory_space<vmem>>, vector<1x144x256xf32>
    %8 = vector.shape_cast %7 : vector<1x144x256xf32> to vector<144x256xf32>
    %cst_10 = arith.constant dense<0.000000e+00> : vector<2x256xf32>
    %9 = tpu.matmul %6, %8, %cst_10 {dimension_numbers = #tpu.dot_dimension_numbers<[1], [0], [0], [1], [0, 0, 1, 1], [], []>} : vector<2x144xf32>, vector<144x256xf32>, vector<2x256xf32> -> vector<2x256xf32>
    %10 = arith.addf %4, %9 : vector<2x256xf32>
    %c2 = arith.constant 2 : index
    %c0_11 = arith.constant 0 : index
    %c0_12 = arith.constant 0 : index
    %11 = vector.load %arg1[%c2, %c0_11, %c0_12] : memref<36x2x144xf32, #tpu.memory_space<vmem>>, vector<1x2x144xf32>
    %12 = vector.shape_cast %11 : vector<1x2x144xf32> to vector<2x144xf32>
    %c2_13 = arith.constant 2 : index
    %c0_14 = arith.constant 0 : index
    %c0_15 = arith.constant 0 : index
    %13 = vector.load %arg2[%c2_13, %c0_14, %c0_15] : memref<8x144x256xf32, #tpu.memory_space<vmem>>, vector<1x144x256xf32>
    %14 = vector.shape_cast %13 : vector<1x144x256xf32> to vector<144x256xf32>
    %cst_16 = arith.constant dense<0.000000e+00> : vector<2x256xf32>
    %15 = tpu.matmul %12, %14, %cst_16 {dimension_numbers = #tpu.dot_dimension_numbers<[1], [0], [0], [1], [0, 0, 1, 1], [], []>} : vector<2x144xf32>, vector<144x256xf32>, vector<2x256xf32> -> vector<2x256xf32>
    %16 = arith.addf %10, %15 : vector<2x256xf32>
    %c3 = arith.constant 3 : index
    %c0_17 = arith.constant 0 : index
    %c0_18 = arith.constant 0 : index
    %17 = vector.load %arg1[%c3, %c0_17, %c0_18] : memref<36x2x144xf32, #tpu.memory_space<vmem>>, vector<1x2x144xf32>
    %18 = vector.shape_cast %17 : vector<1x2x144xf32> to vector<2x144xf32>
    %c3_19 = arith.constant 3 : index
    %c0_20 = arith.constant 0 : index
    %c0_21 = arith.constant 0 : index
    %19 = vector.load %arg2[%c3_19, %c0_20, %c0_21] : memref<8x144x256xf32, #tpu.memory_space<vmem>>, vector<1x144x256xf32>
    %20 = vector.shape_cast %19 : vector<1x144x256xf32> to vector<144x256xf32>
    %cst_22 = arith.constant dense<0.000000e+00> : vector<2x256xf32>
    %21 = tpu.matmul %18, %20, %cst_22 {dimension_numbers = #tpu.dot_dimension_numbers<[1], [0], [0], [1], [0, 0, 1, 1], [], []>} : vector<2x144xf32>, vector<144x256xf32>, vector<2x256xf32> -> vector<2x256xf32>
    %22 = arith.addf %16, %21 : vector<2x256xf32>
    %c4 = arith.constant 4 : index
    %c0_23 = arith.constant 0 : index
    %c0_24 = arith.constant 0 : index
    %23 = vector.load %arg1[%c4, %c0_23, %c0_24] : memref<36x2x144xf32, #tpu.memory_space<vmem>>, vector<1x2x144xf32>
    %24 = vector.shape_cast %23 : vector<1x2x144xf32> to vector<2x144xf32>
    %c4_25 = arith.constant 4 : index
    %c0_26 = arith.constant 0 : index
    %c0_27 = arith.constant 0 : index
    %25 = vector.load %arg2[%c4_25, %c0_26, %c0_27] : memref<8x144x256xf32, #tpu.memory_space<vmem>>, vector<1x144x256xf32>
    %26 = vector.shape_cast %25 : vector<1x144x256xf32> to vector<144x256xf32>
    %cst_28 = arith.constant dense<0.000000e+00> : vector<2x256xf32>
    %27 = tpu.matmul %24, %26, %cst_28 {dimension_numbers = #tpu.dot_dimension_numbers<[1], [0], [0], [1], [0, 0, 1, 1], [], []>} : vector<2x144xf32>, vector<144x256xf32>, vector<2x256xf32> -> vector<2x256xf32>
    %28 = arith.addf %22, %27 : vector<2x256xf32>
    %c5 = arith.constant 5 : index
    %c0_29 = arith.constant 0 : index
    %c0_30 = arith.constant 0 : index
    %29 = vector.load %arg1[%c5, %c0_29, %c0_30] : memref<36x2x144xf32, #tpu.memory_space<vmem>>, vector<1x2x144xf32>
    %30 = vector.shape_cast %29 : vector<1x2x144xf32> to vector<2x144xf32>
    %c5_31 = arith.constant 5 : index
    %c0_32 = arith.constant 0 : index
    %c0_33 = arith.constant 0 : index
    %31 = vector.load %arg2[%c5_31, %c0_32, %c0_33] : memref<8x144x256xf32, #tpu.memory_space<vmem>>, vector<1x144x256xf32>
    %32 = vector.shape_cast %31 : vector<1x144x256xf32> to vector<144x256xf32>
    %cst_34 = arith.constant dense<0.000000e+00> : vector<2x256xf32>
    %33 = tpu.matmul %30, %32, %cst_34 {dimension_numbers = #tpu.dot_dimension_numbers<[1], [0], [0], [1], [0, 0, 1, 1], [], []>} : vector<2x144xf32>, vector<144x256xf32>, vector<2x256xf32> -> vector<2x256xf32>
    %34 = arith.addf %28, %33 : vector<2x256xf32>
    %c6 = arith.constant 6 : index
    %c0_35 = arith.constant 0 : index
    %c0_36 = arith.constant 0 : index
    %35 = vector.load %arg1[%c6, %c0_35, %c0_36] : memref<36x2x144xf32, #tpu.memory_space<vmem>>, vector<1x2x144xf32>
    %36 = vector.shape_cast %35 : vector<1x2x144xf32> to vector<2x144xf32>
    %c6_37 = arith.constant 6 : index
    %c0_38 = arith.constant 0 : index
    %c0_39 = arith.constant 0 : index
    %37 = vector.load %arg2[%c6_37, %c0_38, %c0_39] : memref<8x144x256xf32, #tpu.memory_space<vmem>>, vector<1x144x256xf32>
    %38 = vector.shape_cast %37 : vector<1x144x256xf32> to vector<144x256xf32>
    %cst_40 = arith.constant dense<0.000000e+00> : vector<2x256xf32>
    %39 = tpu.matmul %36, %38, %cst_40 {dimension_numbers = #tpu.dot_dimension_numbers<[1], [0], [0], [1], [0, 0, 1, 1], [], []>} : vector<2x144xf32>, vector<144x256xf32>, vector<2x256xf32> -> vector<2x256xf32>
    %40 = arith.addf %34, %39 : vector<2x256xf32>
    %c7 = arith.constant 7 : index
    %c0_41 = arith.constant 0 : index
    %c0_42 = arith.constant 0 : index
    %41 = vector.load %arg1[%c7, %c0_41, %c0_42] : memref<36x2x144xf32, #tpu.memory_space<vmem>>, vector<1x2x144xf32>
    %42 = vector.shape_cast %41 : vector<1x2x144xf32> to vector<2x144xf32>
    %c7_43 = arith.constant 7 : index
    %c0_44 = arith.constant 0 : index
    %c0_45 = arith.constant 0 : index
    %43 = vector.load %arg2[%c7_43, %c0_44, %c0_45] : memref<8x144x256xf32, #tpu.memory_space<vmem>>, vector<1x144x256xf32>
    %44 = vector.shape_cast %43 : vector<1x144x256xf32> to vector<144x256xf32>
    %cst_46 = arith.constant dense<0.000000e+00> : vector<2x256xf32>
    %45 = tpu.matmul %42, %44, %cst_46 {dimension_numbers = #tpu.dot_dimension_numbers<[1], [0], [0], [1], [0, 0, 1, 1], [], []>} : vector<2x144xf32>, vector<144x256xf32>, vector<2x256xf32> -> vector<2x256xf32>
    %46 = arith.addf %40, %45 : vector<2x256xf32>
    %c0_47 = arith.constant 0 : index
    %c0_48 = arith.constant 0 : index
    %47 = vector.load %arg3[%c0_47, %c0_48] : memref<1x256xf32, #tpu.memory_space<vmem>>, vector<1x256xf32>
    %48 = vector.broadcast %47 : vector<1x256xf32> to vector<2x256xf32>
    %49 = arith.addf %46, %48 : vector<2x256xf32>
    %cst_49 = arith.constant 0.000000e+00 : f32
    %50 = vector.broadcast %cst_49 : f32 to vector<2x256xf32>
    %51 = arith.maximumf %49, %50 : vector<2x256xf32>
    %c4_50 = arith.constant 4 : index
    %c0_51 = arith.constant 0 : index
    %c0_52 = arith.constant 0 : index
    %52 = vector.load %arg1[%c4_50, %c0_51, %c0_52] : memref<36x2x144xf32, #tpu.memory_space<vmem>>, vector<1x2x144xf32>
    %53 = vector.shape_cast %52 : vector<1x2x144xf32> to vector<2x144xf32>
    %c0_53 = arith.constant 0 : index
    %c0_54 = arith.constant 0 : index
    %c0_55 = arith.constant 0 : index
    %54 = vector.load %arg2[%c0_53, %c0_54, %c0_55] : memref<8x144x256xf32, #tpu.memory_space<vmem>>, vector<1x144x256xf32>
    %55 = vector.shape_cast %54 : vector<1x144x256xf32> to vector<144x256xf32>
    %cst_56 = arith.constant dense<0.000000e+00> : vector<2x256xf32>
    %56 = tpu.matmul %53, %55, %cst_56 {dimension_numbers = #tpu.dot_dimension_numbers<[1], [0], [0], [1], [0, 0, 1, 1], [], []>} : vector<2x144xf32>, vector<144x256xf32>, vector<2x256xf32> -> vector<2x256xf32>
    %c5_57 = arith.constant 5 : index
    %c0_58 = arith.constant 0 : index
    %c0_59 = arith.constant 0 : index
    %57 = vector.load %arg1[%c5_57, %c0_58, %c0_59] : memref<36x2x144xf32, #tpu.memory_space<vmem>>, vector<1x2x144xf32>
    %58 = vector.shape_cast %57 : vector<1x2x144xf32> to vector<2x144xf32>
    %c1_60 = arith.constant 1 : index
    %c0_61 = arith.constant 0 : index
    %c0_62 = arith.constant 0 : index
    %59 = vector.load %arg2[%c1_60, %c0_61, %c0_62] : memref<8x144x256xf32, #tpu.memory_space<vmem>>, vector<1x144x256xf32>
    %60 = vector.shape_cast %59 : vector<1x144x256xf32> to vector<144x256xf32>
    %cst_63 = arith.constant dense<0.000000e+00> : vector<2x256xf32>
    %61 = tpu.matmul %58, %60, %cst_63 {dimension_numbers = #tpu.dot_dimension_numbers<[1], [0], [0], [1], [0, 0, 1, 1], [], []>} : vector<2x144xf32>, vector<144x256xf32>, vector<2x256xf32> -> vector<2x256xf32>
    %62 = arith.addf %56, %61 : vector<2x256xf32>
    %c6_64 = arith.constant 6 : index
    %c0_65 = arith.constant 0 : index
    %c0_66 = arith.constant 0 : index
    %63 = vector.load %arg1[%c6_64, %c0_65, %c0_66] : memref<36x2x144xf32, #tpu.memory_space<vmem>>, vector<1x2x144xf32>
    %64 = vector.shape_cast %63 : vector<1x2x144xf32> to vector<2x144xf32>
    %c2_67 = arith.constant 2 : index
    %c0_68 = arith.constant 0 : index
    %c0_69 = arith.constant 0 : index
    %65 = vector.load %arg2[%c2_67, %c0_68, %c0_69] : memref<8x144x256xf32, #tpu.memory_space<vmem>>, vector<1x144x256xf32>
    %66 = vector.shape_cast %65 : vector<1x144x256xf32> to vector<144x256xf32>
    %cst_70 = arith.constant dense<0.000000e+00> : vector<2x256xf32>
    %67 = tpu.matmul %64, %66, %cst_70 {dimension_numbers = #tpu.dot_dimension_numbers<[1], [0], [0], [1], [0, 0, 1, 1], [], []>} : vector<2x144xf32>, vector<144x256xf32>, vector<2x256xf32> -> vector<2x256xf32>
    %68 = arith.addf %62, %67 : vector<2x256xf32>
    %c7_71 = arith.constant 7 : index
    %c0_72 = arith.constant 0 : index
    %c0_73 = arith.constant 0 : index
    %69 = vector.load %arg1[%c7_71, %c0_72, %c0_73] : memref<36x2x144xf32, #tpu.memory_space<vmem>>, vector<1x2x144xf32>
    %70 = vector.shape_cast %69 : vector<1x2x144xf32> to vector<2x144xf32>
    %c3_74 = arith.constant 3 : index
    %c0_75 = arith.constant 0 : index
    %c0_76 = arith.constant 0 : index
    %71 = vector.load %arg2[%c3_74, %c0_75, %c0_76] : memref<8x144x256xf32, #tpu.memory_space<vmem>>, vector<1x144x256xf32>
    %72 = vector.shape_cast %71 : vector<1x144x256xf32> to vector<144x256xf32>
    %cst_77 = arith.constant dense<0.000000e+00> : vector<2x256xf32>
    %73 = tpu.matmul %70, %72, %cst_77 {dimension_numbers = #tpu.dot_dimension_numbers<[1], [0], [0], [1], [0, 0, 1, 1], [], []>} : vector<2x144xf32>, vector<144x256xf32>, vector<2x256xf32> -> vector<2x256xf32>
    %74 = arith.addf %68, %73 : vector<2x256xf32>
    %c8 = arith.constant 8 : index
    %c0_78 = arith.constant 0 : index
    %c0_79 = arith.constant 0 : index
    %75 = vector.load %arg1[%c8, %c0_78, %c0_79] : memref<36x2x144xf32, #tpu.memory_space<vmem>>, vector<1x2x144xf32>
    %76 = vector.shape_cast %75 : vector<1x2x144xf32> to vector<2x144xf32>
    %c4_80 = arith.constant 4 : index
    %c0_81 = arith.constant 0 : index
    %c0_82 = arith.constant 0 : index
    %77 = vector.load %arg2[%c4_80, %c0_81, %c0_82] : memref<8x144x256xf32, #tpu.memory_space<vmem>>, vector<1x144x256xf32>
    %78 = vector.shape_cast %77 : vector<1x144x256xf32> to vector<144x256xf32>
    %cst_83 = arith.constant dense<0.000000e+00> : vector<2x256xf32>
    %79 = tpu.matmul %76, %78, %cst_83 {dimension_numbers = #tpu.dot_dimension_numbers<[1], [0], [0], [1], [0, 0, 1, 1], [], []>} : vector<2x144xf32>, vector<144x256xf32>, vector<2x256xf32> -> vector<2x256xf32>
    %80 = arith.addf %74, %79 : vector<2x256xf32>
    %c9 = arith.constant 9 : index
    %c0_84 = arith.constant 0 : index
    %c0_85 = arith.constant 0 : index
    %81 = vector.load %arg1[%c9, %c0_84, %c0_85] : memref<36x2x144xf32, #tpu.memory_space<vmem>>, vector<1x2x144xf32>
    %82 = vector.shape_cast %81 : vector<1x2x144xf32> to vector<2x144xf32>
    %c5_86 = arith.constant 5 : index
    %c0_87 = arith.constant 0 : index
    %c0_88 = arith.constant 0 : index
    %83 = vector.load %arg2[%c5_86, %c0_87, %c0_88] : memref<8x144x256xf32, #tpu.memory_space<vmem>>, vector<1x144x256xf32>
    %84 = vector.shape_cast %83 : vector<1x144x256xf32> to vector<144x256xf32>
    %cst_89 = arith.constant dense<0.000000e+00> : vector<2x256xf32>
    %85 = tpu.matmul %82, %84, %cst_89 {dimension_numbers = #tpu.dot_dimension_numbers<[1], [0], [0], [1], [0, 0, 1, 1], [], []>} : vector<2x144xf32>, vector<144x256xf32>, vector<2x256xf32> -> vector<2x256xf32>
    %86 = arith.addf %80, %85 : vector<2x256xf32>
    %c10 = arith.constant 10 : index
    %c0_90 = arith.constant 0 : index
    %c0_91 = arith.constant 0 : index
    %87 = vector.load %arg1[%c10, %c0_90, %c0_91] : memref<36x2x144xf32, #tpu.memory_space<vmem>>, vector<1x2x144xf32>
    %88 = vector.shape_cast %87 : vector<1x2x144xf32> to vector<2x144xf32>
    %c6_92 = arith.constant 6 : index
    %c0_93 = arith.constant 0 : index
    %c0_94 = arith.constant 0 : index
    %89 = vector.load %arg2[%c6_92, %c0_93, %c0_94] : memref<8x144x256xf32, #tpu.memory_space<vmem>>, vector<1x144x256xf32>
    %90 = vector.shape_cast %89 : vector<1x144x256xf32> to vector<144x256xf32>
    %cst_95 = arith.constant dense<0.000000e+00> : vector<2x256xf32>
    %91 = tpu.matmul %88, %90, %cst_95 {dimension_numbers = #tpu.dot_dimension_numbers<[1], [0], [0], [1], [0, 0, 1, 1], [], []>} : vector<2x144xf32>, vector<144x256xf32>, vector<2x256xf32> -> vector<2x256xf32>
    %92 = arith.addf %86, %91 : vector<2x256xf32>
    %c11 = arith.constant 11 : index
    %c0_96 = arith.constant 0 : index
    %c0_97 = arith.constant 0 : index
    %93 = vector.load %arg1[%c11, %c0_96, %c0_97] : memref<36x2x144xf32, #tpu.memory_space<vmem>>, vector<1x2x144xf32>
    %94 = vector.shape_cast %93 : vector<1x2x144xf32> to vector<2x144xf32>
    %c7_98 = arith.constant 7 : index
    %c0_99 = arith.constant 0 : index
    %c0_100 = arith.constant 0 : index
    %95 = vector.load %arg2[%c7_98, %c0_99, %c0_100] : memref<8x144x256xf32, #tpu.memory_space<vmem>>, vector<1x144x256xf32>
    %96 = vector.shape_cast %95 : vector<1x144x256xf32> to vector<144x256xf32>
    %cst_101 = arith.constant dense<0.000000e+00> : vector<2x256xf32>
    %97 = tpu.matmul %94, %96, %cst_101 {dimension_numbers = #tpu.dot_dimension_numbers<[1], [0], [0], [1], [0, 0, 1, 1], [], []>} : vector<2x144xf32>, vector<144x256xf32>, vector<2x256xf32> -> vector<2x256xf32>
    %98 = arith.addf %92, %97 : vector<2x256xf32>
    %c0_102 = arith.constant 0 : index
    %c0_103 = arith.constant 0 : index
    %99 = vector.load %arg3[%c0_102, %c0_103] : memref<1x256xf32, #tpu.memory_space<vmem>>, vector<1x256xf32>
    %100 = vector.broadcast %99 : vector<1x256xf32> to vector<2x256xf32>
    %101 = arith.addf %98, %100 : vector<2x256xf32>
    %cst_104 = arith.constant 0.000000e+00 : f32
    %102 = vector.broadcast %cst_104 : f32 to vector<2x256xf32>
    %103 = arith.maximumf %101, %102 : vector<2x256xf32>
    %c8_105 = arith.constant 8 : index
    %c0_106 = arith.constant 0 : index
    %c0_107 = arith.constant 0 : index
    %104 = vector.load %arg1[%c8_105, %c0_106, %c0_107] : memref<36x2x144xf32, #tpu.memory_space<vmem>>, vector<1x2x144xf32>
    %105 = vector.shape_cast %104 : vector<1x2x144xf32> to vector<2x144xf32>
    %c0_108 = arith.constant 0 : index
    %c0_109 = arith.constant 0 : index
    %c0_110 = arith.constant 0 : index
    %106 = vector.load %arg2[%c0_108, %c0_109, %c0_110] : memref<8x144x256xf32, #tpu.memory_space<vmem>>, vector<1x144x256xf32>
    %107 = vector.shape_cast %106 : vector<1x144x256xf32> to vector<144x256xf32>
    %cst_111 = arith.constant dense<0.000000e+00> : vector<2x256xf32>
    %108 = tpu.matmul %105, %107, %cst_111 {dimension_numbers = #tpu.dot_dimension_numbers<[1], [0], [0], [1], [0, 0, 1, 1], [], []>} : vector<2x144xf32>, vector<144x256xf32>, vector<2x256xf32> -> vector<2x256xf32>
    %c9_112 = arith.constant 9 : index
    %c0_113 = arith.constant 0 : index
    %c0_114 = arith.constant 0 : index
    %109 = vector.load %arg1[%c9_112, %c0_113, %c0_114] : memref<36x2x144xf32, #tpu.memory_space<vmem>>, vector<1x2x144xf32>
    %110 = vector.shape_cast %109 : vector<1x2x144xf32> to vector<2x144xf32>
    %c1_115 = arith.constant 1 : index
    %c0_116 = arith.constant 0 : index
    %c0_117 = arith.constant 0 : index
    %111 = vector.load %arg2[%c1_115, %c0_116, %c0_117] : memref<8x144x256xf32, #tpu.memory_space<vmem>>, vector<1x144x256xf32>
    %112 = vector.shape_cast %111 : vector<1x144x256xf32> to vector<144x256xf32>
    %cst_118 = arith.constant dense<0.000000e+00> : vector<2x256xf32>
    %113 = tpu.matmul %110, %112, %cst_118 {dimension_numbers = #tpu.dot_dimension_numbers<[1], [0], [0], [1], [0, 0, 1, 1], [], []>} : vector<2x144xf32>, vector<144x256xf32>, vector<2x256xf32> -> vector<2x256xf32>
    %114 = arith.addf %108, %113 : vector<2x256xf32>
    %c10_119 = arith.constant 10 : index
    %c0_120 = arith.constant 0 : index
    %c0_121 = arith.constant 0 : index
    %115 = vector.load %arg1[%c10_119, %c0_120, %c0_121] : memref<36x2x144xf32, #tpu.memory_space<vmem>>, vector<1x2x144xf32>
    %116 = vector.shape_cast %115 : vector<1x2x144xf32> to vector<2x144xf32>
    %c2_122 = arith.constant 2 : index
    %c0_123 = arith.constant 0 : index
    %c0_124 = arith.constant 0 : index
    %117 = vector.load %arg2[%c2_122, %c0_123, %c0_124] : memref<8x144x256xf32, #tpu.memory_space<vmem>>, vector<1x144x256xf32>
    %118 = vector.shape_cast %117 : vector<1x144x256xf32> to vector<144x256xf32>
    %cst_125 = arith.constant dense<0.000000e+00> : vector<2x256xf32>
    %119 = tpu.matmul %116, %118, %cst_125 {dimension_numbers = #tpu.dot_dimension_numbers<[1], [0], [0], [1], [0, 0, 1, 1], [], []>} : vector<2x144xf32>, vector<144x256xf32>, vector<2x256xf32> -> vector<2x256xf32>
    %120 = arith.addf %114, %119 : vector<2x256xf32>
    %c11_126 = arith.constant 11 : index
    %c0_127 = arith.constant 0 : index
    %c0_128 = arith.constant 0 : index
    %121 = vector.load %arg1[%c11_126, %c0_127, %c0_128] : memref<36x2x144xf32, #tpu.memory_space<vmem>>, vector<1x2x144xf32>
    %122 = vector.shape_cast %121 : vector<1x2x144xf32> to vector<2x144xf32>
    %c3_129 = arith.constant 3 : index
    %c0_130 = arith.constant 0 : index
    %c0_131 = arith.constant 0 : index
    %123 = vector.load %arg2[%c3_129, %c0_130, %c0_131] : memref<8x144x256xf32, #tpu.memory_space<vmem>>, vector<1x144x256xf32>
    %124 = vector.shape_cast %123 : vector<1x144x256xf32> to vector<144x256xf32>
    %cst_132 = arith.constant dense<0.000000e+00> : vector<2x256xf32>
    %125 = tpu.matmul %122, %124, %cst_132 {dimension_numbers = #tpu.dot_dimension_numbers<[1], [0], [0], [1], [0, 0, 1, 1], [], []>} : vector<2x144xf32>, vector<144x256xf32>, vector<2x256xf32> -> vector<2x256xf32>
    %126 = arith.addf %120, %125 : vector<2x256xf32>
    %c12 = arith.constant 12 : index
    %c0_133 = arith.constant 0 : index
    %c0_134 = arith.constant 0 : index
    %127 = vector.load %arg1[%c12, %c0_133, %c0_134] : memref<36x2x144xf32, #tpu.memory_space<vmem>>, vector<1x2x144xf32>
    %128 = vector.shape_cast %127 : vector<1x2x144xf32> to vector<2x144xf32>
    %c4_135 = arith.constant 4 : index
    %c0_136 = arith.constant 0 : index
    %c0_137 = arith.constant 0 : index
    %129 = vector.load %arg2[%c4_135, %c0_136, %c0_137] : memref<8x144x256xf32, #tpu.memory_space<vmem>>, vector<1x144x256xf32>
    %130 = vector.shape_cast %129 : vector<1x144x256xf32> to vector<144x256xf32>
    %cst_138 = arith.constant dense<0.000000e+00> : vector<2x256xf32>
    %131 = tpu.matmul %128, %130, %cst_138 {dimension_numbers = #tpu.dot_dimension_numbers<[1], [0], [0], [1], [0, 0, 1, 1], [], []>} : vector<2x144xf32>, vector<144x256xf32>, vector<2x256xf32> -> vector<2x256xf32>
    %132 = arith.addf %126, %131 : vector<2x256xf32>
    %c13 = arith.constant 13 : index
    %c0_139 = arith.constant 0 : index
    %c0_140 = arith.constant 0 : index
    %133 = vector.load %arg1[%c13, %c0_139, %c0_140] : memref<36x2x144xf32, #tpu.memory_space<vmem>>, vector<1x2x144xf32>
    %134 = vector.shape_cast %133 : vector<1x2x144xf32> to vector<2x144xf32>
    %c5_141 = arith.constant 5 : index
    %c0_142 = arith.constant 0 : index
    %c0_143 = arith.constant 0 : index
    %135 = vector.load %arg2[%c5_141, %c0_142, %c0_143] : memref<8x144x256xf32, #tpu.memory_space<vmem>>, vector<1x144x256xf32>
    %136 = vector.shape_cast %135 : vector<1x144x256xf32> to vector<144x256xf32>
    %cst_144 = arith.constant dense<0.000000e+00> : vector<2x256xf32>
    %137 = tpu.matmul %134, %136, %cst_144 {dimension_numbers = #tpu.dot_dimension_numbers<[1], [0], [0], [1], [0, 0, 1, 1], [], []>} : vector<2x144xf32>, vector<144x256xf32>, vector<2x256xf32> -> vector<2x256xf32>
    %138 = arith.addf %132, %137 : vector<2x256xf32>
    %c14 = arith.constant 14 : index
    %c0_145 = arith.constant 0 : index
    %c0_146 = arith.constant 0 : index
    %139 = vector.load %arg1[%c14, %c0_145, %c0_146] : memref<36x2x144xf32, #tpu.memory_space<vmem>>, vector<1x2x144xf32>
    %140 = vector.shape_cast %139 : vector<1x2x144xf32> to vector<2x144xf32>
    %c6_147 = arith.constant 6 : index
    %c0_148 = arith.constant 0 : index
    %c0_149 = arith.constant 0 : index
    %141 = vector.load %arg2[%c6_147, %c0_148, %c0_149] : memref<8x144x256xf32, #tpu.memory_space<vmem>>, vector<1x144x256xf32>
    %142 = vector.shape_cast %141 : vector<1x144x256xf32> to vector<144x256xf32>
    %cst_150 = arith.constant dense<0.000000e+00> : vector<2x256xf32>
    %143 = tpu.matmul %140, %142, %cst_150 {dimension_numbers = #tpu.dot_dimension_numbers<[1], [0], [0], [1], [0, 0, 1, 1], [], []>} : vector<2x144xf32>, vector<144x256xf32>, vector<2x256xf32> -> vector<2x256xf32>
    %144 = arith.addf %138, %143 : vector<2x256xf32>
    %c15 = arith.constant 15 : index
    %c0_151 = arith.constant 0 : index
    %c0_152 = arith.constant 0 : index
    %145 = vector.load %arg1[%c15, %c0_151, %c0_152] : memref<36x2x144xf32, #tpu.memory_space<vmem>>, vector<1x2x144xf32>
    %146 = vector.shape_cast %145 : vector<1x2x144xf32> to vector<2x144xf32>
    %c7_153 = arith.constant 7 : index
    %c0_154 = arith.constant 0 : index
    %c0_155 = arith.constant 0 : index
    %147 = vector.load %arg2[%c7_153, %c0_154, %c0_155] : memref<8x144x256xf32, #tpu.memory_space<vmem>>, vector<1x144x256xf32>
    %148 = vector.shape_cast %147 : vector<1x144x256xf32> to vector<144x256xf32>
    %cst_156 = arith.constant dense<0.000000e+00> : vector<2x256xf32>
    %149 = tpu.matmul %146, %148, %cst_156 {dimension_numbers = #tpu.dot_dimension_numbers<[1], [0], [0], [1], [0, 0, 1, 1], [], []>} : vector<2x144xf32>, vector<144x256xf32>, vector<2x256xf32> -> vector<2x256xf32>
    %150 = arith.addf %144, %149 : vector<2x256xf32>
    %c0_157 = arith.constant 0 : index
    %c0_158 = arith.constant 0 : index
    %151 = vector.load %arg3[%c0_157, %c0_158] : memref<1x256xf32, #tpu.memory_space<vmem>>, vector<1x256xf32>
    %152 = vector.broadcast %151 : vector<1x256xf32> to vector<2x256xf32>
    %153 = arith.addf %150, %152 : vector<2x256xf32>
    %cst_159 = arith.constant 0.000000e+00 : f32
    %154 = vector.broadcast %cst_159 : f32 to vector<2x256xf32>
    %155 = arith.maximumf %153, %154 : vector<2x256xf32>
    %c12_160 = arith.constant 12 : index
    %c0_161 = arith.constant 0 : index
    %c0_162 = arith.constant 0 : index
    %156 = vector.load %arg1[%c12_160, %c0_161, %c0_162] : memref<36x2x144xf32, #tpu.memory_space<vmem>>, vector<1x2x144xf32>
    %157 = vector.shape_cast %156 : vector<1x2x144xf32> to vector<2x144xf32>
    %c0_163 = arith.constant 0 : index
    %c0_164 = arith.constant 0 : index
    %c0_165 = arith.constant 0 : index
    %158 = vector.load %arg2[%c0_163, %c0_164, %c0_165] : memref<8x144x256xf32, #tpu.memory_space<vmem>>, vector<1x144x256xf32>
    %159 = vector.shape_cast %158 : vector<1x144x256xf32> to vector<144x256xf32>
    %cst_166 = arith.constant dense<0.000000e+00> : vector<2x256xf32>
    %160 = tpu.matmul %157, %159, %cst_166 {dimension_numbers = #tpu.dot_dimension_numbers<[1], [0], [0], [1], [0, 0, 1, 1], [], []>} : vector<2x144xf32>, vector<144x256xf32>, vector<2x256xf32> -> vector<2x256xf32>
    %c13_167 = arith.constant 13 : index
    %c0_168 = arith.constant 0 : index
    %c0_169 = arith.constant 0 : index
    %161 = vector.load %arg1[%c13_167, %c0_168, %c0_169] : memref<36x2x144xf32, #tpu.memory_space<vmem>>, vector<1x2x144xf32>
    %162 = vector.shape_cast %161 : vector<1x2x144xf32> to vector<2x144xf32>
    %c1_170 = arith.constant 1 : index
    %c0_171 = arith.constant 0 : index
    %c0_172 = arith.constant 0 : index
    %163 = vector.load %arg2[%c1_170, %c0_171, %c0_172] : memref<8x144x256xf32, #tpu.memory_space<vmem>>, vector<1x144x256xf32>
    %164 = vector.shape_cast %163 : vector<1x144x256xf32> to vector<144x256xf32>
    %cst_173 = arith.constant dense<0.000000e+00> : vector<2x256xf32>
    %165 = tpu.matmul %162, %164, %cst_173 {dimension_numbers = #tpu.dot_dimension_numbers<[1], [0], [0], [1], [0, 0, 1, 1], [], []>} : vector<2x144xf32>, vector<144x256xf32>, vector<2x256xf32> -> vector<2x256xf32>
    %166 = arith.addf %160, %165 : vector<2x256xf32>
    %c14_174 = arith.constant 14 : index
    %c0_175 = arith.constant 0 : index
    %c0_176 = arith.constant 0 : index
    %167 = vector.load %arg1[%c14_174, %c0_175, %c0_176] : memref<36x2x144xf32, #tpu.memory_space<vmem>>, vector<1x2x144xf32>
    %168 = vector.shape_cast %167 : vector<1x2x144xf32> to vector<2x144xf32>
    %c2_177 = arith.constant 2 : index
    %c0_178 = arith.constant 0 : index
    %c0_179 = arith.constant 0 : index
    %169 = vector.load %arg2[%c2_177, %c0_178, %c0_179] : memref<8x144x256xf32, #tpu.memory_space<vmem>>, vector<1x144x256xf32>
    %170 = vector.shape_cast %169 : vector<1x144x256xf32> to vector<144x256xf32>
    %cst_180 = arith.constant dense<0.000000e+00> : vector<2x256xf32>
    %171 = tpu.matmul %168, %170, %cst_180 {dimension_numbers = #tpu.dot_dimension_numbers<[1], [0], [0], [1], [0, 0, 1, 1], [], []>} : vector<2x144xf32>, vector<144x256xf32>, vector<2x256xf32> -> vector<2x256xf32>
    %172 = arith.addf %166, %171 : vector<2x256xf32>
    %c15_181 = arith.constant 15 : index
    %c0_182 = arith.constant 0 : index
    %c0_183 = arith.constant 0 : index
    %173 = vector.load %arg1[%c15_181, %c0_182, %c0_183] : memref<36x2x144xf32, #tpu.memory_space<vmem>>, vector<1x2x144xf32>
    %174 = vector.shape_cast %173 : vector<1x2x144xf32> to vector<2x144xf32>
    %c3_184 = arith.constant 3 : index
    %c0_185 = arith.constant 0 : index
    %c0_186 = arith.constant 0 : index
    %175 = vector.load %arg2[%c3_184, %c0_185, %c0_186] : memref<8x144x256xf32, #tpu.memory_space<vmem>>, vector<1x144x256xf32>
    %176 = vector.shape_cast %175 : vector<1x144x256xf32> to vector<144x256xf32>
    %cst_187 = arith.constant dense<0.000000e+00> : vector<2x256xf32>
    %177 = tpu.matmul %174, %176, %cst_187 {dimension_numbers = #tpu.dot_dimension_numbers<[1], [0], [0], [1], [0, 0, 1, 1], [], []>} : vector<2x144xf32>, vector<144x256xf32>, vector<2x256xf32> -> vector<2x256xf32>
    %178 = arith.addf %172, %177 : vector<2x256xf32>
    %c16 = arith.constant 16 : index
    %c0_188 = arith.constant 0 : index
    %c0_189 = arith.constant 0 : index
    %179 = vector.load %arg1[%c16, %c0_188, %c0_189] : memref<36x2x144xf32, #tpu.memory_space<vmem>>, vector<1x2x144xf32>
    %180 = vector.shape_cast %179 : vector<1x2x144xf32> to vector<2x144xf32>
    %c4_190 = arith.constant 4 : index
    %c0_191 = arith.constant 0 : index
    %c0_192 = arith.constant 0 : index
    %181 = vector.load %arg2[%c4_190, %c0_191, %c0_192] : memref<8x144x256xf32, #tpu.memory_space<vmem>>, vector<1x144x256xf32>
    %182 = vector.shape_cast %181 : vector<1x144x256xf32> to vector<144x256xf32>
    %cst_193 = arith.constant dense<0.000000e+00> : vector<2x256xf32>
    %183 = tpu.matmul %180, %182, %cst_193 {dimension_numbers = #tpu.dot_dimension_numbers<[1], [0], [0], [1], [0, 0, 1, 1], [], []>} : vector<2x144xf32>, vector<144x256xf32>, vector<2x256xf32> -> vector<2x256xf32>
    %184 = arith.addf %178, %183 : vector<2x256xf32>
    %c17 = arith.constant 17 : index
    %c0_194 = arith.constant 0 : index
    %c0_195 = arith.constant 0 : index
    %185 = vector.load %arg1[%c17, %c0_194, %c0_195] : memref<36x2x144xf32, #tpu.memory_space<vmem>>, vector<1x2x144xf32>
    %186 = vector.shape_cast %185 : vector<1x2x144xf32> to vector<2x144xf32>
    %c5_196 = arith.constant 5 : index
    %c0_197 = arith.constant 0 : index
    %c0_198 = arith.constant 0 : index
    %187 = vector.load %arg2[%c5_196, %c0_197, %c0_198] : memref<8x144x256xf32, #tpu.memory_space<vmem>>, vector<1x144x256xf32>
    %188 = vector.shape_cast %187 : vector<1x144x256xf32> to vector<144x256xf32>
    %cst_199 = arith.constant dense<0.000000e+00> : vector<2x256xf32>
    %189 = tpu.matmul %186, %188, %cst_199 {dimension_numbers = #tpu.dot_dimension_numbers<[1], [0], [0], [1], [0, 0, 1, 1], [], []>} : vector<2x144xf32>, vector<144x256xf32>, vector<2x256xf32> -> vector<2x256xf32>
    %190 = arith.addf %184, %189 : vector<2x256xf32>
    %c18 = arith.constant 18 : index
    %c0_200 = arith.constant 0 : index
    %c0_201 = arith.constant 0 : index
    %191 = vector.load %arg1[%c18, %c0_200, %c0_201] : memref<36x2x144xf32, #tpu.memory_space<vmem>>, vector<1x2x144xf32>
    %192 = vector.shape_cast %191 : vector<1x2x144xf32> to vector<2x144xf32>
    %c6_202 = arith.constant 6 : index
    %c0_203 = arith.constant 0 : index
    %c0_204 = arith.constant 0 : index
    %193 = vector.load %arg2[%c6_202, %c0_203, %c0_204] : memref<8x144x256xf32, #tpu.memory_space<vmem>>, vector<1x144x256xf32>
    %194 = vector.shape_cast %193 : vector<1x144x256xf32> to vector<144x256xf32>
    %cst_205 = arith.constant dense<0.000000e+00> : vector<2x256xf32>
    %195 = tpu.matmul %192, %194, %cst_205 {dimension_numbers = #tpu.dot_dimension_numbers<[1], [0], [0], [1], [0, 0, 1, 1], [], []>} : vector<2x144xf32>, vector<144x256xf32>, vector<2x256xf32> -> vector<2x256xf32>
    %196 = arith.addf %190, %195 : vector<2x256xf32>
    %c19 = arith.constant 19 : index
    %c0_206 = arith.constant 0 : index
    %c0_207 = arith.constant 0 : index
    %197 = vector.load %arg1[%c19, %c0_206, %c0_207] : memref<36x2x144xf32, #tpu.memory_space<vmem>>, vector<1x2x144xf32>
    %198 = vector.shape_cast %197 : vector<1x2x144xf32> to vector<2x144xf32>
    %c7_208 = arith.constant 7 : index
    %c0_209 = arith.constant 0 : index
    %c0_210 = arith.constant 0 : index
    %199 = vector.load %arg2[%c7_208, %c0_209, %c0_210] : memref<8x144x256xf32, #tpu.memory_space<vmem>>, vector<1x144x256xf32>
    %200 = vector.shape_cast %199 : vector<1x144x256xf32> to vector<144x256xf32>
    %cst_211 = arith.constant dense<0.000000e+00> : vector<2x256xf32>
    %201 = tpu.matmul %198, %200, %cst_211 {dimension_numbers = #tpu.dot_dimension_numbers<[1], [0], [0], [1], [0, 0, 1, 1], [], []>} : vector<2x144xf32>, vector<144x256xf32>, vector<2x256xf32> -> vector<2x256xf32>
    %202 = arith.addf %196, %201 : vector<2x256xf32>
    %c0_212 = arith.constant 0 : index
    %c0_213 = arith.constant 0 : index
    %203 = vector.load %arg3[%c0_212, %c0_213] : memref<1x256xf32, #tpu.memory_space<vmem>>, vector<1x256xf32>
    %204 = vector.broadcast %203 : vector<1x256xf32> to vector<2x256xf32>
    %205 = arith.addf %202, %204 : vector<2x256xf32>
    %cst_214 = arith.constant 0.000000e+00 : f32
    %206 = vector.broadcast %cst_214 : f32 to vector<2x256xf32>
    %207 = arith.maximumf %205, %206 : vector<2x256xf32>
    %c16_215 = arith.constant 16 : index
    %c0_216 = arith.constant 0 : index
    %c0_217 = arith.constant 0 : index
    %208 = vector.load %arg1[%c16_215, %c0_216, %c0_217] : memref<36x2x144xf32, #tpu.memory_space<vmem>>, vector<1x2x144xf32>
    %209 = vector.shape_cast %208 : vector<1x2x144xf32> to vector<2x144xf32>
    %c0_218 = arith.constant 0 : index
    %c0_219 = arith.constant 0 : index
    %c0_220 = arith.constant 0 : index
    %210 = vector.load %arg2[%c0_218, %c0_219, %c0_220] : memref<8x144x256xf32, #tpu.memory_space<vmem>>, vector<1x144x256xf32>
    %211 = vector.shape_cast %210 : vector<1x144x256xf32> to vector<144x256xf32>
    %cst_221 = arith.constant dense<0.000000e+00> : vector<2x256xf32>
    %212 = tpu.matmul %209, %211, %cst_221 {dimension_numbers = #tpu.dot_dimension_numbers<[1], [0], [0], [1], [0, 0, 1, 1], [], []>} : vector<2x144xf32>, vector<144x256xf32>, vector<2x256xf32> -> vector<2x256xf32>
    %c17_222 = arith.constant 17 : index
    %c0_223 = arith.constant 0 : index
    %c0_224 = arith.constant 0 : index
    %213 = vector.load %arg1[%c17_222, %c0_223, %c0_224] : memref<36x2x144xf32, #tpu.memory_space<vmem>>, vector<1x2x144xf32>
    %214 = vector.shape_cast %213 : vector<1x2x144xf32> to vector<2x144xf32>
    %c1_225 = arith.constant 1 : index
    %c0_226 = arith.constant 0 : index
    %c0_227 = arith.constant 0 : index
    %215 = vector.load %arg2[%c1_225, %c0_226, %c0_227] : memref<8x144x256xf32, #tpu.memory_space<vmem>>, vector<1x144x256xf32>
    %216 = vector.shape_cast %215 : vector<1x144x256xf32> to vector<144x256xf32>
    %cst_228 = arith.constant dense<0.000000e+00> : vector<2x256xf32>
    %217 = tpu.matmul %214, %216, %cst_228 {dimension_numbers = #tpu.dot_dimension_numbers<[1], [0], [0], [1], [0, 0, 1, 1], [], []>} : vector<2x144xf32>, vector<144x256xf32>, vector<2x256xf32> -> vector<2x256xf32>
    %218 = arith.addf %212, %217 : vector<2x256xf32>
    %c18_229 = arith.constant 18 : index
    %c0_230 = arith.constant 0 : index
    %c0_231 = arith.constant 0 : index
    %219 = vector.load %arg1[%c18_229, %c0_230, %c0_231] : memref<36x2x144xf32, #tpu.memory_space<vmem>>, vector<1x2x144xf32>
    %220 = vector.shape_cast %219 : vector<1x2x144xf32> to vector<2x144xf32>
    %c2_232 = arith.constant 2 : index
    %c0_233 = arith.constant 0 : index
    %c0_234 = arith.constant 0 : index
    %221 = vector.load %arg2[%c2_232, %c0_233, %c0_234] : memref<8x144x256xf32, #tpu.memory_space<vmem>>, vector<1x144x256xf32>
    %222 = vector.shape_cast %221 : vector<1x144x256xf32> to vector<144x256xf32>
    %cst_235 = arith.constant dense<0.000000e+00> : vector<2x256xf32>
    %223 = tpu.matmul %220, %222, %cst_235 {dimension_numbers = #tpu.dot_dimension_numbers<[1], [0], [0], [1], [0, 0, 1, 1], [], []>} : vector<2x144xf32>, vector<144x256xf32>, vector<2x256xf32> -> vector<2x256xf32>
    %224 = arith.addf %218, %223 : vector<2x256xf32>
    %c19_236 = arith.constant 19 : index
    %c0_237 = arith.constant 0 : index
    %c0_238 = arith.constant 0 : index
    %225 = vector.load %arg1[%c19_236, %c0_237, %c0_238] : memref<36x2x144xf32, #tpu.memory_space<vmem>>, vector<1x2x144xf32>
    %226 = vector.shape_cast %225 : vector<1x2x144xf32> to vector<2x144xf32>
    %c3_239 = arith.constant 3 : index
    %c0_240 = arith.constant 0 : index
    %c0_241 = arith.constant 0 : index
    %227 = vector.load %arg2[%c3_239, %c0_240, %c0_241] : memref<8x144x256xf32, #tpu.memory_space<vmem>>, vector<1x144x256xf32>
    %228 = vector.shape_cast %227 : vector<1x144x256xf32> to vector<144x256xf32>
    %cst_242 = arith.constant dense<0.000000e+00> : vector<2x256xf32>
    %229 = tpu.matmul %226, %228, %cst_242 {dimension_numbers = #tpu.dot_dimension_numbers<[1], [0], [0], [1], [0, 0, 1, 1], [], []>} : vector<2x144xf32>, vector<144x256xf32>, vector<2x256xf32> -> vector<2x256xf32>
    %230 = arith.addf %224, %229 : vector<2x256xf32>
    %c20 = arith.constant 20 : index
    %c0_243 = arith.constant 0 : index
    %c0_244 = arith.constant 0 : index
    %231 = vector.load %arg1[%c20, %c0_243, %c0_244] : memref<36x2x144xf32, #tpu.memory_space<vmem>>, vector<1x2x144xf32>
    %232 = vector.shape_cast %231 : vector<1x2x144xf32> to vector<2x144xf32>
    %c4_245 = arith.constant 4 : index
    %c0_246 = arith.constant 0 : index
    %c0_247 = arith.constant 0 : index
    %233 = vector.load %arg2[%c4_245, %c0_246, %c0_247] : memref<8x144x256xf32, #tpu.memory_space<vmem>>, vector<1x144x256xf32>
    %234 = vector.shape_cast %233 : vector<1x144x256xf32> to vector<144x256xf32>
    %cst_248 = arith.constant dense<0.000000e+00> : vector<2x256xf32>
    %235 = tpu.matmul %232, %234, %cst_248 {dimension_numbers = #tpu.dot_dimension_numbers<[1], [0], [0], [1], [0, 0, 1, 1], [], []>} : vector<2x144xf32>, vector<144x256xf32>, vector<2x256xf32> -> vector<2x256xf32>
    %236 = arith.addf %230, %235 : vector<2x256xf32>
    %c21 = arith.constant 21 : index
    %c0_249 = arith.constant 0 : index
    %c0_250 = arith.constant 0 : index
    %237 = vector.load %arg1[%c21, %c0_249, %c0_250] : memref<36x2x144xf32, #tpu.memory_space<vmem>>, vector<1x2x144xf32>
    %238 = vector.shape_cast %237 : vector<1x2x144xf32> to vector<2x144xf32>
    %c5_251 = arith.constant 5 : index
    %c0_252 = arith.constant 0 : index
    %c0_253 = arith.constant 0 : index
    %239 = vector.load %arg2[%c5_251, %c0_252, %c0_253] : memref<8x144x256xf32, #tpu.memory_space<vmem>>, vector<1x144x256xf32>
    %240 = vector.shape_cast %239 : vector<1x144x256xf32> to vector<144x256xf32>
    %cst_254 = arith.constant dense<0.000000e+00> : vector<2x256xf32>
    %241 = tpu.matmul %238, %240, %cst_254 {dimension_numbers = #tpu.dot_dimension_numbers<[1], [0], [0], [1], [0, 0, 1, 1], [], []>} : vector<2x144xf32>, vector<144x256xf32>, vector<2x256xf32> -> vector<2x256xf32>
    %242 = arith.addf %236, %241 : vector<2x256xf32>
    %c22 = arith.constant 22 : index
    %c0_255 = arith.constant 0 : index
    %c0_256 = arith.constant 0 : index
    %243 = vector.load %arg1[%c22, %c0_255, %c0_256] : memref<36x2x144xf32, #tpu.memory_space<vmem>>, vector<1x2x144xf32>
    %244 = vector.shape_cast %243 : vector<1x2x144xf32> to vector<2x144xf32>
    %c6_257 = arith.constant 6 : index
    %c0_258 = arith.constant 0 : index
    %c0_259 = arith.constant 0 : index
    %245 = vector.load %arg2[%c6_257, %c0_258, %c0_259] : memref<8x144x256xf32, #tpu.memory_space<vmem>>, vector<1x144x256xf32>
    %246 = vector.shape_cast %245 : vector<1x144x256xf32> to vector<144x256xf32>
    %cst_260 = arith.constant dense<0.000000e+00> : vector<2x256xf32>
    %247 = tpu.matmul %244, %246, %cst_260 {dimension_numbers = #tpu.dot_dimension_numbers<[1], [0], [0], [1], [0, 0, 1, 1], [], []>} : vector<2x144xf32>, vector<144x256xf32>, vector<2x256xf32> -> vector<2x256xf32>
    %248 = arith.addf %242, %247 : vector<2x256xf32>
    %c23 = arith.constant 23 : index
    %c0_261 = arith.constant 0 : index
    %c0_262 = arith.constant 0 : index
    %249 = vector.load %arg1[%c23, %c0_261, %c0_262] : memref<36x2x144xf32, #tpu.memory_space<vmem>>, vector<1x2x144xf32>
    %250 = vector.shape_cast %249 : vector<1x2x144xf32> to vector<2x144xf32>
    %c7_263 = arith.constant 7 : index
    %c0_264 = arith.constant 0 : index
    %c0_265 = arith.constant 0 : index
    %251 = vector.load %arg2[%c7_263, %c0_264, %c0_265] : memref<8x144x256xf32, #tpu.memory_space<vmem>>, vector<1x144x256xf32>
    %252 = vector.shape_cast %251 : vector<1x144x256xf32> to vector<144x256xf32>
    %cst_266 = arith.constant dense<0.000000e+00> : vector<2x256xf32>
    %253 = tpu.matmul %250, %252, %cst_266 {dimension_numbers = #tpu.dot_dimension_numbers<[1], [0], [0], [1], [0, 0, 1, 1], [], []>} : vector<2x144xf32>, vector<144x256xf32>, vector<2x256xf32> -> vector<2x256xf32>
    %254 = arith.addf %248, %253 : vector<2x256xf32>
    %c0_267 = arith.constant 0 : index
    %c0_268 = arith.constant 0 : index
    %255 = vector.load %arg3[%c0_267, %c0_268] : memref<1x256xf32, #tpu.memory_space<vmem>>, vector<1x256xf32>
    %256 = vector.broadcast %255 : vector<1x256xf32> to vector<2x256xf32>
    %257 = arith.addf %254, %256 : vector<2x256xf32>
    %cst_269 = arith.constant 0.000000e+00 : f32
    %258 = vector.broadcast %cst_269 : f32 to vector<2x256xf32>
    %259 = arith.maximumf %257, %258 : vector<2x256xf32>
    %c20_270 = arith.constant 20 : index
    %c0_271 = arith.constant 0 : index
    %c0_272 = arith.constant 0 : index
    %260 = vector.load %arg1[%c20_270, %c0_271, %c0_272] : memref<36x2x144xf32, #tpu.memory_space<vmem>>, vector<1x2x144xf32>
    %261 = vector.shape_cast %260 : vector<1x2x144xf32> to vector<2x144xf32>
    %c0_273 = arith.constant 0 : index
    %c0_274 = arith.constant 0 : index
    %c0_275 = arith.constant 0 : index
    %262 = vector.load %arg2[%c0_273, %c0_274, %c0_275] : memref<8x144x256xf32, #tpu.memory_space<vmem>>, vector<1x144x256xf32>
    %263 = vector.shape_cast %262 : vector<1x144x256xf32> to vector<144x256xf32>
    %cst_276 = arith.constant dense<0.000000e+00> : vector<2x256xf32>
    %264 = tpu.matmul %261, %263, %cst_276 {dimension_numbers = #tpu.dot_dimension_numbers<[1], [0], [0], [1], [0, 0, 1, 1], [], []>} : vector<2x144xf32>, vector<144x256xf32>, vector<2x256xf32> -> vector<2x256xf32>
    %c21_277 = arith.constant 21 : index
    %c0_278 = arith.constant 0 : index
    %c0_279 = arith.constant 0 : index
    %265 = vector.load %arg1[%c21_277, %c0_278, %c0_279] : memref<36x2x144xf32, #tpu.memory_space<vmem>>, vector<1x2x144xf32>
    %266 = vector.shape_cast %265 : vector<1x2x144xf32> to vector<2x144xf32>
    %c1_280 = arith.constant 1 : index
    %c0_281 = arith.constant 0 : index
    %c0_282 = arith.constant 0 : index
    %267 = vector.load %arg2[%c1_280, %c0_281, %c0_282] : memref<8x144x256xf32, #tpu.memory_space<vmem>>, vector<1x144x256xf32>
    %268 = vector.shape_cast %267 : vector<1x144x256xf32> to vector<144x256xf32>
    %cst_283 = arith.constant dense<0.000000e+00> : vector<2x256xf32>
    %269 = tpu.matmul %266, %268, %cst_283 {dimension_numbers = #tpu.dot_dimension_numbers<[1], [0], [0], [1], [0, 0, 1, 1], [], []>} : vector<2x144xf32>, vector<144x256xf32>, vector<2x256xf32> -> vector<2x256xf32>
    %270 = arith.addf %264, %269 : vector<2x256xf32>
    %c22_284 = arith.constant 22 : index
    %c0_285 = arith.constant 0 : index
    %c0_286 = arith.constant 0 : index
    %271 = vector.load %arg1[%c22_284, %c0_285, %c0_286] : memref<36x2x144xf32, #tpu.memory_space<vmem>>, vector<1x2x144xf32>
    %272 = vector.shape_cast %271 : vector<1x2x144xf32> to vector<2x144xf32>
    %c2_287 = arith.constant 2 : index
    %c0_288 = arith.constant 0 : index
    %c0_289 = arith.constant 0 : index
    %273 = vector.load %arg2[%c2_287, %c0_288, %c0_289] : memref<8x144x256xf32, #tpu.memory_space<vmem>>, vector<1x144x256xf32>
    %274 = vector.shape_cast %273 : vector<1x144x256xf32> to vector<144x256xf32>
    %cst_290 = arith.constant dense<0.000000e+00> : vector<2x256xf32>
    %275 = tpu.matmul %272, %274, %cst_290 {dimension_numbers = #tpu.dot_dimension_numbers<[1], [0], [0], [1], [0, 0, 1, 1], [], []>} : vector<2x144xf32>, vector<144x256xf32>, vector<2x256xf32> -> vector<2x256xf32>
    %276 = arith.addf %270, %275 : vector<2x256xf32>
    %c23_291 = arith.constant 23 : index
    %c0_292 = arith.constant 0 : index
    %c0_293 = arith.constant 0 : index
    %277 = vector.load %arg1[%c23_291, %c0_292, %c0_293] : memref<36x2x144xf32, #tpu.memory_space<vmem>>, vector<1x2x144xf32>
    %278 = vector.shape_cast %277 : vector<1x2x144xf32> to vector<2x144xf32>
    %c3_294 = arith.constant 3 : index
    %c0_295 = arith.constant 0 : index
    %c0_296 = arith.constant 0 : index
    %279 = vector.load %arg2[%c3_294, %c0_295, %c0_296] : memref<8x144x256xf32, #tpu.memory_space<vmem>>, vector<1x144x256xf32>
    %280 = vector.shape_cast %279 : vector<1x144x256xf32> to vector<144x256xf32>
    %cst_297 = arith.constant dense<0.000000e+00> : vector<2x256xf32>
    %281 = tpu.matmul %278, %280, %cst_297 {dimension_numbers = #tpu.dot_dimension_numbers<[1], [0], [0], [1], [0, 0, 1, 1], [], []>} : vector<2x144xf32>, vector<144x256xf32>, vector<2x256xf32> -> vector<2x256xf32>
    %282 = arith.addf %276, %281 : vector<2x256xf32>
    %c24 = arith.constant 24 : index
    %c0_298 = arith.constant 0 : index
    %c0_299 = arith.constant 0 : index
    %283 = vector.load %arg1[%c24, %c0_298, %c0_299] : memref<36x2x144xf32, #tpu.memory_space<vmem>>, vector<1x2x144xf32>
    %284 = vector.shape_cast %283 : vector<1x2x144xf32> to vector<2x144xf32>
    %c4_300 = arith.constant 4 : index
    %c0_301 = arith.constant 0 : index
    %c0_302 = arith.constant 0 : index
    %285 = vector.load %arg2[%c4_300, %c0_301, %c0_302] : memref<8x144x256xf32, #tpu.memory_space<vmem>>, vector<1x144x256xf32>
    %286 = vector.shape_cast %285 : vector<1x144x256xf32> to vector<144x256xf32>
    %cst_303 = arith.constant dense<0.000000e+00> : vector<2x256xf32>
    %287 = tpu.matmul %284, %286, %cst_303 {dimension_numbers = #tpu.dot_dimension_numbers<[1], [0], [0], [1], [0, 0, 1, 1], [], []>} : vector<2x144xf32>, vector<144x256xf32>, vector<2x256xf32> -> vector<2x256xf32>
    %288 = arith.addf %282, %287 : vector<2x256xf32>
    %c25 = arith.constant 25 : index
    %c0_304 = arith.constant 0 : index
    %c0_305 = arith.constant 0 : index
    %289 = vector.load %arg1[%c25, %c0_304, %c0_305] : memref<36x2x144xf32, #tpu.memory_space<vmem>>, vector<1x2x144xf32>
    %290 = vector.shape_cast %289 : vector<1x2x144xf32> to vector<2x144xf32>
    %c5_306 = arith.constant 5 : index
    %c0_307 = arith.constant 0 : index
    %c0_308 = arith.constant 0 : index
    %291 = vector.load %arg2[%c5_306, %c0_307, %c0_308] : memref<8x144x256xf32, #tpu.memory_space<vmem>>, vector<1x144x256xf32>
    %292 = vector.shape_cast %291 : vector<1x144x256xf32> to vector<144x256xf32>
    %cst_309 = arith.constant dense<0.000000e+00> : vector<2x256xf32>
    %293 = tpu.matmul %290, %292, %cst_309 {dimension_numbers = #tpu.dot_dimension_numbers<[1], [0], [0], [1], [0, 0, 1, 1], [], []>} : vector<2x144xf32>, vector<144x256xf32>, vector<2x256xf32> -> vector<2x256xf32>
    %294 = arith.addf %288, %293 : vector<2x256xf32>
    %c26 = arith.constant 26 : index
    %c0_310 = arith.constant 0 : index
    %c0_311 = arith.constant 0 : index
    %295 = vector.load %arg1[%c26, %c0_310, %c0_311] : memref<36x2x144xf32, #tpu.memory_space<vmem>>, vector<1x2x144xf32>
    %296 = vector.shape_cast %295 : vector<1x2x144xf32> to vector<2x144xf32>
    %c6_312 = arith.constant 6 : index
    %c0_313 = arith.constant 0 : index
    %c0_314 = arith.constant 0 : index
    %297 = vector.load %arg2[%c6_312, %c0_313, %c0_314] : memref<8x144x256xf32, #tpu.memory_space<vmem>>, vector<1x144x256xf32>
    %298 = vector.shape_cast %297 : vector<1x144x256xf32> to vector<144x256xf32>
    %cst_315 = arith.constant dense<0.000000e+00> : vector<2x256xf32>
    %299 = tpu.matmul %296, %298, %cst_315 {dimension_numbers = #tpu.dot_dimension_numbers<[1], [0], [0], [1], [0, 0, 1, 1], [], []>} : vector<2x144xf32>, vector<144x256xf32>, vector<2x256xf32> -> vector<2x256xf32>
    %300 = arith.addf %294, %299 : vector<2x256xf32>
    %c27 = arith.constant 27 : index
    %c0_316 = arith.constant 0 : index
    %c0_317 = arith.constant 0 : index
    %301 = vector.load %arg1[%c27, %c0_316, %c0_317] : memref<36x2x144xf32, #tpu.memory_space<vmem>>, vector<1x2x144xf32>
    %302 = vector.shape_cast %301 : vector<1x2x144xf32> to vector<2x144xf32>
    %c7_318 = arith.constant 7 : index
    %c0_319 = arith.constant 0 : index
    %c0_320 = arith.constant 0 : index
    %303 = vector.load %arg2[%c7_318, %c0_319, %c0_320] : memref<8x144x256xf32, #tpu.memory_space<vmem>>, vector<1x144x256xf32>
    %304 = vector.shape_cast %303 : vector<1x144x256xf32> to vector<144x256xf32>
    %cst_321 = arith.constant dense<0.000000e+00> : vector<2x256xf32>
    %305 = tpu.matmul %302, %304, %cst_321 {dimension_numbers = #tpu.dot_dimension_numbers<[1], [0], [0], [1], [0, 0, 1, 1], [], []>} : vector<2x144xf32>, vector<144x256xf32>, vector<2x256xf32> -> vector<2x256xf32>
    %306 = arith.addf %300, %305 : vector<2x256xf32>
    %c0_322 = arith.constant 0 : index
    %c0_323 = arith.constant 0 : index
    %307 = vector.load %arg3[%c0_322, %c0_323] : memref<1x256xf32, #tpu.memory_space<vmem>>, vector<1x256xf32>
    %308 = vector.broadcast %307 : vector<1x256xf32> to vector<2x256xf32>
    %309 = arith.addf %306, %308 : vector<2x256xf32>
    %cst_324 = arith.constant 0.000000e+00 : f32
    %310 = vector.broadcast %cst_324 : f32 to vector<2x256xf32>
    %311 = arith.maximumf %309, %310 : vector<2x256xf32>
    %c24_325 = arith.constant 24 : index
    %c0_326 = arith.constant 0 : index
    %c0_327 = arith.constant 0 : index
    %312 = vector.load %arg1[%c24_325, %c0_326, %c0_327] : memref<36x2x144xf32, #tpu.memory_space<vmem>>, vector<1x2x144xf32>
    %313 = vector.shape_cast %312 : vector<1x2x144xf32> to vector<2x144xf32>
    %c0_328 = arith.constant 0 : index
    %c0_329 = arith.constant 0 : index
    %c0_330 = arith.constant 0 : index
    %314 = vector.load %arg2[%c0_328, %c0_329, %c0_330] : memref<8x144x256xf32, #tpu.memory_space<vmem>>, vector<1x144x256xf32>
    %315 = vector.shape_cast %314 : vector<1x144x256xf32> to vector<144x256xf32>
    %cst_331 = arith.constant dense<0.000000e+00> : vector<2x256xf32>
    %316 = tpu.matmul %313, %315, %cst_331 {dimension_numbers = #tpu.dot_dimension_numbers<[1], [0], [0], [1], [0, 0, 1, 1], [], []>} : vector<2x144xf32>, vector<144x256xf32>, vector<2x256xf32> -> vector<2x256xf32>
    %c25_332 = arith.constant 25 : index
    %c0_333 = arith.constant 0 : index
    %c0_334 = arith.constant 0 : index
    %317 = vector.load %arg1[%c25_332, %c0_333, %c0_334] : memref<36x2x144xf32, #tpu.memory_space<vmem>>, vector<1x2x144xf32>
    %318 = vector.shape_cast %317 : vector<1x2x144xf32> to vector<2x144xf32>
    %c1_335 = arith.constant 1 : index
    %c0_336 = arith.constant 0 : index
    %c0_337 = arith.constant 0 : index
    %319 = vector.load %arg2[%c1_335, %c0_336, %c0_337] : memref<8x144x256xf32, #tpu.memory_space<vmem>>, vector<1x144x256xf32>
    %320 = vector.shape_cast %319 : vector<1x144x256xf32> to vector<144x256xf32>
    %cst_338 = arith.constant dense<0.000000e+00> : vector<2x256xf32>
    %321 = tpu.matmul %318, %320, %cst_338 {dimension_numbers = #tpu.dot_dimension_numbers<[1], [0], [0], [1], [0, 0, 1, 1], [], []>} : vector<2x144xf32>, vector<144x256xf32>, vector<2x256xf32> -> vector<2x256xf32>
    %322 = arith.addf %316, %321 : vector<2x256xf32>
    %c26_339 = arith.constant 26 : index
    %c0_340 = arith.constant 0 : index
    %c0_341 = arith.constant 0 : index
    %323 = vector.load %arg1[%c26_339, %c0_340, %c0_341] : memref<36x2x144xf32, #tpu.memory_space<vmem>>, vector<1x2x144xf32>
    %324 = vector.shape_cast %323 : vector<1x2x144xf32> to vector<2x144xf32>
    %c2_342 = arith.constant 2 : index
    %c0_343 = arith.constant 0 : index
    %c0_344 = arith.constant 0 : index
    %325 = vector.load %arg2[%c2_342, %c0_343, %c0_344] : memref<8x144x256xf32, #tpu.memory_space<vmem>>, vector<1x144x256xf32>
    %326 = vector.shape_cast %325 : vector<1x144x256xf32> to vector<144x256xf32>
    %cst_345 = arith.constant dense<0.000000e+00> : vector<2x256xf32>
    %327 = tpu.matmul %324, %326, %cst_345 {dimension_numbers = #tpu.dot_dimension_numbers<[1], [0], [0], [1], [0, 0, 1, 1], [], []>} : vector<2x144xf32>, vector<144x256xf32>, vector<2x256xf32> -> vector<2x256xf32>
    %328 = arith.addf %322, %327 : vector<2x256xf32>
    %c27_346 = arith.constant 27 : index
    %c0_347 = arith.constant 0 : index
    %c0_348 = arith.constant 0 : index
    %329 = vector.load %arg1[%c27_346, %c0_347, %c0_348] : memref<36x2x144xf32, #tpu.memory_space<vmem>>, vector<1x2x144xf32>
    %330 = vector.shape_cast %329 : vector<1x2x144xf32> to vector<2x144xf32>
    %c3_349 = arith.constant 3 : index
    %c0_350 = arith.constant 0 : index
    %c0_351 = arith.constant 0 : index
    %331 = vector.load %arg2[%c3_349, %c0_350, %c0_351] : memref<8x144x256xf32, #tpu.memory_space<vmem>>, vector<1x144x256xf32>
    %332 = vector.shape_cast %331 : vector<1x144x256xf32> to vector<144x256xf32>
    %cst_352 = arith.constant dense<0.000000e+00> : vector<2x256xf32>
    %333 = tpu.matmul %330, %332, %cst_352 {dimension_numbers = #tpu.dot_dimension_numbers<[1], [0], [0], [1], [0, 0, 1, 1], [], []>} : vector<2x144xf32>, vector<144x256xf32>, vector<2x256xf32> -> vector<2x256xf32>
    %334 = arith.addf %328, %333 : vector<2x256xf32>
    %c28 = arith.constant 28 : index
    %c0_353 = arith.constant 0 : index
    %c0_354 = arith.constant 0 : index
    %335 = vector.load %arg1[%c28, %c0_353, %c0_354] : memref<36x2x144xf32, #tpu.memory_space<vmem>>, vector<1x2x144xf32>
    %336 = vector.shape_cast %335 : vector<1x2x144xf32> to vector<2x144xf32>
    %c4_355 = arith.constant 4 : index
    %c0_356 = arith.constant 0 : index
    %c0_357 = arith.constant 0 : index
    %337 = vector.load %arg2[%c4_355, %c0_356, %c0_357] : memref<8x144x256xf32, #tpu.memory_space<vmem>>, vector<1x144x256xf32>
    %338 = vector.shape_cast %337 : vector<1x144x256xf32> to vector<144x256xf32>
    %cst_358 = arith.constant dense<0.000000e+00> : vector<2x256xf32>
    %339 = tpu.matmul %336, %338, %cst_358 {dimension_numbers = #tpu.dot_dimension_numbers<[1], [0], [0], [1], [0, 0, 1, 1], [], []>} : vector<2x144xf32>, vector<144x256xf32>, vector<2x256xf32> -> vector<2x256xf32>
    %340 = arith.addf %334, %339 : vector<2x256xf32>
    %c29 = arith.constant 29 : index
    %c0_359 = arith.constant 0 : index
    %c0_360 = arith.constant 0 : index
    %341 = vector.load %arg1[%c29, %c0_359, %c0_360] : memref<36x2x144xf32, #tpu.memory_space<vmem>>, vector<1x2x144xf32>
    %342 = vector.shape_cast %341 : vector<1x2x144xf32> to vector<2x144xf32>
    %c5_361 = arith.constant 5 : index
    %c0_362 = arith.constant 0 : index
    %c0_363 = arith.constant 0 : index
    %343 = vector.load %arg2[%c5_361, %c0_362, %c0_363] : memref<8x144x256xf32, #tpu.memory_space<vmem>>, vector<1x144x256xf32>
    %344 = vector.shape_cast %343 : vector<1x144x256xf32> to vector<144x256xf32>
    %cst_364 = arith.constant dense<0.000000e+00> : vector<2x256xf32>
    %345 = tpu.matmul %342, %344, %cst_364 {dimension_numbers = #tpu.dot_dimension_numbers<[1], [0], [0], [1], [0, 0, 1, 1], [], []>} : vector<2x144xf32>, vector<144x256xf32>, vector<2x256xf32> -> vector<2x256xf32>
    %346 = arith.addf %340, %345 : vector<2x256xf32>
    %c30 = arith.constant 30 : index
    %c0_365 = arith.constant 0 : index
    %c0_366 = arith.constant 0 : index
    %347 = vector.load %arg1[%c30, %c0_365, %c0_366] : memref<36x2x144xf32, #tpu.memory_space<vmem>>, vector<1x2x144xf32>
    %348 = vector.shape_cast %347 : vector<1x2x144xf32> to vector<2x144xf32>
    %c6_367 = arith.constant 6 : index
    %c0_368 = arith.constant 0 : index
    %c0_369 = arith.constant 0 : index
    %349 = vector.load %arg2[%c6_367, %c0_368, %c0_369] : memref<8x144x256xf32, #tpu.memory_space<vmem>>, vector<1x144x256xf32>
    %350 = vector.shape_cast %349 : vector<1x144x256xf32> to vector<144x256xf32>
    %cst_370 = arith.constant dense<0.000000e+00> : vector<2x256xf32>
    %351 = tpu.matmul %348, %350, %cst_370 {dimension_numbers = #tpu.dot_dimension_numbers<[1], [0], [0], [1], [0, 0, 1, 1], [], []>} : vector<2x144xf32>, vector<144x256xf32>, vector<2x256xf32> -> vector<2x256xf32>
    %352 = arith.addf %346, %351 : vector<2x256xf32>
    %c31 = arith.constant 31 : index
    %c0_371 = arith.constant 0 : index
    %c0_372 = arith.constant 0 : index
    %353 = vector.load %arg1[%c31, %c0_371, %c0_372] : memref<36x2x144xf32, #tpu.memory_space<vmem>>, vector<1x2x144xf32>
    %354 = vector.shape_cast %353 : vector<1x2x144xf32> to vector<2x144xf32>
    %c7_373 = arith.constant 7 : index
    %c0_374 = arith.constant 0 : index
    %c0_375 = arith.constant 0 : index
    %355 = vector.load %arg2[%c7_373, %c0_374, %c0_375] : memref<8x144x256xf32, #tpu.memory_space<vmem>>, vector<1x144x256xf32>
    %356 = vector.shape_cast %355 : vector<1x144x256xf32> to vector<144x256xf32>
    %cst_376 = arith.constant dense<0.000000e+00> : vector<2x256xf32>
    %357 = tpu.matmul %354, %356, %cst_376 {dimension_numbers = #tpu.dot_dimension_numbers<[1], [0], [0], [1], [0, 0, 1, 1], [], []>} : vector<2x144xf32>, vector<144x256xf32>, vector<2x256xf32> -> vector<2x256xf32>
    %358 = arith.addf %352, %357 : vector<2x256xf32>
    %c0_377 = arith.constant 0 : index
    %c0_378 = arith.constant 0 : index
    %359 = vector.load %arg3[%c0_377, %c0_378] : memref<1x256xf32, #tpu.memory_space<vmem>>, vector<1x256xf32>
    %360 = vector.broadcast %359 : vector<1x256xf32> to vector<2x256xf32>
    %361 = arith.addf %358, %360 : vector<2x256xf32>
    %cst_379 = arith.constant 0.000000e+00 : f32
    %362 = vector.broadcast %cst_379 : f32 to vector<2x256xf32>
    %363 = arith.maximumf %361, %362 : vector<2x256xf32>
    %c28_380 = arith.constant 28 : index
    %c0_381 = arith.constant 0 : index
    %c0_382 = arith.constant 0 : index
    %364 = vector.load %arg1[%c28_380, %c0_381, %c0_382] : memref<36x2x144xf32, #tpu.memory_space<vmem>>, vector<1x2x144xf32>
    %365 = vector.shape_cast %364 : vector<1x2x144xf32> to vector<2x144xf32>
    %c0_383 = arith.constant 0 : index
    %c0_384 = arith.constant 0 : index
    %c0_385 = arith.constant 0 : index
    %366 = vector.load %arg2[%c0_383, %c0_384, %c0_385] : memref<8x144x256xf32, #tpu.memory_space<vmem>>, vector<1x144x256xf32>
    %367 = vector.shape_cast %366 : vector<1x144x256xf32> to vector<144x256xf32>
    %cst_386 = arith.constant dense<0.000000e+00> : vector<2x256xf32>
    %368 = tpu.matmul %365, %367, %cst_386 {dimension_numbers = #tpu.dot_dimension_numbers<[1], [0], [0], [1], [0, 0, 1, 1], [], []>} : vector<2x144xf32>, vector<144x256xf32>, vector<2x256xf32> -> vector<2x256xf32>
    %c29_387 = arith.constant 29 : index
    %c0_388 = arith.constant 0 : index
    %c0_389 = arith.constant 0 : index
    %369 = vector.load %arg1[%c29_387, %c0_388, %c0_389] : memref<36x2x144xf32, #tpu.memory_space<vmem>>, vector<1x2x144xf32>
    %370 = vector.shape_cast %369 : vector<1x2x144xf32> to vector<2x144xf32>
    %c1_390 = arith.constant 1 : index
    %c0_391 = arith.constant 0 : index
    %c0_392 = arith.constant 0 : index
    %371 = vector.load %arg2[%c1_390, %c0_391, %c0_392] : memref<8x144x256xf32, #tpu.memory_space<vmem>>, vector<1x144x256xf32>
    %372 = vector.shape_cast %371 : vector<1x144x256xf32> to vector<144x256xf32>
    %cst_393 = arith.constant dense<0.000000e+00> : vector<2x256xf32>
    %373 = tpu.matmul %370, %372, %cst_393 {dimension_numbers = #tpu.dot_dimension_numbers<[1], [0], [0], [1], [0, 0, 1, 1], [], []>} : vector<2x144xf32>, vector<144x256xf32>, vector<2x256xf32> -> vector<2x256xf32>
    %374 = arith.addf %368, %373 : vector<2x256xf32>
    %c30_394 = arith.constant 30 : index
    %c0_395 = arith.constant 0 : index
    %c0_396 = arith.constant 0 : index
    %375 = vector.load %arg1[%c30_394, %c0_395, %c0_396] : memref<36x2x144xf32, #tpu.memory_space<vmem>>, vector<1x2x144xf32>
    %376 = vector.shape_cast %375 : vector<1x2x144xf32> to vector<2x144xf32>
    %c2_397 = arith.constant 2 : index
    %c0_398 = arith.constant 0 : index
    %c0_399 = arith.constant 0 : index
    %377 = vector.load %arg2[%c2_397, %c0_398, %c0_399] : memref<8x144x256xf32, #tpu.memory_space<vmem>>, vector<1x144x256xf32>
    %378 = vector.shape_cast %377 : vector<1x144x256xf32> to vector<144x256xf32>
    %cst_400 = arith.constant dense<0.000000e+00> : vector<2x256xf32>
    %379 = tpu.matmul %376, %378, %cst_400 {dimension_numbers = #tpu.dot_dimension_numbers<[1], [0], [0], [1], [0, 0, 1, 1], [], []>} : vector<2x144xf32>, vector<144x256xf32>, vector<2x256xf32> -> vector<2x256xf32>
    %380 = arith.addf %374, %379 : vector<2x256xf32>
    %c31_401 = arith.constant 31 : index
    %c0_402 = arith.constant 0 : index
    %c0_403 = arith.constant 0 : index
    %381 = vector.load %arg1[%c31_401, %c0_402, %c0_403] : memref<36x2x144xf32, #tpu.memory_space<vmem>>, vector<1x2x144xf32>
    %382 = vector.shape_cast %381 : vector<1x2x144xf32> to vector<2x144xf32>
    %c3_404 = arith.constant 3 : index
    %c0_405 = arith.constant 0 : index
    %c0_406 = arith.constant 0 : index
    %383 = vector.load %arg2[%c3_404, %c0_405, %c0_406] : memref<8x144x256xf32, #tpu.memory_space<vmem>>, vector<1x144x256xf32>
    %384 = vector.shape_cast %383 : vector<1x144x256xf32> to vector<144x256xf32>
    %cst_407 = arith.constant dense<0.000000e+00> : vector<2x256xf32>
    %385 = tpu.matmul %382, %384, %cst_407 {dimension_numbers = #tpu.dot_dimension_numbers<[1], [0], [0], [1], [0, 0, 1, 1], [], []>} : vector<2x144xf32>, vector<144x256xf32>, vector<2x256xf32> -> vector<2x256xf32>
    %386 = arith.addf %380, %385 : vector<2x256xf32>
    %c32 = arith.constant 32 : index
    %c0_408 = arith.constant 0 : index
    %c0_409 = arith.constant 0 : index
    %387 = vector.load %arg1[%c32, %c0_408, %c0_409] : memref<36x2x144xf32, #tpu.memory_space<vmem>>, vector<1x2x144xf32>
    %388 = vector.shape_cast %387 : vector<1x2x144xf32> to vector<2x144xf32>
    %c4_410 = arith.constant 4 : index
    %c0_411 = arith.constant 0 : index
    %c0_412 = arith.constant 0 : index
    %389 = vector.load %arg2[%c4_410, %c0_411, %c0_412] : memref<8x144x256xf32, #tpu.memory_space<vmem>>, vector<1x144x256xf32>
    %390 = vector.shape_cast %389 : vector<1x144x256xf32> to vector<144x256xf32>
    %cst_413 = arith.constant dense<0.000000e+00> : vector<2x256xf32>
    %391 = tpu.matmul %388, %390, %cst_413 {dimension_numbers = #tpu.dot_dimension_numbers<[1], [0], [0], [1], [0, 0, 1, 1], [], []>} : vector<2x144xf32>, vector<144x256xf32>, vector<2x256xf32> -> vector<2x256xf32>
    %392 = arith.addf %386, %391 : vector<2x256xf32>
    %c33 = arith.constant 33 : index
    %c0_414 = arith.constant 0 : index
    %c0_415 = arith.constant 0 : index
    %393 = vector.load %arg1[%c33, %c0_414, %c0_415] : memref<36x2x144xf32, #tpu.memory_space<vmem>>, vector<1x2x144xf32>
    %394 = vector.shape_cast %393 : vector<1x2x144xf32> to vector<2x144xf32>
    %c5_416 = arith.constant 5 : index
    %c0_417 = arith.constant 0 : index
    %c0_418 = arith.constant 0 : index
    %395 = vector.load %arg2[%c5_416, %c0_417, %c0_418] : memref<8x144x256xf32, #tpu.memory_space<vmem>>, vector<1x144x256xf32>
    %396 = vector.shape_cast %395 : vector<1x144x256xf32> to vector<144x256xf32>
    %cst_419 = arith.constant dense<0.000000e+00> : vector<2x256xf32>
    %397 = tpu.matmul %394, %396, %cst_419 {dimension_numbers = #tpu.dot_dimension_numbers<[1], [0], [0], [1], [0, 0, 1, 1], [], []>} : vector<2x144xf32>, vector<144x256xf32>, vector<2x256xf32> -> vector<2x256xf32>
    %398 = arith.addf %392, %397 : vector<2x256xf32>
    %c34 = arith.constant 34 : index
    %c0_420 = arith.constant 0 : index
    %c0_421 = arith.constant 0 : index
    %399 = vector.load %arg1[%c34, %c0_420, %c0_421] : memref<36x2x144xf32, #tpu.memory_space<vmem>>, vector<1x2x144xf32>
    %400 = vector.shape_cast %399 : vector<1x2x144xf32> to vector<2x144xf32>
    %c6_422 = arith.constant 6 : index
    %c0_423 = arith.constant 0 : index
    %c0_424 = arith.constant 0 : index
    %401 = vector.load %arg2[%c6_422, %c0_423, %c0_424] : memref<8x144x256xf32, #tpu.memory_space<vmem>>, vector<1x144x256xf32>
    %402 = vector.shape_cast %401 : vector<1x144x256xf32> to vector<144x256xf32>
    %cst_425 = arith.constant dense<0.000000e+00> : vector<2x256xf32>
    %403 = tpu.matmul %400, %402, %cst_425 {dimension_numbers = #tpu.dot_dimension_numbers<[1], [0], [0], [1], [0, 0, 1, 1], [], []>} : vector<2x144xf32>, vector<144x256xf32>, vector<2x256xf32> -> vector<2x256xf32>
    %404 = arith.addf %398, %403 : vector<2x256xf32>
    %c35 = arith.constant 35 : index
    %c0_426 = arith.constant 0 : index
    %c0_427 = arith.constant 0 : index
    %405 = vector.load %arg1[%c35, %c0_426, %c0_427] : memref<36x2x144xf32, #tpu.memory_space<vmem>>, vector<1x2x144xf32>
    %406 = vector.shape_cast %405 : vector<1x2x144xf32> to vector<2x144xf32>
    %c7_428 = arith.constant 7 : index
    %c0_429 = arith.constant 0 : index
    %c0_430 = arith.constant 0 : index
    %407 = vector.load %arg2[%c7_428, %c0_429, %c0_430] : memref<8x144x256xf32, #tpu.memory_space<vmem>>, vector<1x144x256xf32>
    %408 = vector.shape_cast %407 : vector<1x144x256xf32> to vector<144x256xf32>
    %cst_431 = arith.constant dense<0.000000e+00> : vector<2x256xf32>
    %409 = tpu.matmul %406, %408, %cst_431 {dimension_numbers = #tpu.dot_dimension_numbers<[1], [0], [0], [1], [0, 0, 1, 1], [], []>} : vector<2x144xf32>, vector<144x256xf32>, vector<2x256xf32> -> vector<2x256xf32>
    %410 = arith.addf %404, %409 : vector<2x256xf32>
    %c0_432 = arith.constant 0 : index
    %c0_433 = arith.constant 0 : index
    %411 = vector.load %arg3[%c0_432, %c0_433] : memref<1x256xf32, #tpu.memory_space<vmem>>, vector<1x256xf32>
    %412 = vector.broadcast %411 : vector<1x256xf32> to vector<2x256xf32>
    %413 = arith.addf %410, %412 : vector<2x256xf32>
    %cst_434 = arith.constant 0.000000e+00 : f32
    %414 = vector.broadcast %cst_434 : f32 to vector<2x256xf32>
    %415 = arith.maximumf %413, %414 : vector<2x256xf32>
    %c0_435 = arith.constant 0 : index
    %c0_436 = arith.constant 0 : index
    %c0_437 = arith.constant 0 : index
    %416 = vector.load %arg4[%c0_435, %c0_436, %c0_437] : memref<4x256x192xf32, #tpu.memory_space<vmem>>, vector<1x256x192xf32>
    %417 = vector.shape_cast %416 : vector<1x256x192xf32> to vector<256x192xf32>
    %cst_438 = arith.constant dense<0.000000e+00> : vector<2x192xf32>
    %418 = tpu.matmul %51, %417, %cst_438 {dimension_numbers = #tpu.dot_dimension_numbers<[1], [0], [0], [1], [0, 0, 1, 1], [], []>} : vector<2x256xf32>, vector<256x192xf32>, vector<2x192xf32> -> vector<2x192xf32>
    %c1_439 = arith.constant 1 : index
    %c0_440 = arith.constant 0 : index
    %c0_441 = arith.constant 0 : index
    %419 = vector.load %arg4[%c1_439, %c0_440, %c0_441] : memref<4x256x192xf32, #tpu.memory_space<vmem>>, vector<1x256x192xf32>
    %420 = vector.shape_cast %419 : vector<1x256x192xf32> to vector<256x192xf32>
    %cst_442 = arith.constant dense<0.000000e+00> : vector<2x192xf32>
    %421 = tpu.matmul %103, %420, %cst_442 {dimension_numbers = #tpu.dot_dimension_numbers<[1], [0], [0], [1], [0, 0, 1, 1], [], []>} : vector<2x256xf32>, vector<256x192xf32>, vector<2x192xf32> -> vector<2x192xf32>
    %422 = arith.addf %418, %421 : vector<2x192xf32>
    %c2_443 = arith.constant 2 : index
    %c0_444 = arith.constant 0 : index
    %c0_445 = arith.constant 0 : index
    %423 = vector.load %arg4[%c2_443, %c0_444, %c0_445] : memref<4x256x192xf32, #tpu.memory_space<vmem>>, vector<1x256x192xf32>
    %424 = vector.shape_cast %423 : vector<1x256x192xf32> to vector<256x192xf32>
    %cst_446 = arith.constant dense<0.000000e+00> : vector<2x192xf32>
    %425 = tpu.matmul %155, %424, %cst_446 {dimension_numbers = #tpu.dot_dimension_numbers<[1], [0], [0], [1], [0, 0, 1, 1], [], []>} : vector<2x256xf32>, vector<256x192xf32>, vector<2x192xf32> -> vector<2x192xf32>
    %426 = arith.addf %422, %425 : vector<2x192xf32>
    %c3_447 = arith.constant 3 : index
    %c0_448 = arith.constant 0 : index
    %c0_449 = arith.constant 0 : index
    %427 = vector.load %arg4[%c3_447, %c0_448, %c0_449] : memref<4x256x192xf32, #tpu.memory_space<vmem>>, vector<1x256x192xf32>
    %428 = vector.shape_cast %427 : vector<1x256x192xf32> to vector<256x192xf32>
    %cst_450 = arith.constant dense<0.000000e+00> : vector<2x192xf32>
    %429 = tpu.matmul %207, %428, %cst_450 {dimension_numbers = #tpu.dot_dimension_numbers<[1], [0], [0], [1], [0, 0, 1, 1], [], []>} : vector<2x256xf32>, vector<256x192xf32>, vector<2x192xf32> -> vector<2x192xf32>
    %430 = arith.addf %426, %429 : vector<2x192xf32>
    %c0_451 = arith.constant 0 : index
    %c0_452 = arith.constant 0 : index
    %431 = vector.load %arg5[%c0_451, %c0_452] : memref<1x192xf32, #tpu.memory_space<vmem>>, vector<1x192xf32>
    %432 = vector.broadcast %431 : vector<1x192xf32> to vector<2x192xf32>
    %433 = arith.addf %430, %432 : vector<2x192xf32>
    %cst_453 = arith.constant 0.000000e+00 : f32
    %434 = vector.broadcast %cst_453 : f32 to vector<2x192xf32>
    %435 = arith.maximumf %433, %434 : vector<2x192xf32>
    %c0_454 = arith.constant 0 : index
    %c0_455 = arith.constant 0 : index
    %c0_456 = arith.constant 0 : index
    %436 = vector.load %arg4[%c0_454, %c0_455, %c0_456] : memref<4x256x192xf32, #tpu.memory_space<vmem>>, vector<1x256x192xf32>
    %437 = vector.shape_cast %436 : vector<1x256x192xf32> to vector<256x192xf32>
    %cst_457 = arith.constant dense<0.000000e+00> : vector<2x192xf32>
    %438 = tpu.matmul %155, %437, %cst_457 {dimension_numbers = #tpu.dot_dimension_numbers<[1], [0], [0], [1], [0, 0, 1, 1], [], []>} : vector<2x256xf32>, vector<256x192xf32>, vector<2x192xf32> -> vector<2x192xf32>
    %c1_458 = arith.constant 1 : index
    %c0_459 = arith.constant 0 : index
    %c0_460 = arith.constant 0 : index
    %439 = vector.load %arg4[%c1_458, %c0_459, %c0_460] : memref<4x256x192xf32, #tpu.memory_space<vmem>>, vector<1x256x192xf32>
    %440 = vector.shape_cast %439 : vector<1x256x192xf32> to vector<256x192xf32>
    %cst_461 = arith.constant dense<0.000000e+00> : vector<2x192xf32>
    %441 = tpu.matmul %207, %440, %cst_461 {dimension_numbers = #tpu.dot_dimension_numbers<[1], [0], [0], [1], [0, 0, 1, 1], [], []>} : vector<2x256xf32>, vector<256x192xf32>, vector<2x192xf32> -> vector<2x192xf32>
    %442 = arith.addf %438, %441 : vector<2x192xf32>
    %c2_462 = arith.constant 2 : index
    %c0_463 = arith.constant 0 : index
    %c0_464 = arith.constant 0 : index
    %443 = vector.load %arg4[%c2_462, %c0_463, %c0_464] : memref<4x256x192xf32, #tpu.memory_space<vmem>>, vector<1x256x192xf32>
    %444 = vector.shape_cast %443 : vector<1x256x192xf32> to vector<256x192xf32>
    %cst_465 = arith.constant dense<0.000000e+00> : vector<2x192xf32>
    %445 = tpu.matmul %259, %444, %cst_465 {dimension_numbers = #tpu.dot_dimension_numbers<[1], [0], [0], [1], [0, 0, 1, 1], [], []>} : vector<2x256xf32>, vector<256x192xf32>, vector<2x192xf32> -> vector<2x192xf32>
    %446 = arith.addf %442, %445 : vector<2x192xf32>
    %c3_466 = arith.constant 3 : index
    %c0_467 = arith.constant 0 : index
    %c0_468 = arith.constant 0 : index
    %447 = vector.load %arg4[%c3_466, %c0_467, %c0_468] : memref<4x256x192xf32, #tpu.memory_space<vmem>>, vector<1x256x192xf32>
    %448 = vector.shape_cast %447 : vector<1x256x192xf32> to vector<256x192xf32>
    %cst_469 = arith.constant dense<0.000000e+00> : vector<2x192xf32>
    %449 = tpu.matmul %311, %448, %cst_469 {dimension_numbers = #tpu.dot_dimension_numbers<[1], [0], [0], [1], [0, 0, 1, 1], [], []>} : vector<2x256xf32>, vector<256x192xf32>, vector<2x192xf32> -> vector<2x192xf32>
    %450 = arith.addf %446, %449 : vector<2x192xf32>
    %c0_470 = arith.constant 0 : index
    %c0_471 = arith.constant 0 : index
    %451 = vector.load %arg5[%c0_470, %c0_471] : memref<1x192xf32, #tpu.memory_space<vmem>>, vector<1x192xf32>
    %452 = vector.broadcast %451 : vector<1x192xf32> to vector<2x192xf32>
    %453 = arith.addf %450, %452 : vector<2x192xf32>
    %cst_472 = arith.constant 0.000000e+00 : f32
    %454 = vector.broadcast %cst_472 : f32 to vector<2x192xf32>
    %455 = arith.maximumf %453, %454 : vector<2x192xf32>
    %c0_473 = arith.constant 0 : index
    %c0_474 = arith.constant 0 : index
    %c0_475 = arith.constant 0 : index
    %456 = vector.load %arg4[%c0_473, %c0_474, %c0_475] : memref<4x256x192xf32, #tpu.memory_space<vmem>>, vector<1x256x192xf32>
    %457 = vector.shape_cast %456 : vector<1x256x192xf32> to vector<256x192xf32>
    %cst_476 = arith.constant dense<0.000000e+00> : vector<2x192xf32>
    %458 = tpu.matmul %259, %457, %cst_476 {dimension_numbers = #tpu.dot_dimension_numbers<[1], [0], [0], [1], [0, 0, 1, 1], [], []>} : vector<2x256xf32>, vector<256x192xf32>, vector<2x192xf32> -> vector<2x192xf32>
    %c1_477 = arith.constant 1 : index
    %c0_478 = arith.constant 0 : index
    %c0_479 = arith.constant 0 : index
    %459 = vector.load %arg4[%c1_477, %c0_478, %c0_479] : memref<4x256x192xf32, #tpu.memory_space<vmem>>, vector<1x256x192xf32>
    %460 = vector.shape_cast %459 : vector<1x256x192xf32> to vector<256x192xf32>
    %cst_480 = arith.constant dense<0.000000e+00> : vector<2x192xf32>
    %461 = tpu.matmul %311, %460, %cst_480 {dimension_numbers = #tpu.dot_dimension_numbers<[1], [0], [0], [1], [0, 0, 1, 1], [], []>} : vector<2x256xf32>, vector<256x192xf32>, vector<2x192xf32> -> vector<2x192xf32>
    %462 = arith.addf %458, %461 : vector<2x192xf32>
    %c2_481 = arith.constant 2 : index
    %c0_482 = arith.constant 0 : index
    %c0_483 = arith.constant 0 : index
    %463 = vector.load %arg4[%c2_481, %c0_482, %c0_483] : memref<4x256x192xf32, #tpu.memory_space<vmem>>, vector<1x256x192xf32>
    %464 = vector.shape_cast %463 : vector<1x256x192xf32> to vector<256x192xf32>
    %cst_484 = arith.constant dense<0.000000e+00> : vector<2x192xf32>
    %465 = tpu.matmul %363, %464, %cst_484 {dimension_numbers = #tpu.dot_dimension_numbers<[1], [0], [0], [1], [0, 0, 1, 1], [], []>} : vector<2x256xf32>, vector<256x192xf32>, vector<2x192xf32> -> vector<2x192xf32>
    %466 = arith.addf %462, %465 : vector<2x192xf32>
    %c3_485 = arith.constant 3 : index
    %c0_486 = arith.constant 0 : index
    %c0_487 = arith.constant 0 : index
    %467 = vector.load %arg4[%c3_485, %c0_486, %c0_487] : memref<4x256x192xf32, #tpu.memory_space<vmem>>, vector<1x256x192xf32>
    %468 = vector.shape_cast %467 : vector<1x256x192xf32> to vector<256x192xf32>
    %cst_488 = arith.constant dense<0.000000e+00> : vector<2x192xf32>
    %469 = tpu.matmul %415, %468, %cst_488 {dimension_numbers = #tpu.dot_dimension_numbers<[1], [0], [0], [1], [0, 0, 1, 1], [], []>} : vector<2x256xf32>, vector<256x192xf32>, vector<2x192xf32> -> vector<2x192xf32>
    %470 = arith.addf %466, %469 : vector<2x192xf32>
    %c0_489 = arith.constant 0 : index
    %c0_490 = arith.constant 0 : index
    %471 = vector.load %arg5[%c0_489, %c0_490] : memref<1x192xf32, #tpu.memory_space<vmem>>, vector<1x192xf32>
    %472 = vector.broadcast %471 : vector<1x192xf32> to vector<2x192xf32>
    %473 = arith.addf %470, %472 : vector<2x192xf32>
    %cst_491 = arith.constant 0.000000e+00 : f32
    %474 = vector.broadcast %cst_491 : f32 to vector<2x192xf32>
    %475 = arith.maximumf %473, %474 : vector<2x192xf32>
    %c0_492 = arith.constant 0 : index
    %c0_493 = arith.constant 0 : index
    %c0_494 = arith.constant 0 : index
    %476 = vector.load %arg6[%c0_492, %c0_493, %c0_494] : memref<3x192x64xf32, #tpu.memory_space<vmem>>, vector<1x192x64xf32>
    %477 = vector.shape_cast %476 : vector<1x192x64xf32> to vector<192x64xf32>
    %cst_495 = arith.constant dense<0.000000e+00> : vector<2x64xf32>
    %478 = tpu.matmul %435, %477, %cst_495 {dimension_numbers = #tpu.dot_dimension_numbers<[1], [0], [0], [1], [0, 0, 1, 1], [], []>} : vector<2x192xf32>, vector<192x64xf32>, vector<2x64xf32> -> vector<2x64xf32>
    %c1_496 = arith.constant 1 : index
    %c0_497 = arith.constant 0 : index
    %c0_498 = arith.constant 0 : index
    %479 = vector.load %arg6[%c1_496, %c0_497, %c0_498] : memref<3x192x64xf32, #tpu.memory_space<vmem>>, vector<1x192x64xf32>
    %480 = vector.shape_cast %479 : vector<1x192x64xf32> to vector<192x64xf32>
    %cst_499 = arith.constant dense<0.000000e+00> : vector<2x64xf32>
    %481 = tpu.matmul %455, %480, %cst_499 {dimension_numbers = #tpu.dot_dimension_numbers<[1], [0], [0], [1], [0, 0, 1, 1], [], []>} : vector<2x192xf32>, vector<192x64xf32>, vector<2x64xf32> -> vector<2x64xf32>
    %482 = arith.addf %478, %481 : vector<2x64xf32>
    %c2_500 = arith.constant 2 : index
    %c0_501 = arith.constant 0 : index
    %c0_502 = arith.constant 0 : index
    %483 = vector.load %arg6[%c2_500, %c0_501, %c0_502] : memref<3x192x64xf32, #tpu.memory_space<vmem>>, vector<1x192x64xf32>
    %484 = vector.shape_cast %483 : vector<1x192x64xf32> to vector<192x64xf32>
    %cst_503 = arith.constant dense<0.000000e+00> : vector<2x64xf32>
    %485 = tpu.matmul %475, %484, %cst_503 {dimension_numbers = #tpu.dot_dimension_numbers<[1], [0], [0], [1], [0, 0, 1, 1], [], []>} : vector<2x192xf32>, vector<192x64xf32>, vector<2x64xf32> -> vector<2x64xf32>
    %486 = arith.addf %482, %485 : vector<2x64xf32>
    %c0_504 = arith.constant 0 : index
    %c0_505 = arith.constant 0 : index
    %487 = vector.load %arg7[%c0_504, %c0_505] : memref<1x64xf32, #tpu.memory_space<vmem>>, vector<1x64xf32>
    %488 = vector.broadcast %487 : vector<1x64xf32> to vector<2x64xf32>
    %489 = arith.addf %486, %488 : vector<2x64xf32>
    %cst_506 = arith.constant 0.000000e+00 : f32
    %490 = vector.broadcast %cst_506 : f32 to vector<2x64xf32>
    %491 = arith.maximumf %489, %490 : vector<2x64xf32>
    %c0_507 = arith.constant 0 : index
    %c0_508 = arith.constant 0 : index
    %c0_509 = arith.constant 0 : index
    %492 = vector.load %arg8[%c0_507, %c0_508, %c0_509] : memref<1x64x256xf32, #tpu.memory_space<vmem>>, vector<1x64x256xf32>
    %493 = vector.shape_cast %492 : vector<1x64x256xf32> to vector<64x256xf32>
    %cst_510 = arith.constant dense<0.000000e+00> : vector<2x256xf32>
    %494 = tpu.matmul %491, %493, %cst_510 {dimension_numbers = #tpu.dot_dimension_numbers<[1], [0], [0], [1], [0, 0, 1, 1], [], []>} : vector<2x64xf32>, vector<64x256xf32>, vector<2x256xf32> -> vector<2x256xf32>
    %c0_511 = arith.constant 0 : index
    %c0_512 = arith.constant 0 : index
    %495 = vector.load %arg9[%c0_511, %c0_512] : memref<1x256xf32, #tpu.memory_space<vmem>>, vector<1x256xf32>
    %496 = vector.broadcast %495 : vector<1x256xf32> to vector<2x256xf32>
    %497 = arith.addf %494, %496 : vector<2x256xf32>
    %cst_513 = arith.constant 0.000000e+00 : f32
    %498 = vector.broadcast %cst_513 : f32 to vector<2x256xf32>
    %499 = arith.maximumf %497, %498 : vector<2x256xf32>
    %500 = vector.extract_strided_slice %499 {offsets = [0, 0], sizes = [2, 128], strides = [1, 1]} : vector<2x256xf32> to vector<2x128xf32>
    %c0_514 = arith.constant 0 : index
    %c0_515 = arith.constant 0 : index
    %501 = vector.load %arg10[%c0_514, %c0_515] : memref<128x6xf32, #tpu.memory_space<vmem>>, vector<128x6xf32>
    %cst_516 = arith.constant dense<0.000000e+00> : vector<2x6xf32>
    %502 = tpu.matmul %500, %501, %cst_516 {dimension_numbers = #tpu.dot_dimension_numbers<[1], [0], [0], [1], [0, 0, 1, 1], [], []>} : vector<2x128xf32>, vector<128x6xf32>, vector<2x6xf32> -> vector<2x6xf32>
    %c0_517 = arith.constant 0 : index
    %c0_518 = arith.constant 0 : index
    %503 = vector.load %arg11[%c0_517, %c0_518] : memref<1x6xf32, #tpu.memory_space<vmem>>, vector<1x6xf32>
    %504 = vector.broadcast %503 : vector<1x6xf32> to vector<2x6xf32>
    %505 = arith.addf %502, %504 : vector<2x6xf32>
    %506 = vector.extract_strided_slice %499 {offsets = [0, 128], sizes = [2, 128], strides = [1, 1]} : vector<2x256xf32> to vector<2x128xf32>
    %c0_519 = arith.constant 0 : index
    %c0_520 = arith.constant 0 : index
    %507 = vector.load %arg12[%c0_519, %c0_520] : memref<128x1xf32, #tpu.memory_space<vmem>>, vector<128x1xf32>
    %cst_521 = arith.constant dense<0.000000e+00> : vector<2x1xf32>
    %508 = tpu.matmul %506, %507, %cst_521 {dimension_numbers = #tpu.dot_dimension_numbers<[1], [0], [0], [1], [0, 0, 1, 1], [], []>} : vector<2x128xf32>, vector<128x1xf32>, vector<2x1xf32> -> vector<2x1xf32>
    %c0_522 = arith.constant 0 : index
    %c0_523 = arith.constant 0 : index
    %509 = vector.load %arg13[%c0_522, %c0_523] : memref<1x1xf32, #tpu.memory_space<vmem>>, vector<1x1xf32>
    %510 = vector.broadcast %509 : vector<1x1xf32> to vector<2x1xf32>
    %511 = arith.addf %508, %510 : vector<2x1xf32>
    %512 = vector.broadcast %511 : vector<2x1xf32> to vector<2x6xf32>
    %513 = arith.addf %512, %505 : vector<2x6xf32>
    %cst_524 = arith.constant dense<0.000000e+00> : vector<2xf32>
    %514 = vector.multi_reduction <add>, %505, %cst_524 [1] : vector<2x6xf32> to vector<2xf32>
    %515 = vector.shape_cast %514 : vector<2xf32> to vector<2x1xf32>
    %cst_525 = arith.constant 6.000000e+00 : f32
    %516 = vector.broadcast %cst_525 : f32 to vector<2x1xf32>
    %517 = arith.divf %515, %516 : vector<2x1xf32>
    %518 = vector.broadcast %517 : vector<2x1xf32> to vector<2x6xf32>
    %519 = arith.subf %513, %518 : vector<2x6xf32>
    %c0_526 = arith.constant 0 : index
    %c0_527 = arith.constant 0 : index
    %520 = vector.load %arg14[%c0_526, %c0_527] : memref<2x6xf32, #tpu.memory_space<vmem>>, vector<2x6xf32>
    tpu.vector_store %arg14[%c0_526, %c0_527], %519 {strides = array<i32>} : memref<2x6xf32, #tpu.memory_space<vmem>>, vector<2x6xf32>,
    return
  }
  func.func @transform_0(%arg0: i32) -> (i32, i32, i32) {
    %c0_i32 = arith.constant 0 : i32
    %c0_i32_0 = arith.constant 0 : i32
    %c0_i32_1 = arith.constant 0 : i32
    return %c0_i32, %arg0, %c0_i32_0 : i32, i32, i32
  }
  func.func @transform_1(%arg0: i32) -> (i32, i32, i32) {
    %c0_i32 = arith.constant 0 : i32
    %c0_i32_0 = arith.constant 0 : i32
    %c0_i32_1 = arith.constant 0 : i32
    %c0_i32_2 = arith.constant 0 : i32
    return %c0_i32, %c0_i32_0, %c0_i32_1 : i32, i32, i32
  }
  func.func @transform_2(%arg0: i32) -> (i32, i32) {
    %c0_i32 = arith.constant 0 : i32
    %c0_i32_0 = arith.constant 0 : i32
    %c0_i32_1 = arith.constant 0 : i32
    return %c0_i32, %c0_i32_0 : i32, i32
  }
  func.func @transform_3(%arg0: i32) -> (i32, i32, i32) {
    %c0_i32 = arith.constant 0 : i32
    %c0_i32_0 = arith.constant 0 : i32
    %c0_i32_1 = arith.constant 0 : i32
    %c0_i32_2 = arith.constant 0 : i32
    return %c0_i32, %c0_i32_0, %c0_i32_1 : i32, i32, i32
  }
  func.func @transform_4(%arg0: i32) -> (i32, i32) {
    %c0_i32 = arith.constant 0 : i32
    %c0_i32_0 = arith.constant 0 : i32
    %c0_i32_1 = arith.constant 0 : i32
    return %c0_i32, %c0_i32_0 : i32, i32
  }
  func.func @transform_5(%arg0: i32) -> (i32, i32, i32) {
    %c0_i32 = arith.constant 0 : i32
    %c0_i32_0 = arith.constant 0 : i32
    %c0_i32_1 = arith.constant 0 : i32
    %c0_i32_2 = arith.constant 0 : i32
    return %c0_i32, %c0_i32_0, %c0_i32_1 : i32, i32, i32
  }
  func.func @transform_6(%arg0: i32) -> (i32, i32) {
    %c0_i32 = arith.constant 0 : i32
    %c0_i32_0 = arith.constant 0 : i32
    %c0_i32_1 = arith.constant 0 : i32
    return %c0_i32, %c0_i32_0 : i32, i32
  }
  func.func @transform_7(%arg0: i32) -> (i32, i32, i32) {
    %c0_i32 = arith.constant 0 : i32
    %c0_i32_0 = arith.constant 0 : i32
    %c0_i32_1 = arith.constant 0 : i32
    %c0_i32_2 = arith.constant 0 : i32
    return %c0_i32, %c0_i32_0, %c0_i32_1 : i32, i32, i32
  }
  func.func @transform_8(%arg0: i32) -> (i32, i32) {
    %c0_i32 = arith.constant 0 : i32
    %c0_i32_0 = arith.constant 0 : i32
    %c0_i32_1 = arith.constant 0 : i32
    return %c0_i32, %c0_i32_0 : i32, i32
  }
  func.func @transform_9(%arg0: i32) -> (i32, i32) {
    %c0_i32 = arith.constant 0 : i32
    %c0_i32_0 = arith.constant 0 : i32
    %c0_i32_1 = arith.constant 0 : i32
    return %c0_i32, %c0_i32_0 : i32, i32
  }
  func.func @transform_10(%arg0: i32) -> (i32, i32) {
    %c0_i32 = arith.constant 0 : i32
    %c0_i32_0 = arith.constant 0 : i32
    %c0_i32_1 = arith.constant 0 : i32
    return %c0_i32, %c0_i32_0 : i32, i32
  }
  func.func @transform_11(%arg0: i32) -> (i32, i32) {
    %c0_i32 = arith.constant 0 : i32
    %c0_i32_0 = arith.constant 0 : i32
    %c0_i32_1 = arith.constant 0 : i32
    return %c0_i32, %c0_i32_0 : i32, i32
  }
  func.func @transform_12(%arg0: i32) -> (i32, i32) {
    %c0_i32 = arith.constant 0 : i32
    %c0_i32_0 = arith.constant 0 : i32
    %c0_i32_1 = arith.constant 0 : i32
    return %c0_i32, %c0_i32_0 : i32, i32
  }
  func.func @transform_13(%arg0: i32) -> (i32, i32) {
    %c0_i32 = arith.constant 0 : i32
    %c0_i32_0 = arith.constant 0 : i32
    return %arg0, %c0_i32 : i32, i32
  }
}

</mosaic_0001>

<llo_original>
// kernel: _lambda_.1
$region0: #{_lambda_.1}
  #allocation0 [shape = 'u32[]', space=smem, size = 0x4, offset = 0x4, fixed_abs, tag = 'smem constant byte address 0x4 - core index']
  #allocation1 [shape = 'u32[144,128]{1,0:T(1,128)}', space=vmem, size = 0x12000, scoped, tag = 'internal scratch']
  #allocation2 [shape = 'f32[1,1]{1,0:T(1,128)S(1)}', space=vmem, size = 0x200, scoped, tag = 'scoped memory for _lambda_.1']
  %s0 = inlined_call_operand.vmem [shape: f32[36,2,144], index: 0, kind: input, shape index: {}]
  %s1 = inlined_call_operand.hbm [shape: f32[8,144,256], index: 1, kind: input, shape index: {}]
  %s2 = inlined_call_operand.hbm [shape: f32[1,256], index: 2, kind: input, shape index: {}]
  %s3 = inlined_call_operand.hbm [shape: f32[4,256,192], index: 3, kind: input, shape index: {}]
  %s4 = inlined_call_operand.hbm [shape: f32[1,192], index: 4, kind: input, shape index: {}]
  %s5 = inlined_call_operand.hbm [shape: f32[3,192,64], index: 5, kind: input, shape index: {}]
  %s6 = inlined_call_operand.hbm [shape: f32[1,64], index: 6, kind: input, shape index: {}]
  %s7 = inlined_call_operand.hbm [shape: f32[1,64,256], index: 7, kind: input, shape index: {}]
  %s8 = inlined_call_operand.hbm [shape: f32[1,256], index: 8, kind: input, shape index: {}]
  %s9 = inlined_call_operand.hbm [shape: f32[128,6], index: 9, kind: input, shape index: {}]
  %s10 = inlined_call_operand.hbm [shape: f32[1,6], index: 10, kind: input, shape index: {}]
  %s11 = inlined_call_operand.hbm [shape: f32[128,1], index: 11, kind: input, shape index: {}]
  %s12 = inlined_call_operand.<no memory space> [shape: f32[1,1], index: 12, kind: input, shape index: {}]
  %s13 = inlined_call_operand.hbm [shape: f32[2,6], index: 13, kind: output, shape index: {}]
  %s14 = sld [smem:[#allocation0]]
  $region106: #{_lambda_.1} parent=0
    _
  %s16 = ssub.s32 1, %s14
  %s17 = scalar_select 0, %s16, %s14
  %v18 = vstv %s12
  %19 = vst [vmem:[#allocation2] sm:$0x1] %v18
  $region1: #{_lambda_.1} parent=0
    #allocation3 [shape = 'u8[1179648]{0}', space=vmem, size = 0x120000, scoped, tag = 'input window, operand 1, single buffered']
    #allocation4 [shape = 's32[1]{0}', space=sflag, size = 0x4, scoped, tag = 'scoped memory for _lambda_.1']
    #allocation5 [shape = 's32[1]{0}', space=sflag, size = 0x4, scoped, tag = 'scoped memory for _lambda_.1']
    #allocation6 [shape = 'u8[1024]{0}', space=vmem, size = 0x400, scoped, tag = 'input window, operand 2, single buffered']
    #allocation7 [shape = 's32[1]{0}', space=sflag, size = 0x4, scoped, tag = 'scoped memory for _lambda_.1']
    #allocation8 [shape = 'u8[1048576]{0}', space=vmem, size = 0x100000, scoped, tag = 'input window, operand 3, single buffered']
    #allocation9 [shape = 'u8[1024]{0}', space=vmem, size = 0x400, scoped, tag = 'input window, operand 4, single buffered']
    #allocation10 [shape = 's32[1]{0}', space=sflag, size = 0x4, scoped, tag = 'scoped memory for _lambda_.1']
    #allocation11 [shape = 'u8[294912]{0}', space=vmem, size = 0x48000, scoped, tag = 'input window, operand 5, single buffered']
    #allocation12 [shape = 'u8[512]{0}', space=vmem, size = 0x400, scoped, tag = 'input window, operand 6, single buffered']
    #allocation13 [shape = 's32[1]{0}', space=sflag, size = 0x4, scoped, tag = 'scoped memory for _lambda_.1']
    #allocation14 [shape = 'u8[65536]{0}', space=vmem, size = 0x10000, scoped, tag = 'input window, operand 7, single buffered']
    #allocation15 [shape = 'u8[1024]{0}', space=vmem, size = 0x400, scoped, tag = 'input window, operand 8, single buffered']
    #allocation16 [shape = 's32[1]{0}', space=sflag, size = 0x4, scoped, tag = 'scoped memory for _lambda_.1']
    #allocation17 [shape = 'u8[65536]{0}', space=vmem, size = 0x10000, scoped, tag = 'input window, operand 9, single buffered']
    #allocation18 [shape = 'u8[512]{0}', space=vmem, size = 0x400, scoped, tag = 'input window, operand 10, single buffered']
    #allocation19 [shape = 's32[1]{0}', space=sflag, size = 0x4, scoped, tag = 'scoped memory for _lambda_.1']
    #allocation20 [shape = 'u8[65536]{0}', space=vmem, size = 0x10000, scoped, tag = 'input window, operand 11, single buffered']
    #allocation21 [shape = 'u8[1024]{0}', space=vmem, size = 0x400, scoped, tag = 'output window, operand 0, single buffered']
    %20 = vsyncpa [#allocation4], 0
    %21 = vsyncpa [#allocation7], 0
    %22 = vsyncpa [#allocation10], 0
    %23 = vsyncpa [#allocation13], 0
    %24 = vsyncpa [#allocation16], 0
    %25 = vsyncpa [#allocation19], 0
    %26 = vsyncpa [#allocation5], 0
    // Predicated region
    $region2: #{_lambda_.1} parent=1 // pred_check
      _
    $region3: #{_lambda_.1} parent=1 // pred_check_branch
      %28 = sbr.rel (0) target = $region5
    $region4: #{_lambda_.1} parent=1 // pred_region
      _
    $region5: #{_lambda_.1} parent=1 // pred_fallthru
      _
    // Predicated region
    $region6: #{_lambda_.1} parent=1 // pred_check
      _
    $region7: #{_lambda_.1} parent=1 // pred_check_branch
      %30 = sbr.rel (0) target = $region9
    $region8: #{_lambda_.1} parent=1 // pred_region
      %s32 = ssub.s32 36864, 36864
      %33 = vsyncadd [#allocation4], %s32
      %s34 = sshll.u32 [#allocation3], 4
      %s35 = int_to_ptr.vmem [resolvable:$true] %s34
      %40 = dma.hbm_to_vmem [thread:$0]  %s1, 36864, %s35, [#allocation4], 256, 256, 16
    $region9: #{_lambda_.1} parent=1 // pred_fallthru
      _
    // Predicated region
    $region10: #{_lambda_.1} parent=1 // pred_check
      _
    $region11: #{_lambda_.1} parent=1 // pred_check_branch
      %42 = sbr.rel (0) target = $region13
    $region12: #{_lambda_.1} parent=1 // pred_region
      %s44 = ssub.s32 32, 32
      %45 = vsyncadd [#allocation7], %s44
      %s47 = sshll.u32 [#allocation6], 4
      %s48 = int_to_ptr.vmem [resolvable:$true] %s47
      %50 = dma.hbm_to_vmem [thread:$0]  %s2, 32, %s48, [#allocation7]
    $region13: #{_lambda_.1} parent=1 // pred_fallthru
      _
    // Predicated region
    $region14: #{_lambda_.1} parent=1 // pred_check
      _
    $region15: #{_lambda_.1} parent=1 // pred_check_branch
      %52 = sbr.rel (0) target = $region17
    $region16: #{_lambda_.1} parent=1 // pred_region
      %s54 = ssub.s32 32768, 32768
      %55 = vsyncadd [#allocation7], %s54
      %s56 = sshll.u32 [#allocation8], 4
      %s57 = int_to_ptr.vmem [resolvable:$true] %s56
      %62 = dma.hbm_to_vmem [thread:$0]  %s3, 32768, %s57, [#allocation7], 256, 256, 16
    $region17: #{_lambda_.1} parent=1 // pred_fallthru
      _
    // Predicated region
    $region18: #{_lambda_.1} parent=1 // pred_check
      _
    $region19: #{_lambda_.1} parent=1 // pred_check_branch
      %64 = sbr.rel (0) target = $region21
    $region20: #{_lambda_.1} parent=1 // pred_region
      %s66 = ssub.s32 32, 32
      %67 = vsyncadd [#allocation10], %s66
      %s69 = sshll.u32 [#allocation9], 4
      %s70 = int_to_ptr.vmem [resolvable:$true] %s69
      %72 = dma.hbm_to_vmem [thread:$0]  %s4, 32, %s70, [#allocation10]
    $region21: #{_lambda_.1} parent=1 // pred_fallthru
      _
    // Predicated region
    $region22: #{_lambda_.1} parent=1 // pred_check
      _
    $region23: #{_lambda_.1} parent=1 // pred_check_branch
      %74 = sbr.rel (0) target = $region25
    $region24: #{_lambda_.1} parent=1 // pred_region
      %s76 = ssub.s32 9216, 9216
      %77 = vsyncadd [#allocation10], %s76
      %s78 = sshll.u32 [#allocation11], 4
      %s79 = int_to_ptr.vmem [resolvable:$true] %s78
      %84 = dma.hbm_to_vmem [thread:$0]  %s5, 9216, %s79, [#allocation10], 128, 128, 8
    $region25: #{_lambda_.1} parent=1 // pred_fallthru
      _
    // Predicated region
    $region26: #{_lambda_.1} parent=1 // pred_check
      _
    $region27: #{_lambda_.1} parent=1 // pred_check_branch
      %86 = sbr.rel (0) target = $region29
    $region28: #{_lambda_.1} parent=1 // pred_region
      %s88 = ssub.s32 16, 16
      %89 = vsyncadd [#allocation13], %s88
      %s91 = sshll.u32 [#allocation12], 4
      %s92 = int_to_ptr.vmem [resolvable:$true] %s91
      %94 = dma.hbm_to_vmem [thread:$0]  %s6, 16, %s92, [#allocation13]
    $region29: #{_lambda_.1} parent=1 // pred_fallthru
      _
    // Predicated region
    $region30: #{_lambda_.1} parent=1 // pred_check
      _
    $region31: #{_lambda_.1} parent=1 // pred_check_branch
      %96 = sbr.rel (0) target = $region33
    $region32: #{_lambda_.1} parent=1 // pred_region
      %s98 = ssub.s32 2048, 2048
      %99 = vsyncadd [#allocation13], %s98
      %s100 = sshll.u32 [#allocation14], 4
      %s101 = int_to_ptr.vmem [resolvable:$true] %s100
      %106 = dma.hbm_to_vmem [thread:$0]  %s7, 2048, %s101, [#allocation13], 256, 256, 16
    $region33: #{_lambda_.1} parent=1 // pred_fallthru
      _
    // Predicated region
    $region34: #{_lambda_.1} parent=1 // pred_check
      _
    $region35: #{_lambda_.1} parent=1 // pred_check_branch
      %108 = sbr.rel (0) target = $region37
    $region36: #{_lambda_.1} parent=1 // pred_region
      %s110 = ssub.s32 32, 32
      %111 = vsyncadd [#allocation16], %s110
      %s113 = sshll.u32 [#allocation15], 4
      %s114 = int_to_ptr.vmem [resolvable:$true] %s113
      %116 = dma.hbm_to_vmem [thread:$0]  %s8, 32, %s114, [#allocation16]
    $region37: #{_lambda_.1} parent=1 // pred_fallthru
      _
    // Predicated region
    $region38: #{_lambda_.1} parent=1 // pred_check
      _
    $region39: #{_lambda_.1} parent=1 // pred_check_branch
      %118 = sbr.rel (0) target = $region41
    $region40: #{_lambda_.1} parent=1 // pred_region
      %s120 = ssub.s32 2048, 2048
      %121 = vsyncadd [#allocation16], %s120
      %s122 = sshll.u32 [#allocation17], 4
      %s123 = int_to_ptr.vmem [resolvable:$true] %s122
      %128 = dma.hbm_to_vmem [thread:$0]  %s9, 2048, %s123, [#allocation16], 128, 128, 8
    $region41: #{_lambda_.1} parent=1 // pred_fallthru
      _
    // Predicated region
    $region42: #{_lambda_.1} parent=1 // pred_check
      _
    $region43: #{_lambda_.1} parent=1 // pred_check_branch
      %130 = sbr.rel (0) target = $region45
    $region44: #{_lambda_.1} parent=1 // pred_region
      %s132 = ssub.s32 16, 16
      %133 = vsyncadd [#allocation19], %s132
      %s135 = sshll.u32 [#allocation18], 4
      %s136 = int_to_ptr.vmem [resolvable:$true] %s135
      %138 = dma.hbm_to_vmem [thread:$0]  %s10, 16, %s136, [#allocation19]
    $region45: #{_lambda_.1} parent=1 // pred_fallthru
      _
    // Predicated region
    $region46: #{_lambda_.1} parent=1 // pred_check
      _
    $region47: #{_lambda_.1} parent=1 // pred_check_branch
      %140 = sbr.rel (0) target = $region49
    $region48: #{_lambda_.1} parent=1 // pred_region
      %s142 = ssub.s32 2048, 2048
      %143 = vsyncadd [#allocation19], %s142
      %s144 = sshll.u32 [#allocation20], 4
      %s145 = int_to_ptr.vmem [resolvable:$true] %s144
      %150 = dma.hbm_to_vmem [thread:$0]  %s11, 2048, %s145, [#allocation19], 128, 128, 8
    $region49: #{_lambda_.1} parent=1 // pred_fallthru
      _
    // Predicated region
    $region50: #{_lambda_.1} parent=1 // pred_check
      _
    $region51: #{_lambda_.1} parent=1 // pred_check_branch
      %152 = sbr.rel (0) target = $region53
    $region52: #{_lambda_.1} parent=1 // pred_region
      _
    $region53: #{_lambda_.1} parent=1 // pred_fallthru
      _
    // Predicated region
    $region54: #{_lambda_.1} parent=1 // pred_check
      _
    $region55: #{_lambda_.1} parent=1 // pred_check_branch
      %154 = sbr.rel (0) target = $region57
    $region56: #{_lambda_.1} parent=1 // pred_region
      %155 = dma.done [#allocation4], 36864
    $region57: #{_lambda_.1} parent=1 // pred_fallthru
      _
    // Predicated region
    $region58: #{_lambda_.1} parent=1 // pred_check
      _
    $region59: #{_lambda_.1} parent=1 // pred_check_branch
      %157 = sbr.rel (0) target = $region61
    $region60: #{_lambda_.1} parent=1 // pred_region
      %158 = dma.done [#allocation7], 32
    $region61: #{_lambda_.1} parent=1 // pred_fallthru
      _
    // Predicated region
    $region62: #{_lambda_.1} parent=1 // pred_check
      _
    $region63: #{_lambda_.1} parent=1 // pred_check_branch
      %160 = sbr.rel (0) target = $region65
    $region64: #{_lambda_.1} parent=1 // pred_region
      %161 = dma.done [#allocation7], 32768
    $region65: #{_lambda_.1} parent=1 // pred_fallthru
      _
    // Predicated region
    $region66: #{_lambda_.1} parent=1 // pred_check
      _
    $region67: #{_lambda_.1} parent=1 // pred_check_branch
      %163 = sbr.rel (0) target = $region69
    $region68: #{_lambda_.1} parent=1 // pred_region
      %164 = dma.done [#allocation10], 32
    $region69: #{_lambda_.1} parent=1 // pred_fallthru
      _
    // Predicated region
    $region70: #{_lambda_.1} parent=1 // pred_check
      _
    $region71: #{_lambda_.1} parent=1 // pred_check_branch
      %166 = sbr.rel (0) target = $region73
    $region72: #{_lambda_.1} parent=1 // pred_region
      %167 = dma.done [#allocation10], 9216
    $region73: #{_lambda_.1} parent=1 // pred_fallthru
      _
    // Predicated region
    $region74: #{_lambda_.1} parent=1 // pred_check
      _
    $region75: #{_lambda_.1} parent=1 // pred_check_branch
      %169 = sbr.rel (0) target = $region77
    $region76: #{_lambda_.1} parent=1 // pred_region
      %170 = dma.done [#allocation13], 16
    $region77: #{_lambda_.1} parent=1 // pred_fallthru
      _
    // Predicated region
    $region78: #{_lambda_.1} parent=1 // pred_check
      _
    $region79: #{_lambda_.1} parent=1 // pred_check_branch
      %172 = sbr.rel (0) target = $region81
    $region80: #{_lambda_.1} parent=1 // pred_region
      %173 = dma.done [#allocation13], 2048
    $region81: #{_lambda_.1} parent=1 // pred_fallthru
      _
    // Predicated region
    $region82: #{_lambda_.1} parent=1 // pred_check
      _
    $region83: #{_lambda_.1} parent=1 // pred_check_branch
      %175 = sbr.rel (0) target = $region85
    $region84: #{_lambda_.1} parent=1 // pred_region
      %176 = dma.done [#allocation16], 32
    $region85: #{_lambda_.1} parent=1 // pred_fallthru
      _
    // Predicated region
    $region86: #{_lambda_.1} parent=1 // pred_check
      _
    $region87: #{_lambda_.1} parent=1 // pred_check_branch
      %178 = sbr.rel (0) target = $region89
    $region88: #{_lambda_.1} parent=1 // pred_region
      %179 = dma.done [#allocation16], 2048
    $region89: #{_lambda_.1} parent=1 // pred_fallthru
      _
    // Predicated region
    $region90: #{_lambda_.1} parent=1 // pred_check
      _
    $region91: #{_lambda_.1} parent=1 // pred_check_branch
      %181 = sbr.rel (0) target = $region93
    $region92: #{_lambda_.1} parent=1 // pred_region
      %182 = dma.done [#allocation19], 16
    $region93: #{_lambda_.1} parent=1 // pred_fallthru
      _
    // Predicated region
    $region94: #{_lambda_.1} parent=1 // pred_check
      _
    $region95: #{_lambda_.1} parent=1 // pred_check_branch
      %184 = sbr.rel (0) target = $region97
    $region96: #{_lambda_.1} parent=1 // pred_region
      %185 = dma.done [#allocation19], 2048
    $region97: #{_lambda_.1} parent=1 // pred_fallthru
      _
    %v186 = vld [vmem:[%s0] sm:$0xf]
    %v187 = vld [vmem:[#allocation3] sm:$0xff]
    %v188 = vld [vmem:[#allocation3 + $0x8] sm:$0xff]
    %v189 = vld [vmem:[#allocation3 + $0x10] sm:$0xff]
    %v190 = vld [vmem:[#allocation3 + $0x18] sm:$0xff]
    %v191 = vld [vmem:[#allocation3 + $0x20] sm:$0xff]
    %v192 = vld [vmem:[#allocation3 + $0x28] sm:$0xff]
    %v193 = vld [vmem:[#allocation3 + $0x30] sm:$0xff]
    %v194 = vld [vmem:[#allocation3 + $0x38] sm:$0xff]
    %v195 = vld [vmem:[#allocation3 + $0x40] sm:$0xff]
    %v196 = vld [vmem:[#allocation3 + $0x48] sm:$0xff]
    %v197 = vld [vmem:[#allocation3 + $0x50] sm:$0xff]
    %v198 = vld [vmem:[#allocation3 + $0x58] sm:$0xff]
    %v199 = vld [vmem:[#allocation3 + $0x60] sm:$0xff]
    %v200 = vld [vmem:[#allocation3 + $0x68] sm:$0xff]
    %v201 = vld [vmem:[#allocation3 + $0x70] sm:$0xff]
    %v202 = vld [vmem:[#allocation3 + $0x78] sm:$0xff]
    %v203 = vld [vmem:[#allocation3 + $0x80] sm:$0xff]
    %v204 = vld [vmem:[#allocation3 + $0x88] sm:$0xff]
    %v205 = vld [vmem:[#allocation3 + $0x90] sm:$0xff]
    %v206 = vld [vmem:[#allocation3 + $0x98] sm:$0xff]
    %v207 = vld [vmem:[#allocation3 + $0xa0] sm:$0xff]
    %v208 = vld [vmem:[#allocation3 + $0xa8] sm:$0xff]
    %v209 = vld [vmem:[#allocation3 + $0xb0] sm:$0xff]
    %v210 = vld [vmem:[#allocation3 + $0xb8] sm:$0xff]
    %v211 = vld [vmem:[#allocation3 + $0xc0] sm:$0xff]
    %v212 = vld [vmem:[#allocation3 + $0xc8] sm:$0xff]
    %v213 = vld [vmem:[#allocation3 + $0xd0] sm:$0xff]
    %v214 = vld [vmem:[#allocation3 + $0xd8] sm:$0xff]
    %v215 = vld [vmem:[#allocation3 + $0xe0] sm:$0xff]
    %v216 = vld [vmem:[#allocation3 + $0xe8] sm:$0xff]
    %v217 = vld [vmem:[#allocation3 + $0xf0] sm:$0xff]
    %v218 = vld [vmem:[#allocation3 + $0xf8] sm:$0xff]
    %v219 = vld [vmem:[#allocation3 + $0x100] sm:$0xff]
    %v220 = vld [vmem:[#allocation3 + $0x108] sm:$0xff]
    %v221 = vld [vmem:[#allocation3 + $0x110] sm:$0xff]
    %v222 = vld [vmem:[#allocation3 + $0x118] sm:$0xff]
    %s223 = scalar_lea.vmem %s0, 4
    %v224 = vld [vmem:[%s223] sm:$0xf]
    %s225 = scalar_lea.vmem [#allocation3], 288
    %v226 = vld [vmem:[%s225] sm:$0xff]
    %v227 = vld [vmem:[%s225 + $0x8] sm:$0xff]
    %v228 = vld [vmem:[%s225 + $0x10] sm:$0xff]
    %v229 = vld [vmem:[%s225 + $0x18] sm:$0xff]
    %v230 = vld [vmem:[%s225 + $0x20] sm:$0xff]
    %v231 = vld [vmem:[%s225 + $0x28] sm:$0xff]
    %v232 = vld [vmem:[%s225 + $0x30] sm:$0xff]
    %v233 = vld [vmem:[%s225 + $0x38] sm:$0xff]
    %v234 = vld [vmem:[%s225 + $0x40] sm:$0xff]
    %v235 = vld [vmem:[%s225 + $0x48] sm:$0xff]
    %v236 = vld [vmem:[%s225 + $0x50] sm:$0xff]
    %v237 = vld [vmem:[%s225 + $0x58] sm:$0xff]
    %v238 = vld [vmem:[%s225 + $0x60] sm:$0xff]
    %v239 = vld [vmem:[%s225 + $0x68] sm:$0xff]
    %v240 = vld [vmem:[%s225 + $0x70] sm:$0xff]
    %v241 = vld [vmem:[%s225 + $0x78] sm:$0xff]
    %v242 = vld [vmem:[%s225 + $0x80] sm:$0xff]
    %v243 = vld [vmem:[%s225 + $0x88] sm:$0xff]
    %v244 = vld [vmem:[%s225 + $0x90] sm:$0xff]
    %v245 = vld [vmem:[%s225 + $0x98] sm:$0xff]
    %v246 = vld [vmem:[%s225 + $0xa0] sm:$0xff]
    %v247 = vld [vmem:[%s225 + $0xa8] sm:$0xff]
    %v248 = vld [vmem:[%s225 + $0xb0] sm:$0xff]
    %v249 = vld [vmem:[%s225 + $0xb8] sm:$0xff]
    %v250 = vld [vmem:[%s225 + $0xc0] sm:$0xff]
    %v251 = vld [vmem:[%s225 + $0xc8] sm:$0xff]
    %v252 = vld [vmem:[%s225 + $0xd0] sm:$0xff]
    %v253 = vld [vmem:[%s225 + $0xd8] sm:$0xff]
    %v254 = vld [vmem:[%s225 + $0xe0] sm:$0xff]
    %v255 = vld [vmem:[%s225 + $0xe8] sm:$0xff]
    %v256 = vld [vmem:[%s225 + $0xf0] sm:$0xff]
    %v257 = vld [vmem:[%s225 + $0xf8] sm:$0xff]
    %v258 = vld [vmem:[%s225 + $0x100] sm:$0xff]
    %v259 = vld [vmem:[%s225 + $0x108] sm:$0xff]
    %v260 = vld [vmem:[%s225 + $0x110] sm:$0xff]
    %v261 = vld [vmem:[%s225 + $0x118] sm:$0xff]
    %v264 = vunpack.c.l.s4 1983009808
    %v265 = vunpack.c.0.s8 %v264
    %v266 = vlaneseq
    %v267 = vshrl.u32 %v266, 7
    %v268 = vsub.s32 %v265, %v267
    %v269 = vrot.slane %v224, %v268
    %v270 = vcombine.high %v269, %v269
    %vm272 = vcmask 130048
    %v273 = vsel %vm272, %v270, 0
    %275 = vmatprep.subr.mxu0 %v227
    %276 = vmatpush1.msra.mxu0 %v226
    %277 = vmatprep.subr.mxu0 %v229
    %278 = vmatpush1.msra.mxu0 %v228
    %279 = vmatprep.subr.mxu0 %v231
    %280 = vmatpush1.msra.mxu0 %v230
    %281 = vmatprep.subr.mxu0 %v233
    %282 = vmatpush1.msra.mxu0 %v232
    %283 = vmatprep.subr.mxu0 %v235
    %284 = vmatpush1.msra.mxu0 %v234
    %285 = vmatprep.subr.mxu0 %v237
    %286 = vmatpush1.msra.mxu0 %v236
    %287 = vmatprep.subr.mxu0 %v239
    %288 = vmatpush1.msra.mxu0 %v238
    %289 = vmatprep.subr.mxu0 %v241
    %290 = vmatpush1.msra.mxu0 %v240
    %291 = vmatprep.subr.mxu0 %v243
    %292 = vmatpush1.msra.mxu0 %v242
    %293 = vmatprep.subr.mxu0 %v245
    %294 = vmatpush1.msra.mxu0 %v244
    %295 = vmatprep.subr.mxu0 %v247
    %296 = vmatpush1.msra.mxu0 %v246
    %297 = vmatprep.subr.mxu0 %v249
    %298 = vmatpush1.msra.mxu0 %v248
    %299 = vmatprep.subr.mxu0 %v251
    %300 = vmatpush1.msra.mxu0 %v250
    %301 = vmatprep.subr.mxu0 %v253
    %302 = vmatpush1.msra.mxu0 %v252
    %303 = vmatprep.subr.mxu0 %v255
    %304 = vmatpush1.msra.mxu0 %v254
    %305 = vmatprep.subr.mxu0 %v257
    %306 = vmatpush1.msra.mxu0 %v256
    %307 = vmatprep.subr.mxu0 %v259
    %308 = vmatpush1.msra.mxu0 %v258
    %309 = vmatprep.subr.mxu0 %v261
    %310 = vmatpush1.msra.mxu0 %v260
    %311 = vmatprep.subr.mxu0 0.0
    %312 = vmatpush1.msra.mxu0 0.0
    %313 = vmatprep.subr.mxu0 0.0
    %314 = vmatpush1.msra.mxu0 0.0
    %315 = vmatprep.subr.mxu0 0.0
    %316 = vmatpush1.msra.mxu0 0.0
    %317 = vmatprep.subr.mxu0 0.0
    %318 = vmatpush1.msra.mxu0 0.0
    %319 = vmatprep.subr.mxu0 0.0
    %320 = vmatpush1.msra.mxu0 0.0
    %321 = vmatprep.subr.mxu0 0.0
    %322 = vmatpush1.msra.mxu0 0.0
    %323 = vmatprep.subr.mxu0 0.0
    %324 = vmatpush1.msra.mxu0 0.0
    %325 = vmatprep.subr.mxu0 0.0
    %326 = vmatpush1.msra.mxu0 0.0
    %327 = vmatprep.subr.mxu0 0.0
    %328 = vmatpush1.msra.mxu0 0.0
    %329 = vmatprep.subr.mxu0 0.0
    %330 = vmatpush1.msra.mxu0 0.0
    %331 = vmatprep.subr.mxu0 0.0
    %332 = vmatpush1.msra.mxu0 0.0
    %333 = vmatprep.subr.mxu0 0.0
    %334 = vmatpush1.msra.mxu0 0.0
    %335 = vmatprep.subr.mxu0 0.0
    %336 = vmatpush1.msra.mxu0 0.0
    %337 = vmatprep.subr.mxu0 0.0
    %338 = vmatpush1.msra.mxu0 0.0
    %339 = vmatprep.mubr.f32.mxu0 %v273
    %340 = vmatmul.mubr.f32.gmra.mrb[0].mxu0 %v269
    %v341 = vpop.f32.mrb[0].mxu0
    %v342 = vadd.f32 0.0, %v341
    %v343 = vpop.f32.mrb[0].mxu0
    %v344 = vadd.f32 0.0, %v343
    %345 = vdwg.mxu0
    %v348 = vunpack.c.l.s4 1983009808
    %v349 = vunpack.c.0.s8 %v348
    %v350 = vlaneseq
    %v351 = vshrl.u32 %v350, 7
    %v352 = vsub.s32 %v349, %v351
    %v353 = vrot.slane %v186, %v352
    %v354 = vcombine.high %v353, %v353
    %v356 = vsel %vm272, %v354, 0
    %358 = vmatprep.subr.mxu0 %v188
    %359 = vmatpush1.msra.mxu0 %v187
    %360 = vmatprep.subr.mxu0 %v190
    %361 = vmatpush1.msra.mxu0 %v189
    %362 = vmatprep.subr.mxu0 %v192
    %363 = vmatpush1.msra.mxu0 %v191
    %364 = vmatprep.subr.mxu0 %v194
    %365 = vmatpush1.msra.mxu0 %v193
    %366 = vmatprep.subr.mxu0 %v196
    %367 = vmatpush1.msra.mxu0 %v195
    %368 = vmatprep.subr.mxu0 %v198
    %369 = vmatpush1.msra.mxu0 %v197
    %370 = vmatprep.subr.mxu0 %v200
    %371 = vmatpush1.msra.mxu0 %v199
    %372 = vmatprep.subr.mxu0 %v202
    %373 = vmatpush1.msra.mxu0 %v201
    %374 = vmatprep.subr.mxu0 %v204
    %375 = vmatpush1.msra.mxu0 %v203
    %376 = vmatprep.subr.mxu0 %v206
    %377 = vmatpush1.msra.mxu0 %v205
    %378 = vmatprep.subr.mxu0 %v208
    %379 = vmatpush1.msra.mxu0 %v207
    %380 = vmatprep.subr.mxu0 %v210
    %381 = vmatpush1.msra.mxu0 %v209
    %382 = vmatprep.subr.mxu0 %v212
    %383 = vmatpush1.msra.mxu0 %v211
    %384 = vmatprep.subr.mxu0 %v214
    %385 = vmatpush1.msra.mxu0 %v213
    %386 = vmatprep.subr.mxu0 %v216
    %387 = vmatpush1.msra.mxu0 %v215
    %388 = vmatprep.subr.mxu0 %v218
    %389 = vmatpush1.msra.mxu0 %v217
    %390 = vmatprep.subr.mxu0 %v220
    %391 = vmatpush1.msra.mxu0 %v219
    %392 = vmatprep.subr.mxu0 %v222
    %393 = vmatpush1.msra.mxu0 %v221
    %394 = vmatprep.subr.mxu0 0.0
    %395 = vmatpush1.msra.mxu0 0.0
    %396 = vmatprep.subr.mxu0 0.0
    %397 = vmatpush1.msra.mxu0 0.0
    %398 = vmatprep.subr.mxu0 0.0
    %399 = vmatpush1.msra.mxu0 0.0
    %400 = vmatprep.subr.mxu0 0.0
    %401 = vmatpush1.msra.mxu0 0.0
    %402 = vmatprep.subr.mxu0 0.0
    %403 = vmatpush1.msra.mxu0 0.0
    %404 = vmatprep.subr.mxu0 0.0
    %405 = vmatpush1.msra.mxu0 0.0
    %406 = vmatprep.subr.mxu0 0.0
    %407 = vmatpush1.msra.mxu0 0.0
    %408 = vmatprep.subr.mxu0 0.0
    %409 = vmatpush1.msra.mxu0 0.0
    %410 = vmatprep.subr.mxu0 0.0
    %411 = vmatpush1.msra.mxu0 0.0
    %412 = vmatprep.subr.mxu0 0.0
    %413 = vmatpush1.msra.mxu0 0.0
    %414 = vmatprep.subr.mxu0 0.0
    %415 = vmatpush1.msra.mxu0 0.0
    %416 = vmatprep.subr.mxu0 0.0
    %417 = vmatpush1.msra.mxu0 0.0
    %418 = vmatprep.subr.mxu0 0.0
    %419 = vmatpush1.msra.mxu0 0.0
    %420 = vmatprep.subr.mxu0 0.0
    %421 = vmatpush1.msra.mxu0 0.0
    %422 = vmatprep.mubr.f32.mxu0 %v356
    %423 = vmatmul.mubr.f32.gmra.mrb[0].mxu0 %v353
    %v424 = vpop.f32.mrb[0].mxu0
    %v425 = vadd.f32 %v342, %v424
    %v426 = vpop.f32.mrb[0].mxu0
    %v427 = vadd.f32 %v344, %v426
    %428 = vdwg.mxu0
    %s429 = scalar_lea.vmem %s0, 8
    %v430 = vld [vmem:[%s429] sm:$0xf]
    %s431 = scalar_lea.vmem [#allocation3], 576
    %v432 = vld [vmem:[%s431] sm:$0xff]
    %v433 = vld [vmem:[%s431 + $0x8] sm:$0xff]
    %v434 = vld [vmem:[%s431 + $0x10] sm:$0xff]
    %v435 = vld [vmem:[%s431 + $0x18] sm:$0xff]
    %v436 = vld [vmem:[%s431 + $0x20] sm:$0xff]
    %v437 = vld [vmem:[%s431 + $0x28] sm:$0xff]
    %v438 = vld [vmem:[%s431 + $0x30] sm:$0xff]
    %v439 = vld [vmem:[%s431 + $0x38] sm:$0xff]
    %v440 = vld [vmem:[%s431 + $0x40] sm:$0xff]
    %v441 = vld [vmem:[%s431 + $0x48] sm:$0xff]
    %v442 = vld [vmem:[%s431 + $0x50] sm:$0xff]
    %v443 = vld [vmem:[%s431 + $0x58] sm:$0xff]
    %v444 = vld [vmem:[%s431 + $0x60] sm:$0xff]
    %v445 = vld [vmem:[%s431 + $0x68] sm:$0xff]
    %v446 = vld [vmem:[%s431 + $0x70] sm:$0xff]
    %v447 = vld [vmem:[%s431 + $0x78] sm:$0xff]
    %v448 = vld [vmem:[%s431 + $0x80] sm:$0xff]
    %v449 = vld [vmem:[%s431 + $0x88] sm:$0xff]
    %v450 = vld [vmem:[%s431 + $0x90] sm:$0xff]
    %v451 = vld [vmem:[%s431 + $0x98] sm:$0xff]
    %v452 = vld [vmem:[%s431 + $0xa0] sm:$0xff]
    %v453 = vld [vmem:[%s431 + $0xa8] sm:$0xff]
    %v454 = vld [vmem:[%s431 + $0xb0] sm:$0xff]
    %v455 = vld [vmem:[%s431 + $0xb8] sm:$0xff]
    %v456 = vld [vmem:[%s431 + $0xc0] sm:$0xff]
    %v457 = vld [vmem:[%s431 + $0xc8] sm:$0xff]
    %v458 = vld [vmem:[%s431 + $0xd0] sm:$0xff]
    %v459 = vld [vmem:[%s431 + $0xd8] sm:$0xff]
    %v460 = vld [vmem:[%s431 + $0xe0] sm:$0xff]
    %v461 = vld [vmem:[%s431 + $0xe8] sm:$0xff]
    %v462 = vld [vmem:[%s431 + $0xf0] sm:$0xff]
    %v463 = vld [vmem:[%s431 + $0xf8] sm:$0xff]
    %v464 = vld [vmem:[%s431 + $0x100] sm:$0xff]
    %v465 = vld [vmem:[%s431 + $0x108] sm:$0xff]
    %v466 = vld [vmem:[%s431 + $0x110] sm:$0xff]
    %v467 = vld [vmem:[%s431 + $0x118] sm:$0xff]
    %v470 = vunpack.c.l.s4 1983009808
    %v471 = vunpack.c.0.s8 %v470
    %v472 = vlaneseq
    %v473 = vshrl.u32 %v472, 7
    %v474 = vsub.s32 %v471, %v473
    %v475 = vrot.slane %v430, %v474
    %v476 = vcombine.high %v475, %v475
    %v478 = vsel %vm272, %v476, 0
    %480 = vmatprep.subr.mxu0 %v433
    %481 = vmatpush1.msra.mxu0 %v432
    %482 = vmatprep.subr.mxu0 %v435
    %483 = vmatpush1.msra.mxu0 %v434
    %484 = vmatprep.subr.mxu0 %v437
    %485 = vmatpush1.msra.mxu0 %v436
    %486 = vmatprep.subr.mxu0 %v439
    %487 = vmatpush1.msra.mxu0 %v438
    %488 = vmatprep.subr.mxu0 %v441
    %489 = vmatpush1.msra.mxu0 %v440
    %490 = vmatprep.subr.mxu0 %v443
    %491 = vmatpush1.msra.mxu0 %v442
    %492 = vmatprep.subr.mxu0 %v445
    %493 = vmatpush1.msra.mxu0 %v444
    %494 = vmatprep.subr.mxu0 %v447
    %495 = vmatpush1.msra.mxu0 %v446
    %496 = vmatprep.subr.mxu0 %v449
    %497 = vmatpush1.msra.mxu0 %v448
    %498 = vmatprep.subr.mxu0 %v451
    %499 = vmatpush1.msra.mxu0 %v450
    %500 = vmatprep.subr.mxu0 %v453
    %501 = vmatpush1.msra.mxu0 %v452
    %502 = vmatprep.subr.mxu0 %v455
    %503 = vmatpush1.msra.mxu0 %v454
    %504 = vmatprep.subr.mxu0 %v457
    %505 = vmatpush1.msra.mxu0 %v456
    %506 = vmatprep.subr.mxu0 %v459
    %507 = vmatpush1.msra.mxu0 %v458
    %508 = vmatprep.subr.mxu0 %v461
    %509 = vmatpush1.msra.mxu0 %v460
    %510 = vmatprep.subr.mxu0 %v463
    %511 = vmatpush1.msra.mxu0 %v462
    %512 = vmatprep.subr.mxu0 %v465
    %513 = vmatpush1.msra.mxu0 %v464
    %514 = vmatprep.subr.mxu0 %v467
    %515 = vmatpush1.msra.mxu0 %v466
    %516 = vmatprep.subr.mxu0 0.0
    %517 = vmatpush1.msra.mxu0 0.0
    %518 = vmatprep.subr.mxu0 0.0
    %519 = vmatpush1.msra.mxu0 0.0
    %520 = vmatprep.subr.mxu0 0.0
    %521 = vmatpush1.msra.mxu0 0.0
    %522 = vmatprep.subr.mxu0 0.0
    %523 = vmatpush1.msra.mxu0 0.0
    %524 = vmatprep.subr.mxu0 0.0
    %525 = vmatpush1.msra.mxu0 0.0
    %526 = vmatprep.subr.mxu0 0.0
    %527 = vmatpush1.msra.mxu0 0.0
    %528 = vmatprep.subr.mxu0 0.0
    %529 = vmatpush1.msra.mxu0 0.0
    %530 = vmatprep.subr.mxu0 0.0
    %531 = vmatpush1.msra.mxu0 0.0
    %532 = vmatprep.subr.mxu0 0.0
    %533 = vmatpush1.msra.mxu0 0.0
    %534 = vmatprep.subr.mxu0 0.0
    %535 = vmatpush1.msra.mxu0 0.0
    %536 = vmatprep.subr.mxu0 0.0
    %537 = vmatpush1.msra.mxu0 0.0
    %538 = vmatprep.subr.mxu0 0.0
    %539 = vmatpush1.msra.mxu0 0.0
    %540 = vmatprep.subr.mxu0 0.0
    %541 = vmatpush1.msra.mxu0 0.0
    %542 = vmatprep.subr.mxu0 0.0
    %543 = vmatpush1.msra.mxu0 0.0
    %544 = vmatprep.mubr.f32.mxu0 %v478
    %545 = vmatmul.mubr.f32.gmra.mrb[0].mxu0 %v475
    %v546 = vpop.f32.mrb[0].mxu0
    %v547 = vadd.f32 0.0, %v546
    %v548 = vpop.f32.mrb[0].mxu0
    %v549 = vadd.f32 0.0, %v548
    %550 = vdwg.mxu0
    %v551 = vadd.f32 %v425, %v547
    %v552 = vadd.f32 %v427, %v549
    %s553 = scalar_lea.vmem %s0, 12
    %v554 = vld [vmem:[%s553] sm:$0xf]
    %s555 = scalar_lea.vmem [#allocation3], 864
    %v556 = vld [vmem:[%s555] sm:$0xff]
    %v557 = vld [vmem:[%s555 + $0x8] sm:$0xff]
    %v558 = vld [vmem:[%s555 + $0x10] sm:$0xff]
    %v559 = vld [vmem:[%s555 + $0x18] sm:$0xff]
    %v560 = vld [vmem:[%s555 + $0x20] sm:$0xff]
    %v561 = vld [vmem:[%s555 + $0x28] sm:$0xff]
    %v562 = vld [vmem:[%s555 + $0x30] sm:$0xff]
    %v563 = vld [vmem:[%s555 + $0x38] sm:$0xff]
    %v564 = vld [vmem:[%s555 + $0x40] sm:$0xff]
    %v565 = vld [vmem:[%s555 + $0x48] sm:$0xff]
    %v566 = vld [vmem:[%s555 + $0x50] sm:$0xff]
    %v567 = vld [vmem:[%s555 + $0x58] sm:$0xff]
    %v568 = vld [vmem:[%s555 + $0x60] sm:$0xff]
    %v569 = vld [vmem:[%s555 + $0x68] sm:$0xff]
    %v570 = vld [vmem:[%s555 + $0x70] sm:$0xff]
    %v571 = vld [vmem:[%s555 + $0x78] sm:$0xff]
    %v572 = vld [vmem:[%s555 + $0x80] sm:$0xff]
    %v573 = vld [vmem:[%s555 + $0x88] sm:$0xff]
    %v574 = vld [vmem:[%s555 + $0x90] sm:$0xff]
    %v575 = vld [vmem:[%s555 + $0x98] sm:$0xff]
    %v576 = vld [vmem:[%s555 + $0xa0] sm:$0xff]
    %v577 = vld [vmem:[%s555 + $0xa8] sm:$0xff]
    %v578 = vld [vmem:[%s555 + $0xb0] sm:$0xff]
    %v579 = vld [vmem:[%s555 + $0xb8] sm:$0xff]
    %v580 = vld [vmem:[%s555 + $0xc0] sm:$0xff]
    %v581 = vld [vmem:[%s555 + $0xc8] sm:$0xff]
    %v582 = vld [vmem:[%s555 + $0xd0] sm:$0xff]
    %v583 = vld [vmem:[%s555 + $0xd8] sm:$0xff]
    %v584 = vld [vmem:[%s555 + $0xe0] sm:$0xff]
    %v585 = vld [vmem:[%s555 + $0xe8] sm:$0xff]
    %v586 = vld [vmem:[%s555 + $0xf0] sm:$0xff]
    %v587 = vld [vmem:[%s555 + $0xf8] sm:$0xff]
    %v588 = vld [vmem:[%s555 + $0x100] sm:$0xff]
    %v589 = vld [vmem:[%s555 + $0x108] sm:$0xff]
    %v590 = vld [vmem:[%s555 + $0x110] sm:$0xff]
    %v591 = vld [vmem:[%s555 + $0x118] sm:$0xff]
    %v594 = vunpack.c.l.s4 1983009808
    %v595 = vunpack.c.0.s8 %v594
    %v596 = vlaneseq
    %v597 = vshrl.u32 %v596, 7
    %v598 = vsub.s32 %v595, %v597
    %v599 = vrot.slane %v554, %v598
    %v600 = vcombine.high %v599, %v599
    %v602 = vsel %vm272, %v600, 0
    %604 = vmatprep.subr.mxu0 %v557
    %605 = vmatpush1.msra.mxu0 %v556
    %606 = vmatprep.subr.mxu0 %v559
    %607 = vmatpush1.msra.mxu0 %v558
    %608 = vmatprep.subr.mxu0 %v561
    %609 = vmatpush1.msra.mxu0 %v560
    %610 = vmatprep.subr.mxu0 %v563
    %611 = vmatpush1.msra.mxu0 %v562
    %612 = vmatprep.subr.mxu0 %v565
    %613 = vmatpush1.msra.mxu0 %v564
    %614 = vmatprep.subr.mxu0 %v567
    %615 = vmatpush1.msra.mxu0 %v566
    %616 = vmatprep.subr.mxu0 %v569
    %617 = vmatpush1.msra.mxu0 %v568
    %618 = vmatprep.subr.mxu0 %v571
    %619 = vmatpush1.msra.mxu0 %v570
    %620 = vmatprep.subr.mxu0 %v573
    %621 = vmatpush1.msra.mxu0 %v572
    %622 = vmatprep.subr.mxu0 %v575
    %623 = vmatpush1.msra.mxu0 %v574
    %624 = vmatprep.subr.mxu0 %v577
    %625 = vmatpush1.msra.mxu0 %v576
    %626 = vmatprep.subr.mxu0 %v579
    %627 = vmatpush1.msra.mxu0 %v578
    %628 = vmatprep.subr.mxu0 %v581
    %629 = vmatpush1.msra.mxu0 %v580
    %630 = vmatprep.subr.mxu0 %v583
    %631 = vmatpush1.msra.mxu0 %v582
    %632 = vmatprep.subr.mxu0 %v585
    %633 = vmatpush1.msra.mxu0 %v584
    %634 = vmatprep.subr.mxu0 %v587
    %635 = vmatpush1.msra.mxu0 %v586
    %636 = vmatprep.subr.mxu0 %v589
    %637 = vmatpush1.msra.mxu0 %v588
    %638 = vmatprep.subr.mxu0 %v591
    %639 = vmatpush1.msra.mxu0 %v590
    %640 = vmatprep.subr.mxu0 0.0
    %641 = vmatpush1.msra.mxu0 0.0
    %642 = vmatprep.subr.mxu0 0.0
    %643 = vmatpush1.msra.mxu0 0.0
    %644 = vmatprep.subr.mxu0 0.0
    %645 = vmatpush1.msra.mxu0 0.0
    %646 = vmatprep.subr.mxu0 0.0
    %647 = vmatpush1.msra.mxu0 0.0
    %648 = vmatprep.subr.mxu0 0.0
    %649 = vmatpush1.msra.mxu0 0.0
    %650 = vmatprep.subr.mxu0 0.0
    %651 = vmatpush1.msra.mxu0 0.0
    %652 = vmatprep.subr.mxu0 0.0
    %653 = vmatpush1.msra.mxu0 0.0
    %654 = vmatprep.subr.mxu0 0.0
    %655 = vmatpush1.msra.mxu0 0.0
    %656 = vmatprep.subr.mxu0 0.0
    %657 = vmatpush1.msra.mxu0 0.0
    %658 = vmatprep.subr.mxu0 0.0
    %659 = vmatpush1.msra.mxu0 0.0
    %660 = vmatprep.subr.mxu0 0.0
    %661 = vmatpush1.msra.mxu0 0.0
    %662 = vmatprep.subr.mxu0 0.0
    %663 = vmatpush1.msra.mxu0 0.0
    %664 = vmatprep.subr.mxu0 0.0
    %665 = vmatpush1.msra.mxu0 0.0
    %666 = vmatprep.subr.mxu0 0.0
    %667 = vmatpush1.msra.mxu0 0.0
    %668 = vmatprep.mubr.f32.mxu0 %v602
    %669 = vmatmul.mubr.f32.gmra.mrb[0].mxu0 %v599
    %v670 = vpop.f32.mrb[0].mxu0
    %v671 = vadd.f32 0.0, %v670
    %v672 = vpop.f32.mrb[0].mxu0
    %v673 = vadd.f32 0.0, %v672
    %674 = vdwg.mxu0
    %v675 = vadd.f32 %v551, %v671
    %v676 = vadd.f32 %v552, %v673
    %s677 = scalar_lea.vmem %s0, 16
    %v678 = vld [vmem:[%s677] sm:$0xf]
    %s679 = scalar_lea.vmem [#allocation3], 1152
    %v680 = vld [vmem:[%s679] sm:$0xff]
    %v681 = vld [vmem:[%s679 + $0x8] sm:$0xff]
    %v682 = vld [vmem:[%s679 + $0x10] sm:$0xff]
    %v683 = vld [vmem:[%s679 + $0x18] sm:$0xff]
    %v684 = vld [vmem:[%s679 + $0x20] sm:$0xff]
    %v685 = vld [vmem:[%s679 + $0x28] sm:$0xff]
    %v686 = vld [vmem:[%s679 + $0x30] sm:$0xff]
    %v687 = vld [vmem:[%s679 + $0x38] sm:$0xff]
    %v688 = vld [vmem:[%s679 + $0x40] sm:$0xff]
    %v689 = vld [vmem:[%s679 + $0x48] sm:$0xff]
    %v690 = vld [vmem:[%s679 + $0x50] sm:$0xff]
    %v691 = vld [vmem:[%s679 + $0x58] sm:$0xff]
    %v692 = vld [vmem:[%s679 + $0x60] sm:$0xff]
    %v693 = vld [vmem:[%s679 + $0x68] sm:$0xff]
    %v694 = vld [vmem:[%s679 + $0x70] sm:$0xff]
    %v695 = vld [vmem:[%s679 + $0x78] sm:$0xff]
    %v696 = vld [vmem:[%s679 + $0x80] sm:$0xff]
    %v697 = vld [vmem:[%s679 + $0x88] sm:$0xff]
    %v698 = vld [vmem:[%s679 + $0x90] sm:$0xff]
    %v699 = vld [vmem:[%s679 + $0x98] sm:$0xff]
    %v700 = vld [vmem:[%s679 + $0xa0] sm:$0xff]
    %v701 = vld [vmem:[%s679 + $0xa8] sm:$0xff]
    %v702 = vld [vmem:[%s679 + $0xb0] sm:$0xff]
    %v703 = vld [vmem:[%s679 + $0xb8] sm:$0xff]
    %v704 = vld [vmem:[%s679 + $0xc0] sm:$0xff]
    %v705 = vld [vmem:[%s679 + $0xc8] sm:$0xff]
    %v706 = vld [vmem:[%s679 + $0xd0] sm:$0xff]
    %v707 = vld [vmem:[%s679 + $0xd8] sm:$0xff]
    %v708 = vld [vmem:[%s679 + $0xe0] sm:$0xff]
    %v709 = vld [vmem:[%s679 + $0xe8] sm:$0xff]
    %v710 = vld [vmem:[%s679 + $0xf0] sm:$0xff]
    %v711 = vld [vmem:[%s679 + $0xf8] sm:$0xff]
    %v712 = vld [vmem:[%s679 + $0x100] sm:$0xff]
    %v713 = vld [vmem:[%s679 + $0x108] sm:$0xff]
    %v714 = vld [vmem:[%s679 + $0x110] sm:$0xff]
    %v715 = vld [vmem:[%s679 + $0x118] sm:$0xff]
    %v718 = vunpack.c.l.s4 1983009808
    %v719 = vunpack.c.0.s8 %v718
    %v720 = vlaneseq
    %v721 = vshrl.u32 %v720, 7
    %v722 = vsub.s32 %v719, %v721
    %v723 = vrot.slane %v678, %v722
    %v724 = vcombine.high %v723, %v723
    %v726 = vsel %vm272, %v724, 0
    %728 = vmatprep.subr.mxu0 %v681
    %729 = vmatpush1.msra.mxu0 %v680
    %730 = vmatprep.subr.mxu0 %v683
    %731 = vmatpush1.msra.mxu0 %v682
    %732 = vmatprep.subr.mxu0 %v685
    %733 = vmatpush1.msra.mxu0 %v684
    %734 = vmatprep.subr.mxu0 %v687
    %735 = vmatpush1.msra.mxu0 %v686
    %736 = vmatprep.subr.mxu0 %v689
    %737 = vmatpush1.msra.mxu0 %v688
    %738 = vmatprep.subr.mxu0 %v691
    %739 = vmatpush1.msra.mxu0 %v690
    %740 = vmatprep.subr.mxu0 %v693
    %741 = vmatpush1.msra.mxu0 %v692
    %742 = vmatprep.subr.mxu0 %v695
    %743 = vmatpush1.msra.mxu0 %v694
    %744 = vmatprep.subr.mxu0 %v697
    %745 = vmatpush1.msra.mxu0 %v696
    %746 = vmatprep.subr.mxu0 %v699
    %747 = vmatpush1.msra.mxu0 %v698
    %748 = vmatprep.subr.mxu0 %v701
    %749 = vmatpush1.msra.mxu0 %v700
    %750 = vmatprep.subr.mxu0 %v703
    %751 = vmatpush1.msra.mxu0 %v702
    %752 = vmatprep.subr.mxu0 %v705
    %753 = vmatpush1.msra.mxu0 %v704
    %754 = vmatprep.subr.mxu0 %v707
    %755 = vmatpush1.msra.mxu0 %v706
    %756 = vmatprep.subr.mxu0 %v709
    %757 = vmatpush1.msra.mxu0 %v708
    %758 = vmatprep.subr.mxu0 %v711
    %759 = vmatpush1.msra.mxu0 %v710
    %760 = vmatprep.subr.mxu0 %v713
    %761 = vmatpush1.msra.mxu0 %v712
    %762 = vmatprep.subr.mxu0 %v715
    %763 = vmatpush1.msra.mxu0 %v714
    %764 = vmatprep.subr.mxu0 0.0
    %765 = vmatpush1.msra.mxu0 0.0
    %766 = vmatprep.subr.mxu0 0.0
    %767 = vmatpush1.msra.mxu0 0.0
    %768 = vmatprep.subr.mxu0 0.0
    %769 = vmatpush1.msra.mxu0 0.0
    %770 = vmatprep.subr.mxu0 0.0
    %771 = vmatpush1.msra.mxu0 0.0
    %772 = vmatprep.subr.mxu0 0.0
    %773 = vmatpush1.msra.mxu0 0.0
    %774 = vmatprep.subr.mxu0 0.0
    %775 = vmatpush1.msra.mxu0 0.0
    %776 = vmatprep.subr.mxu0 0.0
    %777 = vmatpush1.msra.mxu0 0.0
    %778 = vmatprep.subr.mxu0 0.0
    %779 = vmatpush1.msra.mxu0 0.0
    %780 = vmatprep.subr.mxu0 0.0
    %781 = vmatpush1.msra.mxu0 0.0
    %782 = vmatprep.subr.mxu0 0.0
    %783 = vmatpush1.msra.mxu0 0.0
    %784 = vmatprep.subr.mxu0 0.0
    %785 = vmatpush1.msra.mxu0 0.0
    %786 = vmatprep.subr.mxu0 0.0
    %787 = vmatpush1.msra.mxu0 0.0
    %788 = vmatprep.subr.mxu0 0.0
    %789 = vmatpush1.msra.mxu0 0.0
    %790 = vmatprep.subr.mxu0 0.0
    %791 = vmatpush1.msra.mxu0 0.0
    %792 = vmatprep.mubr.f32.mxu0 %v726
    %793 = vmatmul.mubr.f32.gmra.mrb[0].mxu0 %v723
    %v794 = vpop.f32.mrb[0].mxu0
    %v795 = vadd.f32 0.0, %v794
    %v796 = vpop.f32.mrb[0].mxu0
    %v797 = vadd.f32 0.0, %v796
    %798 = vdwg.mxu0
    %v799 = vadd.f32 %v675, %v795
    %v800 = vadd.f32 %v676, %v797
    %s801 = scalar_lea.vmem %s0, 20
    %v802 = vld [vmem:[%s801] sm:$0xf]
    %s803 = scalar_lea.vmem [#allocation3], 1440
    %v804 = vld [vmem:[%s803] sm:$0xff]
    %v805 = vld [vmem:[%s803 + $0x8] sm:$0xff]
    %v806 = vld [vmem:[%s803 + $0x10] sm:$0xff]
    %v807 = vld [vmem:[%s803 + $0x18] sm:$0xff]
    %v808 = vld [vmem:[%s803 + $0x20] sm:$0xff]
    %v809 = vld [vmem:[%s803 + $0x28] sm:$0xff]
    %v810 = vld [vmem:[%s803 + $0x30] sm:$0xff]
    %v811 = vld [vmem:[%s803 + $0x38] sm:$0xff]
    %v812 = vld [vmem:[%s803 + $0x40] sm:$0xff]
    %v813 = vld [vmem:[%s803 + $0x48] sm:$0xff]
    %v814 = vld [vmem:[%s803 + $0x50] sm:$0xff]
    %v815 = vld [vmem:[%s803 + $0x58] sm:$0xff]
    %v816 = vld [vmem:[%s803 + $0x60] sm:$0xff]
    %v817 = vld [vmem:[%s803 + $0x68] sm:$0xff]
    %v818 = vld [vmem:[%s803 + $0x70] sm:$0xff]
    %v819 = vld [vmem:[%s803 + $0x78] sm:$0xff]
    %v820 = vld [vmem:[%s803 + $0x80] sm:$0xff]
    %v821 = vld [vmem:[%s803 + $0x88] sm:$0xff]
    %v822 = vld [vmem:[%s803 + $0x90] sm:$0xff]
    %v823 = vld [vmem:[%s803 + $0x98] sm:$0xff]
    %v824 = vld [vmem:[%s803 + $0xa0] sm:$0xff]
    %v825 = vld [vmem:[%s803 + $0xa8] sm:$0xff]
    %v826 = vld [vmem:[%s803 + $0xb0] sm:$0xff]
    %v827 = vld [vmem:[%s803 + $0xb8] sm:$0xff]
    %v828 = vld [vmem:[%s803 + $0xc0] sm:$0xff]
    %v829 = vld [vmem:[%s803 + $0xc8] sm:$0xff]
    %v830 = vld [vmem:[%s803 + $0xd0] sm:$0xff]
    %v831 = vld [vmem:[%s803 + $0xd8] sm:$0xff]
    %v832 = vld [vmem:[%s803 + $0xe0] sm:$0xff]
    %v833 = vld [vmem:[%s803 + $0xe8] sm:$0xff]
    %v834 = vld [vmem:[%s803 + $0xf0] sm:$0xff]
    %v835 = vld [vmem:[%s803 + $0xf8] sm:$0xff]
    %v836 = vld [vmem:[%s803 + $0x100] sm:$0xff]
    %v837 = vld [vmem:[%s803 + $0x108] sm:$0xff]
    %v838 = vld [vmem:[%s803 + $0x110] sm:$0xff]
    %v839 = vld [vmem:[%s803 + $0x118] sm:$0xff]
    %v842 = vunpack.c.l.s4 1983009808
    %v843 = vunpack.c.0.s8 %v842
    %v844 = vlaneseq
    %v845 = vshrl.u32 %v844, 7
    %v846 = vsub.s32 %v843, %v845
    %v847 = vrot.slane %v802, %v846
    %v848 = vcombine.high %v847, %v847
    %v850 = vsel %vm272, %v848, 0
    %852 = vmatprep.subr.mxu0 %v805
    %853 = vmatpush1.msra.mxu0 %v804
    %854 = vmatprep.subr.mxu0 %v807
    %855 = vmatpush1.msra.mxu0 %v806
    %856 = vmatprep.subr.mxu0 %v809
    %857 = vmatpush1.msra.mxu0 %v808
    %858 = vmatprep.subr.mxu0 %v811
    %859 = vmatpush1.msra.mxu0 %v810
    %860 = vmatprep.subr.mxu0 %v813
    %861 = vmatpush1.msra.mxu0 %v812
    %862 = vmatprep.subr.mxu0 %v815
    %863 = vmatpush1.msra.mxu0 %v814
    %864 = vmatprep.subr.mxu0 %v817
    %865 = vmatpush1.msra.mxu0 %v816
    %866 = vmatprep.subr.mxu0 %v819
    %867 = vmatpush1.msra.mxu0 %v818
    %868 = vmatprep.subr.mxu0 %v821
    %869 = vmatpush1.msra.mxu0 %v820
    %870 = vmatprep.subr.mxu0 %v823
    %871 = vmatpush1.msra.mxu0 %v822
    %872 = vmatprep.subr.mxu0 %v825
    %873 = vmatpush1.msra.mxu0 %v824
    %874 = vmatprep.subr.mxu0 %v827
    %875 = vmatpush1.msra.mxu0 %v826
    %876 = vmatprep.subr.mxu0 %v829
    %877 = vmatpush1.msra.mxu0 %v828
    %878 = vmatprep.subr.mxu0 %v831
    %879 = vmatpush1.msra.mxu0 %v830
    %880 = vmatprep.subr.mxu0 %v833
    %881 = vmatpush1.msra.mxu0 %v832
    %882 = vmatprep.subr.mxu0 %v835
    %883 = vmatpush1.msra.mxu0 %v834
    %884 = vmatprep.subr.mxu0 %v837
    %885 = vmatpush1.msra.mxu0 %v836
    %886 = vmatprep.subr.mxu0 %v839
    %887 = vmatpush1.msra.mxu0 %v838
    %888 = vmatprep.subr.mxu0 0.0
    %889 = vmatpush1.msra.mxu0 0.0
    %890 = vmatprep.subr.mxu0 0.0
    %891 = vmatpush1.msra.mxu0 0.0
    %892 = vmatprep.subr.mxu0 0.0
    %893 = vmatpush1.msra.mxu0 0.0
    %894 = vmatprep.subr.mxu0 0.0
    %895 = vmatpush1.msra.mxu0 0.0
    %896 = vmatprep.subr.mxu0 0.0
    %897 = vmatpush1.msra.mxu0 0.0
    %898 = vmatprep.subr.mxu0 0.0
    %899 = vmatpush1.msra.mxu0 0.0
    %900 = vmatprep.subr.mxu0 0.0
    %901 = vmatpush1.msra.mxu0 0.0
    %902 = vmatprep.subr.mxu0 0.0
    %903 = vmatpush1.msra.mxu0 0.0
    %904 = vmatprep.subr.mxu0 0.0
    %905 = vmatpush1.msra.mxu0 0.0
    %906 = vmatprep.subr.mxu0 0.0
    %907 = vmatpush1.msra.mxu0 0.0
    %908 = vmatprep.subr.mxu0 0.0
    %909 = vmatpush1.msra.mxu0 0.0
    %910 = vmatprep.subr.mxu0 0.0
    %911 = vmatpush1.msra.mxu0 0.0
    %912 = vmatprep.subr.mxu0 0.0
    %913 = vmatpush1.msra.mxu0 0.0
    %914 = vmatprep.subr.mxu0 0.0
    %915 = vmatpush1.msra.mxu0 0.0
    %916 = vmatprep.mubr.f32.mxu0 %v850
    %917 = vmatmul.mubr.f32.gmra.mrb[0].mxu0 %v847
    %v918 = vpop.f32.mrb[0].mxu0
    %v919 = vadd.f32 0.0, %v918
    %v920 = vpop.f32.mrb[0].mxu0
    %v921 = vadd.f32 0.0, %v920
    %922 = vdwg.mxu0
    %v923 = vadd.f32 %v799, %v919
    %v924 = vadd.f32 %v800, %v921
    %s925 = scalar_lea.vmem %s0, 24
    %v926 = vld [vmem:[%s925] sm:$0xf]
    %s927 = scalar_lea.vmem [#allocation3], 1728
    %v928 = vld [vmem:[%s927] sm:$0xff]
    %v929 = vld [vmem:[%s927 + $0x8] sm:$0xff]
    %v930 = vld [vmem:[%s927 + $0x10] sm:$0xff]
    %v931 = vld [vmem:[%s927 + $0x18] sm:$0xff]
    %v932 = vld [vmem:[%s927 + $0x20] sm:$0xff]
    %v933 = vld [vmem:[%s927 + $0x28] sm:$0xff]
    %v934 = vld [vmem:[%s927 + $0x30] sm:$0xff]
    %v935 = vld [vmem:[%s927 + $0x38] sm:$0xff]
    %v936 = vld [vmem:[%s927 + $0x40] sm:$0xff]
    %v937 = vld [vmem:[%s927 + $0x48] sm:$0xff]
    %v938 = vld [vmem:[%s927 + $0x50] sm:$0xff]
    %v939 = vld [vmem:[%s927 + $0x58] sm:$0xff]
    %v940 = vld [vmem:[%s927 + $0x60] sm:$0xff]
    %v941 = vld [vmem:[%s927 + $0x68] sm:$0xff]
    %v942 = vld [vmem:[%s927 + $0x70] sm:$0xff]
    %v943 = vld [vmem:[%s927 + $0x78] sm:$0xff]
    %v944 = vld [vmem:[%s927 + $0x80] sm:$0xff]
    %v945 = vld [vmem:[%s927 + $0x88] sm:$0xff]
    %v946 = vld [vmem:[%s927 + $0x90] sm:$0xff]
    %v947 = vld [vmem:[%s927 + $0x98] sm:$0xff]
    %v948 = vld [vmem:[%s927 + $0xa0] sm:$0xff]
    %v949 = vld [vmem:[%s927 + $0xa8] sm:$0xff]
    %v950 = vld [vmem:[%s927 + $0xb0] sm:$0xff]
    %v951 = vld [vmem:[%s927 + $0xb8] sm:$0xff]
    %v952 = vld [vmem:[%s927 + $0xc0] sm:$0xff]
    %v953 = vld [vmem:[%s927 + $0xc8] sm:$0xff]
    %v954 = vld [vmem:[%s927 + $0xd0] sm:$0xff]
    %v955 = vld [vmem:[%s927 + $0xd8] sm:$0xff]
    %v956 = vld [vmem:[%s927 + $0xe0] sm:$0xff]
    %v957 = vld [vmem:[%s927 + $0xe8] sm:$0xff]
    %v958 = vld [vmem:[%s927 + $0xf0] sm:$0xff]
    %v959 = vld [vmem:[%s927 + $0xf8] sm:$0xff]
    %v960 = vld [vmem:[%s927 + $0x100] sm:$0xff]
    %v961 = vld [vmem:[%s927 + $0x108] sm:$0xff]
    %v962 = vld [vmem:[%s927 + $0x110] sm:$0xff]
    %v963 = vld [vmem:[%s927 + $0x118] sm:$0xff]
    %v966 = vunpack.c.l.s4 1983009808
    %v967 = vunpack.c.0.s8 %v966
    %v968 = vlaneseq
    %v969 = vshrl.u32 %v968, 7
    %v970 = vsub.s32 %v967, %v969
    %v971 = vrot.slane %v926, %v970
    %v972 = vcombine.high %v971, %v971
    %v974 = vsel %vm272, %v972, 0
    %976 = vmatprep.subr.mxu0 %v929
    %977 = vmatpush1.msra.mxu0 %v928
    %978 = vmatprep.subr.mxu0 %v931
    %979 = vmatpush1.msra.mxu0 %v930
    %980 = vmatprep.subr.mxu0 %v933
    %981 = vmatpush1.msra.mxu0 %v932
    %982 = vmatprep.subr.mxu0 %v935
    %983 = vmatpush1.msra.mxu0 %v934
    %984 = vmatprep.subr.mxu0 %v937
    %985 = vmatpush1.msra.mxu0 %v936
    %986 = vmatprep.subr.mxu0 %v939
    %987 = vmatpush1.msra.mxu0 %v938
    %988 = vmatprep.subr.mxu0 %v941
    %989 = vmatpush1.msra.mxu0 %v940
    %990 = vmatprep.subr.mxu0 %v943
    %991 = vmatpush1.msra.mxu0 %v942
    %992 = vmatprep.subr.mxu0 %v945
    %993 = vmatpush1.msra.mxu0 %v944
    %994 = vmatprep.subr.mxu0 %v947
    %995 = vmatpush1.msra.mxu0 %v946
    %996 = vmatprep.subr.mxu0 %v949
    %997 = vmatpush1.msra.mxu0 %v948
    %998 = vmatprep.subr.mxu0 %v951
    %999 = vmatpush1.msra.mxu0 %v950
    %1000 = vmatprep.subr.mxu0 %v953
    %1001 = vmatpush1.msra.mxu0 %v952
    %1002 = vmatprep.subr.mxu0 %v955
    %1003 = vmatpush1.msra.mxu0 %v954
    %1004 = vmatprep.subr.mxu0 %v957
    %1005 = vmatpush1.msra.mxu0 %v956
    %1006 = vmatprep.subr.mxu0 %v959
    %1007 = vmatpush1.msra.mxu0 %v958
    %1008 = vmatprep.subr.mxu0 %v961
    %1009 = vmatpush1.msra.mxu0 %v960
    %1010 = vmatprep.subr.mxu0 %v963
    %1011 = vmatpush1.msra.mxu0 %v962
    %1012 = vmatprep.subr.mxu0 0.0
    %1013 = vmatpush1.msra.mxu0 0.0
    %1014 = vmatprep.subr.mxu0 0.0
    %1015 = vmatpush1.msra.mxu0 0.0
    %1016 = vmatprep.subr.mxu0 0.0
    %1017 = vmatpush1.msra.mxu0 0.0
    %1018 = vmatprep.subr.mxu0 0.0
    %1019 = vmatpush1.msra.mxu0 0.0
    %1020 = vmatprep.subr.mxu0 0.0
    %1021 = vmatpush1.msra.mxu0 0.0
    %1022 = vmatprep.subr.mxu0 0.0
    %1023 = vmatpush1.msra.mxu0 0.0
    %1024 = vmatprep.subr.mxu0 0.0
    %1025 = vmatpush1.msra.mxu0 0.0
    %1026 = vmatprep.subr.mxu0 0.0
    %1027 = vmatpush1.msra.mxu0 0.0
    %1028 = vmatprep.subr.mxu0 0.0
    %1029 = vmatpush1.msra.mxu0 0.0
    %1030 = vmatprep.subr.mxu0 0.0
    %1031 = vmatpush1.msra.mxu0 0.0
    %1032 = vmatprep.subr.mxu0 0.0
    %1033 = vmatpush1.msra.mxu0 0.0
    %1034 = vmatprep.subr.mxu0 0.0
    %1035 = vmatpush1.msra.mxu0 0.0
    %1036 = vmatprep.subr.mxu0 0.0
    %1037 = vmatpush1.msra.mxu0 0.0
    %1038 = vmatprep.subr.mxu0 0.0
    %1039 = vmatpush1.msra.mxu0 0.0
    %1040 = vmatprep.mubr.f32.mxu0 %v974
    %1041 = vmatmul.mubr.f32.gmra.mrb[0].mxu0 %v971
    %v1042 = vpop.f32.mrb[0].mxu0
    %v1043 = vadd.f32 0.0, %v1042
    %v1044 = vpop.f32.mrb[0].mxu0
    %v1045 = vadd.f32 0.0, %v1044
    %1046 = vdwg.mxu0
    %v1047 = vadd.f32 %v923, %v1043
    %v1048 = vadd.f32 %v924, %v1045
    %s1049 = scalar_lea.vmem %s0, 28
    %v1050 = vld [vmem:[%s1049] sm:$0xf]
    %s1051 = scalar_lea.vmem [#allocation3], 2016
    %v1052 = vld [vmem:[%s1051] sm:$0xff]
    %v1053 = vld [vmem:[%s1051 + $0x8] sm:$0xff]
    %v1054 = vld [vmem:[%s1051 + $0x10] sm:$0xff]
    %v1055 = vld [vmem:[%s1051 + $0x18] sm:$0xff]
    %v1056 = vld [vmem:[%s1051 + $0x20] sm:$0xff]
    %v1057 = vld [vmem:[%s1051 + $0x28] sm:$0xff]
    %v1058 = vld [vmem:[%s1051 + $0x30] sm:$0xff]
    %v1059 = vld [vmem:[%s1051 + $0x38] sm:$0xff]
    %v1060 = vld [vmem:[%s1051 + $0x40] sm:$0xff]
    %v1061 = vld [vmem:[%s1051 + $0x48] sm:$0xff]
    %v1062 = vld [vmem:[%s1051 + $0x50] sm:$0xff]
    %v1063 = vld [vmem:[%s1051 + $0x58] sm:$0xff]
    %v1064 = vld [vmem:[%s1051 + $0x60] sm:$0xff]
    %v1065 = vld [vmem:[%s1051 + $0x68] sm:$0xff]
    %v1066 = vld [vmem:[%s1051 + $0x70] sm:$0xff]
    %v1067 = vld [vmem:[%s1051 + $0x78] sm:$0xff]
    %v1068 = vld [vmem:[%s1051 + $0x80] sm:$0xff]
    %v1069 = vld [vmem:[%s1051 + $0x88] sm:$0xff]
    %v1070 = vld [vmem:[%s1051 + $0x90] sm:$0xff]
    %v1071 = vld [vmem:[%s1051 + $0x98] sm:$0xff]
    %v1072 = vld [vmem:[%s1051 + $0xa0] sm:$0xff]
    %v1073 = vld [vmem:[%s1051 + $0xa8] sm:$0xff]
    %v1074 = vld [vmem:[%s1051 + $0xb0] sm:$0xff]
    %v1075 = vld [vmem:[%s1051 + $0xb8] sm:$0xff]
    %v1076 = vld [vmem:[%s1051 + $0xc0] sm:$0xff]
    %v1077 = vld [vmem:[%s1051 + $0xc8] sm:$0xff]
    %v1078 = vld [vmem:[%s1051 + $0xd0] sm:$0xff]
    %v1079 = vld [vmem:[%s1051 + $0xd8] sm:$0xff]
    %v1080 = vld [vmem:[%s1051 + $0xe0] sm:$0xff]
    %v1081 = vld [vmem:[%s1051 + $0xe8] sm:$0xff]
    %v1082 = vld [vmem:[%s1051 + $0xf0] sm:$0xff]
    %v1083 = vld [vmem:[%s1051 + $0xf8] sm:$0xff]
    %v1084 = vld [vmem:[%s1051 + $0x100] sm:$0xff]
    %v1085 = vld [vmem:[%s1051 + $0x108] sm:$0xff]
    %v1086 = vld [vmem:[%s1051 + $0x110] sm:$0xff]
    %v1087 = vld [vmem:[%s1051 + $0x118] sm:$0xff]
    %v1090 = vunpack.c.l.s4 1983009808
    %v1091 = vunpack.c.0.s8 %v1090
    %v1092 = vlaneseq
    %v1093 = vshrl.u32 %v1092, 7
    %v1094 = vsub.s32 %v1091, %v1093
    %v1095 = vrot.slane %v1050, %v1094
    %v1096 = vcombine.high %v1095, %v1095
    %v1098 = vsel %vm272, %v1096, 0
    %1100 = vmatprep.subr.mxu0 %v1053
    %1101 = vmatpush1.msra.mxu0 %v1052
    %1102 = vmatprep.subr.mxu0 %v1055
    %1103 = vmatpush1.msra.mxu0 %v1054
    %1104 = vmatprep.subr.mxu0 %v1057
    %1105 = vmatpush1.msra.mxu0 %v1056
    %1106 = vmatprep.subr.mxu0 %v1059
    %1107 = vmatpush1.msra.mxu0 %v1058
    %1108 = vmatprep.subr.mxu0 %v1061
    %1109 = vmatpush1.msra.mxu0 %v1060
    %1110 = vmatprep.subr.mxu0 %v1063
    %1111 = vmatpush1.msra.mxu0 %v1062
    %1112 = vmatprep.subr.mxu0 %v1065
    %1113 = vmatpush1.msra.mxu0 %v1064
    %1114 = vmatprep.subr.mxu0 %v1067
    %1115 = vmatpush1.msra.mxu0 %v1066
    %1116 = vmatprep.subr.mxu0 %v1069
    %1117 = vmatpush1.msra.mxu0 %v1068
    %1118 = vmatprep.subr.mxu0 %v1071
    %1119 = vmatpush1.msra.mxu0 %v1070
    %1120 = vmatprep.subr.mxu0 %v1073
    %1121 = vmatpush1.msra.mxu0 %v1072
    %1122 = vmatprep.subr.mxu0 %v1075
    %1123 = vmatpush1.msra.mxu0 %v1074
    %1124 = vmatprep.subr.mxu0 %v1077
    %1125 = vmatpush1.msra.mxu0 %v1076
    %1126 = vmatprep.subr.mxu0 %v1079
    %1127 = vmatpush1.msra.mxu0 %v1078
    %1128 = vmatprep.subr.mxu0 %v1081
    %1129 = vmatpush1.msra.mxu0 %v1080
    %1130 = vmatprep.subr.mxu0 %v1083
    %1131 = vmatpush1.msra.mxu0 %v1082
    %1132 = vmatprep.subr.mxu0 %v1085
    %1133 = vmatpush1.msra.mxu0 %v1084
    %1134 = vmatprep.subr.mxu0 %v1087
    %1135 = vmatpush1.msra.mxu0 %v1086
    %1136 = vmatprep.subr.mxu0 0.0
    %1137 = vmatpush1.msra.mxu0 0.0
    %1138 = vmatprep.subr.mxu0 0.0
    %1139 = vmatpush1.msra.mxu0 0.0
    %1140 = vmatprep.subr.mxu0 0.0
    %1141 = vmatpush1.msra.mxu0 0.0
    %1142 = vmatprep.subr.mxu0 0.0
    %1143 = vmatpush1.msra.mxu0 0.0
    %1144 = vmatprep.subr.mxu0 0.0
    %1145 = vmatpush1.msra.mxu0 0.0
    %1146 = vmatprep.subr.mxu0 0.0
    %1147 = vmatpush1.msra.mxu0 0.0
    %1148 = vmatprep.subr.mxu0 0.0
    %1149 = vmatpush1.msra.mxu0 0.0
    %1150 = vmatprep.subr.mxu0 0.0
    %1151 = vmatpush1.msra.mxu0 0.0
    %1152 = vmatprep.subr.mxu0 0.0
    %1153 = vmatpush1.msra.mxu0 0.0
    %1154 = vmatprep.subr.mxu0 0.0
    %1155 = vmatpush1.msra.mxu0 0.0
    %1156 = vmatprep.subr.mxu0 0.0
    %1157 = vmatpush1.msra.mxu0 0.0
    %1158 = vmatprep.subr.mxu0 0.0
    %1159 = vmatpush1.msra.mxu0 0.0
    %1160 = vmatprep.subr.mxu0 0.0
    %1161 = vmatpush1.msra.mxu0 0.0
    %1162 = vmatprep.subr.mxu0 0.0
    %1163 = vmatpush1.msra.mxu0 0.0
    %1164 = vmatprep.mubr.f32.mxu0 %v1098
    %1165 = vmatmul.mubr.f32.gmra.mrb[0].mxu0 %v1095
    %v1166 = vpop.f32.mrb[0].mxu0
    %v1167 = vadd.f32 0.0, %v1166
    %v1168 = vpop.f32.mrb[0].mxu0
    %v1169 = vadd.f32 0.0, %v1168
    %1170 = vdwg.mxu0
    %v1171 = vadd.f32 %v1047, %v1167
    %v1172 = vadd.f32 %v1048, %v1169
    %v1173 = vld [vmem:[#allocation6] sm:$0x3]
    %v1175 = vlaneseq
    %v1176 = vshrl.u32 %v1175, 7
    %v1177 = vsub.s32 0, %v1176
    %v1178 = vrot.slane %v1173, %v1177
    %v1179 = vlaneseq
    %v1180 = vshrl.u32 %v1179, 7
    %v1181 = vsub.s32 1, %v1180
    %v1182 = vrot.slane %v1173, %v1181
    %v1185 = vadd.f32 %v1171, %v1178
    %v1186 = vadd.f32 %v1172, %v1182
    %v1187 = vmax.f32 %v1185, 0.0
    %v1188 = vmax.f32 %v1186, 0.0
    %1189 = vmatprep.subr.mxu0 %v227
    %1190 = vmatpush1.msra.mxu0 %v226
    %1191 = vmatprep.subr.mxu0 %v229
    %1192 = vmatpush1.msra.mxu0 %v228
    %1193 = vmatprep.subr.mxu0 %v231
    %1194 = vmatpush1.msra.mxu0 %v230
    %1195 = vmatprep.subr.mxu0 %v233
    %1196 = vmatpush1.msra.mxu0 %v232
    %1197 = vmatprep.subr.mxu0 %v235
    %1198 = vmatpush1.msra.mxu0 %v234
    %1199 = vmatprep.subr.mxu0 %v237
    %1200 = vmatpush1.msra.mxu0 %v236
    %1201 = vmatprep.subr.mxu0 %v239
    %1202 = vmatpush1.msra.mxu0 %v238
    %1203 = vmatprep.subr.mxu0 %v241
    %1204 = vmatpush1.msra.mxu0 %v240
    %1205 = vmatprep.subr.mxu0 %v243
    %1206 = vmatpush1.msra.mxu0 %v242
    %1207 = vmatprep.subr.mxu0 %v245
    %1208 = vmatpush1.msra.mxu0 %v244
    %1209 = vmatprep.subr.mxu0 %v247
    %1210 = vmatpush1.msra.mxu0 %v246
    %1211 = vmatprep.subr.mxu0 %v249
    %1212 = vmatpush1.msra.mxu0 %v248
    %1213 = vmatprep.subr.mxu0 %v251
    %1214 = vmatpush1.msra.mxu0 %v250
    %1215 = vmatprep.subr.mxu0 %v253
    %1216 = vmatpush1.msra.mxu0 %v252
    %1217 = vmatprep.subr.mxu0 %v255
    %1218 = vmatpush1.msra.mxu0 %v254
    %1219 = vmatprep.subr.mxu0 %v257
    %1220 = vmatpush1.msra.mxu0 %v256
    %1221 = vmatprep.subr.mxu0 %v259
    %1222 = vmatpush1.msra.mxu0 %v258
    %1223 = vmatprep.subr.mxu0 %v261
    %1224 = vmatpush1.msra.mxu0 %v260
    %1225 = vmatprep.subr.mxu0 0.0
    %1226 = vmatpush1.msra.mxu0 0.0
    %1227 = vmatprep.subr.mxu0 0.0
    %1228 = vmatpush1.msra.mxu0 0.0
    %1229 = vmatprep.subr.mxu0 0.0
    %1230 = vmatpush1.msra.mxu0 0.0
    %1231 = vmatprep.subr.mxu0 0.0
    %1232 = vmatpush1.msra.mxu0 0.0
    %1233 = vmatprep.subr.mxu0 0.0
    %1234 = vmatpush1.msra.mxu0 0.0
    %1235 = vmatprep.subr.mxu0 0.0
    %1236 = vmatpush1.msra.mxu0 0.0
    %1237 = vmatprep.subr.mxu0 0.0
    %1238 = vmatpush1.msra.mxu0 0.0
    %1239 = vmatprep.subr.mxu0 0.0
    %1240 = vmatpush1.msra.mxu0 0.0
    %1241 = vmatprep.subr.mxu0 0.0
    %1242 = vmatpush1.msra.mxu0 0.0
    %1243 = vmatprep.subr.mxu0 0.0
    %1244 = vmatpush1.msra.mxu0 0.0
    %1245 = vmatprep.subr.mxu0 0.0
    %1246 = vmatpush1.msra.mxu0 0.0
    %1247 = vmatprep.subr.mxu0 0.0
    %1248 = vmatpush1.msra.mxu0 0.0
    %1249 = vmatprep.subr.mxu0 0.0
    %1250 = vmatpush1.msra.mxu0 0.0
    %1251 = vmatprep.subr.mxu0 0.0
    %1252 = vmatpush1.msra.mxu0 0.0
    %1253 = vmatprep.mubr.f32.mxu0 %v850
    %1254 = vmatmul.mubr.f32.gmra.mrb[0].mxu0 %v847
    %v1255 = vpop.f32.mrb[0].mxu0
    %v1256 = vadd.f32 0.0, %v1255
    %v1257 = vpop.f32.mrb[0].mxu0
    %v1258 = vadd.f32 0.0, %v1257
    %1259 = vdwg.mxu0
    %1260 = vmatprep.subr.mxu0 %v188
    %1261 = vmatpush1.msra.mxu0 %v187
    %1262 = vmatprep.subr.mxu0 %v190
    %1263 = vmatpush1.msra.mxu0 %v189
    %1264 = vmatprep.subr.mxu0 %v192
    %1265 = vmatpush1.msra.mxu0 %v191
    %1266 = vmatprep.subr.mxu0 %v194
    %1267 = vmatpush1.msra.mxu0 %v193
    %1268 = vmatprep.subr.mxu0 %v196
    %1269 = vmatpush1.msra.mxu0 %v195
    %1270 = vmatprep.subr.mxu0 %v198
    %1271 = vmatpush1.msra.mxu0 %v197
    %1272 = vmatprep.subr.mxu0 %v200
    %1273 = vmatpush1.msra.mxu0 %v199
    %1274 = vmatprep.subr.mxu0 %v202
    %1275 = vmatpush1.msra.mxu0 %v201
    %1276 = vmatprep.subr.mxu0 %v204
    %1277 = vmatpush1.msra.mxu0 %v203
    %1278 = vmatprep.subr.mxu0 %v206
    %1279 = vmatpush1.msra.mxu0 %v205
    %1280 = vmatprep.subr.mxu0 %v208
    %1281 = vmatpush1.msra.mxu0 %v207
    %1282 = vmatprep.subr.mxu0 %v210
    %1283 = vmatpush1.msra.mxu0 %v209
    %1284 = vmatprep.subr.mxu0 %v212
    %1285 = vmatpush1.msra.mxu0 %v211
    %1286 = vmatprep.subr.mxu0 %v214
    %1287 = vmatpush1.msra.mxu0 %v213
    %1288 = vmatprep.subr.mxu0 %v216
    %1289 = vmatpush1.msra.mxu0 %v215
    %1290 = vmatprep.subr.mxu0 %v218
    %1291 = vmatpush1.msra.mxu0 %v217
    %1292 = vmatprep.subr.mxu0 %v220
    %1293 = vmatpush1.msra.mxu0 %v219
    %1294 = vmatprep.subr.mxu0 %v222
    %1295 = vmatpush1.msra.mxu0 %v221
    %1296 = vmatprep.subr.mxu0 0.0
    %1297 = vmatpush1.msra.mxu0 0.0
    %1298 = vmatprep.subr.mxu0 0.0
    %1299 = vmatpush1.msra.mxu0 0.0
    %1300 = vmatprep.subr.mxu0 0.0
    %1301 = vmatpush1.msra.mxu0 0.0
    %1302 = vmatprep.subr.mxu0 0.0
    %1303 = vmatpush1.msra.mxu0 0.0
    %1304 = vmatprep.subr.mxu0 0.0
    %1305 = vmatpush1.msra.mxu0 0.0
    %1306 = vmatprep.subr.mxu0 0.0
    %1307 = vmatpush1.msra.mxu0 0.0
    %1308 = vmatprep.subr.mxu0 0.0
    %1309 = vmatpush1.msra.mxu0 0.0
    %1310 = vmatprep.subr.mxu0 0.0
    %1311 = vmatpush1.msra.mxu0 0.0
    %1312 = vmatprep.subr.mxu0 0.0
    %1313 = vmatpush1.msra.mxu0 0.0
    %1314 = vmatprep.subr.mxu0 0.0
    %1315 = vmatpush1.msra.mxu0 0.0
    %1316 = vmatprep.subr.mxu0 0.0
    %1317 = vmatpush1.msra.mxu0 0.0
    %1318 = vmatprep.subr.mxu0 0.0
    %1319 = vmatpush1.msra.mxu0 0.0
    %1320 = vmatprep.subr.mxu0 0.0
    %1321 = vmatpush1.msra.mxu0 0.0
    %1322 = vmatprep.subr.mxu0 0.0
    %1323 = vmatpush1.msra.mxu0 0.0
    %1324 = vmatprep.mubr.f32.mxu0 %v726
    %1325 = vmatmul.mubr.f32.gmra.mrb[0].mxu0 %v723
    %v1326 = vpop.f32.mrb[0].mxu0
    %v1327 = vadd.f32 %v1256, %v1326
    %v1328 = vpop.f32.mrb[0].mxu0
    %v1329 = vadd.f32 %v1258, %v1328
    %1330 = vdwg.mxu0
    %1331 = vmatprep.subr.mxu0 %v433
    %1332 = vmatpush1.msra.mxu0 %v432
    %1333 = vmatprep.subr.mxu0 %v435
    %1334 = vmatpush1.msra.mxu0 %v434
    %1335 = vmatprep.subr.mxu0 %v437
    %1336 = vmatpush1.msra.mxu0 %v436
    %1337 = vmatprep.subr.mxu0 %v439
    %1338 = vmatpush1.msra.mxu0 %v438
    %1339 = vmatprep.subr.mxu0 %v441
    %1340 = vmatpush1.msra.mxu0 %v440
    %1341 = vmatprep.subr.mxu0 %v443
    %1342 = vmatpush1.msra.mxu0 %v442
    %1343 = vmatprep.subr.mxu0 %v445
    %1344 = vmatpush1.msra.mxu0 %v444
    %1345 = vmatprep.subr.mxu0 %v447
    %1346 = vmatpush1.msra.mxu0 %v446
    %1347 = vmatprep.subr.mxu0 %v449
    %1348 = vmatpush1.msra.mxu0 %v448
    %1349 = vmatprep.subr.mxu0 %v451
    %1350 = vmatpush1.msra.mxu0 %v450
    %1351 = vmatprep.subr.mxu0 %v453
    %1352 = vmatpush1.msra.mxu0 %v452
    %1353 = vmatprep.subr.mxu0 %v455
    %1354 = vmatpush1.msra.mxu0 %v454
    %1355 = vmatprep.subr.mxu0 %v457
    %1356 = vmatpush1.msra.mxu0 %v456
    %1357 = vmatprep.subr.mxu0 %v459
    %1358 = vmatpush1.msra.mxu0 %v458
    %1359 = vmatprep.subr.mxu0 %v461
    %1360 = vmatpush1.msra.mxu0 %v460
    %1361 = vmatprep.subr.mxu0 %v463
    %1362 = vmatpush1.msra.mxu0 %v462
    %1363 = vmatprep.subr.mxu0 %v465
    %1364 = vmatpush1.msra.mxu0 %v464
    %1365 = vmatprep.subr.mxu0 %v467
    %1366 = vmatpush1.msra.mxu0 %v466
    %1367 = vmatprep.subr.mxu0 0.0
    %1368 = vmatpush1.msra.mxu0 0.0
    %1369 = vmatprep.subr.mxu0 0.0
    %1370 = vmatpush1.msra.mxu0 0.0
    %1371 = vmatprep.subr.mxu0 0.0
    %1372 = vmatpush1.msra.mxu0 0.0
    %1373 = vmatprep.subr.mxu0 0.0
    %1374 = vmatpush1.msra.mxu0 0.0
    %1375 = vmatprep.subr.mxu0 0.0
    %1376 = vmatpush1.msra.mxu0 0.0
    %1377 = vmatprep.subr.mxu0 0.0
    %1378 = vmatpush1.msra.mxu0 0.0
    %1379 = vmatprep.subr.mxu0 0.0
    %1380 = vmatpush1.msra.mxu0 0.0
    %1381 = vmatprep.subr.mxu0 0.0
    %1382 = vmatpush1.msra.mxu0 0.0
    %1383 = vmatprep.subr.mxu0 0.0
    %1384 = vmatpush1.msra.mxu0 0.0
    %1385 = vmatprep.subr.mxu0 0.0
    %1386 = vmatpush1.msra.mxu0 0.0
    %1387 = vmatprep.subr.mxu0 0.0
    %1388 = vmatpush1.msra.mxu0 0.0
    %1389 = vmatprep.subr.mxu0 0.0
    %1390 = vmatpush1.msra.mxu0 0.0
    %1391 = vmatprep.subr.mxu0 0.0
    %1392 = vmatpush1.msra.mxu0 0.0
    %1393 = vmatprep.subr.mxu0 0.0
    %1394 = vmatpush1.msra.mxu0 0.0
    %1395 = vmatprep.mubr.f32.mxu0 %v974
    %1396 = vmatmul.mubr.f32.gmra.mrb[0].mxu0 %v971
    %v1397 = vpop.f32.mrb[0].mxu0
    %v1398 = vadd.f32 0.0, %v1397
    %v1399 = vpop.f32.mrb[0].mxu0
    %v1400 = vadd.f32 0.0, %v1399
    %1401 = vdwg.mxu0
    %v1402 = vadd.f32 %v1327, %v1398
    %v1403 = vadd.f32 %v1329, %v1400
    %1404 = vmatprep.subr.mxu0 %v557
    %1405 = vmatpush1.msra.mxu0 %v556
    %1406 = vmatprep.subr.mxu0 %v559
    %1407 = vmatpush1.msra.mxu0 %v558
    %1408 = vmatprep.subr.mxu0 %v561
    %1409 = vmatpush1.msra.mxu0 %v560
    %1410 = vmatprep.subr.mxu0 %v563
    %1411 = vmatpush1.msra.mxu0 %v562
    %1412 = vmatprep.subr.mxu0 %v565
    %1413 = vmatpush1.msra.mxu0 %v564
    %1414 = vmatprep.subr.mxu0 %v567
    %1415 = vmatpush1.msra.mxu0 %v566
    %1416 = vmatprep.subr.mxu0 %v569
    %1417 = vmatpush1.msra.mxu0 %v568
    %1418 = vmatprep.subr.mxu0 %v571
    %1419 = vmatpush1.msra.mxu0 %v570
    %1420 = vmatprep.subr.mxu0 %v573
    %1421 = vmatpush1.msra.mxu0 %v572
    %1422 = vmatprep.subr.mxu0 %v575
    %1423 = vmatpush1.msra.mxu0 %v574
    %1424 = vmatprep.subr.mxu0 %v577
    %1425 = vmatpush1.msra.mxu0 %v576
    %1426 = vmatprep.subr.mxu0 %v579
    %1427 = vmatpush1.msra.mxu0 %v578
    %1428 = vmatprep.subr.mxu0 %v581
    %1429 = vmatpush1.msra.mxu0 %v580
    %1430 = vmatprep.subr.mxu0 %v583
    %1431 = vmatpush1.msra.mxu0 %v582
    %1432 = vmatprep.subr.mxu0 %v585
    %1433 = vmatpush1.msra.mxu0 %v584
    %1434 = vmatprep.subr.mxu0 %v587
    %1435 = vmatpush1.msra.mxu0 %v586
    %1436 = vmatprep.subr.mxu0 %v589
    %1437 = vmatpush1.msra.mxu0 %v588
    %1438 = vmatprep.subr.mxu0 %v591
    %1439 = vmatpush1.msra.mxu0 %v590
    %1440 = vmatprep.subr.mxu0 0.0
    %1441 = vmatpush1.msra.mxu0 0.0
    %1442 = vmatprep.subr.mxu0 0.0
    %1443 = vmatpush1.msra.mxu0 0.0
    %1444 = vmatprep.subr.mxu0 0.0
    %1445 = vmatpush1.msra.mxu0 0.0
    %1446 = vmatprep.subr.mxu0 0.0
    %1447 = vmatpush1.msra.mxu0 0.0
    %1448 = vmatprep.subr.mxu0 0.0
    %1449 = vmatpush1.msra.mxu0 0.0
    %1450 = vmatprep.subr.mxu0 0.0
    %1451 = vmatpush1.msra.mxu0 0.0
    %1452 = vmatprep.subr.mxu0 0.0
    %1453 = vmatpush1.msra.mxu0 0.0
    %1454 = vmatprep.subr.mxu0 0.0
    %1455 = vmatpush1.msra.mxu0 0.0
    %1456 = vmatprep.subr.mxu0 0.0
    %1457 = vmatpush1.msra.mxu0 0.0
    %1458 = vmatprep.subr.mxu0 0.0
    %1459 = vmatpush1.msra.mxu0 0.0
    %1460 = vmatprep.subr.mxu0 0.0
    %1461 = vmatpush1.msra.mxu0 0.0
    %1462 = vmatprep.subr.mxu0 0.0
    %1463 = vmatpush1.msra.mxu0 0.0
    %1464 = vmatprep.subr.mxu0 0.0
    %1465 = vmatpush1.msra.mxu0 0.0
    %1466 = vmatprep.subr.mxu0 0.0
    %1467 = vmatpush1.msra.mxu0 0.0
    %1468 = vmatprep.mubr.f32.mxu0 %v1098
    %1469 = vmatmul.mubr.f32.gmra.mrb[0].mxu0 %v1095
    %v1470 = vpop.f32.mrb[0].mxu0
    %v1471 = vadd.f32 0.0, %v1470
    %v1472 = vpop.f32.mrb[0].mxu0
    %v1473 = vadd.f32 0.0, %v1472
    %1474 = vdwg.mxu0
    %v1475 = vadd.f32 %v1402, %v1471
    %v1476 = vadd.f32 %v1403, %v1473
    %s1477 = scalar_lea.vmem %s0, 32
    %v1478 = vld [vmem:[%s1477] sm:$0xf]
    %v1481 = vunpack.c.l.s4 1983009808
    %v1482 = vunpack.c.0.s8 %v1481
    %v1483 = vlaneseq
    %v1484 = vshrl.u32 %v1483, 7
    %v1485 = vsub.s32 %v1482, %v1484
    %v1486 = vrot.slane %v1478, %v1485
    %v1487 = vcombine.high %v1486, %v1486
    %v1489 = vsel %vm272, %v1487, 0
    %1491 = vmatprep.subr.mxu0 %v681
    %1492 = vmatpush1.msra.mxu0 %v680
    %1493 = vmatprep.subr.mxu0 %v683
    %1494 = vmatpush1.msra.mxu0 %v682
    %1495 = vmatprep.subr.mxu0 %v685
    %1496 = vmatpush1.msra.mxu0 %v684
    %1497 = vmatprep.subr.mxu0 %v687
    %1498 = vmatpush1.msra.mxu0 %v686
    %1499 = vmatprep.subr.mxu0 %v689
    %1500 = vmatpush1.msra.mxu0 %v688
    %1501 = vmatprep.subr.mxu0 %v691
    %1502 = vmatpush1.msra.mxu0 %v690
    %1503 = vmatprep.subr.mxu0 %v693
    %1504 = vmatpush1.msra.mxu0 %v692
    %1505 = vmatprep.subr.mxu0 %v695
    %1506 = vmatpush1.msra.mxu0 %v694
    %1507 = vmatprep.subr.mxu0 %v697
    %1508 = vmatpush1.msra.mxu0 %v696
    %1509 = vmatprep.subr.mxu0 %v699
    %1510 = vmatpush1.msra.mxu0 %v698
    %1511 = vmatprep.subr.mxu0 %v701
    %1512 = vmatpush1.msra.mxu0 %v700
    %1513 = vmatprep.subr.mxu0 %v703
    %1514 = vmatpush1.msra.mxu0 %v702
    %1515 = vmatprep.subr.mxu0 %v705
    %1516 = vmatpush1.msra.mxu0 %v704
    %1517 = vmatprep.subr.mxu0 %v707
    %1518 = vmatpush1.msra.mxu0 %v706
    %1519 = vmatprep.subr.mxu0 %v709
    %1520 = vmatpush1.msra.mxu0 %v708
    %1521 = vmatprep.subr.mxu0 %v711
    %1522 = vmatpush1.msra.mxu0 %v710
    %1523 = vmatprep.subr.mxu0 %v713
    %1524 = vmatpush1.msra.mxu0 %v712
    %1525 = vmatprep.subr.mxu0 %v715
    %1526 = vmatpush1.msra.mxu0 %v714
    %1527 = vmatprep.subr.mxu0 0.0
    %1528 = vmatpush1.msra.mxu0 0.0
    %1529 = vmatprep.subr.mxu0 0.0
    %1530 = vmatpush1.msra.mxu0 0.0
    %1531 = vmatprep.subr.mxu0 0.0
    %1532 = vmatpush1.msra.mxu0 0.0
    %1533 = vmatprep.subr.mxu0 0.0
    %1534 = vmatpush1.msra.mxu0 0.0
    %1535 = vmatprep.subr.mxu0 0.0
    %1536 = vmatpush1.msra.mxu0 0.0
    %1537 = vmatprep.subr.mxu0 0.0
    %1538 = vmatpush1.msra.mxu0 0.0
    %1539 = vmatprep.subr.mxu0 0.0
    %1540 = vmatpush1.msra.mxu0 0.0
    %1541 = vmatprep.subr.mxu0 0.0
    %1542 = vmatpush1.msra.mxu0 0.0
    %1543 = vmatprep.subr.mxu0 0.0
    %1544 = vmatpush1.msra.mxu0 0.0
    %1545 = vmatprep.subr.mxu0 0.0
    %1546 = vmatpush1.msra.mxu0 0.0
    %1547 = vmatprep.subr.mxu0 0.0
    %1548 = vmatpush1.msra.mxu0 0.0
    %1549 = vmatprep.subr.mxu0 0.0
    %1550 = vmatpush1.msra.mxu0 0.0
    %1551 = vmatprep.subr.mxu0 0.0
    %1552 = vmatpush1.msra.mxu0 0.0
    %1553 = vmatprep.subr.mxu0 0.0
    %1554 = vmatpush1.msra.mxu0 0.0
    %1555 = vmatprep.mubr.f32.mxu0 %v1489
    %1556 = vmatmul.mubr.f32.gmra.mrb[0].mxu0 %v1486
    %v1557 = vpop.f32.mrb[0].mxu0
    %v1558 = vadd.f32 0.0, %v1557
    %v1559 = vpop.f32.mrb[0].mxu0
    %v1560 = vadd.f32 0.0, %v1559
    %1561 = vdwg.mxu0
    %v1562 = vadd.f32 %v1475, %v1558
    %v1563 = vadd.f32 %v1476, %v1560
    %s1564 = scalar_lea.vmem %s0, 36
    %v1565 = vld [vmem:[%s1564] sm:$0xf]
    %v1568 = vunpack.c.l.s4 1983009808
    %v1569 = vunpack.c.0.s8 %v1568
    %v1570 = vlaneseq
    %v1571 = vshrl.u32 %v1570, 7
    %v1572 = vsub.s32 %v1569, %v1571
    %v1573 = vrot.slane %v1565, %v1572
    %v1574 = vcombine.high %v1573, %v1573
    %v1576 = vsel %vm272, %v1574, 0
    %1578 = vmatprep.subr.mxu0 %v805
    %1579 = vmatpush1.msra.mxu0 %v804
    %1580 = vmatprep.subr.mxu0 %v807
    %1581 = vmatpush1.msra.mxu0 %v806
    %1582 = vmatprep.subr.mxu0 %v809
    %1583 = vmatpush1.msra.mxu0 %v808
    %1584 = vmatprep.subr.mxu0 %v811
    %1585 = vmatpush1.msra.mxu0 %v810
    %1586 = vmatprep.subr.mxu0 %v813
    %1587 = vmatpush1.msra.mxu0 %v812
    %1588 = vmatprep.subr.mxu0 %v815
    %1589 = vmatpush1.msra.mxu0 %v814
    %1590 = vmatprep.subr.mxu0 %v817
    %1591 = vmatpush1.msra.mxu0 %v816
    %1592 = vmatprep.subr.mxu0 %v819
    %1593 = vmatpush1.msra.mxu0 %v818
    %1594 = vmatprep.subr.mxu0 %v821
    %1595 = vmatpush1.msra.mxu0 %v820
    %1596 = vmatprep.subr.mxu0 %v823
    %1597 = vmatpush1.msra.mxu0 %v822
    %1598 = vmatprep.subr.mxu0 %v825
    %1599 = vmatpush1.msra.mxu0 %v824
    %1600 = vmatprep.subr.mxu0 %v827
    %1601 = vmatpush1.msra.mxu0 %v826
    %1602 = vmatprep.subr.mxu0 %v829
    %1603 = vmatpush1.msra.mxu0 %v828
    %1604 = vmatprep.subr.mxu0 %v831
    %1605 = vmatpush1.msra.mxu0 %v830
    %1606 = vmatprep.subr.mxu0 %v833
    %1607 = vmatpush1.msra.mxu0 %v832
    %1608 = vmatprep.subr.mxu0 %v835
    %1609 = vmatpush1.msra.mxu0 %v834
    %1610 = vmatprep.subr.mxu0 %v837
    %1611 = vmatpush1.msra.mxu0 %v836
    %1612 = vmatprep.subr.mxu0 %v839
    %1613 = vmatpush1.msra.mxu0 %v838
    %1614 = vmatprep.subr.mxu0 0.0
    %1615 = vmatpush1.msra.mxu0 0.0
    %1616 = vmatprep.subr.mxu0 0.0
    %1617 = vmatpush1.msra.mxu0 0.0
    %1618 = vmatprep.subr.mxu0 0.0
    %1619 = vmatpush1.msra.mxu0 0.0
    %1620 = vmatprep.subr.mxu0 0.0
    %1621 = vmatpush1.msra.mxu0 0.0
    %1622 = vmatprep.subr.mxu0 0.0
    %1623 = vmatpush1.msra.mxu0 0.0
    %1624 = vmatprep.subr.mxu0 0.0
    %1625 = vmatpush1.msra.mxu0 0.0
    %1626 = vmatprep.subr.mxu0 0.0
    %1627 = vmatpush1.msra.mxu0 0.0
    %1628 = vmatprep.subr.mxu0 0.0
    %1629 = vmatpush1.msra.mxu0 0.0
    %1630 = vmatprep.subr.mxu0 0.0
    %1631 = vmatpush1.msra.mxu0 0.0
    %1632 = vmatprep.subr.mxu0 0.0
    %1633 = vmatpush1.msra.mxu0 0.0
    %1634 = vmatprep.subr.mxu0 0.0
    %1635 = vmatpush1.msra.mxu0 0.0
    %1636 = vmatprep.subr.mxu0 0.0
    %1637 = vmatpush1.msra.mxu0 0.0
    %1638 = vmatprep.subr.mxu0 0.0
    %1639 = vmatpush1.msra.mxu0 0.0
    %1640 = vmatprep.subr.mxu0 0.0
    %1641 = vmatpush1.msra.mxu0 0.0
    %1642 = vmatprep.mubr.f32.mxu0 %v1576
    %1643 = vmatmul.mubr.f32.gmra.mrb[0].mxu0 %v1573
    %v1644 = vpop.f32.mrb[0].mxu0
    %v1645 = vadd.f32 0.0, %v1644
    %v1646 = vpop.f32.mrb[0].mxu0
    %v1647 = vadd.f32 0.0, %v1646
    %1648 = vdwg.mxu0
    %v1649 = vadd.f32 %v1562, %v1645
    %v1650 = vadd.f32 %v1563, %v1647
    %s1651 = scalar_lea.vmem %s0, 40
    %v1652 = vld [vmem:[%s1651] sm:$0xf]
    %v1655 = vunpack.c.l.s4 1983009808
    %v1656 = vunpack.c.0.s8 %v1655
    %v1657 = vlaneseq
    %v1658 = vshrl.u32 %v1657, 7
    %v1659 = vsub.s32 %v1656, %v1658
    %v1660 = vrot.slane %v1652, %v1659
    %v1661 = vcombine.high %v1660, %v1660
    %v1663 = vsel %vm272, %v1661, 0
    %1665 = vmatprep.subr.mxu0 %v929
    %1666 = vmatpush1.msra.mxu0 %v928
    %1667 = vmatprep.subr.mxu0 %v931
    %1668 = vmatpush1.msra.mxu0 %v930
    %1669 = vmatprep.subr.mxu0 %v933
    %1670 = vmatpush1.msra.mxu0 %v932
    %1671 = vmatprep.subr.mxu0 %v935
    %1672 = vmatpush1.msra.mxu0 %v934
    %1673 = vmatprep.subr.mxu0 %v937
    %1674 = vmatpush1.msra.mxu0 %v936
    %1675 = vmatprep.subr.mxu0 %v939
    %1676 = vmatpush1.msra.mxu0 %v938
    %1677 = vmatprep.subr.mxu0 %v941
    %1678 = vmatpush1.msra.mxu0 %v940
    %1679 = vmatprep.subr.mxu0 %v943
    %1680 = vmatpush1.msra.mxu0 %v942
    %1681 = vmatprep.subr.mxu0 %v945
    %1682 = vmatpush1.msra.mxu0 %v944
    %1683 = vmatprep.subr.mxu0 %v947
    %1684 = vmatpush1.msra.mxu0 %v946
    %1685 = vmatprep.subr.mxu0 %v949
    %1686 = vmatpush1.msra.mxu0 %v948
    %1687 = vmatprep.subr.mxu0 %v951
    %1688 = vmatpush1.msra.mxu0 %v950
    %1689 = vmatprep.subr.mxu0 %v953
    %1690 = vmatpush1.msra.mxu0 %v952
    %1691 = vmatprep.subr.mxu0 %v955
    %1692 = vmatpush1.msra.mxu0 %v954
    %1693 = vmatprep.subr.mxu0 %v957
    %1694 = vmatpush1.msra.mxu0 %v956
    %1695 = vmatprep.subr.mxu0 %v959
    %1696 = vmatpush1.msra.mxu0 %v958
    %1697 = vmatprep.subr.mxu0 %v961
    %1698 = vmatpush1.msra.mxu0 %v960
    %1699 = vmatprep.subr.mxu0 %v963
    %1700 = vmatpush1.msra.mxu0 %v962
    %1701 = vmatprep.subr.mxu0 0.0
    %1702 = vmatpush1.msra.mxu0 0.0
    %1703 = vmatprep.subr.mxu0 0.0
    %1704 = vmatpush1.msra.mxu0 0.0
    %1705 = vmatprep.subr.mxu0 0.0
    %1706 = vmatpush1.msra.mxu0 0.0
    %1707 = vmatprep.subr.mxu0 0.0
    %1708 = vmatpush1.msra.mxu0 0.0
    %1709 = vmatprep.subr.mxu0 0.0
    %1710 = vmatpush1.msra.mxu0 0.0
    %1711 = vmatprep.subr.mxu0 0.0
    %1712 = vmatpush1.msra.mxu0 0.0
    %1713 = vmatprep.subr.mxu0 0.0
    %1714 = vmatpush1.msra.mxu0 0.0
    %1715 = vmatprep.subr.mxu0 0.0
    %1716 = vmatpush1.msra.mxu0 0.0
    %1717 = vmatprep.subr.mxu0 0.0
    %1718 = vmatpush1.msra.mxu0 0.0
    %1719 = vmatprep.subr.mxu0 0.0
    %1720 = vmatpush1.msra.mxu0 0.0
    %1721 = vmatprep.subr.mxu0 0.0
    %1722 = vmatpush1.msra.mxu0 0.0
    %1723 = vmatprep.subr.mxu0 0.0
    %1724 = vmatpush1.msra.mxu0 0.0
    %1725 = vmatprep.subr.mxu0 0.0
    %1726 = vmatpush1.msra.mxu0 0.0
    %1727 = vmatprep.subr.mxu0 0.0
    %1728 = vmatpush1.msra.mxu0 0.0
    %1729 = vmatprep.mubr.f32.mxu0 %v1663
    %1730 = vmatmul.mubr.f32.gmra.mrb[0].mxu0 %v1660
    %v1731 = vpop.f32.mrb[0].mxu0
    %v1732 = vadd.f32 0.0, %v1731
    %v1733 = vpop.f32.mrb[0].mxu0
    %v1734 = vadd.f32 0.0, %v1733
    %1735 = vdwg.mxu0
    %v1736 = vadd.f32 %v1649, %v1732
    %v1737 = vadd.f32 %v1650, %v1734
    %s1738 = scalar_lea.vmem %s0, 44
    %v1739 = vld [vmem:[%s1738] sm:$0xf]
    %v1742 = vunpack.c.l.s4 1983009808
    %v1743 = vunpack.c.0.s8 %v1742
    %v1744 = vlaneseq
    %v1745 = vshrl.u32 %v1744, 7
    %v1746 = vsub.s32 %v1743, %v1745
    %v1747 = vrot.slane %v1739, %v1746
    %v1748 = vcombine.high %v1747, %v1747
    %v1750 = vsel %vm272, %v1748, 0
    %1752 = vmatprep.subr.mxu0 %v1053
    %1753 = vmatpush1.msra.mxu0 %v1052
    %1754 = vmatprep.subr.mxu0 %v1055
    %1755 = vmatpush1.msra.mxu0 %v1054
    %1756 = vmatprep.subr.mxu0 %v1057
    %1757 = vmatpush1.msra.mxu0 %v1056
    %1758 = vmatprep.subr.mxu0 %v1059
    %1759 = vmatpush1.msra.mxu0 %v1058
    %1760 = vmatprep.subr.mxu0 %v1061
    %1761 = vmatpush1.msra.mxu0 %v1060
    %1762 = vmatprep.subr.mxu0 %v1063
    %1763 = vmatpush1.msra.mxu0 %v1062
    %1764 = vmatprep.subr.mxu0 %v1065
    %1765 = vmatpush1.msra.mxu0 %v1064
    %1766 = vmatprep.subr.mxu0 %v1067
    %1767 = vmatpush1.msra.mxu0 %v1066
    %1768 = vmatprep.subr.mxu0 %v1069
    %1769 = vmatpush1.msra.mxu0 %v1068
    %1770 = vmatprep.subr.mxu0 %v1071
    %1771 = vmatpush1.msra.mxu0 %v1070
    %1772 = vmatprep.subr.mxu0 %v1073
    %1773 = vmatpush1.msra.mxu0 %v1072
    %1774 = vmatprep.subr.mxu0 %v1075
    %1775 = vmatpush1.msra.mxu0 %v1074
    %1776 = vmatprep.subr.mxu0 %v1077
    %1777 = vmatpush1.msra.mxu0 %v1076
    %1778 = vmatprep.subr.mxu0 %v1079
    %1779 = vmatpush1.msra.mxu0 %v1078
    %1780 = vmatprep.subr.mxu0 %v1081
    %1781 = vmatpush1.msra.mxu0 %v1080
    %1782 = vmatprep.subr.mxu0 %v1083
    %1783 = vmatpush1.msra.mxu0 %v1082
    %1784 = vmatprep.subr.mxu0 %v1085
    %1785 = vmatpush1.msra.mxu0 %v1084
    %1786 = vmatprep.subr.mxu0 %v1087
    %1787 = vmatpush1.msra.mxu0 %v1086
    %1788 = vmatprep.subr.mxu0 0.0
    %1789 = vmatpush1.msra.mxu0 0.0
    %1790 = vmatprep.subr.mxu0 0.0
    %1791 = vmatpush1.msra.mxu0 0.0
    %1792 = vmatprep.subr.mxu0 0.0
    %1793 = vmatpush1.msra.mxu0 0.0
    %1794 = vmatprep.subr.mxu0 0.0
    %1795 = vmatpush1.msra.mxu0 0.0
    %1796 = vmatprep.subr.mxu0 0.0
    %1797 = vmatpush1.msra.mxu0 0.0
    %1798 = vmatprep.subr.mxu0 0.0
    %1799 = vmatpush1.msra.mxu0 0.0
    %1800 = vmatprep.subr.mxu0 0.0
    %1801 = vmatpush1.msra.mxu0 0.0
    %1802 = vmatprep.subr.mxu0 0.0
    %1803 = vmatpush1.msra.mxu0 0.0
    %1804 = vmatprep.subr.mxu0 0.0
    %1805 = vmatpush1.msra.mxu0 0.0
    %1806 = vmatprep.subr.mxu0 0.0
    %1807 = vmatpush1.msra.mxu0 0.0
    %1808 = vmatprep.subr.mxu0 0.0
    %1809 = vmatpush1.msra.mxu0 0.0
    %1810 = vmatprep.subr.mxu0 0.0
    %1811 = vmatpush1.msra.mxu0 0.0
    %1812 = vmatprep.subr.mxu0 0.0
    %1813 = vmatpush1.msra.mxu0 0.0
    %1814 = vmatprep.subr.mxu0 0.0
    %1815 = vmatpush1.msra.mxu0 0.0
    %1816 = vmatprep.mubr.f32.mxu0 %v1750
    %1817 = vmatmul.mubr.f32.gmra.mrb[0].mxu0 %v1747
    %v1818 = vpop.f32.mrb[0].mxu0
    %v1819 = vadd.f32 0.0, %v1818
    %v1820 = vpop.f32.mrb[0].mxu0
    %v1821 = vadd.f32 0.0, %v1820
    %1822 = vdwg.mxu0
    %v1823 = vadd.f32 %v1736, %v1819
    %v1824 = vadd.f32 %v1737, %v1821
    %v1825 = vadd.f32 %v1823, %v1178
    %v1826 = vadd.f32 %v1824, %v1182
    %v1827 = vmax.f32 %v1825, 0.0
    %v1828 = vmax.f32 %v1826, 0.0
    %1829 = vmatprep.subr.mxu0 %v227
    %1830 = vmatpush1.msra.mxu0 %v226
    %1831 = vmatprep.subr.mxu0 %v229
    %1832 = vmatpush1.msra.mxu0 %v228
    %1833 = vmatprep.subr.mxu0 %v231
    %1834 = vmatpush1.msra.mxu0 %v230
    %1835 = vmatprep.subr.mxu0 %v233
    %1836 = vmatpush1.msra.mxu0 %v232
    %1837 = vmatprep.subr.mxu0 %v235
    %1838 = vmatpush1.msra.mxu0 %v234
    %1839 = vmatprep.subr.mxu0 %v237
    %1840 = vmatpush1.msra.mxu0 %v236
    %1841 = vmatprep.subr.mxu0 %v239
    %1842 = vmatpush1.msra.mxu0 %v238
    %1843 = vmatprep.subr.mxu0 %v241
    %1844 = vmatpush1.msra.mxu0 %v240
    %1845 = vmatprep.subr.mxu0 %v243
    %1846 = vmatpush1.msra.mxu0 %v242
    %1847 = vmatprep.subr.mxu0 %v245
    %1848 = vmatpush1.msra.mxu0 %v244
    %1849 = vmatprep.subr.mxu0 %v247
    %1850 = vmatpush1.msra.mxu0 %v246
    %1851 = vmatprep.subr.mxu0 %v249
    %1852 = vmatpush1.msra.mxu0 %v248
    %1853 = vmatprep.subr.mxu0 %v251
    %1854 = vmatpush1.msra.mxu0 %v250
    %1855 = vmatprep.subr.mxu0 %v253
    %1856 = vmatpush1.msra.mxu0 %v252
    %1857 = vmatprep.subr.mxu0 %v255
    %1858 = vmatpush1.msra.mxu0 %v254
    %1859 = vmatprep.subr.mxu0 %v257
    %1860 = vmatpush1.msra.mxu0 %v256
    %1861 = vmatprep.subr.mxu0 %v259
    %1862 = vmatpush1.msra.mxu0 %v258
    %1863 = vmatprep.subr.mxu0 %v261
    %1864 = vmatpush1.msra.mxu0 %v260
    %1865 = vmatprep.subr.mxu0 0.0
    %1866 = vmatpush1.msra.mxu0 0.0
    %1867 = vmatprep.subr.mxu0 0.0
    %1868 = vmatpush1.msra.mxu0 0.0
    %1869 = vmatprep.subr.mxu0 0.0
    %1870 = vmatpush1.msra.mxu0 0.0
    %1871 = vmatprep.subr.mxu0 0.0
    %1872 = vmatpush1.msra.mxu0 0.0
    %1873 = vmatprep.subr.mxu0 0.0
    %1874 = vmatpush1.msra.mxu0 0.0
    %1875 = vmatprep.subr.mxu0 0.0
    %1876 = vmatpush1.msra.mxu0 0.0
    %1877 = vmatprep.subr.mxu0 0.0
    %1878 = vmatpush1.msra.mxu0 0.0
    %1879 = vmatprep.subr.mxu0 0.0
    %1880 = vmatpush1.msra.mxu0 0.0
    %1881 = vmatprep.subr.mxu0 0.0
    %1882 = vmatpush1.msra.mxu0 0.0
    %1883 = vmatprep.subr.mxu0 0.0
    %1884 = vmatpush1.msra.mxu0 0.0
    %1885 = vmatprep.subr.mxu0 0.0
    %1886 = vmatpush1.msra.mxu0 0.0
    %1887 = vmatprep.subr.mxu0 0.0
    %1888 = vmatpush1.msra.mxu0 0.0
    %1889 = vmatprep.subr.mxu0 0.0
    %1890 = vmatpush1.msra.mxu0 0.0
    %1891 = vmatprep.subr.mxu0 0.0
    %1892 = vmatpush1.msra.mxu0 0.0
    %1893 = vmatprep.mubr.f32.mxu0 %v1576
    %1894 = vmatmul.mubr.f32.gmra.mrb[0].mxu0 %v1573
    %v1895 = vpop.f32.mrb[0].mxu0
    %v1896 = vadd.f32 0.0, %v1895
    %v1897 = vpop.f32.mrb[0].mxu0
    %v1898 = vadd.f32 0.0, %v1897
    %1899 = vdwg.mxu0
    %1900 = vmatprep.subr.mxu0 %v188
    %1901 = vmatpush1.msra.mxu0 %v187
    %1902 = vmatprep.subr.mxu0 %v190
    %1903 = vmatpush1.msra.mxu0 %v189
    %1904 = vmatprep.subr.mxu0 %v192
    %1905 = vmatpush1.msra.mxu0 %v191
    %1906 = vmatprep.subr.mxu0 %v194
    %1907 = vmatpush1.msra.mxu0 %v193
    %1908 = vmatprep.subr.mxu0 %v196
    %1909 = vmatpush1.msra.mxu0 %v195
    %1910 = vmatprep.subr.mxu0 %v198
    %1911 = vmatpush1.msra.mxu0 %v197
    %1912 = vmatprep.subr.mxu0 %v200
    %1913 = vmatpush1.msra.mxu0 %v199
    %1914 = vmatprep.subr.mxu0 %v202
    %1915 = vmatpush1.msra.mxu0 %v201
    %1916 = vmatprep.subr.mxu0 %v204
    %1917 = vmatpush1.msra.mxu0 %v203
    %1918 = vmatprep.subr.mxu0 %v206
    %1919 = vmatpush1.msra.mxu0 %v205
    %1920 = vmatprep.subr.mxu0 %v208
    %1921 = vmatpush1.msra.mxu0 %v207
    %1922 = vmatprep.subr.mxu0 %v210
    %1923 = vmatpush1.msra.mxu0 %v209
    %1924 = vmatprep.subr.mxu0 %v212
    %1925 = vmatpush1.msra.mxu0 %v211
    %1926 = vmatprep.subr.mxu0 %v214
    %1927 = vmatpush1.msra.mxu0 %v213
    %1928 = vmatprep.subr.mxu0 %v216
    %1929 = vmatpush1.msra.mxu0 %v215
    %1930 = vmatprep.subr.mxu0 %v218
    %1931 = vmatpush1.msra.mxu0 %v217
    %1932 = vmatprep.subr.mxu0 %v220
    %1933 = vmatpush1.msra.mxu0 %v219
    %1934 = vmatprep.subr.mxu0 %v222
    %1935 = vmatpush1.msra.mxu0 %v221
    %1936 = vmatprep.subr.mxu0 0.0
    %1937 = vmatpush1.msra.mxu0 0.0
    %1938 = vmatprep.subr.mxu0 0.0
    %1939 = vmatpush1.msra.mxu0 0.0
    %1940 = vmatprep.subr.mxu0 0.0
    %1941 = vmatpush1.msra.mxu0 0.0
    %1942 = vmatprep.subr.mxu0 0.0
    %1943 = vmatpush1.msra.mxu0 0.0
    %1944 = vmatprep.subr.mxu0 0.0
    %1945 = vmatpush1.msra.mxu0 0.0
    %1946 = vmatprep.subr.mxu0 0.0
    %1947 = vmatpush1.msra.mxu0 0.0
    %1948 = vmatprep.subr.mxu0 0.0
    %1949 = vmatpush1.msra.mxu0 0.0
    %1950 = vmatprep.subr.mxu0 0.0
    %1951 = vmatpush1.msra.mxu0 0.0
    %1952 = vmatprep.subr.mxu0 0.0
    %1953 = vmatpush1.msra.mxu0 0.0
    %1954 = vmatprep.subr.mxu0 0.0
    %1955 = vmatpush1.msra.mxu0 0.0
    %1956 = vmatprep.subr.mxu0 0.0
    %1957 = vmatpush1.msra.mxu0 0.0
    %1958 = vmatprep.subr.mxu0 0.0
    %1959 = vmatpush1.msra.mxu0 0.0
    %1960 = vmatprep.subr.mxu0 0.0
    %1961 = vmatpush1.msra.mxu0 0.0
    %1962 = vmatprep.subr.mxu0 0.0
    %1963 = vmatpush1.msra.mxu0 0.0
    %1964 = vmatprep.mubr.f32.mxu0 %v1489
    %1965 = vmatmul.mubr.f32.gmra.mrb[0].mxu0 %v1486
    %v1966 = vpop.f32.mrb[0].mxu0
    %v1967 = vadd.f32 %v1896, %v1966
    %v1968 = vpop.f32.mrb[0].mxu0
    %v1969 = vadd.f32 %v1898, %v1968
    %1970 = vdwg.mxu0
    %1971 = vmatprep.subr.mxu0 %v433
    %1972 = vmatpush1.msra.mxu0 %v432
    %1973 = vmatprep.subr.mxu0 %v435
    %1974 = vmatpush1.msra.mxu0 %v434
    %1975 = vmatprep.subr.mxu0 %v437
    %1976 = vmatpush1.msra.mxu0 %v436
    %1977 = vmatprep.subr.mxu0 %v439
    %1978 = vmatpush1.msra.mxu0 %v438
    %1979 = vmatprep.subr.mxu0 %v441
    %1980 = vmatpush1.msra.mxu0 %v440
    %1981 = vmatprep.subr.mxu0 %v443
    %1982 = vmatpush1.msra.mxu0 %v442
    %1983 = vmatprep.subr.mxu0 %v445
    %1984 = vmatpush1.msra.mxu0 %v444
    %1985 = vmatprep.subr.mxu0 %v447
    %1986 = vmatpush1.msra.mxu0 %v446
    %1987 = vmatprep.subr.mxu0 %v449
    %1988 = vmatpush1.msra.mxu0 %v448
    %1989 = vmatprep.subr.mxu0 %v451
    %1990 = vmatpush1.msra.mxu0 %v450
    %1991 = vmatprep.subr.mxu0 %v453
    %1992 = vmatpush1.msra.mxu0 %v452
    %1993 = vmatprep.subr.mxu0 %v455
    %1994 = vmatpush1.msra.mxu0 %v454
    %1995 = vmatprep.subr.mxu0 %v457
    %1996 = vmatpush1.msra.mxu0 %v456
    %1997 = vmatprep.subr.mxu0 %v459
    %1998 = vmatpush1.msra.mxu0 %v458
    %1999 = vmatprep.subr.mxu0 %v461
    %2000 = vmatpush1.msra.mxu0 %v460
    %2001 = vmatprep.subr.mxu0 %v463
    %2002 = vmatpush1.msra.mxu0 %v462
    %2003 = vmatprep.subr.mxu0 %v465
    %2004 = vmatpush1.msra.mxu0 %v464
    %2005 = vmatprep.subr.mxu0 %v467
    %2006 = vmatpush1.msra.mxu0 %v466
    %2007 = vmatprep.subr.mxu0 0.0
    %2008 = vmatpush1.msra.mxu0 0.0
    %2009 = vmatprep.subr.mxu0 0.0
    %2010 = vmatpush1.msra.mxu0 0.0
    %2011 = vmatprep.subr.mxu0 0.0
    %2012 = vmatpush1.msra.mxu0 0.0
    %2013 = vmatprep.subr.mxu0 0.0
    %2014 = vmatpush1.msra.mxu0 0.0
    %2015 = vmatprep.subr.mxu0 0.0
    %2016 = vmatpush1.msra.mxu0 0.0
    %2017 = vmatprep.subr.mxu0 0.0
    %2018 = vmatpush1.msra.mxu0 0.0
    %2019 = vmatprep.subr.mxu0 0.0
    %2020 = vmatpush1.msra.mxu0 0.0
    %2021 = vmatprep.subr.mxu0 0.0
    %2022 = vmatpush1.msra.mxu0 0.0
    %2023 = vmatprep.subr.mxu0 0.0
    %2024 = vmatpush1.msra.mxu0 0.0
    %2025 = vmatprep.subr.mxu0 0.0
    %2026 = vmatpush1.msra.mxu0 0.0
    %2027 = vmatprep.subr.mxu0 0.0
    %2028 = vmatpush1.msra.mxu0 0.0
    %2029 = vmatprep.subr.mxu0 0.0
    %2030 = vmatpush1.msra.mxu0 0.0
    %2031 = vmatprep.subr.mxu0 0.0
    %2032 = vmatpush1.msra.mxu0 0.0
    %2033 = vmatprep.subr.mxu0 0.0
    %2034 = vmatpush1.msra.mxu0 0.0
    %2035 = vmatprep.mubr.f32.mxu0 %v1663
    %2036 = vmatmul.mubr.f32.gmra.mrb[0].mxu0 %v1660
    %v2037 = vpop.f32.mrb[0].mxu0
    %v2038 = vadd.f32 0.0, %v2037
    %v2039 = vpop.f32.mrb[0].mxu0
    %v2040 = vadd.f32 0.0, %v2039
    %2041 = vdwg.mxu0
    %v2042 = vadd.f32 %v1967, %v2038
    %v2043 = vadd.f32 %v1969, %v2040
    %2044 = vmatprep.subr.mxu0 %v557
    %2045 = vmatpush1.msra.mxu0 %v556
    %2046 = vmatprep.subr.mxu0 %v559
    %2047 = vmatpush1.msra.mxu0 %v558
    %2048 = vmatprep.subr.mxu0 %v561
    %2049 = vmatpush1.msra.mxu0 %v560
    %2050 = vmatprep.subr.mxu0 %v563
    %2051 = vmatpush1.msra.mxu0 %v562
    %2052 = vmatprep.subr.mxu0 %v565
    %2053 = vmatpush1.msra.mxu0 %v564
    %2054 = vmatprep.subr.mxu0 %v567
    %2055 = vmatpush1.msra.mxu0 %v566
    %2056 = vmatprep.subr.mxu0 %v569
    %2057 = vmatpush1.msra.mxu0 %v568
    %2058 = vmatprep.subr.mxu0 %v571
    %2059 = vmatpush1.msra.mxu0 %v570
    %2060 = vmatprep.subr.mxu0 %v573
    %2061 = vmatpush1.msra.mxu0 %v572
    %2062 = vmatprep.subr.mxu0 %v575
    %2063 = vmatpush1.msra.mxu0 %v574
    %2064 = vmatprep.subr.mxu0 %v577
    %2065 = vmatpush1.msra.mxu0 %v576
    %2066 = vmatprep.subr.mxu0 %v579
    %2067 = vmatpush1.msra.mxu0 %v578
    %2068 = vmatprep.subr.mxu0 %v581
    %2069 = vmatpush1.msra.mxu0 %v580
    %2070 = vmatprep.subr.mxu0 %v583
    %2071 = vmatpush1.msra.mxu0 %v582
    %2072 = vmatprep.subr.mxu0 %v585
    %2073 = vmatpush1.msra.mxu0 %v584
    %2074 = vmatprep.subr.mxu0 %v587
    %2075 = vmatpush1.msra.mxu0 %v586
    %2076 = vmatprep.subr.mxu0 %v589
    %2077 = vmatpush1.msra.mxu0 %v588
    %2078 = vmatprep.subr.mxu0 %v591
    %2079 = vmatpush1.msra.mxu0 %v590
    %2080 = vmatprep.subr.mxu0 0.0
    %2081 = vmatpush1.msra.mxu0 0.0
    %2082 = vmatprep.subr.mxu0 0.0
    %2083 = vmatpush1.msra.mxu0 0.0
    %2084 = vmatprep.subr.mxu0 0.0
    %2085 = vmatpush1.msra.mxu0 0.0
    %2086 = vmatprep.subr.mxu0 0.0
    %2087 = vmatpush1.msra.mxu0 0.0
    %2088 = vmatprep.subr.mxu0 0.0
    %2089 = vmatpush1.msra.mxu0 0.0
    %2090 = vmatprep.subr.mxu0 0.0
    %2091 = vmatpush1.msra.mxu0 0.0
    %2092 = vmatprep.subr.mxu0 0.0
    %2093 = vmatpush1.msra.mxu0 0.0
    %2094 = vmatprep.subr.mxu0 0.0
    %2095 = vmatpush1.msra.mxu0 0.0
    %2096 = vmatprep.subr.mxu0 0.0
    %2097 = vmatpush1.msra.mxu0 0.0
    %2098 = vmatprep.subr.mxu0 0.0
    %2099 = vmatpush1.msra.mxu0 0.0
    %2100 = vmatprep.subr.mxu0 0.0
    %2101 = vmatpush1.msra.mxu0 0.0
    %2102 = vmatprep.subr.mxu0 0.0
    %2103 = vmatpush1.msra.mxu0 0.0
    %2104 = vmatprep.subr.mxu0 0.0
    %2105 = vmatpush1.msra.mxu0 0.0
    %2106 = vmatprep.subr.mxu0 0.0
    %2107 = vmatpush1.msra.mxu0 0.0
    %2108 = vmatprep.mubr.f32.mxu0 %v1750
    %2109 = vmatmul.mubr.f32.gmra.mrb[0].mxu0 %v1747
    %v2110 = vpop.f32.mrb[0].mxu0
    %v2111 = vadd.f32 0.0, %v2110
    %v2112 = vpop.f32.mrb[0].mxu0
    %v2113 = vadd.f32 0.0, %v2112
    %2114 = vdwg.mxu0
    %v2115 = vadd.f32 %v2042, %v2111
    %v2116 = vadd.f32 %v2043, %v2113
    %s2117 = scalar_lea.vmem %s0, 48
    %v2118 = vld [vmem:[%s2117] sm:$0xf]
    %v2121 = vunpack.c.l.s4 1983009808
    %v2122 = vunpack.c.0.s8 %v2121
    %v2123 = vlaneseq
    %v2124 = vshrl.u32 %v2123, 7
    %v2125 = vsub.s32 %v2122, %v2124
    %v2126 = vrot.slane %v2118, %v2125
    %v2127 = vcombine.high %v2126, %v2126
    %v2129 = vsel %vm272, %v2127, 0
    %2131 = vmatprep.subr.mxu0 %v681
    %2132 = vmatpush1.msra.mxu0 %v680
    %2133 = vmatprep.subr.mxu0 %v683
    %2134 = vmatpush1.msra.mxu0 %v682
    %2135 = vmatprep.subr.mxu0 %v685
    %2136 = vmatpush1.msra.mxu0 %v684
    %2137 = vmatprep.subr.mxu0 %v687
    %2138 = vmatpush1.msra.mxu0 %v686
    %2139 = vmatprep.subr.mxu0 %v689
    %2140 = vmatpush1.msra.mxu0 %v688
    %2141 = vmatprep.subr.mxu0 %v691
    %2142 = vmatpush1.msra.mxu0 %v690
    %2143 = vmatprep.subr.mxu0 %v693
    %2144 = vmatpush1.msra.mxu0 %v692
    %2145 = vmatprep.subr.mxu0 %v695
    %2146 = vmatpush1.msra.mxu0 %v694
    %2147 = vmatprep.subr.mxu0 %v697
    %2148 = vmatpush1.msra.mxu0 %v696
    %2149 = vmatprep.subr.mxu0 %v699
    %2150 = vmatpush1.msra.mxu0 %v698
    %2151 = vmatprep.subr.mxu0 %v701
    %2152 = vmatpush1.msra.mxu0 %v700
    %2153 = vmatprep.subr.mxu0 %v703
    %2154 = vmatpush1.msra.mxu0 %v702
    %2155 = vmatprep.subr.mxu0 %v705
    %2156 = vmatpush1.msra.mxu0 %v704
    %2157 = vmatprep.subr.mxu0 %v707
    %2158 = vmatpush1.msra.mxu0 %v706
    %2159 = vmatprep.subr.mxu0 %v709
    %2160 = vmatpush1.msra.mxu0 %v708
    %2161 = vmatprep.subr.mxu0 %v711
    %2162 = vmatpush1.msra.mxu0 %v710
    %2163 = vmatprep.subr.mxu0 %v713
    %2164 = vmatpush1.msra.mxu0 %v712
    %2165 = vmatprep.subr.mxu0 %v715
    %2166 = vmatpush1.msra.mxu0 %v714
    %2167 = vmatprep.subr.mxu0 0.0
    %2168 = vmatpush1.msra.mxu0 0.0
    %2169 = vmatprep.subr.mxu0 0.0
    %2170 = vmatpush1.msra.mxu0 0.0
    %2171 = vmatprep.subr.mxu0 0.0
    %2172 = vmatpush1.msra.mxu0 0.0
    %2173 = vmatprep.subr.mxu0 0.0
    %2174 = vmatpush1.msra.mxu0 0.0
    %2175 = vmatprep.subr.mxu0 0.0
    %2176 = vmatpush1.msra.mxu0 0.0
    %2177 = vmatprep.subr.mxu0 0.0
    %2178 = vmatpush1.msra.mxu0 0.0
    %2179 = vmatprep.subr.mxu0 0.0
    %2180 = vmatpush1.msra.mxu0 0.0
    %2181 = vmatprep.subr.mxu0 0.0
    %2182 = vmatpush1.msra.mxu0 0.0
    %2183 = vmatprep.subr.mxu0 0.0
    %2184 = vmatpush1.msra.mxu0 0.0
    %2185 = vmatprep.subr.mxu0 0.0
    %2186 = vmatpush1.msra.mxu0 0.0
    %2187 = vmatprep.subr.mxu0 0.0
    %2188 = vmatpush1.msra.mxu0 0.0
    %2189 = vmatprep.subr.mxu0 0.0
    %2190 = vmatpush1.msra.mxu0 0.0
    %2191 = vmatprep.subr.mxu0 0.0
    %2192 = vmatpush1.msra.mxu0 0.0
    %2193 = vmatprep.subr.mxu0 0.0
    %2194 = vmatpush1.msra.mxu0 0.0
    %2195 = vmatprep.mubr.f32.mxu0 %v2129
    %2196 = vmatmul.mubr.f32.gmra.mrb[0].mxu0 %v2126
    %v2197 = vpop.f32.mrb[0].mxu0
    %v2198 = vadd.f32 0.0, %v2197
    %v2199 = vpop.f32.mrb[0].mxu0
    %v2200 = vadd.f32 0.0, %v2199
    %2201 = vdwg.mxu0
    %v2202 = vadd.f32 %v2115, %v2198
    %v2203 = vadd.f32 %v2116, %v2200
    %s2204 = scalar_lea.vmem %s0, 52
    %v2205 = vld [vmem:[%s2204] sm:$0xf]
    %v2208 = vunpack.c.l.s4 1983009808
    %v2209 = vunpack.c.0.s8 %v2208
    %v2210 = vlaneseq
    %v2211 = vshrl.u32 %v2210, 7
    %v2212 = vsub.s32 %v2209, %v2211
    %v2213 = vrot.slane %v2205, %v2212
    %v2214 = vcombine.high %v2213, %v2213
    %v2216 = vsel %vm272, %v2214, 0
    %2218 = vmatprep.subr.mxu0 %v805
    %2219 = vmatpush1.msra.mxu0 %v804
    %2220 = vmatprep.subr.mxu0 %v807
    %2221 = vmatpush1.msra.mxu0 %v806
    %2222 = vmatprep.subr.mxu0 %v809
    %2223 = vmatpush1.msra.mxu0 %v808
    %2224 = vmatprep.subr.mxu0 %v811
    %2225 = vmatpush1.msra.mxu0 %v810
    %2226 = vmatprep.subr.mxu0 %v813
    %2227 = vmatpush1.msra.mxu0 %v812
    %2228 = vmatprep.subr.mxu0 %v815
    %2229 = vmatpush1.msra.mxu0 %v814
    %2230 = vmatprep.subr.mxu0 %v817
    %2231 = vmatpush1.msra.mxu0 %v816
    %2232 = vmatprep.subr.mxu0 %v819
    %2233 = vmatpush1.msra.mxu0 %v818
    %2234 = vmatprep.subr.mxu0 %v821
    %2235 = vmatpush1.msra.mxu0 %v820
    %2236 = vmatprep.subr.mxu0 %v823
    %2237 = vmatpush1.msra.mxu0 %v822
    %2238 = vmatprep.subr.mxu0 %v825
    %2239 = vmatpush1.msra.mxu0 %v824
    %2240 = vmatprep.subr.mxu0 %v827
    %2241 = vmatpush1.msra.mxu0 %v826
    %2242 = vmatprep.subr.mxu0 %v829
    %2243 = vmatpush1.msra.mxu0 %v828
    %2244 = vmatprep.subr.mxu0 %v831
    %2245 = vmatpush1.msra.mxu0 %v830
    %2246 = vmatprep.subr.mxu0 %v833
    %2247 = vmatpush1.msra.mxu0 %v832
    %2248 = vmatprep.subr.mxu0 %v835
    %2249 = vmatpush1.msra.mxu0 %v834
    %2250 = vmatprep.subr.mxu0 %v837
    %2251 = vmatpush1.msra.mxu0 %v836
    %2252 = vmatprep.subr.mxu0 %v839
    %2253 = vmatpush1.msra.mxu0 %v838
    %2254 = vmatprep.subr.mxu0 0.0
    %2255 = vmatpush1.msra.mxu0 0.0
    %2256 = vmatprep.subr.mxu0 0.0
    %2257 = vmatpush1.msra.mxu0 0.0
    %2258 = vmatprep.subr.mxu0 0.0
    %2259 = vmatpush1.msra.mxu0 0.0
    %2260 = vmatprep.subr.mxu0 0.0
    %2261 = vmatpush1.msra.mxu0 0.0
    %2262 = vmatprep.subr.mxu0 0.0
    %2263 = vmatpush1.msra.mxu0 0.0
    %2264 = vmatprep.subr.mxu0 0.0
    %2265 = vmatpush1.msra.mxu0 0.0
    %2266 = vmatprep.subr.mxu0 0.0
    %2267 = vmatpush1.msra.mxu0 0.0
    %2268 = vmatprep.subr.mxu0 0.0
    %2269 = vmatpush1.msra.mxu0 0.0
    %2270 = vmatprep.subr.mxu0 0.0
    %2271 = vmatpush1.msra.mxu0 0.0
    %2272 = vmatprep.subr.mxu0 0.0
    %2273 = vmatpush1.msra.mxu0 0.0
    %2274 = vmatprep.subr.mxu0 0.0
    %2275 = vmatpush1.msra.mxu0 0.0
    %2276 = vmatprep.subr.mxu0 0.0
    %2277 = vmatpush1.msra.mxu0 0.0
    %2278 = vmatprep.subr.mxu0 0.0
    %2279 = vmatpush1.msra.mxu0 0.0
    %2280 = vmatprep.subr.mxu0 0.0
    %2281 = vmatpush1.msra.mxu0 0.0
    %2282 = vmatprep.mubr.f32.mxu0 %v2216
    %2283 = vmatmul.mubr.f32.gmra.mrb[0].mxu0 %v2213
    %v2284 = vpop.f32.mrb[0].mxu0
    %v2285 = vadd.f32 0.0, %v2284
    %v2286 = vpop.f32.mrb[0].mxu0
    %v2287 = vadd.f32 0.0, %v2286
    %2288 = vdwg.mxu0
    %v2289 = vadd.f32 %v2202, %v2285
    %v2290 = vadd.f32 %v2203, %v2287
    %s2291 = scalar_lea.vmem %s0, 56
    %v2292 = vld [vmem:[%s2291] sm:$0xf]
    %v2295 = vunpack.c.l.s4 1983009808
    %v2296 = vunpack.c.0.s8 %v2295
    %v2297 = vlaneseq
    %v2298 = vshrl.u32 %v2297, 7
    %v2299 = vsub.s32 %v2296, %v2298
    %v2300 = vrot.slane %v2292, %v2299
    %v2301 = vcombine.high %v2300, %v2300
    %v2303 = vsel %vm272, %v2301, 0
    %2305 = vmatprep.subr.mxu0 %v929
    %2306 = vmatpush1.msra.mxu0 %v928
    %2307 = vmatprep.subr.mxu0 %v931
    %2308 = vmatpush1.msra.mxu0 %v930
    %2309 = vmatprep.subr.mxu0 %v933
    %2310 = vmatpush1.msra.mxu0 %v932
    %2311 = vmatprep.subr.mxu0 %v935
    %2312 = vmatpush1.msra.mxu0 %v934
    %2313 = vmatprep.subr.mxu0 %v937
    %2314 = vmatpush1.msra.mxu0 %v936
    %2315 = vmatprep.subr.mxu0 %v939
    %2316 = vmatpush1.msra.mxu0 %v938
    %2317 = vmatprep.subr.mxu0 %v941
    %2318 = vmatpush1.msra.mxu0 %v940
    %2319 = vmatprep.subr.mxu0 %v943
    %2320 = vmatpush1.msra.mxu0 %v942
    %2321 = vmatprep.subr.mxu0 %v945
    %2322 = vmatpush1.msra.mxu0 %v944
    %2323 = vmatprep.subr.mxu0 %v947
    %2324 = vmatpush1.msra.mxu0 %v946
    %2325 = vmatprep.subr.mxu0 %v949
    %2326 = vmatpush1.msra.mxu0 %v948
    %2327 = vmatprep.subr.mxu0 %v951
    %2328 = vmatpush1.msra.mxu0 %v950
    %2329 = vmatprep.subr.mxu0 %v953
    %2330 = vmatpush1.msra.mxu0 %v952
    %2331 = vmatprep.subr.mxu0 %v955
    %2332 = vmatpush1.msra.mxu0 %v954
    %2333 = vmatprep.subr.mxu0 %v957
    %2334 = vmatpush1.msra.mxu0 %v956
    %2335 = vmatprep.subr.mxu0 %v959
    %2336 = vmatpush1.msra.mxu0 %v958
    %2337 = vmatprep.subr.mxu0 %v961
    %2338 = vmatpush1.msra.mxu0 %v960
    %2339 = vmatprep.subr.mxu0 %v963
    %2340 = vmatpush1.msra.mxu0 %v962
    %2341 = vmatprep.subr.mxu0 0.0
    %2342 = vmatpush1.msra.mxu0 0.0
    %2343 = vmatprep.subr.mxu0 0.0
    %2344 = vmatpush1.msra.mxu0 0.0
    %2345 = vmatprep.subr.mxu0 0.0
    %2346 = vmatpush1.msra.mxu0 0.0
    %2347 = vmatprep.subr.mxu0 0.0
    %2348 = vmatpush1.msra.mxu0 0.0
    %2349 = vmatprep.subr.mxu0 0.0
    %2350 = vmatpush1.msra.mxu0 0.0
    %2351 = vmatprep.subr.mxu0 0.0
    %2352 = vmatpush1.msra.mxu0 0.0
    %2353 = vmatprep.subr.mxu0 0.0
    %2354 = vmatpush1.msra.mxu0 0.0
    %2355 = vmatprep.subr.mxu0 0.0
    %2356 = vmatpush1.msra.mxu0 0.0
    %2357 = vmatprep.subr.mxu0 0.0
    %2358 = vmatpush1.msra.mxu0 0.0
    %2359 = vmatprep.subr.mxu0 0.0
    %2360 = vmatpush1.msra.mxu0 0.0
    %2361 = vmatprep.subr.mxu0 0.0
    %2362 = vmatpush1.msra.mxu0 0.0
    %2363 = vmatprep.subr.mxu0 0.0
    %2364 = vmatpush1.msra.mxu0 0.0
    %2365 = vmatprep.subr.mxu0 0.0
    %2366 = vmatpush1.msra.mxu0 0.0
    %2367 = vmatprep.subr.mxu0 0.0
    %2368 = vmatpush1.msra.mxu0 0.0
    %2369 = vmatprep.mubr.f32.mxu0 %v2303
    %2370 = vmatmul.mubr.f32.gmra.mrb[0].mxu0 %v2300
    %v2371 = vpop.f32.mrb[0].mxu0
    %v2372 = vadd.f32 0.0, %v2371
    %v2373 = vpop.f32.mrb[0].mxu0
    %v2374 = vadd.f32 0.0, %v2373
    %2375 = vdwg.mxu0
    %v2376 = vadd.f32 %v2289, %v2372
    %v2377 = vadd.f32 %v2290, %v2374
    %s2378 = scalar_lea.vmem %s0, 60
    %v2379 = vld [vmem:[%s2378] sm:$0xf]
    %v2382 = vunpack.c.l.s4 1983009808
    %v2383 = vunpack.c.0.s8 %v2382
    %v2384 = vlaneseq
    %v2385 = vshrl.u32 %v2384, 7
    %v2386 = vsub.s32 %v2383, %v2385
    %v2387 = vrot.slane %v2379, %v2386
    %v2388 = vcombine.high %v2387, %v2387
    %v2390 = vsel %vm272, %v2388, 0
    %2392 = vmatprep.subr.mxu0 %v1053
    %2393 = vmatpush1.msra.mxu0 %v1052
    %2394 = vmatprep.subr.mxu0 %v1055
    %2395 = vmatpush1.msra.mxu0 %v1054
    %2396 = vmatprep.subr.mxu0 %v1057
    %2397 = vmatpush1.msra.mxu0 %v1056
    %2398 = vmatprep.subr.mxu0 %v1059
    %2399 = vmatpush1.msra.mxu0 %v1058
    %2400 = vmatprep.subr.mxu0 %v1061
    %2401 = vmatpush1.msra.mxu0 %v1060
    %2402 = vmatprep.subr.mxu0 %v1063
    %2403 = vmatpush1.msra.mxu0 %v1062
    %2404 = vmatprep.subr.mxu0 %v1065
    %2405 = vmatpush1.msra.mxu0 %v1064
    %2406 = vmatprep.subr.mxu0 %v1067
    %2407 = vmatpush1.msra.mxu0 %v1066
    %2408 = vmatprep.subr.mxu0 %v1069
    %2409 = vmatpush1.msra.mxu0 %v1068
    %2410 = vmatprep.subr.mxu0 %v1071
    %2411 = vmatpush1.msra.mxu0 %v1070
    %2412 = vmatprep.subr.mxu0 %v1073
    %2413 = vmatpush1.msra.mxu0 %v1072
    %2414 = vmatprep.subr.mxu0 %v1075
    %2415 = vmatpush1.msra.mxu0 %v1074
    %2416 = vmatprep.subr.mxu0 %v1077
    %2417 = vmatpush1.msra.mxu0 %v1076
    %2418 = vmatprep.subr.mxu0 %v1079
    %2419 = vmatpush1.msra.mxu0 %v1078
    %2420 = vmatprep.subr.mxu0 %v1081
    %2421 = vmatpush1.msra.mxu0 %v1080
    %2422 = vmatprep.subr.mxu0 %v1083
    %2423 = vmatpush1.msra.mxu0 %v1082
    %2424 = vmatprep.subr.mxu0 %v1085
    %2425 = vmatpush1.msra.mxu0 %v1084
    %2426 = vmatprep.subr.mxu0 %v1087
    %2427 = vmatpush1.msra.mxu0 %v1086
    %2428 = vmatprep.subr.mxu0 0.0
    %2429 = vmatpush1.msra.mxu0 0.0
    %2430 = vmatprep.subr.mxu0 0.0
    %2431 = vmatpush1.msra.mxu0 0.0
    %2432 = vmatprep.subr.mxu0 0.0
    %2433 = vmatpush1.msra.mxu0 0.0
    %2434 = vmatprep.subr.mxu0 0.0
    %2435 = vmatpush1.msra.mxu0 0.0
    %2436 = vmatprep.subr.mxu0 0.0
    %2437 = vmatpush1.msra.mxu0 0.0
    %2438 = vmatprep.subr.mxu0 0.0
    %2439 = vmatpush1.msra.mxu0 0.0
    %2440 = vmatprep.subr.mxu0 0.0
    %2441 = vmatpush1.msra.mxu0 0.0
    %2442 = vmatprep.subr.mxu0 0.0
    %2443 = vmatpush1.msra.mxu0 0.0
    %2444 = vmatprep.subr.mxu0 0.0
    %2445 = vmatpush1.msra.mxu0 0.0
    %2446 = vmatprep.subr.mxu0 0.0
    %2447 = vmatpush1.msra.mxu0 0.0
    %2448 = vmatprep.subr.mxu0 0.0
    %2449 = vmatpush1.msra.mxu0 0.0
    %2450 = vmatprep.subr.mxu0 0.0
    %2451 = vmatpush1.msra.mxu0 0.0
    %2452 = vmatprep.subr.mxu0 0.0
    %2453 = vmatpush1.msra.mxu0 0.0
    %2454 = vmatprep.subr.mxu0 0.0
    %2455 = vmatpush1.msra.mxu0 0.0
    %2456 = vmatprep.mubr.f32.mxu0 %v2390
    %2457 = vmatmul.mubr.f32.gmra.mrb[0].mxu0 %v2387
    %v2458 = vpop.f32.mrb[0].mxu0
    %v2459 = vadd.f32 0.0, %v2458
    %v2460 = vpop.f32.mrb[0].mxu0
    %v2461 = vadd.f32 0.0, %v2460
    %2462 = vdwg.mxu0
    %v2463 = vadd.f32 %v2376, %v2459
    %v2464 = vadd.f32 %v2377, %v2461
    %v2465 = vadd.f32 %v2463, %v1178
    %v2466 = vadd.f32 %v2464, %v1182
    %v2467 = vmax.f32 %v2465, 0.0
    %v2468 = vmax.f32 %v2466, 0.0
    %2469 = vmatprep.subr.mxu0 %v227
    %2470 = vmatpush1.msra.mxu0 %v226
    %2471 = vmatprep.subr.mxu0 %v229
    %2472 = vmatpush1.msra.mxu0 %v228
    %2473 = vmatprep.subr.mxu0 %v231
    %2474 = vmatpush1.msra.mxu0 %v230
    %2475 = vmatprep.subr.mxu0 %v233
    %2476 = vmatpush1.msra.mxu0 %v232
    %2477 = vmatprep.subr.mxu0 %v235
    %2478 = vmatpush1.msra.mxu0 %v234
    %2479 = vmatprep.subr.mxu0 %v237
    %2480 = vmatpush1.msra.mxu0 %v236
    %2481 = vmatprep.subr.mxu0 %v239
    %2482 = vmatpush1.msra.mxu0 %v238
    %2483 = vmatprep.subr.mxu0 %v241
    %2484 = vmatpush1.msra.mxu0 %v240
    %2485 = vmatprep.subr.mxu0 %v243
    %2486 = vmatpush1.msra.mxu0 %v242
    %2487 = vmatprep.subr.mxu0 %v245
    %2488 = vmatpush1.msra.mxu0 %v244
    %2489 = vmatprep.subr.mxu0 %v247
    %2490 = vmatpush1.msra.mxu0 %v246
    %2491 = vmatprep.subr.mxu0 %v249
    %2492 = vmatpush1.msra.mxu0 %v248
    %2493 = vmatprep.subr.mxu0 %v251
    %2494 = vmatpush1.msra.mxu0 %v250
    %2495 = vmatprep.subr.mxu0 %v253
    %2496 = vmatpush1.msra.mxu0 %v252
    %2497 = vmatprep.subr.mxu0 %v255
    %2498 = vmatpush1.msra.mxu0 %v254
    %2499 = vmatprep.subr.mxu0 %v257
    %2500 = vmatpush1.msra.mxu0 %v256
    %2501 = vmatprep.subr.mxu0 %v259
    %2502 = vmatpush1.msra.mxu0 %v258
    %2503 = vmatprep.subr.mxu0 %v261
    %2504 = vmatpush1.msra.mxu0 %v260
    %2505 = vmatprep.subr.mxu0 0.0
    %2506 = vmatpush1.msra.mxu0 0.0
    %2507 = vmatprep.subr.mxu0 0.0
    %2508 = vmatpush1.msra.mxu0 0.0
    %2509 = vmatprep.subr.mxu0 0.0
    %2510 = vmatpush1.msra.mxu0 0.0
    %2511 = vmatprep.subr.mxu0 0.0
    %2512 = vmatpush1.msra.mxu0 0.0
    %2513 = vmatprep.subr.mxu0 0.0
    %2514 = vmatpush1.msra.mxu0 0.0
    %2515 = vmatprep.subr.mxu0 0.0
    %2516 = vmatpush1.msra.mxu0 0.0
    %2517 = vmatprep.subr.mxu0 0.0
    %2518 = vmatpush1.msra.mxu0 0.0
    %2519 = vmatprep.subr.mxu0 0.0
    %2520 = vmatpush1.msra.mxu0 0.0
    %2521 = vmatprep.subr.mxu0 0.0
    %2522 = vmatpush1.msra.mxu0 0.0
    %2523 = vmatprep.subr.mxu0 0.0
    %2524 = vmatpush1.msra.mxu0 0.0
    %2525 = vmatprep.subr.mxu0 0.0
    %2526 = vmatpush1.msra.mxu0 0.0
    %2527 = vmatprep.subr.mxu0 0.0
    %2528 = vmatpush1.msra.mxu0 0.0
    %2529 = vmatprep.subr.mxu0 0.0
    %2530 = vmatpush1.msra.mxu0 0.0
    %2531 = vmatprep.subr.mxu0 0.0
    %2532 = vmatpush1.msra.mxu0 0.0
    %2533 = vmatprep.mubr.f32.mxu0 %v2216
    %2534 = vmatmul.mubr.f32.gmra.mrb[0].mxu0 %v2213
    %v2535 = vpop.f32.mrb[0].mxu0
    %v2536 = vadd.f32 0.0, %v2535
    %v2537 = vpop.f32.mrb[0].mxu0
    %v2538 = vadd.f32 0.0, %v2537
    %2539 = vdwg.mxu0
    %2540 = vmatprep.subr.mxu0 %v188
    %2541 = vmatpush1.msra.mxu0 %v187
    %2542 = vmatprep.subr.mxu0 %v190
    %2543 = vmatpush1.msra.mxu0 %v189
    %2544 = vmatprep.subr.mxu0 %v192
    %2545 = vmatpush1.msra.mxu0 %v191
    %2546 = vmatprep.subr.mxu0 %v194
    %2547 = vmatpush1.msra.mxu0 %v193
    %2548 = vmatprep.subr.mxu0 %v196
    %2549 = vmatpush1.msra.mxu0 %v195
    %2550 = vmatprep.subr.mxu0 %v198
    %2551 = vmatpush1.msra.mxu0 %v197
    %2552 = vmatprep.subr.mxu0 %v200
    %2553 = vmatpush1.msra.mxu0 %v199
    %2554 = vmatprep.subr.mxu0 %v202
    %2555 = vmatpush1.msra.mxu0 %v201
    %2556 = vmatprep.subr.mxu0 %v204
    %2557 = vmatpush1.msra.mxu0 %v203
    %2558 = vmatprep.subr.mxu0 %v206
    %2559 = vmatpush1.msra.mxu0 %v205
    %2560 = vmatprep.subr.mxu0 %v208
    %2561 = vmatpush1.msra.mxu0 %v207
    %2562 = vmatprep.subr.mxu0 %v210
    %2563 = vmatpush1.msra.mxu0 %v209
    %2564 = vmatprep.subr.mxu0 %v212
    %2565 = vmatpush1.msra.mxu0 %v211
    %2566 = vmatprep.subr.mxu0 %v214
    %2567 = vmatpush1.msra.mxu0 %v213
    %2568 = vmatprep.subr.mxu0 %v216
    %2569 = vmatpush1.msra.mxu0 %v215
    %2570 = vmatprep.subr.mxu0 %v218
    %2571 = vmatpush1.msra.mxu0 %v217
    %2572 = vmatprep.subr.mxu0 %v220
    %2573 = vmatpush1.msra.mxu0 %v219
    %2574 = vmatprep.subr.mxu0 %v222
    %2575 = vmatpush1.msra.mxu0 %v221
    %2576 = vmatprep.subr.mxu0 0.0
    %2577 = vmatpush1.msra.mxu0 0.0
    %2578 = vmatprep.subr.mxu0 0.0
    %2579 = vmatpush1.msra.mxu0 0.0
    %2580 = vmatprep.subr.mxu0 0.0
    %2581 = vmatpush1.msra.mxu0 0.0
    %2582 = vmatprep.subr.mxu0 0.0
    %2583 = vmatpush1.msra.mxu0 0.0
    %2584 = vmatprep.subr.mxu0 0.0
    %2585 = vmatpush1.msra.mxu0 0.0
    %2586 = vmatprep.subr.mxu0 0.0
    %2587 = vmatpush1.msra.mxu0 0.0
    %2588 = vmatprep.subr.mxu0 0.0
    %2589 = vmatpush1.msra.mxu0 0.0
    %2590 = vmatprep.subr.mxu0 0.0
    %2591 = vmatpush1.msra.mxu0 0.0
    %2592 = vmatprep.subr.mxu0 0.0
    %2593 = vmatpush1.msra.mxu0 0.0
    %2594 = vmatprep.subr.mxu0 0.0
    %2595 = vmatpush1.msra.mxu0 0.0
    %2596 = vmatprep.subr.mxu0 0.0
    %2597 = vmatpush1.msra.mxu0 0.0
    %2598 = vmatprep.subr.mxu0 0.0
    %2599 = vmatpush1.msra.mxu0 0.0
    %2600 = vmatprep.subr.mxu0 0.0
    %2601 = vmatpush1.msra.mxu0 0.0
    %2602 = vmatprep.subr.mxu0 0.0
    %2603 = vmatpush1.msra.mxu0 0.0
    %2604 = vmatprep.mubr.f32.mxu0 %v2129
    %2605 = vmatmul.mubr.f32.gmra.mrb[0].mxu0 %v2126
    %v2606 = vpop.f32.mrb[0].mxu0
    %v2607 = vadd.f32 %v2536, %v2606
    %v2608 = vpop.f32.mrb[0].mxu0
    %v2609 = vadd.f32 %v2538, %v2608
    %2610 = vdwg.mxu0
    %2611 = vmatprep.subr.mxu0 %v433
    %2612 = vmatpush1.msra.mxu0 %v432
    %2613 = vmatprep.subr.mxu0 %v435
    %2614 = vmatpush1.msra.mxu0 %v434
    %2615 = vmatprep.subr.mxu0 %v437
    %2616 = vmatpush1.msra.mxu0 %v436
    %2617 = vmatprep.subr.mxu0 %v439
    %2618 = vmatpush1.msra.mxu0 %v438
    %2619 = vmatprep.subr.mxu0 %v441
    %2620 = vmatpush1.msra.mxu0 %v440
    %2621 = vmatprep.subr.mxu0 %v443
    %2622 = vmatpush1.msra.mxu0 %v442
    %2623 = vmatprep.subr.mxu0 %v445
    %2624 = vmatpush1.msra.mxu0 %v444
    %2625 = vmatprep.subr.mxu0 %v447
    %2626 = vmatpush1.msra.mxu0 %v446
    %2627 = vmatprep.subr.mxu0 %v449
    %2628 = vmatpush1.msra.mxu0 %v448
    %2629 = vmatprep.subr.mxu0 %v451
    %2630 = vmatpush1.msra.mxu0 %v450
    %2631 = vmatprep.subr.mxu0 %v453
    %2632 = vmatpush1.msra.mxu0 %v452
    %2633 = vmatprep.subr.mxu0 %v455
    %2634 = vmatpush1.msra.mxu0 %v454
    %2635 = vmatprep.subr.mxu0 %v457
    %2636 = vmatpush1.msra.mxu0 %v456
    %2637 = vmatprep.subr.mxu0 %v459
    %2638 = vmatpush1.msra.mxu0 %v458
    %2639 = vmatprep.subr.mxu0 %v461
    %2640 = vmatpush1.msra.mxu0 %v460
    %2641 = vmatprep.subr.mxu0 %v463
    %2642 = vmatpush1.msra.mxu0 %v462
    %2643 = vmatprep.subr.mxu0 %v465
    %2644 = vmatpush1.msra.mxu0 %v464
    %2645 = vmatprep.subr.mxu0 %v467
    %2646 = vmatpush1.msra.mxu0 %v466
    %2647 = vmatprep.subr.mxu0 0.0
    %2648 = vmatpush1.msra.mxu0 0.0
    %2649 = vmatprep.subr.mxu0 0.0
    %2650 = vmatpush1.msra.mxu0 0.0
    %2651 = vmatprep.subr.mxu0 0.0
    %2652 = vmatpush1.msra.mxu0 0.0
    %2653 = vmatprep.subr.mxu0 0.0
    %2654 = vmatpush1.msra.mxu0 0.0
    %2655 = vmatprep.subr.mxu0 0.0
    %2656 = vmatpush1.msra.mxu0 0.0
    %2657 = vmatprep.subr.mxu0 0.0
    %2658 = vmatpush1.msra.mxu0 0.0
    %2659 = vmatprep.subr.mxu0 0.0
    %2660 = vmatpush1.msra.mxu0 0.0
    %2661 = vmatprep.subr.mxu0 0.0
    %2662 = vmatpush1.msra.mxu0 0.0
    %2663 = vmatprep.subr.mxu0 0.0
    %2664 = vmatpush1.msra.mxu0 0.0
    %2665 = vmatprep.subr.mxu0 0.0
    %2666 = vmatpush1.msra.mxu0 0.0
    %2667 = vmatprep.subr.mxu0 0.0
    %2668 = vmatpush1.msra.mxu0 0.0
    %2669 = vmatprep.subr.mxu0 0.0
    %2670 = vmatpush1.msra.mxu0 0.0
    %2671 = vmatprep.subr.mxu0 0.0
    %2672 = vmatpush1.msra.mxu0 0.0
    %2673 = vmatprep.subr.mxu0 0.0
    %2674 = vmatpush1.msra.mxu0 0.0
    %2675 = vmatprep.mubr.f32.mxu0 %v2303
    %2676 = vmatmul.mubr.f32.gmra.mrb[0].mxu0 %v2300
    %v2677 = vpop.f32.mrb[0].mxu0
    %v2678 = vadd.f32 0.0, %v2677
    %v2679 = vpop.f32.mrb[0].mxu0
    %v2680 = vadd.f32 0.0, %v2679
    %2681 = vdwg.mxu0
    %v2682 = vadd.f32 %v2607, %v2678
    %v2683 = vadd.f32 %v2609, %v2680
    %2684 = vmatprep.subr.mxu0 %v557
    %2685 = vmatpush1.msra.mxu0 %v556
    %2686 = vmatprep.subr.mxu0 %v559
    %2687 = vmatpush1.msra.mxu0 %v558
    %2688 = vmatprep.subr.mxu0 %v561
    %2689 = vmatpush1.msra.mxu0 %v560
    %2690 = vmatprep.subr.mxu0 %v563
    %2691 = vmatpush1.msra.mxu0 %v562
    %2692 = vmatprep.subr.mxu0 %v565
    %2693 = vmatpush1.msra.mxu0 %v564
    %2694 = vmatprep.subr.mxu0 %v567
    %2695 = vmatpush1.msra.mxu0 %v566
    %2696 = vmatprep.subr.mxu0 %v569
    %2697 = vmatpush1.msra.mxu0 %v568
    %2698 = vmatprep.subr.mxu0 %v571
    %2699 = vmatpush1.msra.mxu0 %v570
    %2700 = vmatprep.subr.mxu0 %v573
    %2701 = vmatpush1.msra.mxu0 %v572
    %2702 = vmatprep.subr.mxu0 %v575
    %2703 = vmatpush1.msra.mxu0 %v574
    %2704 = vmatprep.subr.mxu0 %v577
    %2705 = vmatpush1.msra.mxu0 %v576
    %2706 = vmatprep.subr.mxu0 %v579
    %2707 = vmatpush1.msra.mxu0 %v578
    %2708 = vmatprep.subr.mxu0 %v581
    %2709 = vmatpush1.msra.mxu0 %v580
    %2710 = vmatprep.subr.mxu0 %v583
    %2711 = vmatpush1.msra.mxu0 %v582
    %2712 = vmatprep.subr.mxu0 %v585
    %2713 = vmatpush1.msra.mxu0 %v584
    %2714 = vmatprep.subr.mxu0 %v587
    %2715 = vmatpush1.msra.mxu0 %v586
    %2716 = vmatprep.subr.mxu0 %v589
    %2717 = vmatpush1.msra.mxu0 %v588
    %2718 = vmatprep.subr.mxu0 %v591
    %2719 = vmatpush1.msra.mxu0 %v590
    %2720 = vmatprep.subr.mxu0 0.0
    %2721 = vmatpush1.msra.mxu0 0.0
    %2722 = vmatprep.subr.mxu0 0.0
    %2723 = vmatpush1.msra.mxu0 0.0
    %2724 = vmatprep.subr.mxu0 0.0
    %2725 = vmatpush1.msra.mxu0 0.0
    %2726 = vmatprep.subr.mxu0 0.0
    %2727 = vmatpush1.msra.mxu0 0.0
    %2728 = vmatprep.subr.mxu0 0.0
    %2729 = vmatpush1.msra.mxu0 0.0
    %2730 = vmatprep.subr.mxu0 0.0
    %2731 = vmatpush1.msra.mxu0 0.0
    %2732 = vmatprep.subr.mxu0 0.0
    %2733 = vmatpush1.msra.mxu0 0.0
    %2734 = vmatprep.subr.mxu0 0.0
    %2735 = vmatpush1.msra.mxu0 0.0
    %2736 = vmatprep.subr.mxu0 0.0
    %2737 = vmatpush1.msra.mxu0 0.0
    %2738 = vmatprep.subr.mxu0 0.0
    %2739 = vmatpush1.msra.mxu0 0.0
    %2740 = vmatprep.subr.mxu0 0.0
    %2741 = vmatpush1.msra.mxu0 0.0
    %2742 = vmatprep.subr.mxu0 0.0
    %2743 = vmatpush1.msra.mxu0 0.0
    %2744 = vmatprep.subr.mxu0 0.0
    %2745 = vmatpush1.msra.mxu0 0.0
    %2746 = vmatprep.subr.mxu0 0.0
    %2747 = vmatpush1.msra.mxu0 0.0
    %2748 = vmatprep.mubr.f32.mxu0 %v2390
    %2749 = vmatmul.mubr.f32.gmra.mrb[0].mxu0 %v2387
    %v2750 = vpop.f32.mrb[0].mxu0
    %v2751 = vadd.f32 0.0, %v2750
    %v2752 = vpop.f32.mrb[0].mxu0
    %v2753 = vadd.f32 0.0, %v2752
    %2754 = vdwg.mxu0
    %v2755 = vadd.f32 %v2682, %v2751
    %v2756 = vadd.f32 %v2683, %v2753
    %s2757 = scalar_lea.vmem %s0, 64
    %v2758 = vld [vmem:[%s2757] sm:$0xf]
    %v2761 = vunpack.c.l.s4 1983009808
    %v2762 = vunpack.c.0.s8 %v2761
    %v2763 = vlaneseq
    %v2764 = vshrl.u32 %v2763, 7
    %v2765 = vsub.s32 %v2762, %v2764
    %v2766 = vrot.slane %v2758, %v2765
    %v2767 = vcombine.high %v2766, %v2766
    %v2769 = vsel %vm272, %v2767, 0
    %2771 = vmatprep.subr.mxu0 %v681
    %2772 = vmatpush1.msra.mxu0 %v680
    %2773 = vmatprep.subr.mxu0 %v683
    %2774 = vmatpush1.msra.mxu0 %v682
    %2775 = vmatprep.subr.mxu0 %v685
    %2776 = vmatpush1.msra.mxu0 %v684
    %2777 = vmatprep.subr.mxu0 %v687
    %2778 = vmatpush1.msra.mxu0 %v686
    %2779 = vmatprep.subr.mxu0 %v689
    %2780 = vmatpush1.msra.mxu0 %v688
    %2781 = vmatprep.subr.mxu0 %v691
    %2782 = vmatpush1.msra.mxu0 %v690
    %2783 = vmatprep.subr.mxu0 %v693
    %2784 = vmatpush1.msra.mxu0 %v692
    %2785 = vmatprep.subr.mxu0 %v695
    %2786 = vmatpush1.msra.mxu0 %v694
    %2787 = vmatprep.subr.mxu0 %v697
    %2788 = vmatpush1.msra.mxu0 %v696
    %2789 = vmatprep.subr.mxu0 %v699
    %2790 = vmatpush1.msra.mxu0 %v698
    %2791 = vmatprep.subr.mxu0 %v701
    %2792 = vmatpush1.msra.mxu0 %v700
    %2793 = vmatprep.subr.mxu0 %v703
    %2794 = vmatpush1.msra.mxu0 %v702
    %2795 = vmatprep.subr.mxu0 %v705
    %2796 = vmatpush1.msra.mxu0 %v704
    %2797 = vmatprep.subr.mxu0 %v707
    %2798 = vmatpush1.msra.mxu0 %v706
    %2799 = vmatprep.subr.mxu0 %v709
    %2800 = vmatpush1.msra.mxu0 %v708
    %2801 = vmatprep.subr.mxu0 %v711
    %2802 = vmatpush1.msra.mxu0 %v710
    %2803 = vmatprep.subr.mxu0 %v713
    %2804 = vmatpush1.msra.mxu0 %v712
    %2805 = vmatprep.subr.mxu0 %v715
    %2806 = vmatpush1.msra.mxu0 %v714
    %2807 = vmatprep.subr.mxu0 0.0
    %2808 = vmatpush1.msra.mxu0 0.0
    %2809 = vmatprep.subr.mxu0 0.0
    %2810 = vmatpush1.msra.mxu0 0.0
    %2811 = vmatprep.subr.mxu0 0.0
    %2812 = vmatpush1.msra.mxu0 0.0
    %2813 = vmatprep.subr.mxu0 0.0
    %2814 = vmatpush1.msra.mxu0 0.0
    %2815 = vmatprep.subr.mxu0 0.0
    %2816 = vmatpush1.msra.mxu0 0.0
    %2817 = vmatprep.subr.mxu0 0.0
    %2818 = vmatpush1.msra.mxu0 0.0
    %2819 = vmatprep.subr.mxu0 0.0
    %2820 = vmatpush1.msra.mxu0 0.0
    %2821 = vmatprep.subr.mxu0 0.0
    %2822 = vmatpush1.msra.mxu0 0.0
    %2823 = vmatprep.subr.mxu0 0.0
    %2824 = vmatpush1.msra.mxu0 0.0
    %2825 = vmatprep.subr.mxu0 0.0
    %2826 = vmatpush1.msra.mxu0 0.0
    %2827 = vmatprep.subr.mxu0 0.0
    %2828 = vmatpush1.msra.mxu0 0.0
    %2829 = vmatprep.subr.mxu0 0.0
    %2830 = vmatpush1.msra.mxu0 0.0
    %2831 = vmatprep.subr.mxu0 0.0
    %2832 = vmatpush1.msra.mxu0 0.0
    %2833 = vmatprep.subr.mxu0 0.0
    %2834 = vmatpush1.msra.mxu0 0.0
    %2835 = vmatprep.mubr.f32.mxu0 %v2769
    %2836 = vmatmul.mubr.f32.gmra.mrb[0].mxu0 %v2766
    %v2837 = vpop.f32.mrb[0].mxu0
    %v2838 = vadd.f32 0.0, %v2837
    %v2839 = vpop.f32.mrb[0].mxu0
    %v2840 = vadd.f32 0.0, %v2839
    %2841 = vdwg.mxu0
    %v2842 = vadd.f32 %v2755, %v2838
    %v2843 = vadd.f32 %v2756, %v2840
    %s2844 = scalar_lea.vmem %s0, 68
    %v2845 = vld [vmem:[%s2844] sm:$0xf]
    %v2848 = vunpack.c.l.s4 1983009808
    %v2849 = vunpack.c.0.s8 %v2848
    %v2850 = vlaneseq
    %v2851 = vshrl.u32 %v2850, 7
    %v2852 = vsub.s32 %v2849, %v2851
    %v2853 = vrot.slane %v2845, %v2852
    %v2854 = vcombine.high %v2853, %v2853
    %v2856 = vsel %vm272, %v2854, 0
    %2858 = vmatprep.subr.mxu0 %v805
    %2859 = vmatpush1.msra.mxu0 %v804
    %2860 = vmatprep.subr.mxu0 %v807
    %2861 = vmatpush1.msra.mxu0 %v806
    %2862 = vmatprep.subr.mxu0 %v809
    %2863 = vmatpush1.msra.mxu0 %v808
    %2864 = vmatprep.subr.mxu0 %v811
    %2865 = vmatpush1.msra.mxu0 %v810
    %2866 = vmatprep.subr.mxu0 %v813
    %2867 = vmatpush1.msra.mxu0 %v812
    %2868 = vmatprep.subr.mxu0 %v815
    %2869 = vmatpush1.msra.mxu0 %v814
    %2870 = vmatprep.subr.mxu0 %v817
    %2871 = vmatpush1.msra.mxu0 %v816
    %2872 = vmatprep.subr.mxu0 %v819
    %2873 = vmatpush1.msra.mxu0 %v818
    %2874 = vmatprep.subr.mxu0 %v821
    %2875 = vmatpush1.msra.mxu0 %v820
    %2876 = vmatprep.subr.mxu0 %v823
    %2877 = vmatpush1.msra.mxu0 %v822
    %2878 = vmatprep.subr.mxu0 %v825
    %2879 = vmatpush1.msra.mxu0 %v824
    %2880 = vmatprep.subr.mxu0 %v827
    %2881 = vmatpush1.msra.mxu0 %v826
    %2882 = vmatprep.subr.mxu0 %v829
    %2883 = vmatpush1.msra.mxu0 %v828
    %2884 = vmatprep.subr.mxu0 %v831
    %2885 = vmatpush1.msra.mxu0 %v830
    %2886 = vmatprep.subr.mxu0 %v833
    %2887 = vmatpush1.msra.mxu0 %v832
    %2888 = vmatprep.subr.mxu0 %v835
    %2889 = vmatpush1.msra.mxu0 %v834
    %2890 = vmatprep.subr.mxu0 %v837
    %2891 = vmatpush1.msra.mxu0 %v836
    %2892 = vmatprep.subr.mxu0 %v839
    %2893 = vmatpush1.msra.mxu0 %v838
    %2894 = vmatprep.subr.mxu0 0.0
    %2895 = vmatpush1.msra.mxu0 0.0
    %2896 = vmatprep.subr.mxu0 0.0
    %2897 = vmatpush1.msra.mxu0 0.0
    %2898 = vmatprep.subr.mxu0 0.0
    %2899 = vmatpush1.msra.mxu0 0.0
    %2900 = vmatprep.subr.mxu0 0.0
    %2901 = vmatpush1.msra.mxu0 0.0
    %2902 = vmatprep.subr.mxu0 0.0
    %2903 = vmatpush1.msra.mxu0 0.0
    %2904 = vmatprep.subr.mxu0 0.0
    %2905 = vmatpush1.msra.mxu0 0.0
    %2906 = vmatprep.subr.mxu0 0.0
    %2907 = vmatpush1.msra.mxu0 0.0
    %2908 = vmatprep.subr.mxu0 0.0
    %2909 = vmatpush1.msra.mxu0 0.0
    %2910 = vmatprep.subr.mxu0 0.0
    %2911 = vmatpush1.msra.mxu0 0.0
    %2912 = vmatprep.subr.mxu0 0.0
    %2913 = vmatpush1.msra.mxu0 0.0
    %2914 = vmatprep.subr.mxu0 0.0
    %2915 = vmatpush1.msra.mxu0 0.0
    %2916 = vmatprep.subr.mxu0 0.0
    %2917 = vmatpush1.msra.mxu0 0.0
    %2918 = vmatprep.subr.mxu0 0.0
    %2919 = vmatpush1.msra.mxu0 0.0
    %2920 = vmatprep.subr.mxu0 0.0
    %2921 = vmatpush1.msra.mxu0 0.0
    %2922 = vmatprep.mubr.f32.mxu0 %v2856
    %2923 = vmatmul.mubr.f32.gmra.mrb[0].mxu0 %v2853
    %v2924 = vpop.f32.mrb[0].mxu0
    %v2925 = vadd.f32 0.0, %v2924
    %v2926 = vpop.f32.mrb[0].mxu0
    %v2927 = vadd.f32 0.0, %v2926
    %2928 = vdwg.mxu0
    %v2929 = vadd.f32 %v2842, %v2925
    %v2930 = vadd.f32 %v2843, %v2927
    %s2931 = scalar_lea.vmem %s0, 72
    %v2932 = vld [vmem:[%s2931] sm:$0xf]
    %v2935 = vunpack.c.l.s4 1983009808
    %v2936 = vunpack.c.0.s8 %v2935
    %v2937 = vlaneseq
    %v2938 = vshrl.u32 %v2937, 7
    %v2939 = vsub.s32 %v2936, %v2938
    %v2940 = vrot.slane %v2932, %v2939
    %v2941 = vcombine.high %v2940, %v2940
    %v2943 = vsel %vm272, %v2941, 0
    %2945 = vmatprep.subr.mxu0 %v929
    %2946 = vmatpush1.msra.mxu0 %v928
    %2947 = vmatprep.subr.mxu0 %v931
    %2948 = vmatpush1.msra.mxu0 %v930
    %2949 = vmatprep.subr.mxu0 %v933
    %2950 = vmatpush1.msra.mxu0 %v932
    %2951 = vmatprep.subr.mxu0 %v935
    %2952 = vmatpush1.msra.mxu0 %v934
    %2953 = vmatprep.subr.mxu0 %v937
    %2954 = vmatpush1.msra.mxu0 %v936
    %2955 = vmatprep.subr.mxu0 %v939
    %2956 = vmatpush1.msra.mxu0 %v938
    %2957 = vmatprep.subr.mxu0 %v941
    %2958 = vmatpush1.msra.mxu0 %v940
    %2959 = vmatprep.subr.mxu0 %v943
    %2960 = vmatpush1.msra.mxu0 %v942
    %2961 = vmatprep.subr.mxu0 %v945
    %2962 = vmatpush1.msra.mxu0 %v944
    %2963 = vmatprep.subr.mxu0 %v947
    %2964 = vmatpush1.msra.mxu0 %v946
    %2965 = vmatprep.subr.mxu0 %v949
    %2966 = vmatpush1.msra.mxu0 %v948
    %2967 = vmatprep.subr.mxu0 %v951
    %2968 = vmatpush1.msra.mxu0 %v950
    %2969 = vmatprep.subr.mxu0 %v953
    %2970 = vmatpush1.msra.mxu0 %v952
    %2971 = vmatprep.subr.mxu0 %v955
    %2972 = vmatpush1.msra.mxu0 %v954
    %2973 = vmatprep.subr.mxu0 %v957
    %2974 = vmatpush1.msra.mxu0 %v956
    %2975 = vmatprep.subr.mxu0 %v959
    %2976 = vmatpush1.msra.mxu0 %v958
    %2977 = vmatprep.subr.mxu0 %v961
    %2978 = vmatpush1.msra.mxu0 %v960
    %2979 = vmatprep.subr.mxu0 %v963
    %2980 = vmatpush1.msra.mxu0 %v962
    %2981 = vmatprep.subr.mxu0 0.0
    %2982 = vmatpush1.msra.mxu0 0.0
    %2983 = vmatprep.subr.mxu0 0.0
    %2984 = vmatpush1.msra.mxu0 0.0
    %2985 = vmatprep.subr.mxu0 0.0
    %2986 = vmatpush1.msra.mxu0 0.0
    %2987 = vmatprep.subr.mxu0 0.0
    %2988 = vmatpush1.msra.mxu0 0.0
    %2989 = vmatprep.subr.mxu0 0.0
    %2990 = vmatpush1.msra.mxu0 0.0
    %2991 = vmatprep.subr.mxu0 0.0
    %2992 = vmatpush1.msra.mxu0 0.0
    %2993 = vmatprep.subr.mxu0 0.0
    %2994 = vmatpush1.msra.mxu0 0.0
    %2995 = vmatprep.subr.mxu0 0.0
    %2996 = vmatpush1.msra.mxu0 0.0
    %2997 = vmatprep.subr.mxu0 0.0
    %2998 = vmatpush1.msra.mxu0 0.0
    %2999 = vmatprep.subr.mxu0 0.0
    %3000 = vmatpush1.msra.mxu0 0.0
    %3001 = vmatprep.subr.mxu0 0.0
    %3002 = vmatpush1.msra.mxu0 0.0
    %3003 = vmatprep.subr.mxu0 0.0
    %3004 = vmatpush1.msra.mxu0 0.0
    %3005 = vmatprep.subr.mxu0 0.0
    %3006 = vmatpush1.msra.mxu0 0.0
    %3007 = vmatprep.subr.mxu0 0.0
    %3008 = vmatpush1.msra.mxu0 0.0
    %3009 = vmatprep.mubr.f32.mxu0 %v2943
    %3010 = vmatmul.mubr.f32.gmra.mrb[0].mxu0 %v2940
    %v3011 = vpop.f32.mrb[0].mxu0
    %v3012 = vadd.f32 0.0, %v3011
    %v3013 = vpop.f32.mrb[0].mxu0
    %v3014 = vadd.f32 0.0, %v3013
    %3015 = vdwg.mxu0
    %v3016 = vadd.f32 %v2929, %v3012
    %v3017 = vadd.f32 %v2930, %v3014
    %s3018 = scalar_lea.vmem %s0, 76
    %v3019 = vld [vmem:[%s3018] sm:$0xf]
    %v3022 = vunpack.c.l.s4 1983009808
    %v3023 = vunpack.c.0.s8 %v3022
    %v3024 = vlaneseq
    %v3025 = vshrl.u32 %v3024, 7
    %v3026 = vsub.s32 %v3023, %v3025
    %v3027 = vrot.slane %v3019, %v3026
    %v3028 = vcombine.high %v3027, %v3027
    %v3030 = vsel %vm272, %v3028, 0
    %3032 = vmatprep.subr.mxu0 %v1053
    %3033 = vmatpush1.msra.mxu0 %v1052
    %3034 = vmatprep.subr.mxu0 %v1055
    %3035 = vmatpush1.msra.mxu0 %v1054
    %3036 = vmatprep.subr.mxu0 %v1057
    %3037 = vmatpush1.msra.mxu0 %v1056
    %3038 = vmatprep.subr.mxu0 %v1059
    %3039 = vmatpush1.msra.mxu0 %v1058
    %3040 = vmatprep.subr.mxu0 %v1061
    %3041 = vmatpush1.msra.mxu0 %v1060
    %3042 = vmatprep.subr.mxu0 %v1063
    %3043 = vmatpush1.msra.mxu0 %v1062
    %3044 = vmatprep.subr.mxu0 %v1065
    %3045 = vmatpush1.msra.mxu0 %v1064
    %3046 = vmatprep.subr.mxu0 %v1067
    %3047 = vmatpush1.msra.mxu0 %v1066
    %3048 = vmatprep.subr.mxu0 %v1069
    %3049 = vmatpush1.msra.mxu0 %v1068
    %3050 = vmatprep.subr.mxu0 %v1071
    %3051 = vmatpush1.msra.mxu0 %v1070
    %3052 = vmatprep.subr.mxu0 %v1073
    %3053 = vmatpush1.msra.mxu0 %v1072
    %3054 = vmatprep.subr.mxu0 %v1075
    %3055 = vmatpush1.msra.mxu0 %v1074
    %3056 = vmatprep.subr.mxu0 %v1077
    %3057 = vmatpush1.msra.mxu0 %v1076
    %3058 = vmatprep.subr.mxu0 %v1079
    %3059 = vmatpush1.msra.mxu0 %v1078
    %3060 = vmatprep.subr.mxu0 %v1081
    %3061 = vmatpush1.msra.mxu0 %v1080
    %3062 = vmatprep.subr.mxu0 %v1083
    %3063 = vmatpush1.msra.mxu0 %v1082
    %3064 = vmatprep.subr.mxu0 %v1085
    %3065 = vmatpush1.msra.mxu0 %v1084
    %3066 = vmatprep.subr.mxu0 %v1087
    %3067 = vmatpush1.msra.mxu0 %v1086
    %3068 = vmatprep.subr.mxu0 0.0
    %3069 = vmatpush1.msra.mxu0 0.0
    %3070 = vmatprep.subr.mxu0 0.0
    %3071 = vmatpush1.msra.mxu0 0.0
    %3072 = vmatprep.subr.mxu0 0.0
    %3073 = vmatpush1.msra.mxu0 0.0
    %3074 = vmatprep.subr.mxu0 0.0
    %3075 = vmatpush1.msra.mxu0 0.0
    %3076 = vmatprep.subr.mxu0 0.0
    %3077 = vmatpush1.msra.mxu0 0.0
    %3078 = vmatprep.subr.mxu0 0.0
    %3079 = vmatpush1.msra.mxu0 0.0
    %3080 = vmatprep.subr.mxu0 0.0
    %3081 = vmatpush1.msra.mxu0 0.0
    %3082 = vmatprep.subr.mxu0 0.0
    %3083 = vmatpush1.msra.mxu0 0.0
    %3084 = vmatprep.subr.mxu0 0.0
    %3085 = vmatpush1.msra.mxu0 0.0
    %3086 = vmatprep.subr.mxu0 0.0
    %3087 = vmatpush1.msra.mxu0 0.0
    %3088 = vmatprep.subr.mxu0 0.0
    %3089 = vmatpush1.msra.mxu0 0.0
    %3090 = vmatprep.subr.mxu0 0.0
    %3091 = vmatpush1.msra.mxu0 0.0
    %3092 = vmatprep.subr.mxu0 0.0
    %3093 = vmatpush1.msra.mxu0 0.0
    %3094 = vmatprep.subr.mxu0 0.0
    %3095 = vmatpush1.msra.mxu0 0.0
    %3096 = vmatprep.mubr.f32.mxu0 %v3030
    %3097 = vmatmul.mubr.f32.gmra.mrb[0].mxu0 %v3027
    %v3098 = vpop.f32.mrb[0].mxu0
    %v3099 = vadd.f32 0.0, %v3098
    %v3100 = vpop.f32.mrb[0].mxu0
    %v3101 = vadd.f32 0.0, %v3100
    %3102 = vdwg.mxu0
    %v3103 = vadd.f32 %v3016, %v3099
    %v3104 = vadd.f32 %v3017, %v3101
    %v3105 = vadd.f32 %v3103, %v1178
    %v3106 = vadd.f32 %v3104, %v1182
    %v3107 = vmax.f32 %v3105, 0.0
    %v3108 = vmax.f32 %v3106, 0.0
    %3109 = vmatprep.subr.mxu0 %v227
    %3110 = vmatpush1.msra.mxu0 %v226
    %3111 = vmatprep.subr.mxu0 %v229
    %3112 = vmatpush1.msra.mxu0 %v228
    %3113 = vmatprep.subr.mxu0 %v231
    %3114 = vmatpush1.msra.mxu0 %v230
    %3115 = vmatprep.subr.mxu0 %v233
    %3116 = vmatpush1.msra.mxu0 %v232
    %3117 = vmatprep.subr.mxu0 %v235
    %3118 = vmatpush1.msra.mxu0 %v234
    %3119 = vmatprep.subr.mxu0 %v237
    %3120 = vmatpush1.msra.mxu0 %v236
    %3121 = vmatprep.subr.mxu0 %v239
    %3122 = vmatpush1.msra.mxu0 %v238
    %3123 = vmatprep.subr.mxu0 %v241
    %3124 = vmatpush1.msra.mxu0 %v240
    %3125 = vmatprep.subr.mxu0 %v243
    %3126 = vmatpush1.msra.mxu0 %v242
    %3127 = vmatprep.subr.mxu0 %v245
    %3128 = vmatpush1.msra.mxu0 %v244
    %3129 = vmatprep.subr.mxu0 %v247
    %3130 = vmatpush1.msra.mxu0 %v246
    %3131 = vmatprep.subr.mxu0 %v249
    %3132 = vmatpush1.msra.mxu0 %v248
    %3133 = vmatprep.subr.mxu0 %v251
    %3134 = vmatpush1.msra.mxu0 %v250
    %3135 = vmatprep.subr.mxu0 %v253
    %3136 = vmatpush1.msra.mxu0 %v252
    %3137 = vmatprep.subr.mxu0 %v255
    %3138 = vmatpush1.msra.mxu0 %v254
    %3139 = vmatprep.subr.mxu0 %v257
    %3140 = vmatpush1.msra.mxu0 %v256
    %3141 = vmatprep.subr.mxu0 %v259
    %3142 = vmatpush1.msra.mxu0 %v258
    %3143 = vmatprep.subr.mxu0 %v261
    %3144 = vmatpush1.msra.mxu0 %v260
    %3145 = vmatprep.subr.mxu0 0.0
    %3146 = vmatpush1.msra.mxu0 0.0
    %3147 = vmatprep.subr.mxu0 0.0
    %3148 = vmatpush1.msra.mxu0 0.0
    %3149 = vmatprep.subr.mxu0 0.0
    %3150 = vmatpush1.msra.mxu0 0.0
    %3151 = vmatprep.subr.mxu0 0.0
    %3152 = vmatpush1.msra.mxu0 0.0
    %3153 = vmatprep.subr.mxu0 0.0
    %3154 = vmatpush1.msra.mxu0 0.0
    %3155 = vmatprep.subr.mxu0 0.0
    %3156 = vmatpush1.msra.mxu0 0.0
    %3157 = vmatprep.subr.mxu0 0.0
    %3158 = vmatpush1.msra.mxu0 0.0
    %3159 = vmatprep.subr.mxu0 0.0
    %3160 = vmatpush1.msra.mxu0 0.0
    %3161 = vmatprep.subr.mxu0 0.0
    %3162 = vmatpush1.msra.mxu0 0.0
    %3163 = vmatprep.subr.mxu0 0.0
    %3164 = vmatpush1.msra.mxu0 0.0
    %3165 = vmatprep.subr.mxu0 0.0
    %3166 = vmatpush1.msra.mxu0 0.0
    %3167 = vmatprep.subr.mxu0 0.0
    %3168 = vmatpush1.msra.mxu0 0.0
    %3169 = vmatprep.subr.mxu0 0.0
    %3170 = vmatpush1.msra.mxu0 0.0
    %3171 = vmatprep.subr.mxu0 0.0
    %3172 = vmatpush1.msra.mxu0 0.0
    %3173 = vmatprep.mubr.f32.mxu0 %v2856
    %3174 = vmatmul.mubr.f32.gmra.mrb[0].mxu0 %v2853
    %v3175 = vpop.f32.mrb[0].mxu0
    %v3176 = vadd.f32 0.0, %v3175
    %v3177 = vpop.f32.mrb[0].mxu0
    %v3178 = vadd.f32 0.0, %v3177
    %3179 = vdwg.mxu0
    %3180 = vmatprep.subr.mxu0 %v188
    %3181 = vmatpush1.msra.mxu0 %v187
    %3182 = vmatprep.subr.mxu0 %v190
    %3183 = vmatpush1.msra.mxu0 %v189
    %3184 = vmatprep.subr.mxu0 %v192
    %3185 = vmatpush1.msra.mxu0 %v191
    %3186 = vmatprep.subr.mxu0 %v194
    %3187 = vmatpush1.msra.mxu0 %v193
    %3188 = vmatprep.subr.mxu0 %v196
    %3189 = vmatpush1.msra.mxu0 %v195
    %3190 = vmatprep.subr.mxu0 %v198
    %3191 = vmatpush1.msra.mxu0 %v197
    %3192 = vmatprep.subr.mxu0 %v200
    %3193 = vmatpush1.msra.mxu0 %v199
    %3194 = vmatprep.subr.mxu0 %v202
    %3195 = vmatpush1.msra.mxu0 %v201
    %3196 = vmatprep.subr.mxu0 %v204
    %3197 = vmatpush1.msra.mxu0 %v203
    %3198 = vmatprep.subr.mxu0 %v206
    %3199 = vmatpush1.msra.mxu0 %v205
    %3200 = vmatprep.subr.mxu0 %v208
    %3201 = vmatpush1.msra.mxu0 %v207
    %3202 = vmatprep.subr.mxu0 %v210
    %3203 = vmatpush1.msra.mxu0 %v209
    %3204 = vmatprep.subr.mxu0 %v212
    %3205 = vmatpush1.msra.mxu0 %v211
    %3206 = vmatprep.subr.mxu0 %v214
    %3207 = vmatpush1.msra.mxu0 %v213
    %3208 = vmatprep.subr.mxu0 %v216
    %3209 = vmatpush1.msra.mxu0 %v215
    %3210 = vmatprep.subr.mxu0 %v218
    %3211 = vmatpush1.msra.mxu0 %v217
    %3212 = vmatprep.subr.mxu0 %v220
    %3213 = vmatpush1.msra.mxu0 %v219
    %3214 = vmatprep.subr.mxu0 %v222
    %3215 = vmatpush1.msra.mxu0 %v221
    %3216 = vmatprep.subr.mxu0 0.0
    %3217 = vmatpush1.msra.mxu0 0.0
    %3218 = vmatprep.subr.mxu0 0.0
    %3219 = vmatpush1.msra.mxu0 0.0
    %3220 = vmatprep.subr.mxu0 0.0
    %3221 = vmatpush1.msra.mxu0 0.0
    %3222 = vmatprep.subr.mxu0 0.0
    %3223 = vmatpush1.msra.mxu0 0.0
    %3224 = vmatprep.subr.mxu0 0.0
    %3225 = vmatpush1.msra.mxu0 0.0
    %3226 = vmatprep.subr.mxu0 0.0
    %3227 = vmatpush1.msra.mxu0 0.0
    %3228 = vmatprep.subr.mxu0 0.0
    %3229 = vmatpush1.msra.mxu0 0.0
    %3230 = vmatprep.subr.mxu0 0.0
    %3231 = vmatpush1.msra.mxu0 0.0
    %3232 = vmatprep.subr.mxu0 0.0
    %3233 = vmatpush1.msra.mxu0 0.0
    %3234 = vmatprep.subr.mxu0 0.0
    %3235 = vmatpush1.msra.mxu0 0.0
    %3236 = vmatprep.subr.mxu0 0.0
    %3237 = vmatpush1.msra.mxu0 0.0
    %3238 = vmatprep.subr.mxu0 0.0
    %3239 = vmatpush1.msra.mxu0 0.0
    %3240 = vmatprep.subr.mxu0 0.0
    %3241 = vmatpush1.msra.mxu0 0.0
    %3242 = vmatprep.subr.mxu0 0.0
    %3243 = vmatpush1.msra.mxu0 0.0
    %3244 = vmatprep.mubr.f32.mxu0 %v2769
    %3245 = vmatmul.mubr.f32.gmra.mrb[0].mxu0 %v2766
    %v3246 = vpop.f32.mrb[0].mxu0
    %v3247 = vadd.f32 %v3176, %v3246
    %v3248 = vpop.f32.mrb[0].mxu0
    %v3249 = vadd.f32 %v3178, %v3248
    %3250 = vdwg.mxu0
    %3251 = vmatprep.subr.mxu0 %v433
    %3252 = vmatpush1.msra.mxu0 %v432
    %3253 = vmatprep.subr.mxu0 %v435
    %3254 = vmatpush1.msra.mxu0 %v434
    %3255 = vmatprep.subr.mxu0 %v437
    %3256 = vmatpush1.msra.mxu0 %v436
    %3257 = vmatprep.subr.mxu0 %v439
    %3258 = vmatpush1.msra.mxu0 %v438
    %3259 = vmatprep.subr.mxu0 %v441
    %3260 = vmatpush1.msra.mxu0 %v440
    %3261 = vmatprep.subr.mxu0 %v443
    %3262 = vmatpush1.msra.mxu0 %v442
    %3263 = vmatprep.subr.mxu0 %v445
    %3264 = vmatpush1.msra.mxu0 %v444
    %3265 = vmatprep.subr.mxu0 %v447
    %3266 = vmatpush1.msra.mxu0 %v446
    %3267 = vmatprep.subr.mxu0 %v449
    %3268 = vmatpush1.msra.mxu0 %v448
    %3269 = vmatprep.subr.mxu0 %v451
    %3270 = vmatpush1.msra.mxu0 %v450
    %3271 = vmatprep.subr.mxu0 %v453
    %3272 = vmatpush1.msra.mxu0 %v452
    %3273 = vmatprep.subr.mxu0 %v455
    %3274 = vmatpush1.msra.mxu0 %v454
    %3275 = vmatprep.subr.mxu0 %v457
    %3276 = vmatpush1.msra.mxu0 %v456
    %3277 = vmatprep.subr.mxu0 %v459
    %3278 = vmatpush1.msra.mxu0 %v458
    %3279 = vmatprep.subr.mxu0 %v461
    %3280 = vmatpush1.msra.mxu0 %v460
    %3281 = vmatprep.subr.mxu0 %v463
    %3282 = vmatpush1.msra.mxu0 %v462
    %3283 = vmatprep.subr.mxu0 %v465
    %3284 = vmatpush1.msra.mxu0 %v464
    %3285 = vmatprep.subr.mxu0 %v467
    %3286 = vmatpush1.msra.mxu0 %v466
    %3287 = vmatprep.subr.mxu0 0.0
    %3288 = vmatpush1.msra.mxu0 0.0
    %3289 = vmatprep.subr.mxu0 0.0
    %3290 = vmatpush1.msra.mxu0 0.0
    %3291 = vmatprep.subr.mxu0 0.0
    %3292 = vmatpush1.msra.mxu0 0.0
    %3293 = vmatprep.subr.mxu0 0.0
    %3294 = vmatpush1.msra.mxu0 0.0
    %3295 = vmatprep.subr.mxu0 0.0
    %3296 = vmatpush1.msra.mxu0 0.0
    %3297 = vmatprep.subr.mxu0 0.0
    %3298 = vmatpush1.msra.mxu0 0.0
    %3299 = vmatprep.subr.mxu0 0.0
    %3300 = vmatpush1.msra.mxu0 0.0
    %3301 = vmatprep.subr.mxu0 0.0
    %3302 = vmatpush1.msra.mxu0 0.0
    %3303 = vmatprep.subr.mxu0 0.0
    %3304 = vmatpush1.msra.mxu0 0.0
    %3305 = vmatprep.subr.mxu0 0.0
    %3306 = vmatpush1.msra.mxu0 0.0
    %3307 = vmatprep.subr.mxu0 0.0
    %3308 = vmatpush1.msra.mxu0 0.0
    %3309 = vmatprep.subr.mxu0 0.0
    %3310 = vmatpush1.msra.mxu0 0.0
    %3311 = vmatprep.subr.mxu0 0.0
    %3312 = vmatpush1.msra.mxu0 0.0
    %3313 = vmatprep.subr.mxu0 0.0
    %3314 = vmatpush1.msra.mxu0 0.0
    %3315 = vmatprep.mubr.f32.mxu0 %v2943
    %3316 = vmatmul.mubr.f32.gmra.mrb[0].mxu0 %v2940
    %v3317 = vpop.f32.mrb[0].mxu0
    %v3318 = vadd.f32 0.0, %v3317
    %v3319 = vpop.f32.mrb[0].mxu0
    %v3320 = vadd.f32 0.0, %v3319
    %3321 = vdwg.mxu0
    %v3322 = vadd.f32 %v3247, %v3318
    %v3323 = vadd.f32 %v3249, %v3320
    %3324 = vmatprep.subr.mxu0 %v557
    %3325 = vmatpush1.msra.mxu0 %v556
    %3326 = vmatprep.subr.mxu0 %v559
    %3327 = vmatpush1.msra.mxu0 %v558
    %3328 = vmatprep.subr.mxu0 %v561
    %3329 = vmatpush1.msra.mxu0 %v560
    %3330 = vmatprep.subr.mxu0 %v563
    %3331 = vmatpush1.msra.mxu0 %v562
    %3332 = vmatprep.subr.mxu0 %v565
    %3333 = vmatpush1.msra.mxu0 %v564
    %3334 = vmatprep.subr.mxu0 %v567
    %3335 = vmatpush1.msra.mxu0 %v566
    %3336 = vmatprep.subr.mxu0 %v569
    %3337 = vmatpush1.msra.mxu0 %v568
    %3338 = vmatprep.subr.mxu0 %v571
    %3339 = vmatpush1.msra.mxu0 %v570
    %3340 = vmatprep.subr.mxu0 %v573
    %3341 = vmatpush1.msra.mxu0 %v572
    %3342 = vmatprep.subr.mxu0 %v575
    %3343 = vmatpush1.msra.mxu0 %v574
    %3344 = vmatprep.subr.mxu0 %v577
    %3345 = vmatpush1.msra.mxu0 %v576
    %3346 = vmatprep.subr.mxu0 %v579
    %3347 = vmatpush1.msra.mxu0 %v578
    %3348 = vmatprep.subr.mxu0 %v581
    %3349 = vmatpush1.msra.mxu0 %v580
    %3350 = vmatprep.subr.mxu0 %v583
    %3351 = vmatpush1.msra.mxu0 %v582
    %3352 = vmatprep.subr.mxu0 %v585
    %3353 = vmatpush1.msra.mxu0 %v584
    %3354 = vmatprep.subr.mxu0 %v587
    %3355 = vmatpush1.msra.mxu0 %v586
    %3356 = vmatprep.subr.mxu0 %v589
    %3357 = vmatpush1.msra.mxu0 %v588
    %3358 = vmatprep.subr.mxu0 %v591
    %3359 = vmatpush1.msra.mxu0 %v590
    %3360 = vmatprep.subr.mxu0 0.0
    %3361 = vmatpush1.msra.mxu0 0.0
    %3362 = vmatprep.subr.mxu0 0.0
    %3363 = vmatpush1.msra.mxu0 0.0
    %3364 = vmatprep.subr.mxu0 0.0
    %3365 = vmatpush1.msra.mxu0 0.0
    %3366 = vmatprep.subr.mxu0 0.0
    %3367 = vmatpush1.msra.mxu0 0.0
    %3368 = vmatprep.subr.mxu0 0.0
    %3369 = vmatpush1.msra.mxu0 0.0
    %3370 = vmatprep.subr.mxu0 0.0
    %3371 = vmatpush1.msra.mxu0 0.0
    %3372 = vmatprep.subr.mxu0 0.0
    %3373 = vmatpush1.msra.mxu0 0.0
    %3374 = vmatprep.subr.mxu0 0.0
    %3375 = vmatpush1.msra.mxu0 0.0
    %3376 = vmatprep.subr.mxu0 0.0
    %3377 = vmatpush1.msra.mxu0 0.0
    %3378 = vmatprep.subr.mxu0 0.0
    %3379 = vmatpush1.msra.mxu0 0.0
    %3380 = vmatprep.subr.mxu0 0.0
    %3381 = vmatpush1.msra.mxu0 0.0
    %3382 = vmatprep.subr.mxu0 0.0
    %3383 = vmatpush1.msra.mxu0 0.0
    %3384 = vmatprep.subr.mxu0 0.0
    %3385 = vmatpush1.msra.mxu0 0.0
    %3386 = vmatprep.subr.mxu0 0.0
    %3387 = vmatpush1.msra.mxu0 0.0
    %3388 = vmatprep.mubr.f32.mxu0 %v3030
    %3389 = vmatmul.mubr.f32.gmra.mrb[0].mxu0 %v3027
    %v3390 = vpop.f32.mrb[0].mxu0
    %v3391 = vadd.f32 0.0, %v3390
    %v3392 = vpop.f32.mrb[0].mxu0
    %v3393 = vadd.f32 0.0, %v3392
    %3394 = vdwg.mxu0
    %v3395 = vadd.f32 %v3322, %v3391
    %v3396 = vadd.f32 %v3323, %v3393
    %s3397 = scalar_lea.vmem %s0, 80
    %v3398 = vld [vmem:[%s3397] sm:$0xf]
    %v3401 = vunpack.c.l.s4 1983009808
    %v3402 = vunpack.c.0.s8 %v3401
    %v3403 = vlaneseq
    %v3404 = vshrl.u32 %v3403, 7
    %v3405 = vsub.s32 %v3402, %v3404
    %v3406 = vrot.slane %v3398, %v3405
    %v3407 = vcombine.high %v3406, %v3406
    %v3409 = vsel %vm272, %v3407, 0
    %3411 = vmatprep.subr.mxu0 %v681
    %3412 = vmatpush1.msra.mxu0 %v680
    %3413 = vmatprep.subr.mxu0 %v683
    %3414 = vmatpush1.msra.mxu0 %v682
    %3415 = vmatprep.subr.mxu0 %v685
    %3416 = vmatpush1.msra.mxu0 %v684
    %3417 = vmatprep.subr.mxu0 %v687
    %3418 = vmatpush1.msra.mxu0 %v686
    %3419 = vmatprep.subr.mxu0 %v689
    %3420 = vmatpush1.msra.mxu0 %v688
    %3421 = vmatprep.subr.mxu0 %v691
    %3422 = vmatpush1.msra.mxu0 %v690
    %3423 = vmatprep.subr.mxu0 %v693
    %3424 = vmatpush1.msra.mxu0 %v692
    %3425 = vmatprep.subr.mxu0 %v695
    %3426 = vmatpush1.msra.mxu0 %v694
    %3427 = vmatprep.subr.mxu0 %v697
    %3428 = vmatpush1.msra.mxu0 %v696
    %3429 = vmatprep.subr.mxu0 %v699
    %3430 = vmatpush1.msra.mxu0 %v698
    %3431 = vmatprep.subr.mxu0 %v701
    %3432 = vmatpush1.msra.mxu0 %v700
    %3433 = vmatprep.subr.mxu0 %v703
    %3434 = vmatpush1.msra.mxu0 %v702
    %3435 = vmatprep.subr.mxu0 %v705
    %3436 = vmatpush1.msra.mxu0 %v704
    %3437 = vmatprep.subr.mxu0 %v707
    %3438 = vmatpush1.msra.mxu0 %v706
    %3439 = vmatprep.subr.mxu0 %v709
    %3440 = vmatpush1.msra.mxu0 %v708
    %3441 = vmatprep.subr.mxu0 %v711
    %3442 = vmatpush1.msra.mxu0 %v710
    %3443 = vmatprep.subr.mxu0 %v713
    %3444 = vmatpush1.msra.mxu0 %v712
    %3445 = vmatprep.subr.mxu0 %v715
    %3446 = vmatpush1.msra.mxu0 %v714
    %3447 = vmatprep.subr.mxu0 0.0
    %3448 = vmatpush1.msra.mxu0 0.0
    %3449 = vmatprep.subr.mxu0 0.0
    %3450 = vmatpush1.msra.mxu0 0.0
    %3451 = vmatprep.subr.mxu0 0.0
    %3452 = vmatpush1.msra.mxu0 0.0
    %3453 = vmatprep.subr.mxu0 0.0
    %3454 = vmatpush1.msra.mxu0 0.0
    %3455 = vmatprep.subr.mxu0 0.0
    %3456 = vmatpush1.msra.mxu0 0.0
    %3457 = vmatprep.subr.mxu0 0.0
    %3458 = vmatpush1.msra.mxu0 0.0
    %3459 = vmatprep.subr.mxu0 0.0
    %3460 = vmatpush1.msra.mxu0 0.0
    %3461 = vmatprep.subr.mxu0 0.0
    %3462 = vmatpush1.msra.mxu0 0.0
    %3463 = vmatprep.subr.mxu0 0.0
    %3464 = vmatpush1.msra.mxu0 0.0
    %3465 = vmatprep.subr.mxu0 0.0
    %3466 = vmatpush1.msra.mxu0 0.0
    %3467 = vmatprep.subr.mxu0 0.0
    %3468 = vmatpush1.msra.mxu0 0.0
    %3469 = vmatprep.subr.mxu0 0.0
    %3470 = vmatpush1.msra.mxu0 0.0
    %3471 = vmatprep.subr.mxu0 0.0
    %3472 = vmatpush1.msra.mxu0 0.0
    %3473 = vmatprep.subr.mxu0 0.0
    %3474 = vmatpush1.msra.mxu0 0.0
    %3475 = vmatprep.mubr.f32.mxu0 %v3409
    %3476 = vmatmul.mubr.f32.gmra.mrb[0].mxu0 %v3406
    %v3477 = vpop.f32.mrb[0].mxu0
    %v3478 = vadd.f32 0.0, %v3477
    %v3479 = vpop.f32.mrb[0].mxu0
    %v3480 = vadd.f32 0.0, %v3479
    %3481 = vdwg.mxu0
    %v3482 = vadd.f32 %v3395, %v3478
    %v3483 = vadd.f32 %v3396, %v3480
    %s3484 = scalar_lea.vmem %s0, 84
    %v3485 = vld [vmem:[%s3484] sm:$0xf]
    %v3488 = vunpack.c.l.s4 1983009808
    %v3489 = vunpack.c.0.s8 %v3488
    %v3490 = vlaneseq
    %v3491 = vshrl.u32 %v3490, 7
    %v3492 = vsub.s32 %v3489, %v3491
    %v3493 = vrot.slane %v3485, %v3492
    %v3494 = vcombine.high %v3493, %v3493
    %v3496 = vsel %vm272, %v3494, 0
    %3498 = vmatprep.subr.mxu0 %v805
    %3499 = vmatpush1.msra.mxu0 %v804
    %3500 = vmatprep.subr.mxu0 %v807
    %3501 = vmatpush1.msra.mxu0 %v806
    %3502 = vmatprep.subr.mxu0 %v809
    %3503 = vmatpush1.msra.mxu0 %v808
    %3504 = vmatprep.subr.mxu0 %v811
    %3505 = vmatpush1.msra.mxu0 %v810
    %3506 = vmatprep.subr.mxu0 %v813
    %3507 = vmatpush1.msra.mxu0 %v812
    %3508 = vmatprep.subr.mxu0 %v815
    %3509 = vmatpush1.msra.mxu0 %v814
    %3510 = vmatprep.subr.mxu0 %v817
    %3511 = vmatpush1.msra.mxu0 %v816
    %3512 = vmatprep.subr.mxu0 %v819
    %3513 = vmatpush1.msra.mxu0 %v818
    %3514 = vmatprep.subr.mxu0 %v821
    %3515 = vmatpush1.msra.mxu0 %v820
    %3516 = vmatprep.subr.mxu0 %v823
    %3517 = vmatpush1.msra.mxu0 %v822
    %3518 = vmatprep.subr.mxu0 %v825
    %3519 = vmatpush1.msra.mxu0 %v824
    %3520 = vmatprep.subr.mxu0 %v827
    %3521 = vmatpush1.msra.mxu0 %v826
    %3522 = vmatprep.subr.mxu0 %v829
    %3523 = vmatpush1.msra.mxu0 %v828
    %3524 = vmatprep.subr.mxu0 %v831
    %3525 = vmatpush1.msra.mxu0 %v830
    %3526 = vmatprep.subr.mxu0 %v833
    %3527 = vmatpush1.msra.mxu0 %v832
    %3528 = vmatprep.subr.mxu0 %v835
    %3529 = vmatpush1.msra.mxu0 %v834
    %3530 = vmatprep.subr.mxu0 %v837
    %3531 = vmatpush1.msra.mxu0 %v836
    %3532 = vmatprep.subr.mxu0 %v839
    %3533 = vmatpush1.msra.mxu0 %v838
    %3534 = vmatprep.subr.mxu0 0.0
    %3535 = vmatpush1.msra.mxu0 0.0
    %3536 = vmatprep.subr.mxu0 0.0
    %3537 = vmatpush1.msra.mxu0 0.0
    %3538 = vmatprep.subr.mxu0 0.0
    %3539 = vmatpush1.msra.mxu0 0.0
    %3540 = vmatprep.subr.mxu0 0.0
    %3541 = vmatpush1.msra.mxu0 0.0
    %3542 = vmatprep.subr.mxu0 0.0
    %3543 = vmatpush1.msra.mxu0 0.0
    %3544 = vmatprep.subr.mxu0 0.0
    %3545 = vmatpush1.msra.mxu0 0.0
    %3546 = vmatprep.subr.mxu0 0.0
    %3547 = vmatpush1.msra.mxu0 0.0
    %3548 = vmatprep.subr.mxu0 0.0
    %3549 = vmatpush1.msra.mxu0 0.0
    %3550 = vmatprep.subr.mxu0 0.0
    %3551 = vmatpush1.msra.mxu0 0.0
    %3552 = vmatprep.subr.mxu0 0.0
    %3553 = vmatpush1.msra.mxu0 0.0
    %3554 = vmatprep.subr.mxu0 0.0
    %3555 = vmatpush1.msra.mxu0 0.0
    %3556 = vmatprep.subr.mxu0 0.0
    %3557 = vmatpush1.msra.mxu0 0.0
    %3558 = vmatprep.subr.mxu0 0.0
    %3559 = vmatpush1.msra.mxu0 0.0
    %3560 = vmatprep.subr.mxu0 0.0
    %3561 = vmatpush1.msra.mxu0 0.0
    %3562 = vmatprep.mubr.f32.mxu0 %v3496
    %3563 = vmatmul.mubr.f32.gmra.mrb[0].mxu0 %v3493
    %v3564 = vpop.f32.mrb[0].mxu0
    %v3565 = vadd.f32 0.0, %v3564
    %v3566 = vpop.f32.mrb[0].mxu0
    %v3567 = vadd.f32 0.0, %v3566
    %3568 = vdwg.mxu0
    %v3569 = vadd.f32 %v3482, %v3565
    %v3570 = vadd.f32 %v3483, %v3567
    %s3571 = scalar_lea.vmem %s0, 88
    %v3572 = vld [vmem:[%s3571] sm:$0xf]
    %v3575 = vunpack.c.l.s4 1983009808
    %v3576 = vunpack.c.0.s8 %v3575
    %v3577 = vlaneseq
    %v3578 = vshrl.u32 %v3577, 7
    %v3579 = vsub.s32 %v3576, %v3578
    %v3580 = vrot.slane %v3572, %v3579
    %v3581 = vcombine.high %v3580, %v3580
    %v3583 = vsel %vm272, %v3581, 0
    %3585 = vmatprep.subr.mxu0 %v929
    %3586 = vmatpush1.msra.mxu0 %v928
    %3587 = vmatprep.subr.mxu0 %v931
    %3588 = vmatpush1.msra.mxu0 %v930
    %3589 = vmatprep.subr.mxu0 %v933
    %3590 = vmatpush1.msra.mxu0 %v932
    %3591 = vmatprep.subr.mxu0 %v935
    %3592 = vmatpush1.msra.mxu0 %v934
    %3593 = vmatprep.subr.mxu0 %v937
    %3594 = vmatpush1.msra.mxu0 %v936
    %3595 = vmatprep.subr.mxu0 %v939
    %3596 = vmatpush1.msra.mxu0 %v938
    %3597 = vmatprep.subr.mxu0 %v941
    %3598 = vmatpush1.msra.mxu0 %v940
    %3599 = vmatprep.subr.mxu0 %v943
    %3600 = vmatpush1.msra.mxu0 %v942
    %3601 = vmatprep.subr.mxu0 %v945
    %3602 = vmatpush1.msra.mxu0 %v944
    %3603 = vmatprep.subr.mxu0 %v947
    %3604 = vmatpush1.msra.mxu0 %v946
    %3605 = vmatprep.subr.mxu0 %v949
    %3606 = vmatpush1.msra.mxu0 %v948
    %3607 = vmatprep.subr.mxu0 %v951
    %3608 = vmatpush1.msra.mxu0 %v950
    %3609 = vmatprep.subr.mxu0 %v953
    %3610 = vmatpush1.msra.mxu0 %v952
    %3611 = vmatprep.subr.mxu0 %v955
    %3612 = vmatpush1.msra.mxu0 %v954
    %3613 = vmatprep.subr.mxu0 %v957
    %3614 = vmatpush1.msra.mxu0 %v956
    %3615 = vmatprep.subr.mxu0 %v959
    %3616 = vmatpush1.msra.mxu0 %v958
    %3617 = vmatprep.subr.mxu0 %v961
    %3618 = vmatpush1.msra.mxu0 %v960
    %3619 = vmatprep.subr.mxu0 %v963
    %3620 = vmatpush1.msra.mxu0 %v962
    %3621 = vmatprep.subr.mxu0 0.0
    %3622 = vmatpush1.msra.mxu0 0.0
    %3623 = vmatprep.subr.mxu0 0.0
    %3624 = vmatpush1.msra.mxu0 0.0
    %3625 = vmatprep.subr.mxu0 0.0
    %3626 = vmatpush1.msra.mxu0 0.0
    %3627 = vmatprep.subr.mxu0 0.0
    %3628 = vmatpush1.msra.mxu0 0.0
    %3629 = vmatprep.subr.mxu0 0.0
    %3630 = vmatpush1.msra.mxu0 0.0
    %3631 = vmatprep.subr.mxu0 0.0
    %3632 = vmatpush1.msra.mxu0 0.0
    %3633 = vmatprep.subr.mxu0 0.0
    %3634 = vmatpush1.msra.mxu0 0.0
    %3635 = vmatprep.subr.mxu0 0.0
    %3636 = vmatpush1.msra.mxu0 0.0
    %3637 = vmatprep.subr.mxu0 0.0
    %3638 = vmatpush1.msra.mxu0 0.0
    %3639 = vmatprep.subr.mxu0 0.0
    %3640 = vmatpush1.msra.mxu0 0.0
    %3641 = vmatprep.subr.mxu0 0.0
    %3642 = vmatpush1.msra.mxu0 0.0
    %3643 = vmatprep.subr.mxu0 0.0
    %3644 = vmatpush1.msra.mxu0 0.0
    %3645 = vmatprep.subr.mxu0 0.0
    %3646 = vmatpush1.msra.mxu0 0.0
    %3647 = vmatprep.subr.mxu0 0.0
    %3648 = vmatpush1.msra.mxu0 0.0
    %3649 = vmatprep.mubr.f32.mxu0 %v3583
    %3650 = vmatmul.mubr.f32.gmra.mrb[0].mxu0 %v3580
    %v3651 = vpop.f32.mrb[0].mxu0
    %v3652 = vadd.f32 0.0, %v3651
    %v3653 = vpop.f32.mrb[0].mxu0
    %v3654 = vadd.f32 0.0, %v3653
    %3655 = vdwg.mxu0
    %v3656 = vadd.f32 %v3569, %v3652
    %v3657 = vadd.f32 %v3570, %v3654
    %s3658 = scalar_lea.vmem %s0, 92
    %v3659 = vld [vmem:[%s3658] sm:$0xf]
    %v3662 = vunpack.c.l.s4 1983009808
    %v3663 = vunpack.c.0.s8 %v3662
    %v3664 = vlaneseq
    %v3665 = vshrl.u32 %v3664, 7
    %v3666 = vsub.s32 %v3663, %v3665
    %v3667 = vrot.slane %v3659, %v3666
    %v3668 = vcombine.high %v3667, %v3667
    %v3670 = vsel %vm272, %v3668, 0
    %3672 = vmatprep.subr.mxu0 %v1053
    %3673 = vmatpush1.msra.mxu0 %v1052
    %3674 = vmatprep.subr.mxu0 %v1055
    %3675 = vmatpush1.msra.mxu0 %v1054
    %3676 = vmatprep.subr.mxu0 %v1057
    %3677 = vmatpush1.msra.mxu0 %v1056
    %3678 = vmatprep.subr.mxu0 %v1059
    %3679 = vmatpush1.msra.mxu0 %v1058
    %3680 = vmatprep.subr.mxu0 %v1061
    %3681 = vmatpush1.msra.mxu0 %v1060
    %3682 = vmatprep.subr.mxu0 %v1063
    %3683 = vmatpush1.msra.mxu0 %v1062
    %3684 = vmatprep.subr.mxu0 %v1065
    %3685 = vmatpush1.msra.mxu0 %v1064
    %3686 = vmatprep.subr.mxu0 %v1067
    %3687 = vmatpush1.msra.mxu0 %v1066
    %3688 = vmatprep.subr.mxu0 %v1069
    %3689 = vmatpush1.msra.mxu0 %v1068
    %3690 = vmatprep.subr.mxu0 %v1071
    %3691 = vmatpush1.msra.mxu0 %v1070
    %3692 = vmatprep.subr.mxu0 %v1073
    %3693 = vmatpush1.msra.mxu0 %v1072
    %3694 = vmatprep.subr.mxu0 %v1075
    %3695 = vmatpush1.msra.mxu0 %v1074
    %3696 = vmatprep.subr.mxu0 %v1077
    %3697 = vmatpush1.msra.mxu0 %v1076
    %3698 = vmatprep.subr.mxu0 %v1079
    %3699 = vmatpush1.msra.mxu0 %v1078
    %3700 = vmatprep.subr.mxu0 %v1081
    %3701 = vmatpush1.msra.mxu0 %v1080
    %3702 = vmatprep.subr.mxu0 %v1083
    %3703 = vmatpush1.msra.mxu0 %v1082
    %3704 = vmatprep.subr.mxu0 %v1085
    %3705 = vmatpush1.msra.mxu0 %v1084
    %3706 = vmatprep.subr.mxu0 %v1087
    %3707 = vmatpush1.msra.mxu0 %v1086
    %3708 = vmatprep.subr.mxu0 0.0
    %3709 = vmatpush1.msra.mxu0 0.0
    %3710 = vmatprep.subr.mxu0 0.0
    %3711 = vmatpush1.msra.mxu0 0.0
    %3712 = vmatprep.subr.mxu0 0.0
    %3713 = vmatpush1.msra.mxu0 0.0
    %3714 = vmatprep.subr.mxu0 0.0
    %3715 = vmatpush1.msra.mxu0 0.0
    %3716 = vmatprep.subr.mxu0 0.0
    %3717 = vmatpush1.msra.mxu0 0.0
    %3718 = vmatprep.subr.mxu0 0.0
    %3719 = vmatpush1.msra.mxu0 0.0
    %3720 = vmatprep.subr.mxu0 0.0
    %3721 = vmatpush1.msra.mxu0 0.0
    %3722 = vmatprep.subr.mxu0 0.0
    %3723 = vmatpush1.msra.mxu0 0.0
    %3724 = vmatprep.subr.mxu0 0.0
    %3725 = vmatpush1.msra.mxu0 0.0
    %3726 = vmatprep.subr.mxu0 0.0
    %3727 = vmatpush1.msra.mxu0 0.0
    %3728 = vmatprep.subr.mxu0 0.0
    %3729 = vmatpush1.msra.mxu0 0.0
    %3730 = vmatprep.subr.mxu0 0.0
    %3731 = vmatpush1.msra.mxu0 0.0
    %3732 = vmatprep.subr.mxu0 0.0
    %3733 = vmatpush1.msra.mxu0 0.0
    %3734 = vmatprep.subr.mxu0 0.0
    %3735 = vmatpush1.msra.mxu0 0.0
    %3736 = vmatprep.mubr.f32.mxu0 %v3670
    %3737 = vmatmul.mubr.f32.gmra.mrb[0].mxu0 %v3667
    %v3738 = vpop.f32.mrb[0].mxu0
    %v3739 = vadd.f32 0.0, %v3738
    %v3740 = vpop.f32.mrb[0].mxu0
    %v3741 = vadd.f32 0.0, %v3740
    %3742 = vdwg.mxu0
    %v3743 = vadd.f32 %v3656, %v3739
    %v3744 = vadd.f32 %v3657, %v3741
    %v3745 = vadd.f32 %v3743, %v1178
    %v3746 = vadd.f32 %v3744, %v1182
    %v3747 = vmax.f32 %v3745, 0.0
    %v3748 = vmax.f32 %v3746, 0.0
    %3749 = vmatprep.subr.mxu0 %v227
    %3750 = vmatpush1.msra.mxu0 %v226
    %3751 = vmatprep.subr.mxu0 %v229
    %3752 = vmatpush1.msra.mxu0 %v228
    %3753 = vmatprep.subr.mxu0 %v231
    %3754 = vmatpush1.msra.mxu0 %v230
    %3755 = vmatprep.subr.mxu0 %v233
    %3756 = vmatpush1.msra.mxu0 %v232
    %3757 = vmatprep.subr.mxu0 %v235
    %3758 = vmatpush1.msra.mxu0 %v234
    %3759 = vmatprep.subr.mxu0 %v237
    %3760 = vmatpush1.msra.mxu0 %v236
    %3761 = vmatprep.subr.mxu0 %v239
    %3762 = vmatpush1.msra.mxu0 %v238
    %3763 = vmatprep.subr.mxu0 %v241
    %3764 = vmatpush1.msra.mxu0 %v240
    %3765 = vmatprep.subr.mxu0 %v243
    %3766 = vmatpush1.msra.mxu0 %v242
    %3767 = vmatprep.subr.mxu0 %v245
    %3768 = vmatpush1.msra.mxu0 %v244
    %3769 = vmatprep.subr.mxu0 %v247
    %3770 = vmatpush1.msra.mxu0 %v246
    %3771 = vmatprep.subr.mxu0 %v249
    %3772 = vmatpush1.msra.mxu0 %v248
    %3773 = vmatprep.subr.mxu0 %v251
    %3774 = vmatpush1.msra.mxu0 %v250
    %3775 = vmatprep.subr.mxu0 %v253
    %3776 = vmatpush1.msra.mxu0 %v252
    %3777 = vmatprep.subr.mxu0 %v255
    %3778 = vmatpush1.msra.mxu0 %v254
    %3779 = vmatprep.subr.mxu0 %v257
    %3780 = vmatpush1.msra.mxu0 %v256
    %3781 = vmatprep.subr.mxu0 %v259
    %3782 = vmatpush1.msra.mxu0 %v258
    %3783 = vmatprep.subr.mxu0 %v261
    %3784 = vmatpush1.msra.mxu0 %v260
    %3785 = vmatprep.subr.mxu0 0.0
    %3786 = vmatpush1.msra.mxu0 0.0
    %3787 = vmatprep.subr.mxu0 0.0
    %3788 = vmatpush1.msra.mxu0 0.0
    %3789 = vmatprep.subr.mxu0 0.0
    %3790 = vmatpush1.msra.mxu0 0.0
    %3791 = vmatprep.subr.mxu0 0.0
    %3792 = vmatpush1.msra.mxu0 0.0
    %3793 = vmatprep.subr.mxu0 0.0
    %3794 = vmatpush1.msra.mxu0 0.0
    %3795 = vmatprep.subr.mxu0 0.0
    %3796 = vmatpush1.msra.mxu0 0.0
    %3797 = vmatprep.subr.mxu0 0.0
    %3798 = vmatpush1.msra.mxu0 0.0
    %3799 = vmatprep.subr.mxu0 0.0
    %3800 = vmatpush1.msra.mxu0 0.0
    %3801 = vmatprep.subr.mxu0 0.0
    %3802 = vmatpush1.msra.mxu0 0.0
    %3803 = vmatprep.subr.mxu0 0.0
    %3804 = vmatpush1.msra.mxu0 0.0
    %3805 = vmatprep.subr.mxu0 0.0
    %3806 = vmatpush1.msra.mxu0 0.0
    %3807 = vmatprep.subr.mxu0 0.0
    %3808 = vmatpush1.msra.mxu0 0.0
    %3809 = vmatprep.subr.mxu0 0.0
    %3810 = vmatpush1.msra.mxu0 0.0
    %3811 = vmatprep.subr.mxu0 0.0
    %3812 = vmatpush1.msra.mxu0 0.0
    %3813 = vmatprep.mubr.f32.mxu0 %v3496
    %3814 = vmatmul.mubr.f32.gmra.mrb[0].mxu0 %v3493
    %v3815 = vpop.f32.mrb[0].mxu0
    %v3816 = vadd.f32 0.0, %v3815
    %v3817 = vpop.f32.mrb[0].mxu0
    %v3818 = vadd.f32 0.0, %v3817
    %3819 = vdwg.mxu0
    %3820 = vmatprep.subr.mxu0 %v188
    %3821 = vmatpush1.msra.mxu0 %v187
    %3822 = vmatprep.subr.mxu0 %v190
    %3823 = vmatpush1.msra.mxu0 %v189
    %3824 = vmatprep.subr.mxu0 %v192
    %3825 = vmatpush1.msra.mxu0 %v191
    %3826 = vmatprep.subr.mxu0 %v194
    %3827 = vmatpush1.msra.mxu0 %v193
    %3828 = vmatprep.subr.mxu0 %v196
    %3829 = vmatpush1.msra.mxu0 %v195
    %3830 = vmatprep.subr.mxu0 %v198
    %3831 = vmatpush1.msra.mxu0 %v197
    %3832 = vmatprep.subr.mxu0 %v200
    %3833 = vmatpush1.msra.mxu0 %v199
    %3834 = vmatprep.subr.mxu0 %v202
    %3835 = vmatpush1.msra.mxu0 %v201
    %3836 = vmatprep.subr.mxu0 %v204
    %3837 = vmatpush1.msra.mxu0 %v203
    %3838 = vmatprep.subr.mxu0 %v206
    %3839 = vmatpush1.msra.mxu0 %v205
    %3840 = vmatprep.subr.mxu0 %v208
    %3841 = vmatpush1.msra.mxu0 %v207
    %3842 = vmatprep.subr.mxu0 %v210
    %3843 = vmatpush1.msra.mxu0 %v209
    %3844 = vmatprep.subr.mxu0 %v212
    %3845 = vmatpush1.msra.mxu0 %v211
    %3846 = vmatprep.subr.mxu0 %v214
    %3847 = vmatpush1.msra.mxu0 %v213
    %3848 = vmatprep.subr.mxu0 %v216
    %3849 = vmatpush1.msra.mxu0 %v215
    %3850 = vmatprep.subr.mxu0 %v218
    %3851 = vmatpush1.msra.mxu0 %v217
    %3852 = vmatprep.subr.mxu0 %v220
    %3853 = vmatpush1.msra.mxu0 %v219
    %3854 = vmatprep.subr.mxu0 %v222
    %3855 = vmatpush1.msra.mxu0 %v221
    %3856 = vmatprep.subr.mxu0 0.0
    %3857 = vmatpush1.msra.mxu0 0.0
    %3858 = vmatprep.subr.mxu0 0.0
    %3859 = vmatpush1.msra.mxu0 0.0
    %3860 = vmatprep.subr.mxu0 0.0
    %3861 = vmatpush1.msra.mxu0 0.0
    %3862 = vmatprep.subr.mxu0 0.0
    %3863 = vmatpush1.msra.mxu0 0.0
    %3864 = vmatprep.subr.mxu0 0.0
    %3865 = vmatpush1.msra.mxu0 0.0
    %3866 = vmatprep.subr.mxu0 0.0
    %3867 = vmatpush1.msra.mxu0 0.0
    %3868 = vmatprep.subr.mxu0 0.0
    %3869 = vmatpush1.msra.mxu0 0.0
    %3870 = vmatprep.subr.mxu0 0.0
    %3871 = vmatpush1.msra.mxu0 0.0
    %3872 = vmatprep.subr.mxu0 0.0
    %3873 = vmatpush1.msra.mxu0 0.0
    %3874 = vmatprep.subr.mxu0 0.0
    %3875 = vmatpush1.msra.mxu0 0.0
    %3876 = vmatprep.subr.mxu0 0.0
    %3877 = vmatpush1.msra.mxu0 0.0
    %3878 = vmatprep.subr.mxu0 0.0
    %3879 = vmatpush1.msra.mxu0 0.0
    %3880 = vmatprep.subr.mxu0 0.0
    %3881 = vmatpush1.msra.mxu0 0.0
    %3882 = vmatprep.subr.mxu0 0.0
    %3883 = vmatpush1.msra.mxu0 0.0
    %3884 = vmatprep.mubr.f32.mxu0 %v3409
    %3885 = vmatmul.mubr.f32.gmra.mrb[0].mxu0 %v3406
    %v3886 = vpop.f32.mrb[0].mxu0
    %v3887 = vadd.f32 %v3816, %v3886
    %v3888 = vpop.f32.mrb[0].mxu0
    %v3889 = vadd.f32 %v3818, %v3888
    %3890 = vdwg.mxu0
    %3891 = vmatprep.subr.mxu0 %v433
    %3892 = vmatpush1.msra.mxu0 %v432
    %3893 = vmatprep.subr.mxu0 %v435
    %3894 = vmatpush1.msra.mxu0 %v434
    %3895 = vmatprep.subr.mxu0 %v437
    %3896 = vmatpush1.msra.mxu0 %v436
    %3897 = vmatprep.subr.mxu0 %v439
    %3898 = vmatpush1.msra.mxu0 %v438
    %3899 = vmatprep.subr.mxu0 %v441
    %3900 = vmatpush1.msra.mxu0 %v440
    %3901 = vmatprep.subr.mxu0 %v443
    %3902 = vmatpush1.msra.mxu0 %v442
    %3903 = vmatprep.subr.mxu0 %v445
    %3904 = vmatpush1.msra.mxu0 %v444
    %3905 = vmatprep.subr.mxu0 %v447
    %3906 = vmatpush1.msra.mxu0 %v446
    %3907 = vmatprep.subr.mxu0 %v449
    %3908 = vmatpush1.msra.mxu0 %v448
    %3909 = vmatprep.subr.mxu0 %v451
    %3910 = vmatpush1.msra.mxu0 %v450
    %3911 = vmatprep.subr.mxu0 %v453
    %3912 = vmatpush1.msra.mxu0 %v452
    %3913 = vmatprep.subr.mxu0 %v455
    %3914 = vmatpush1.msra.mxu0 %v454
    %3915 = vmatprep.subr.mxu0 %v457
    %3916 = vmatpush1.msra.mxu0 %v456
    %3917 = vmatprep.subr.mxu0 %v459
    %3918 = vmatpush1.msra.mxu0 %v458
    %3919 = vmatprep.subr.mxu0 %v461
    %3920 = vmatpush1.msra.mxu0 %v460
    %3921 = vmatprep.subr.mxu0 %v463
    %3922 = vmatpush1.msra.mxu0 %v462
    %3923 = vmatprep.subr.mxu0 %v465
    %3924 = vmatpush1.msra.mxu0 %v464
    %3925 = vmatprep.subr.mxu0 %v467
    %3926 = vmatpush1.msra.mxu0 %v466
    %3927 = vmatprep.subr.mxu0 0.0
    %3928 = vmatpush1.msra.mxu0 0.0
    %3929 = vmatprep.subr.mxu0 0.0
    %3930 = vmatpush1.msra.mxu0 0.0
    %3931 = vmatprep.subr.mxu0 0.0
    %3932 = vmatpush1.msra.mxu0 0.0
    %3933 = vmatprep.subr.mxu0 0.0
    %3934 = vmatpush1.msra.mxu0 0.0
    %3935 = vmatprep.subr.mxu0 0.0
    %3936 = vmatpush1.msra.mxu0 0.0
    %3937 = vmatprep.subr.mxu0 0.0
    %3938 = vmatpush1.msra.mxu0 0.0
    %3939 = vmatprep.subr.mxu0 0.0
    %3940 = vmatpush1.msra.mxu0 0.0
    %3941 = vmatprep.subr.mxu0 0.0
    %3942 = vmatpush1.msra.mxu0 0.0
    %3943 = vmatprep.subr.mxu0 0.0
    %3944 = vmatpush1.msra.mxu0 0.0
    %3945 = vmatprep.subr.mxu0 0.0
    %3946 = vmatpush1.msra.mxu0 0.0
    %3947 = vmatprep.subr.mxu0 0.0
    %3948 = vmatpush1.msra.mxu0 0.0
    %3949 = vmatprep.subr.mxu0 0.0
    %3950 = vmatpush1.msra.mxu0 0.0
    %3951 = vmatprep.subr.mxu0 0.0
    %3952 = vmatpush1.msra.mxu0 0.0
    %3953 = vmatprep.subr.mxu0 0.0
    %3954 = vmatpush1.msra.mxu0 0.0
    %3955 = vmatprep.mubr.f32.mxu0 %v3583
    %3956 = vmatmul.mubr.f32.gmra.mrb[0].mxu0 %v3580
    %v3957 = vpop.f32.mrb[0].mxu0
    %v3958 = vadd.f32 0.0, %v3957
    %v3959 = vpop.f32.mrb[0].mxu0
    %v3960 = vadd.f32 0.0, %v3959
    %3961 = vdwg.mxu0
    %v3962 = vadd.f32 %v3887, %v3958
    %v3963 = vadd.f32 %v3889, %v3960
    %3964 = vmatprep.subr.mxu0 %v557
    %3965 = vmatpush1.msra.mxu0 %v556
    %3966 = vmatprep.subr.mxu0 %v559
    %3967 = vmatpush1.msra.mxu0 %v558
    %3968 = vmatprep.subr.mxu0 %v561
    %3969 = vmatpush1.msra.mxu0 %v560
    %3970 = vmatprep.subr.mxu0 %v563
    %3971 = vmatpush1.msra.mxu0 %v562
    %3972 = vmatprep.subr.mxu0 %v565
    %3973 = vmatpush1.msra.mxu0 %v564
    %3974 = vmatprep.subr.mxu0 %v567
    %3975 = vmatpush1.msra.mxu0 %v566
    %3976 = vmatprep.subr.mxu0 %v569
    %3977 = vmatpush1.msra.mxu0 %v568
    %3978 = vmatprep.subr.mxu0 %v571
    %3979 = vmatpush1.msra.mxu0 %v570
    %3980 = vmatprep.subr.mxu0 %v573
    %3981 = vmatpush1.msra.mxu0 %v572
    %3982 = vmatprep.subr.mxu0 %v575
    %3983 = vmatpush1.msra.mxu0 %v574
    %3984 = vmatprep.subr.mxu0 %v577
    %3985 = vmatpush1.msra.mxu0 %v576
    %3986 = vmatprep.subr.mxu0 %v579
    %3987 = vmatpush1.msra.mxu0 %v578
    %3988 = vmatprep.subr.mxu0 %v581
    %3989 = vmatpush1.msra.mxu0 %v580
    %3990 = vmatprep.subr.mxu0 %v583
    %3991 = vmatpush1.msra.mxu0 %v582
    %3992 = vmatprep.subr.mxu0 %v585
    %3993 = vmatpush1.msra.mxu0 %v584
    %3994 = vmatprep.subr.mxu0 %v587
    %3995 = vmatpush1.msra.mxu0 %v586
    %3996 = vmatprep.subr.mxu0 %v589
    %3997 = vmatpush1.msra.mxu0 %v588
    %3998 = vmatprep.subr.mxu0 %v591
    %3999 = vmatpush1.msra.mxu0 %v590
    %4000 = vmatprep.subr.mxu0 0.0
    %4001 = vmatpush1.msra.mxu0 0.0
    %4002 = vmatprep.subr.mxu0 0.0
    %4003 = vmatpush1.msra.mxu0 0.0
    %4004 = vmatprep.subr.mxu0 0.0
    %4005 = vmatpush1.msra.mxu0 0.0
    %4006 = vmatprep.subr.mxu0 0.0
    %4007 = vmatpush1.msra.mxu0 0.0
    %4008 = vmatprep.subr.mxu0 0.0
    %4009 = vmatpush1.msra.mxu0 0.0
    %4010 = vmatprep.subr.mxu0 0.0
    %4011 = vmatpush1.msra.mxu0 0.0
    %4012 = vmatprep.subr.mxu0 0.0
    %4013 = vmatpush1.msra.mxu0 0.0
    %4014 = vmatprep.subr.mxu0 0.0
    %4015 = vmatpush1.msra.mxu0 0.0
    %4016 = vmatprep.subr.mxu0 0.0
    %4017 = vmatpush1.msra.mxu0 0.0
    %4018 = vmatprep.subr.mxu0 0.0
    %4019 = vmatpush1.msra.mxu0 0.0
    %4020 = vmatprep.subr.mxu0 0.0
    %4021 = vmatpush1.msra.mxu0 0.0
    %4022 = vmatprep.subr.mxu0 0.0
    %4023 = vmatpush1.msra.mxu0 0.0
    %4024 = vmatprep.subr.mxu0 0.0
    %4025 = vmatpush1.msra.mxu0 0.0
    %4026 = vmatprep.subr.mxu0 0.0
    %4027 = vmatpush1.msra.mxu0 0.0
    %4028 = vmatprep.mubr.f32.mxu0 %v3670
    %4029 = vmatmul.mubr.f32.gmra.mrb[0].mxu0 %v3667
    %v4030 = vpop.f32.mrb[0].mxu0
    %v4031 = vadd.f32 0.0, %v4030
    %v4032 = vpop.f32.mrb[0].mxu0
    %v4033 = vadd.f32 0.0, %v4032
    %4034 = vdwg.mxu0
    %v4035 = vadd.f32 %v3962, %v4031
    %v4036 = vadd.f32 %v3963, %v4033
    %s4037 = scalar_lea.vmem %s0, 96
    %v4038 = vld [vmem:[%s4037] sm:$0xf]
    %v4041 = vunpack.c.l.s4 1983009808
    %v4042 = vunpack.c.0.s8 %v4041
    %v4043 = vlaneseq
    %v4044 = vshrl.u32 %v4043, 7
    %v4045 = vsub.s32 %v4042, %v4044
    %v4046 = vrot.slane %v4038, %v4045
    %v4047 = vcombine.high %v4046, %v4046
    %v4049 = vsel %vm272, %v4047, 0
    %4051 = vmatprep.subr.mxu0 %v681
    %4052 = vmatpush1.msra.mxu0 %v680
    %4053 = vmatprep.subr.mxu0 %v683
    %4054 = vmatpush1.msra.mxu0 %v682
    %4055 = vmatprep.subr.mxu0 %v685
    %4056 = vmatpush1.msra.mxu0 %v684
    %4057 = vmatprep.subr.mxu0 %v687
    %4058 = vmatpush1.msra.mxu0 %v686
    %4059 = vmatprep.subr.mxu0 %v689
    %4060 = vmatpush1.msra.mxu0 %v688
    %4061 = vmatprep.subr.mxu0 %v691
    %4062 = vmatpush1.msra.mxu0 %v690
    %4063 = vmatprep.subr.mxu0 %v693
    %4064 = vmatpush1.msra.mxu0 %v692
    %4065 = vmatprep.subr.mxu0 %v695
    %4066 = vmatpush1.msra.mxu0 %v694
    %4067 = vmatprep.subr.mxu0 %v697
    %4068 = vmatpush1.msra.mxu0 %v696
    %4069 = vmatprep.subr.mxu0 %v699
    %4070 = vmatpush1.msra.mxu0 %v698
    %4071 = vmatprep.subr.mxu0 %v701
    %4072 = vmatpush1.msra.mxu0 %v700
    %4073 = vmatprep.subr.mxu0 %v703
    %4074 = vmatpush1.msra.mxu0 %v702
    %4075 = vmatprep.subr.mxu0 %v705
    %4076 = vmatpush1.msra.mxu0 %v704
    %4077 = vmatprep.subr.mxu0 %v707
    %4078 = vmatpush1.msra.mxu0 %v706
    %4079 = vmatprep.subr.mxu0 %v709
    %4080 = vmatpush1.msra.mxu0 %v708
    %4081 = vmatprep.subr.mxu0 %v711
    %4082 = vmatpush1.msra.mxu0 %v710
    %4083 = vmatprep.subr.mxu0 %v713
    %4084 = vmatpush1.msra.mxu0 %v712
    %4085 = vmatprep.subr.mxu0 %v715
    %4086 = vmatpush1.msra.mxu0 %v714
    %4087 = vmatprep.subr.mxu0 0.0
    %4088 = vmatpush1.msra.mxu0 0.0
    %4089 = vmatprep.subr.mxu0 0.0
    %4090 = vmatpush1.msra.mxu0 0.0
    %4091 = vmatprep.subr.mxu0 0.0
    %4092 = vmatpush1.msra.mxu0 0.0
    %4093 = vmatprep.subr.mxu0 0.0
    %4094 = vmatpush1.msra.mxu0 0.0
    %4095 = vmatprep.subr.mxu0 0.0
    %4096 = vmatpush1.msra.mxu0 0.0
    %4097 = vmatprep.subr.mxu0 0.0
    %4098 = vmatpush1.msra.mxu0 0.0
    %4099 = vmatprep.subr.mxu0 0.0
    %4100 = vmatpush1.msra.mxu0 0.0
    %4101 = vmatprep.subr.mxu0 0.0
    %4102 = vmatpush1.msra.mxu0 0.0
    %4103 = vmatprep.subr.mxu0 0.0
    %4104 = vmatpush1.msra.mxu0 0.0
    %4105 = vmatprep.subr.mxu0 0.0
    %4106 = vmatpush1.msra.mxu0 0.0
    %4107 = vmatprep.subr.mxu0 0.0
    %4108 = vmatpush1.msra.mxu0 0.0
    %4109 = vmatprep.subr.mxu0 0.0
    %4110 = vmatpush1.msra.mxu0 0.0
    %4111 = vmatprep.subr.mxu0 0.0
    %4112 = vmatpush1.msra.mxu0 0.0
    %4113 = vmatprep.subr.mxu0 0.0
    %4114 = vmatpush1.msra.mxu0 0.0
    %4115 = vmatprep.mubr.f32.mxu0 %v4049
    %4116 = vmatmul.mubr.f32.gmra.mrb[0].mxu0 %v4046
    %v4117 = vpop.f32.mrb[0].mxu0
    %v4118 = vadd.f32 0.0, %v4117
    %v4119 = vpop.f32.mrb[0].mxu0
    %v4120 = vadd.f32 0.0, %v4119
    %4121 = vdwg.mxu0
    %v4122 = vadd.f32 %v4035, %v4118
    %v4123 = vadd.f32 %v4036, %v4120
    %s4124 = scalar_lea.vmem %s0, 100
    %v4125 = vld [vmem:[%s4124] sm:$0xf]
    %v4128 = vunpack.c.l.s4 1983009808
    %v4129 = vunpack.c.0.s8 %v4128
    %v4130 = vlaneseq
    %v4131 = vshrl.u32 %v4130, 7
    %v4132 = vsub.s32 %v4129, %v4131
    %v4133 = vrot.slane %v4125, %v4132
    %v4134 = vcombine.high %v4133, %v4133
    %v4136 = vsel %vm272, %v4134, 0
    %4138 = vmatprep.subr.mxu0 %v805
    %4139 = vmatpush1.msra.mxu0 %v804
    %4140 = vmatprep.subr.mxu0 %v807
    %4141 = vmatpush1.msra.mxu0 %v806
    %4142 = vmatprep.subr.mxu0 %v809
    %4143 = vmatpush1.msra.mxu0 %v808
    %4144 = vmatprep.subr.mxu0 %v811
    %4145 = vmatpush1.msra.mxu0 %v810
    %4146 = vmatprep.subr.mxu0 %v813
    %4147 = vmatpush1.msra.mxu0 %v812
    %4148 = vmatprep.subr.mxu0 %v815
    %4149 = vmatpush1.msra.mxu0 %v814
    %4150 = vmatprep.subr.mxu0 %v817
    %4151 = vmatpush1.msra.mxu0 %v816
    %4152 = vmatprep.subr.mxu0 %v819
    %4153 = vmatpush1.msra.mxu0 %v818
    %4154 = vmatprep.subr.mxu0 %v821
    %4155 = vmatpush1.msra.mxu0 %v820
    %4156 = vmatprep.subr.mxu0 %v823
    %4157 = vmatpush1.msra.mxu0 %v822
    %4158 = vmatprep.subr.mxu0 %v825
    %4159 = vmatpush1.msra.mxu0 %v824
    %4160 = vmatprep.subr.mxu0 %v827
    %4161 = vmatpush1.msra.mxu0 %v826
    %4162 = vmatprep.subr.mxu0 %v829
    %4163 = vmatpush1.msra.mxu0 %v828
    %4164 = vmatprep.subr.mxu0 %v831
    %4165 = vmatpush1.msra.mxu0 %v830
    %4166 = vmatprep.subr.mxu0 %v833
    %4167 = vmatpush1.msra.mxu0 %v832
    %4168 = vmatprep.subr.mxu0 %v835
    %4169 = vmatpush1.msra.mxu0 %v834
    %4170 = vmatprep.subr.mxu0 %v837
    %4171 = vmatpush1.msra.mxu0 %v836
    %4172 = vmatprep.subr.mxu0 %v839
    %4173 = vmatpush1.msra.mxu0 %v838
    %4174 = vmatprep.subr.mxu0 0.0
    %4175 = vmatpush1.msra.mxu0 0.0
    %4176 = vmatprep.subr.mxu0 0.0
    %4177 = vmatpush1.msra.mxu0 0.0
    %4178 = vmatprep.subr.mxu0 0.0
    %4179 = vmatpush1.msra.mxu0 0.0
    %4180 = vmatprep.subr.mxu0 0.0
    %4181 = vmatpush1.msra.mxu0 0.0
    %4182 = vmatprep.subr.mxu0 0.0
    %4183 = vmatpush1.msra.mxu0 0.0
    %4184 = vmatprep.subr.mxu0 0.0
    %4185 = vmatpush1.msra.mxu0 0.0
    %4186 = vmatprep.subr.mxu0 0.0
    %4187 = vmatpush1.msra.mxu0 0.0
    %4188 = vmatprep.subr.mxu0 0.0
    %4189 = vmatpush1.msra.mxu0 0.0
    %4190 = vmatprep.subr.mxu0 0.0
    %4191 = vmatpush1.msra.mxu0 0.0
    %4192 = vmatprep.subr.mxu0 0.0
    %4193 = vmatpush1.msra.mxu0 0.0
    %4194 = vmatprep.subr.mxu0 0.0
    %4195 = vmatpush1.msra.mxu0 0.0
    %4196 = vmatprep.subr.mxu0 0.0
    %4197 = vmatpush1.msra.mxu0 0.0
    %4198 = vmatprep.subr.mxu0 0.0
    %4199 = vmatpush1.msra.mxu0 0.0
    %4200 = vmatprep.subr.mxu0 0.0
    %4201 = vmatpush1.msra.mxu0 0.0
    %4202 = vmatprep.mubr.f32.mxu0 %v4136
    %4203 = vmatmul.mubr.f32.gmra.mrb[0].mxu0 %v4133
    %v4204 = vpop.f32.mrb[0].mxu0
    %v4205 = vadd.f32 0.0, %v4204
    %v4206 = vpop.f32.mrb[0].mxu0
    %v4207 = vadd.f32 0.0, %v4206
    %4208 = vdwg.mxu0
    %v4209 = vadd.f32 %v4122, %v4205
    %v4210 = vadd.f32 %v4123, %v4207
    %s4211 = scalar_lea.vmem %s0, 104
    %v4212 = vld [vmem:[%s4211] sm:$0xf]
    %v4215 = vunpack.c.l.s4 1983009808
    %v4216 = vunpack.c.0.s8 %v4215
    %v4217 = vlaneseq
    %v4218 = vshrl.u32 %v4217, 7
    %v4219 = vsub.s32 %v4216, %v4218
    %v4220 = vrot.slane %v4212, %v4219
    %v4221 = vcombine.high %v4220, %v4220
    %v4223 = vsel %vm272, %v4221, 0
    %4225 = vmatprep.subr.mxu0 %v929
    %4226 = vmatpush1.msra.mxu0 %v928
    %4227 = vmatprep.subr.mxu0 %v931
    %4228 = vmatpush1.msra.mxu0 %v930
    %4229 = vmatprep.subr.mxu0 %v933
    %4230 = vmatpush1.msra.mxu0 %v932
    %4231 = vmatprep.subr.mxu0 %v935
    %4232 = vmatpush1.msra.mxu0 %v934
    %4233 = vmatprep.subr.mxu0 %v937
    %4234 = vmatpush1.msra.mxu0 %v936
    %4235 = vmatprep.subr.mxu0 %v939
    %4236 = vmatpush1.msra.mxu0 %v938
    %4237 = vmatprep.subr.mxu0 %v941
    %4238 = vmatpush1.msra.mxu0 %v940
    %4239 = vmatprep.subr.mxu0 %v943
    %4240 = vmatpush1.msra.mxu0 %v942
    %4241 = vmatprep.subr.mxu0 %v945
    %4242 = vmatpush1.msra.mxu0 %v944
    %4243 = vmatprep.subr.mxu0 %v947
    %4244 = vmatpush1.msra.mxu0 %v946
    %4245 = vmatprep.subr.mxu0 %v949
    %4246 = vmatpush1.msra.mxu0 %v948
    %4247 = vmatprep.subr.mxu0 %v951
    %4248 = vmatpush1.msra.mxu0 %v950
    %4249 = vmatprep.subr.mxu0 %v953
    %4250 = vmatpush1.msra.mxu0 %v952
    %4251 = vmatprep.subr.mxu0 %v955
    %4252 = vmatpush1.msra.mxu0 %v954
    %4253 = vmatprep.subr.mxu0 %v957
    %4254 = vmatpush1.msra.mxu0 %v956
    %4255 = vmatprep.subr.mxu0 %v959
    %4256 = vmatpush1.msra.mxu0 %v958
    %4257 = vmatprep.subr.mxu0 %v961
    %4258 = vmatpush1.msra.mxu0 %v960
    %4259 = vmatprep.subr.mxu0 %v963
    %4260 = vmatpush1.msra.mxu0 %v962
    %4261 = vmatprep.subr.mxu0 0.0
    %4262 = vmatpush1.msra.mxu0 0.0
    %4263 = vmatprep.subr.mxu0 0.0
    %4264 = vmatpush1.msra.mxu0 0.0
    %4265 = vmatprep.subr.mxu0 0.0
    %4266 = vmatpush1.msra.mxu0 0.0
    %4267 = vmatprep.subr.mxu0 0.0
    %4268 = vmatpush1.msra.mxu0 0.0
    %4269 = vmatprep.subr.mxu0 0.0
    %4270 = vmatpush1.msra.mxu0 0.0
    %4271 = vmatprep.subr.mxu0 0.0
    %4272 = vmatpush1.msra.mxu0 0.0
    %4273 = vmatprep.subr.mxu0 0.0
    %4274 = vmatpush1.msra.mxu0 0.0
    %4275 = vmatprep.subr.mxu0 0.0
    %4276 = vmatpush1.msra.mxu0 0.0
    %4277 = vmatprep.subr.mxu0 0.0
    %4278 = vmatpush1.msra.mxu0 0.0
    %4279 = vmatprep.subr.mxu0 0.0
    %4280 = vmatpush1.msra.mxu0 0.0
    %4281 = vmatprep.subr.mxu0 0.0
    %4282 = vmatpush1.msra.mxu0 0.0
    %4283 = vmatprep.subr.mxu0 0.0
    %4284 = vmatpush1.msra.mxu0 0.0
    %4285 = vmatprep.subr.mxu0 0.0
    %4286 = vmatpush1.msra.mxu0 0.0
    %4287 = vmatprep.subr.mxu0 0.0
    %4288 = vmatpush1.msra.mxu0 0.0
    %4289 = vmatprep.mubr.f32.mxu0 %v4223
    %4290 = vmatmul.mubr.f32.gmra.mrb[0].mxu0 %v4220
    %v4291 = vpop.f32.mrb[0].mxu0
    %v4292 = vadd.f32 0.0, %v4291
    %v4293 = vpop.f32.mrb[0].mxu0
    %v4294 = vadd.f32 0.0, %v4293
    %4295 = vdwg.mxu0
    %v4296 = vadd.f32 %v4209, %v4292
    %v4297 = vadd.f32 %v4210, %v4294
    %s4298 = scalar_lea.vmem %s0, 108
    %v4299 = vld [vmem:[%s4298] sm:$0xf]
    %v4302 = vunpack.c.l.s4 1983009808
    %v4303 = vunpack.c.0.s8 %v4302
    %v4304 = vlaneseq
    %v4305 = vshrl.u32 %v4304, 7
    %v4306 = vsub.s32 %v4303, %v4305
    %v4307 = vrot.slane %v4299, %v4306
    %v4308 = vcombine.high %v4307, %v4307
    %v4310 = vsel %vm272, %v4308, 0
    %4312 = vmatprep.subr.mxu0 %v1053
    %4313 = vmatpush1.msra.mxu0 %v1052
    %4314 = vmatprep.subr.mxu0 %v1055
    %4315 = vmatpush1.msra.mxu0 %v1054
    %4316 = vmatprep.subr.mxu0 %v1057
    %4317 = vmatpush1.msra.mxu0 %v1056
    %4318 = vmatprep.subr.mxu0 %v1059
    %4319 = vmatpush1.msra.mxu0 %v1058
    %4320 = vmatprep.subr.mxu0 %v1061
    %4321 = vmatpush1.msra.mxu0 %v1060
    %4322 = vmatprep.subr.mxu0 %v1063
    %4323 = vmatpush1.msra.mxu0 %v1062
    %4324 = vmatprep.subr.mxu0 %v1065
    %4325 = vmatpush1.msra.mxu0 %v1064
    %4326 = vmatprep.subr.mxu0 %v1067
    %4327 = vmatpush1.msra.mxu0 %v1066
    %4328 = vmatprep.subr.mxu0 %v1069
    %4329 = vmatpush1.msra.mxu0 %v1068
    %4330 = vmatprep.subr.mxu0 %v1071
    %4331 = vmatpush1.msra.mxu0 %v1070
    %4332 = vmatprep.subr.mxu0 %v1073
    %4333 = vmatpush1.msra.mxu0 %v1072
    %4334 = vmatprep.subr.mxu0 %v1075
    %4335 = vmatpush1.msra.mxu0 %v1074
    %4336 = vmatprep.subr.mxu0 %v1077
    %4337 = vmatpush1.msra.mxu0 %v1076
    %4338 = vmatprep.subr.mxu0 %v1079
    %4339 = vmatpush1.msra.mxu0 %v1078
    %4340 = vmatprep.subr.mxu0 %v1081
    %4341 = vmatpush1.msra.mxu0 %v1080
    %4342 = vmatprep.subr.mxu0 %v1083
    %4343 = vmatpush1.msra.mxu0 %v1082
    %4344 = vmatprep.subr.mxu0 %v1085
    %4345 = vmatpush1.msra.mxu0 %v1084
    %4346 = vmatprep.subr.mxu0 %v1087
    %4347 = vmatpush1.msra.mxu0 %v1086
    %4348 = vmatprep.subr.mxu0 0.0
    %4349 = vmatpush1.msra.mxu0 0.0
    %4350 = vmatprep.subr.mxu0 0.0
    %4351 = vmatpush1.msra.mxu0 0.0
    %4352 = vmatprep.subr.mxu0 0.0
    %4353 = vmatpush1.msra.mxu0 0.0
    %4354 = vmatprep.subr.mxu0 0.0
    %4355 = vmatpush1.msra.mxu0 0.0
    %4356 = vmatprep.subr.mxu0 0.0
    %4357 = vmatpush1.msra.mxu0 0.0
    %4358 = vmatprep.subr.mxu0 0.0
    %4359 = vmatpush1.msra.mxu0 0.0
    %4360 = vmatprep.subr.mxu0 0.0
    %4361 = vmatpush1.msra.mxu0 0.0
    %4362 = vmatprep.subr.mxu0 0.0
    %4363 = vmatpush1.msra.mxu0 0.0
    %4364 = vmatprep.subr.mxu0 0.0
    %4365 = vmatpush1.msra.mxu0 0.0
    %4366 = vmatprep.subr.mxu0 0.0
    %4367 = vmatpush1.msra.mxu0 0.0
    %4368 = vmatprep.subr.mxu0 0.0
    %4369 = vmatpush1.msra.mxu0 0.0
    %4370 = vmatprep.subr.mxu0 0.0
    %4371 = vmatpush1.msra.mxu0 0.0
    %4372 = vmatprep.subr.mxu0 0.0
    %4373 = vmatpush1.msra.mxu0 0.0
    %4374 = vmatprep.subr.mxu0 0.0
    %4375 = vmatpush1.msra.mxu0 0.0
    %4376 = vmatprep.mubr.f32.mxu0 %v4310
    %4377 = vmatmul.mubr.f32.gmra.mrb[0].mxu0 %v4307
    %v4378 = vpop.f32.mrb[0].mxu0
    %v4379 = vadd.f32 0.0, %v4378
    %v4380 = vpop.f32.mrb[0].mxu0
    %v4381 = vadd.f32 0.0, %v4380
    %4382 = vdwg.mxu0
    %v4383 = vadd.f32 %v4296, %v4379
    %v4384 = vadd.f32 %v4297, %v4381
    %v4385 = vadd.f32 %v4383, %v1178
    %v4386 = vadd.f32 %v4384, %v1182
    %v4387 = vmax.f32 %v4385, 0.0
    %v4388 = vmax.f32 %v4386, 0.0
    %4389 = vmatprep.subr.mxu0 %v227
    %4390 = vmatpush1.msra.mxu0 %v226
    %4391 = vmatprep.subr.mxu0 %v229
    %4392 = vmatpush1.msra.mxu0 %v228
    %4393 = vmatprep.subr.mxu0 %v231
    %4394 = vmatpush1.msra.mxu0 %v230
    %4395 = vmatprep.subr.mxu0 %v233
    %4396 = vmatpush1.msra.mxu0 %v232
    %4397 = vmatprep.subr.mxu0 %v235
    %4398 = vmatpush1.msra.mxu0 %v234
    %4399 = vmatprep.subr.mxu0 %v237
    %4400 = vmatpush1.msra.mxu0 %v236
    %4401 = vmatprep.subr.mxu0 %v239
    %4402 = vmatpush1.msra.mxu0 %v238
    %4403 = vmatprep.subr.mxu0 %v241
    %4404 = vmatpush1.msra.mxu0 %v240
    %4405 = vmatprep.subr.mxu0 %v243
    %4406 = vmatpush1.msra.mxu0 %v242
    %4407 = vmatprep.subr.mxu0 %v245
    %4408 = vmatpush1.msra.mxu0 %v244
    %4409 = vmatprep.subr.mxu0 %v247
    %4410 = vmatpush1.msra.mxu0 %v246
    %4411 = vmatprep.subr.mxu0 %v249
    %4412 = vmatpush1.msra.mxu0 %v248
    %4413 = vmatprep.subr.mxu0 %v251
    %4414 = vmatpush1.msra.mxu0 %v250
    %4415 = vmatprep.subr.mxu0 %v253
    %4416 = vmatpush1.msra.mxu0 %v252
    %4417 = vmatprep.subr.mxu0 %v255
    %4418 = vmatpush1.msra.mxu0 %v254
    %4419 = vmatprep.subr.mxu0 %v257
    %4420 = vmatpush1.msra.mxu0 %v256
    %4421 = vmatprep.subr.mxu0 %v259
    %4422 = vmatpush1.msra.mxu0 %v258
    %4423 = vmatprep.subr.mxu0 %v261
    %4424 = vmatpush1.msra.mxu0 %v260
    %4425 = vmatprep.subr.mxu0 0.0
    %4426 = vmatpush1.msra.mxu0 0.0
    %4427 = vmatprep.subr.mxu0 0.0
    %4428 = vmatpush1.msra.mxu0 0.0
    %4429 = vmatprep.subr.mxu0 0.0
    %4430 = vmatpush1.msra.mxu0 0.0
    %4431 = vmatprep.subr.mxu0 0.0
    %4432 = vmatpush1.msra.mxu0 0.0
    %4433 = vmatprep.subr.mxu0 0.0
    %4434 = vmatpush1.msra.mxu0 0.0
    %4435 = vmatprep.subr.mxu0 0.0
    %4436 = vmatpush1.msra.mxu0 0.0
    %4437 = vmatprep.subr.mxu0 0.0
    %4438 = vmatpush1.msra.mxu0 0.0
    %4439 = vmatprep.subr.mxu0 0.0
    %4440 = vmatpush1.msra.mxu0 0.0
    %4441 = vmatprep.subr.mxu0 0.0
    %4442 = vmatpush1.msra.mxu0 0.0
    %4443 = vmatprep.subr.mxu0 0.0
    %4444 = vmatpush1.msra.mxu0 0.0
    %4445 = vmatprep.subr.mxu0 0.0
    %4446 = vmatpush1.msra.mxu0 0.0
    %4447 = vmatprep.subr.mxu0 0.0
    %4448 = vmatpush1.msra.mxu0 0.0
    %4449 = vmatprep.subr.mxu0 0.0
    %4450 = vmatpush1.msra.mxu0 0.0
    %4451 = vmatprep.subr.mxu0 0.0
    %4452 = vmatpush1.msra.mxu0 0.0
    %4453 = vmatprep.mubr.f32.mxu0 %v4136
    %4454 = vmatmul.mubr.f32.gmra.mrb[0].mxu0 %v4133
    %v4455 = vpop.f32.mrb[0].mxu0
    %v4456 = vadd.f32 0.0, %v4455
    %v4457 = vpop.f32.mrb[0].mxu0
    %v4458 = vadd.f32 0.0, %v4457
    %4459 = vdwg.mxu0
    %4460 = vmatprep.subr.mxu0 %v188
    %4461 = vmatpush1.msra.mxu0 %v187
    %4462 = vmatprep.subr.mxu0 %v190
    %4463 = vmatpush1.msra.mxu0 %v189
    %4464 = vmatprep.subr.mxu0 %v192
    %4465 = vmatpush1.msra.mxu0 %v191
    %4466 = vmatprep.subr.mxu0 %v194
    %4467 = vmatpush1.msra.mxu0 %v193
    %4468 = vmatprep.subr.mxu0 %v196
    %4469 = vmatpush1.msra.mxu0 %v195
    %4470 = vmatprep.subr.mxu0 %v198
    %4471 = vmatpush1.msra.mxu0 %v197
    %4472 = vmatprep.subr.mxu0 %v200
    %4473 = vmatpush1.msra.mxu0 %v199
    %4474 = vmatprep.subr.mxu0 %v202
    %4475 = vmatpush1.msra.mxu0 %v201
    %4476 = vmatprep.subr.mxu0 %v204
    %4477 = vmatpush1.msra.mxu0 %v203
    %4478 = vmatprep.subr.mxu0 %v206
    %4479 = vmatpush1.msra.mxu0 %v205
    %4480 = vmatprep.subr.mxu0 %v208
    %4481 = vmatpush1.msra.mxu0 %v207
    %4482 = vmatprep.subr.mxu0 %v210
    %4483 = vmatpush1.msra.mxu0 %v209
    %4484 = vmatprep.subr.mxu0 %v212
    %4485 = vmatpush1.msra.mxu0 %v211
    %4486 = vmatprep.subr.mxu0 %v214
    %4487 = vmatpush1.msra.mxu0 %v213
    %4488 = vmatprep.subr.mxu0 %v216
    %4489 = vmatpush1.msra.mxu0 %v215
    %4490 = vmatprep.subr.mxu0 %v218
    %4491 = vmatpush1.msra.mxu0 %v217
    %4492 = vmatprep.subr.mxu0 %v220
    %4493 = vmatpush1.msra.mxu0 %v219
    %4494 = vmatprep.subr.mxu0 %v222
    %4495 = vmatpush1.msra.mxu0 %v221
    %4496 = vmatprep.subr.mxu0 0.0
    %4497 = vmatpush1.msra.mxu0 0.0
    %4498 = vmatprep.subr.mxu0 0.0
    %4499 = vmatpush1.msra.mxu0 0.0
    %4500 = vmatprep.subr.mxu0 0.0
    %4501 = vmatpush1.msra.mxu0 0.0
    %4502 = vmatprep.subr.mxu0 0.0
    %4503 = vmatpush1.msra.mxu0 0.0
    %4504 = vmatprep.subr.mxu0 0.0
    %4505 = vmatpush1.msra.mxu0 0.0
    %4506 = vmatprep.subr.mxu0 0.0
    %4507 = vmatpush1.msra.mxu0 0.0
    %4508 = vmatprep.subr.mxu0 0.0
    %4509 = vmatpush1.msra.mxu0 0.0
    %4510 = vmatprep.subr.mxu0 0.0
    %4511 = vmatpush1.msra.mxu0 0.0
    %4512 = vmatprep.subr.mxu0 0.0
    %4513 = vmatpush1.msra.mxu0 0.0
    %4514 = vmatprep.subr.mxu0 0.0
    %4515 = vmatpush1.msra.mxu0 0.0
    %4516 = vmatprep.subr.mxu0 0.0
    %4517 = vmatpush1.msra.mxu0 0.0
    %4518 = vmatprep.subr.mxu0 0.0
    %4519 = vmatpush1.msra.mxu0 0.0
    %4520 = vmatprep.subr.mxu0 0.0
    %4521 = vmatpush1.msra.mxu0 0.0
    %4522 = vmatprep.subr.mxu0 0.0
    %4523 = vmatpush1.msra.mxu0 0.0
    %4524 = vmatprep.mubr.f32.mxu0 %v4049
    %4525 = vmatmul.mubr.f32.gmra.mrb[0].mxu0 %v4046
    %v4526 = vpop.f32.mrb[0].mxu0
    %v4527 = vadd.f32 %v4456, %v4526
    %v4528 = vpop.f32.mrb[0].mxu0
    %v4529 = vadd.f32 %v4458, %v4528
    %4530 = vdwg.mxu0
    %4531 = vmatprep.subr.mxu0 %v433
    %4532 = vmatpush1.msra.mxu0 %v432
    %4533 = vmatprep.subr.mxu0 %v435
    %4534 = vmatpush1.msra.mxu0 %v434
    %4535 = vmatprep.subr.mxu0 %v437
    %4536 = vmatpush1.msra.mxu0 %v436
    %4537 = vmatprep.subr.mxu0 %v439
    %4538 = vmatpush1.msra.mxu0 %v438
    %4539 = vmatprep.subr.mxu0 %v441
    %4540 = vmatpush1.msra.mxu0 %v440
    %4541 = vmatprep.subr.mxu0 %v443
    %4542 = vmatpush1.msra.mxu0 %v442
    %4543 = vmatprep.subr.mxu0 %v445
    %4544 = vmatpush1.msra.mxu0 %v444
    %4545 = vmatprep.subr.mxu0 %v447
    %4546 = vmatpush1.msra.mxu0 %v446
    %4547 = vmatprep.subr.mxu0 %v449
    %4548 = vmatpush1.msra.mxu0 %v448
    %4549 = vmatprep.subr.mxu0 %v451
    %4550 = vmatpush1.msra.mxu0 %v450
    %4551 = vmatprep.subr.mxu0 %v453
    %4552 = vmatpush1.msra.mxu0 %v452
    %4553 = vmatprep.subr.mxu0 %v455
    %4554 = vmatpush1.msra.mxu0 %v454
    %4555 = vmatprep.subr.mxu0 %v457
    %4556 = vmatpush1.msra.mxu0 %v456
    %4557 = vmatprep.subr.mxu0 %v459
    %4558 = vmatpush1.msra.mxu0 %v458
    %4559 = vmatprep.subr.mxu0 %v461
    %4560 = vmatpush1.msra.mxu0 %v460
    %4561 = vmatprep.subr.mxu0 %v463
    %4562 = vmatpush1.msra.mxu0 %v462
    %4563 = vmatprep.subr.mxu0 %v465
    %4564 = vmatpush1.msra.mxu0 %v464
    %4565 = vmatprep.subr.mxu0 %v467
    %4566 = vmatpush1.msra.mxu0 %v466
    %4567 = vmatprep.subr.mxu0 0.0
    %4568 = vmatpush1.msra.mxu0 0.0
    %4569 = vmatprep.subr.mxu0 0.0
    %4570 = vmatpush1.msra.mxu0 0.0
    %4571 = vmatprep.subr.mxu0 0.0
    %4572 = vmatpush1.msra.mxu0 0.0
    %4573 = vmatprep.subr.mxu0 0.0
    %4574 = vmatpush1.msra.mxu0 0.0
    %4575 = vmatprep.subr.mxu0 0.0
    %4576 = vmatpush1.msra.mxu0 0.0
    %4577 = vmatprep.subr.mxu0 0.0
    %4578 = vmatpush1.msra.mxu0 0.0
    %4579 = vmatprep.subr.mxu0 0.0
    %4580 = vmatpush1.msra.mxu0 0.0
    %4581 = vmatprep.subr.mxu0 0.0
    %4582 = vmatpush1.msra.mxu0 0.0
    %4583 = vmatprep.subr.mxu0 0.0
    %4584 = vmatpush1.msra.mxu0 0.0
    %4585 = vmatprep.subr.mxu0 0.0
    %4586 = vmatpush1.msra.mxu0 0.0
    %4587 = vmatprep.subr.mxu0 0.0
    %4588 = vmatpush1.msra.mxu0 0.0
    %4589 = vmatprep.subr.mxu0 0.0
    %4590 = vmatpush1.msra.mxu0 0.0
    %4591 = vmatprep.subr.mxu0 0.0
    %4592 = vmatpush1.msra.mxu0 0.0
    %4593 = vmatprep.subr.mxu0 0.0
    %4594 = vmatpush1.msra.mxu0 0.0
    %4595 = vmatprep.mubr.f32.mxu0 %v4223
    %4596 = vmatmul.mubr.f32.gmra.mrb[0].mxu0 %v4220
    %v4597 = vpop.f32.mrb[0].mxu0
    %v4598 = vadd.f32 0.0, %v4597
    %v4599 = vpop.f32.mrb[0].mxu0
    %v4600 = vadd.f32 0.0, %v4599
    %4601 = vdwg.mxu0
    %v4602 = vadd.f32 %v4527, %v4598
    %v4603 = vadd.f32 %v4529, %v4600
    %4604 = vmatprep.subr.mxu0 %v557
    %4605 = vmatpush1.msra.mxu0 %v556
    %4606 = vmatprep.subr.mxu0 %v559
    %4607 = vmatpush1.msra.mxu0 %v558
    %4608 = vmatprep.subr.mxu0 %v561
    %4609 = vmatpush1.msra.mxu0 %v560
    %4610 = vmatprep.subr.mxu0 %v563
    %4611 = vmatpush1.msra.mxu0 %v562
    %4612 = vmatprep.subr.mxu0 %v565
    %4613 = vmatpush1.msra.mxu0 %v564
    %4614 = vmatprep.subr.mxu0 %v567
    %4615 = vmatpush1.msra.mxu0 %v566
    %4616 = vmatprep.subr.mxu0 %v569
    %4617 = vmatpush1.msra.mxu0 %v568
    %4618 = vmatprep.subr.mxu0 %v571
    %4619 = vmatpush1.msra.mxu0 %v570
    %4620 = vmatprep.subr.mxu0 %v573
    %4621 = vmatpush1.msra.mxu0 %v572
    %4622 = vmatprep.subr.mxu0 %v575
    %4623 = vmatpush1.msra.mxu0 %v574
    %4624 = vmatprep.subr.mxu0 %v577
    %4625 = vmatpush1.msra.mxu0 %v576
    %4626 = vmatprep.subr.mxu0 %v579
    %4627 = vmatpush1.msra.mxu0 %v578
    %4628 = vmatprep.subr.mxu0 %v581
    %4629 = vmatpush1.msra.mxu0 %v580
    %4630 = vmatprep.subr.mxu0 %v583
    %4631 = vmatpush1.msra.mxu0 %v582
    %4632 = vmatprep.subr.mxu0 %v585
    %4633 = vmatpush1.msra.mxu0 %v584
    %4634 = vmatprep.subr.mxu0 %v587
    %4635 = vmatpush1.msra.mxu0 %v586
    %4636 = vmatprep.subr.mxu0 %v589
    %4637 = vmatpush1.msra.mxu0 %v588
    %4638 = vmatprep.subr.mxu0 %v591
    %4639 = vmatpush1.msra.mxu0 %v590
    %4640 = vmatprep.subr.mxu0 0.0
    %4641 = vmatpush1.msra.mxu0 0.0
    %4642 = vmatprep.subr.mxu0 0.0
    %4643 = vmatpush1.msra.mxu0 0.0
    %4644 = vmatprep.subr.mxu0 0.0
    %4645 = vmatpush1.msra.mxu0 0.0
    %4646 = vmatprep.subr.mxu0 0.0
    %4647 = vmatpush1.msra.mxu0 0.0
    %4648 = vmatprep.subr.mxu0 0.0
    %4649 = vmatpush1.msra.mxu0 0.0
    %4650 = vmatprep.subr.mxu0 0.0
    %4651 = vmatpush1.msra.mxu0 0.0
    %4652 = vmatprep.subr.mxu0 0.0
    %4653 = vmatpush1.msra.mxu0 0.0
    %4654 = vmatprep.subr.mxu0 0.0
    %4655 = vmatpush1.msra.mxu0 0.0
    %4656 = vmatprep.subr.mxu0 0.0
    %4657 = vmatpush1.msra.mxu0 0.0
    %4658 = vmatprep.subr.mxu0 0.0
    %4659 = vmatpush1.msra.mxu0 0.0
    %4660 = vmatprep.subr.mxu0 0.0
    %4661 = vmatpush1.msra.mxu0 0.0
    %4662 = vmatprep.subr.mxu0 0.0
    %4663 = vmatpush1.msra.mxu0 0.0
    %4664 = vmatprep.subr.mxu0 0.0
    %4665 = vmatpush1.msra.mxu0 0.0
    %4666 = vmatprep.subr.mxu0 0.0
    %4667 = vmatpush1.msra.mxu0 0.0
    %4668 = vmatprep.mubr.f32.mxu0 %v4310
    %4669 = vmatmul.mubr.f32.gmra.mrb[0].mxu0 %v4307
    %v4670 = vpop.f32.mrb[0].mxu0
    %v4671 = vadd.f32 0.0, %v4670
    %v4672 = vpop.f32.mrb[0].mxu0
    %v4673 = vadd.f32 0.0, %v4672
    %4674 = vdwg.mxu0
    %v4675 = vadd.f32 %v4602, %v4671
    %v4676 = vadd.f32 %v4603, %v4673
    %s4677 = scalar_lea.vmem %s0, 112
    %v4678 = vld [vmem:[%s4677] sm:$0xf]
    %v4681 = vunpack.c.l.s4 1983009808
    %v4682 = vunpack.c.0.s8 %v4681
    %v4683 = vlaneseq
    %v4684 = vshrl.u32 %v4683, 7
    %v4685 = vsub.s32 %v4682, %v4684
    %v4686 = vrot.slane %v4678, %v4685
    %v4687 = vcombine.high %v4686, %v4686
    %v4689 = vsel %vm272, %v4687, 0
    %4691 = vmatprep.subr.mxu0 %v681
    %4692 = vmatpush1.msra.mxu0 %v680
    %4693 = vmatprep.subr.mxu0 %v683
    %4694 = vmatpush1.msra.mxu0 %v682
    %4695 = vmatprep.subr.mxu0 %v685
    %4696 = vmatpush1.msra.mxu0 %v684
    %4697 = vmatprep.subr.mxu0 %v687
    %4698 = vmatpush1.msra.mxu0 %v686
    %4699 = vmatprep.subr.mxu0 %v689
    %4700 = vmatpush1.msra.mxu0 %v688
    %4701 = vmatprep.subr.mxu0 %v691
    %4702 = vmatpush1.msra.mxu0 %v690
    %4703 = vmatprep.subr.mxu0 %v693
    %4704 = vmatpush1.msra.mxu0 %v692
    %4705 = vmatprep.subr.mxu0 %v695
    %4706 = vmatpush1.msra.mxu0 %v694
    %4707 = vmatprep.subr.mxu0 %v697
    %4708 = vmatpush1.msra.mxu0 %v696
    %4709 = vmatprep.subr.mxu0 %v699
    %4710 = vmatpush1.msra.mxu0 %v698
    %4711 = vmatprep.subr.mxu0 %v701
    %4712 = vmatpush1.msra.mxu0 %v700
    %4713 = vmatprep.subr.mxu0 %v703
    %4714 = vmatpush1.msra.mxu0 %v702
    %4715 = vmatprep.subr.mxu0 %v705
    %4716 = vmatpush1.msra.mxu0 %v704
    %4717 = vmatprep.subr.mxu0 %v707
    %4718 = vmatpush1.msra.mxu0 %v706
    %4719 = vmatprep.subr.mxu0 %v709
    %4720 = vmatpush1.msra.mxu0 %v708
    %4721 = vmatprep.subr.mxu0 %v711
    %4722 = vmatpush1.msra.mxu0 %v710
    %4723 = vmatprep.subr.mxu0 %v713
    %4724 = vmatpush1.msra.mxu0 %v712
    %4725 = vmatprep.subr.mxu0 %v715
    %4726 = vmatpush1.msra.mxu0 %v714
    %4727 = vmatprep.subr.mxu0 0.0
    %4728 = vmatpush1.msra.mxu0 0.0
    %4729 = vmatprep.subr.mxu0 0.0
    %4730 = vmatpush1.msra.mxu0 0.0
    %4731 = vmatprep.subr.mxu0 0.0
    %4732 = vmatpush1.msra.mxu0 0.0
    %4733 = vmatprep.subr.mxu0 0.0
    %4734 = vmatpush1.msra.mxu0 0.0
    %4735 = vmatprep.subr.mxu0 0.0
    %4736 = vmatpush1.msra.mxu0 0.0
    %4737 = vmatprep.subr.mxu0 0.0
    %4738 = vmatpush1.msra.mxu0 0.0
    %4739 = vmatprep.subr.mxu0 0.0
    %4740 = vmatpush1.msra.mxu0 0.0
    %4741 = vmatprep.subr.mxu0 0.0
    %4742 = vmatpush1.msra.mxu0 0.0
    %4743 = vmatprep.subr.mxu0 0.0
    %4744 = vmatpush1.msra.mxu0 0.0
    %4745 = vmatprep.subr.mxu0 0.0
    %4746 = vmatpush1.msra.mxu0 0.0
    %4747 = vmatprep.subr.mxu0 0.0
    %4748 = vmatpush1.msra.mxu0 0.0
    %4749 = vmatprep.subr.mxu0 0.0
    %4750 = vmatpush1.msra.mxu0 0.0
    %4751 = vmatprep.subr.mxu0 0.0
    %4752 = vmatpush1.msra.mxu0 0.0
    %4753 = vmatprep.subr.mxu0 0.0
    %4754 = vmatpush1.msra.mxu0 0.0
    %4755 = vmatprep.mubr.f32.mxu0 %v4689
    %4756 = vmatmul.mubr.f32.gmra.mrb[0].mxu0 %v4686
    %v4757 = vpop.f32.mrb[0].mxu0
    %v4758 = vadd.f32 0.0, %v4757
    %v4759 = vpop.f32.mrb[0].mxu0
    %v4760 = vadd.f32 0.0, %v4759
    %4761 = vdwg.mxu0
    %v4762 = vadd.f32 %v4675, %v4758
    %v4763 = vadd.f32 %v4676, %v4760
    %s4764 = scalar_lea.vmem %s0, 116
    %v4765 = vld [vmem:[%s4764] sm:$0xf]
    %v4768 = vunpack.c.l.s4 1983009808
    %v4769 = vunpack.c.0.s8 %v4768
    %v4770 = vlaneseq
    %v4771 = vshrl.u32 %v4770, 7
    %v4772 = vsub.s32 %v4769, %v4771
    %v4773 = vrot.slane %v4765, %v4772
    %v4774 = vcombine.high %v4773, %v4773
    %v4776 = vsel %vm272, %v4774, 0
    %4778 = vmatprep.subr.mxu0 %v805
    %4779 = vmatpush1.msra.mxu0 %v804
    %4780 = vmatprep.subr.mxu0 %v807
    %4781 = vmatpush1.msra.mxu0 %v806
    %4782 = vmatprep.subr.mxu0 %v809
    %4783 = vmatpush1.msra.mxu0 %v808
    %4784 = vmatprep.subr.mxu0 %v811
    %4785 = vmatpush1.msra.mxu0 %v810
    %4786 = vmatprep.subr.mxu0 %v813
    %4787 = vmatpush1.msra.mxu0 %v812
    %4788 = vmatprep.subr.mxu0 %v815
    %4789 = vmatpush1.msra.mxu0 %v814
    %4790 = vmatprep.subr.mxu0 %v817
    %4791 = vmatpush1.msra.mxu0 %v816
    %4792 = vmatprep.subr.mxu0 %v819
    %4793 = vmatpush1.msra.mxu0 %v818
    %4794 = vmatprep.subr.mxu0 %v821
    %4795 = vmatpush1.msra.mxu0 %v820
    %4796 = vmatprep.subr.mxu0 %v823
    %4797 = vmatpush1.msra.mxu0 %v822
    %4798 = vmatprep.subr.mxu0 %v825
    %4799 = vmatpush1.msra.mxu0 %v824
    %4800 = vmatprep.subr.mxu0 %v827
    %4801 = vmatpush1.msra.mxu0 %v826
    %4802 = vmatprep.subr.mxu0 %v829
    %4803 = vmatpush1.msra.mxu0 %v828
    %4804 = vmatprep.subr.mxu0 %v831
    %4805 = vmatpush1.msra.mxu0 %v830
    %4806 = vmatprep.subr.mxu0 %v833
    %4807 = vmatpush1.msra.mxu0 %v832
    %4808 = vmatprep.subr.mxu0 %v835
    %4809 = vmatpush1.msra.mxu0 %v834
    %4810 = vmatprep.subr.mxu0 %v837
    %4811 = vmatpush1.msra.mxu0 %v836
    %4812 = vmatprep.subr.mxu0 %v839
    %4813 = vmatpush1.msra.mxu0 %v838
    %4814 = vmatprep.subr.mxu0 0.0
    %4815 = vmatpush1.msra.mxu0 0.0
    %4816 = vmatprep.subr.mxu0 0.0
    %4817 = vmatpush1.msra.mxu0 0.0
    %4818 = vmatprep.subr.mxu0 0.0
    %4819 = vmatpush1.msra.mxu0 0.0
    %4820 = vmatprep.subr.mxu0 0.0
    %4821 = vmatpush1.msra.mxu0 0.0
    %4822 = vmatprep.subr.mxu0 0.0
    %4823 = vmatpush1.msra.mxu0 0.0
    %4824 = vmatprep.subr.mxu0 0.0
    %4825 = vmatpush1.msra.mxu0 0.0
    %4826 = vmatprep.subr.mxu0 0.0
    %4827 = vmatpush1.msra.mxu0 0.0
    %4828 = vmatprep.subr.mxu0 0.0
    %4829 = vmatpush1.msra.mxu0 0.0
    %4830 = vmatprep.subr.mxu0 0.0
    %4831 = vmatpush1.msra.mxu0 0.0
    %4832 = vmatprep.subr.mxu0 0.0
    %4833 = vmatpush1.msra.mxu0 0.0
    %4834 = vmatprep.subr.mxu0 0.0
    %4835 = vmatpush1.msra.mxu0 0.0
    %4836 = vmatprep.subr.mxu0 0.0
    %4837 = vmatpush1.msra.mxu0 0.0
    %4838 = vmatprep.subr.mxu0 0.0
    %4839 = vmatpush1.msra.mxu0 0.0
    %4840 = vmatprep.subr.mxu0 0.0
    %4841 = vmatpush1.msra.mxu0 0.0
    %4842 = vmatprep.mubr.f32.mxu0 %v4776
    %4843 = vmatmul.mubr.f32.gmra.mrb[0].mxu0 %v4773
    %v4844 = vpop.f32.mrb[0].mxu0
    %v4845 = vadd.f32 0.0, %v4844
    %v4846 = vpop.f32.mrb[0].mxu0
    %v4847 = vadd.f32 0.0, %v4846
    %4848 = vdwg.mxu0
    %v4849 = vadd.f32 %v4762, %v4845
    %v4850 = vadd.f32 %v4763, %v4847
    %s4851 = scalar_lea.vmem %s0, 120
    %v4852 = vld [vmem:[%s4851] sm:$0xf]
    %v4855 = vunpack.c.l.s4 1983009808
    %v4856 = vunpack.c.0.s8 %v4855
    %v4857 = vlaneseq
    %v4858 = vshrl.u32 %v4857, 7
    %v4859 = vsub.s32 %v4856, %v4858
    %v4860 = vrot.slane %v4852, %v4859
    %v4861 = vcombine.high %v4860, %v4860
    %v4863 = vsel %vm272, %v4861, 0
    %4865 = vmatprep.subr.mxu0 %v929
    %4866 = vmatpush1.msra.mxu0 %v928
    %4867 = vmatprep.subr.mxu0 %v931
    %4868 = vmatpush1.msra.mxu0 %v930
    %4869 = vmatprep.subr.mxu0 %v933
    %4870 = vmatpush1.msra.mxu0 %v932
    %4871 = vmatprep.subr.mxu0 %v935
    %4872 = vmatpush1.msra.mxu0 %v934
    %4873 = vmatprep.subr.mxu0 %v937
    %4874 = vmatpush1.msra.mxu0 %v936
    %4875 = vmatprep.subr.mxu0 %v939
    %4876 = vmatpush1.msra.mxu0 %v938
    %4877 = vmatprep.subr.mxu0 %v941
    %4878 = vmatpush1.msra.mxu0 %v940
    %4879 = vmatprep.subr.mxu0 %v943
    %4880 = vmatpush1.msra.mxu0 %v942
    %4881 = vmatprep.subr.mxu0 %v945
    %4882 = vmatpush1.msra.mxu0 %v944
    %4883 = vmatprep.subr.mxu0 %v947
    %4884 = vmatpush1.msra.mxu0 %v946
    %4885 = vmatprep.subr.mxu0 %v949
    %4886 = vmatpush1.msra.mxu0 %v948
    %4887 = vmatprep.subr.mxu0 %v951
    %4888 = vmatpush1.msra.mxu0 %v950
    %4889 = vmatprep.subr.mxu0 %v953
    %4890 = vmatpush1.msra.mxu0 %v952
    %4891 = vmatprep.subr.mxu0 %v955
    %4892 = vmatpush1.msra.mxu0 %v954
    %4893 = vmatprep.subr.mxu0 %v957
    %4894 = vmatpush1.msra.mxu0 %v956
    %4895 = vmatprep.subr.mxu0 %v959
    %4896 = vmatpush1.msra.mxu0 %v958
    %4897 = vmatprep.subr.mxu0 %v961
    %4898 = vmatpush1.msra.mxu0 %v960
    %4899 = vmatprep.subr.mxu0 %v963
    %4900 = vmatpush1.msra.mxu0 %v962
    %4901 = vmatprep.subr.mxu0 0.0
    %4902 = vmatpush1.msra.mxu0 0.0
    %4903 = vmatprep.subr.mxu0 0.0
    %4904 = vmatpush1.msra.mxu0 0.0
    %4905 = vmatprep.subr.mxu0 0.0
    %4906 = vmatpush1.msra.mxu0 0.0
    %4907 = vmatprep.subr.mxu0 0.0
    %4908 = vmatpush1.msra.mxu0 0.0
    %4909 = vmatprep.subr.mxu0 0.0
    %4910 = vmatpush1.msra.mxu0 0.0
    %4911 = vmatprep.subr.mxu0 0.0
    %4912 = vmatpush1.msra.mxu0 0.0
    %4913 = vmatprep.subr.mxu0 0.0
    %4914 = vmatpush1.msra.mxu0 0.0
    %4915 = vmatprep.subr.mxu0 0.0
    %4916 = vmatpush1.msra.mxu0 0.0
    %4917 = vmatprep.subr.mxu0 0.0
    %4918 = vmatpush1.msra.mxu0 0.0
    %4919 = vmatprep.subr.mxu0 0.0
    %4920 = vmatpush1.msra.mxu0 0.0
    %4921 = vmatprep.subr.mxu0 0.0
    %4922 = vmatpush1.msra.mxu0 0.0
    %4923 = vmatprep.subr.mxu0 0.0
    %4924 = vmatpush1.msra.mxu0 0.0
    %4925 = vmatprep.subr.mxu0 0.0
    %4926 = vmatpush1.msra.mxu0 0.0
    %4927 = vmatprep.subr.mxu0 0.0
    %4928 = vmatpush1.msra.mxu0 0.0
    %4929 = vmatprep.mubr.f32.mxu0 %v4863
    %4930 = vmatmul.mubr.f32.gmra.mrb[0].mxu0 %v4860
    %v4931 = vpop.f32.mrb[0].mxu0
    %v4932 = vadd.f32 0.0, %v4931
    %v4933 = vpop.f32.mrb[0].mxu0
    %v4934 = vadd.f32 0.0, %v4933
    %4935 = vdwg.mxu0
    %v4936 = vadd.f32 %v4849, %v4932
    %v4937 = vadd.f32 %v4850, %v4934
    %s4938 = scalar_lea.vmem %s0, 124
    %v4939 = vld [vmem:[%s4938] sm:$0xf]
    %v4942 = vunpack.c.l.s4 1983009808
    %v4943 = vunpack.c.0.s8 %v4942
    %v4944 = vlaneseq
    %v4945 = vshrl.u32 %v4944, 7
    %v4946 = vsub.s32 %v4943, %v4945
    %v4947 = vrot.slane %v4939, %v4946
    %v4948 = vcombine.high %v4947, %v4947
    %v4950 = vsel %vm272, %v4948, 0
    %4952 = vmatprep.subr.mxu0 %v1053
    %4953 = vmatpush1.msra.mxu0 %v1052
    %4954 = vmatprep.subr.mxu0 %v1055
    %4955 = vmatpush1.msra.mxu0 %v1054
    %4956 = vmatprep.subr.mxu0 %v1057
    %4957 = vmatpush1.msra.mxu0 %v1056
    %4958 = vmatprep.subr.mxu0 %v1059
    %4959 = vmatpush1.msra.mxu0 %v1058
    %4960 = vmatprep.subr.mxu0 %v1061
    %4961 = vmatpush1.msra.mxu0 %v1060
    %4962 = vmatprep.subr.mxu0 %v1063
    %4963 = vmatpush1.msra.mxu0 %v1062
    %4964 = vmatprep.subr.mxu0 %v1065
    %4965 = vmatpush1.msra.mxu0 %v1064
    %4966 = vmatprep.subr.mxu0 %v1067
    %4967 = vmatpush1.msra.mxu0 %v1066
    %4968 = vmatprep.subr.mxu0 %v1069
    %4969 = vmatpush1.msra.mxu0 %v1068
    %4970 = vmatprep.subr.mxu0 %v1071
    %4971 = vmatpush1.msra.mxu0 %v1070
    %4972 = vmatprep.subr.mxu0 %v1073
    %4973 = vmatpush1.msra.mxu0 %v1072
    %4974 = vmatprep.subr.mxu0 %v1075
    %4975 = vmatpush1.msra.mxu0 %v1074
    %4976 = vmatprep.subr.mxu0 %v1077
    %4977 = vmatpush1.msra.mxu0 %v1076
    %4978 = vmatprep.subr.mxu0 %v1079
    %4979 = vmatpush1.msra.mxu0 %v1078
    %4980 = vmatprep.subr.mxu0 %v1081
    %4981 = vmatpush1.msra.mxu0 %v1080
    %4982 = vmatprep.subr.mxu0 %v1083
    %4983 = vmatpush1.msra.mxu0 %v1082
    %4984 = vmatprep.subr.mxu0 %v1085
    %4985 = vmatpush1.msra.mxu0 %v1084
    %4986 = vmatprep.subr.mxu0 %v1087
    %4987 = vmatpush1.msra.mxu0 %v1086
    %4988 = vmatprep.subr.mxu0 0.0
    %4989 = vmatpush1.msra.mxu0 0.0
    %4990 = vmatprep.subr.mxu0 0.0
    %4991 = vmatpush1.msra.mxu0 0.0
    %4992 = vmatprep.subr.mxu0 0.0
    %4993 = vmatpush1.msra.mxu0 0.0
    %4994 = vmatprep.subr.mxu0 0.0
    %4995 = vmatpush1.msra.mxu0 0.0
    %4996 = vmatprep.subr.mxu0 0.0
    %4997 = vmatpush1.msra.mxu0 0.0
    %4998 = vmatprep.subr.mxu0 0.0
    %4999 = vmatpush1.msra.mxu0 0.0
    %5000 = vmatprep.subr.mxu0 0.0
    %5001 = vmatpush1.msra.mxu0 0.0
    %5002 = vmatprep.subr.mxu0 0.0
    %5003 = vmatpush1.msra.mxu0 0.0
    %5004 = vmatprep.subr.mxu0 0.0
    %5005 = vmatpush1.msra.mxu0 0.0
    %5006 = vmatprep.subr.mxu0 0.0
    %5007 = vmatpush1.msra.mxu0 0.0
    %5008 = vmatprep.subr.mxu0 0.0
    %5009 = vmatpush1.msra.mxu0 0.0
    %5010 = vmatprep.subr.mxu0 0.0
    %5011 = vmatpush1.msra.mxu0 0.0
    %5012 = vmatprep.subr.mxu0 0.0
    %5013 = vmatpush1.msra.mxu0 0.0
    %5014 = vmatprep.subr.mxu0 0.0
    %5015 = vmatpush1.msra.mxu0 0.0
    %5016 = vmatprep.mubr.f32.mxu0 %v4950
    %5017 = vmatmul.mubr.f32.gmra.mrb[0].mxu0 %v4947
    %v5018 = vpop.f32.mrb[0].mxu0
    %v5019 = vadd.f32 0.0, %v5018
    %v5020 = vpop.f32.mrb[0].mxu0
    %v5021 = vadd.f32 0.0, %v5020
    %5022 = vdwg.mxu0
    %v5023 = vadd.f32 %v4936, %v5019
    %v5024 = vadd.f32 %v4937, %v5021
    %v5025 = vadd.f32 %v5023, %v1178
    %v5026 = vadd.f32 %v5024, %v1182
    %v5027 = vmax.f32 %v5025, 0.0
    %v5028 = vmax.f32 %v5026, 0.0
    %5029 = vmatprep.subr.mxu0 %v227
    %5030 = vmatpush1.msra.mxu0 %v226
    %5031 = vmatprep.subr.mxu0 %v229
    %5032 = vmatpush1.msra.mxu0 %v228
    %5033 = vmatprep.subr.mxu0 %v231
    %5034 = vmatpush1.msra.mxu0 %v230
    %5035 = vmatprep.subr.mxu0 %v233
    %5036 = vmatpush1.msra.mxu0 %v232
    %5037 = vmatprep.subr.mxu0 %v235
    %5038 = vmatpush1.msra.mxu0 %v234
    %5039 = vmatprep.subr.mxu0 %v237
    %5040 = vmatpush1.msra.mxu0 %v236
    %5041 = vmatprep.subr.mxu0 %v239
    %5042 = vmatpush1.msra.mxu0 %v238
    %5043 = vmatprep.subr.mxu0 %v241
    %5044 = vmatpush1.msra.mxu0 %v240
    %5045 = vmatprep.subr.mxu0 %v243
    %5046 = vmatpush1.msra.mxu0 %v242
    %5047 = vmatprep.subr.mxu0 %v245
    %5048 = vmatpush1.msra.mxu0 %v244
    %5049 = vmatprep.subr.mxu0 %v247
    %5050 = vmatpush1.msra.mxu0 %v246
    %5051 = vmatprep.subr.mxu0 %v249
    %5052 = vmatpush1.msra.mxu0 %v248
    %5053 = vmatprep.subr.mxu0 %v251
    %5054 = vmatpush1.msra.mxu0 %v250
    %5055 = vmatprep.subr.mxu0 %v253
    %5056 = vmatpush1.msra.mxu0 %v252
    %5057 = vmatprep.subr.mxu0 %v255
    %5058 = vmatpush1.msra.mxu0 %v254
    %5059 = vmatprep.subr.mxu0 %v257
    %5060 = vmatpush1.msra.mxu0 %v256
    %5061 = vmatprep.subr.mxu0 %v259
    %5062 = vmatpush1.msra.mxu0 %v258
    %5063 = vmatprep.subr.mxu0 %v261
    %5064 = vmatpush1.msra.mxu0 %v260
    %5065 = vmatprep.subr.mxu0 0.0
    %5066 = vmatpush1.msra.mxu0 0.0
    %5067 = vmatprep.subr.mxu0 0.0
    %5068 = vmatpush1.msra.mxu0 0.0
    %5069 = vmatprep.subr.mxu0 0.0
    %5070 = vmatpush1.msra.mxu0 0.0
    %5071 = vmatprep.subr.mxu0 0.0
    %5072 = vmatpush1.msra.mxu0 0.0
    %5073 = vmatprep.subr.mxu0 0.0
    %5074 = vmatpush1.msra.mxu0 0.0
    %5075 = vmatprep.subr.mxu0 0.0
    %5076 = vmatpush1.msra.mxu0 0.0
    %5077 = vmatprep.subr.mxu0 0.0
    %5078 = vmatpush1.msra.mxu0 0.0
    %5079 = vmatprep.subr.mxu0 0.0
    %5080 = vmatpush1.msra.mxu0 0.0
    %5081 = vmatprep.subr.mxu0 0.0
    %5082 = vmatpush1.msra.mxu0 0.0
    %5083 = vmatprep.subr.mxu0 0.0
    %5084 = vmatpush1.msra.mxu0 0.0
    %5085 = vmatprep.subr.mxu0 0.0
    %5086 = vmatpush1.msra.mxu0 0.0
    %5087 = vmatprep.subr.mxu0 0.0
    %5088 = vmatpush1.msra.mxu0 0.0
    %5089 = vmatprep.subr.mxu0 0.0
    %5090 = vmatpush1.msra.mxu0 0.0
    %5091 = vmatprep.subr.mxu0 0.0
    %5092 = vmatpush1.msra.mxu0 0.0
    %5093 = vmatprep.mubr.f32.mxu0 %v4776
    %5094 = vmatmul.mubr.f32.gmra.mrb[0].mxu0 %v4773
    %v5095 = vpop.f32.mrb[0].mxu0
    %v5096 = vadd.f32 0.0, %v5095
    %v5097 = vpop.f32.mrb[0].mxu0
    %v5098 = vadd.f32 0.0, %v5097
    %5099 = vdwg.mxu0
    %5100 = vmatprep.subr.mxu0 %v188
    %5101 = vmatpush1.msra.mxu0 %v187
    %5102 = vmatprep.subr.mxu0 %v190
    %5103 = vmatpush1.msra.mxu0 %v189
    %5104 = vmatprep.subr.mxu0 %v192
    %5105 = vmatpush1.msra.mxu0 %v191
    %5106 = vmatprep.subr.mxu0 %v194
    %5107 = vmatpush1.msra.mxu0 %v193
    %5108 = vmatprep.subr.mxu0 %v196
    %5109 = vmatpush1.msra.mxu0 %v195
    %5110 = vmatprep.subr.mxu0 %v198
    %5111 = vmatpush1.msra.mxu0 %v197
    %5112 = vmatprep.subr.mxu0 %v200
    %5113 = vmatpush1.msra.mxu0 %v199
    %5114 = vmatprep.subr.mxu0 %v202
    %5115 = vmatpush1.msra.mxu0 %v201
    %5116 = vmatprep.subr.mxu0 %v204
    %5117 = vmatpush1.msra.mxu0 %v203
    %5118 = vmatprep.subr.mxu0 %v206
    %5119 = vmatpush1.msra.mxu0 %v205
    %5120 = vmatprep.subr.mxu0 %v208
    %5121 = vmatpush1.msra.mxu0 %v207
    %5122 = vmatprep.subr.mxu0 %v210
    %5123 = vmatpush1.msra.mxu0 %v209
    %5124 = vmatprep.subr.mxu0 %v212
    %5125 = vmatpush1.msra.mxu0 %v211
    %5126 = vmatprep.subr.mxu0 %v214
    %5127 = vmatpush1.msra.mxu0 %v213
    %5128 = vmatprep.subr.mxu0 %v216
    %5129 = vmatpush1.msra.mxu0 %v215
    %5130 = vmatprep.subr.mxu0 %v218
    %5131 = vmatpush1.msra.mxu0 %v217
    %5132 = vmatprep.subr.mxu0 %v220
    %5133 = vmatpush1.msra.mxu0 %v219
    %5134 = vmatprep.subr.mxu0 %v222
    %5135 = vmatpush1.msra.mxu0 %v221
    %5136 = vmatprep.subr.mxu0 0.0
    %5137 = vmatpush1.msra.mxu0 0.0
    %5138 = vmatprep.subr.mxu0 0.0
    %5139 = vmatpush1.msra.mxu0 0.0
    %5140 = vmatprep.subr.mxu0 0.0
    %5141 = vmatpush1.msra.mxu0 0.0
    %5142 = vmatprep.subr.mxu0 0.0
    %5143 = vmatpush1.msra.mxu0 0.0
    %5144 = vmatprep.subr.mxu0 0.0
    %5145 = vmatpush1.msra.mxu0 0.0
    %5146 = vmatprep.subr.mxu0 0.0
    %5147 = vmatpush1.msra.mxu0 0.0
    %5148 = vmatprep.subr.mxu0 0.0
    %5149 = vmatpush1.msra.mxu0 0.0
    %5150 = vmatprep.subr.mxu0 0.0
    %5151 = vmatpush1.msra.mxu0 0.0
    %5152 = vmatprep.subr.mxu0 0.0
    %5153 = vmatpush1.msra.mxu0 0.0
    %5154 = vmatprep.subr.mxu0 0.0
    %5155 = vmatpush1.msra.mxu0 0.0
    %5156 = vmatprep.subr.mxu0 0.0
    %5157 = vmatpush1.msra.mxu0 0.0
    %5158 = vmatprep.subr.mxu0 0.0
    %5159 = vmatpush1.msra.mxu0 0.0
    %5160 = vmatprep.subr.mxu0 0.0
    %5161 = vmatpush1.msra.mxu0 0.0
    %5162 = vmatprep.subr.mxu0 0.0
    %5163 = vmatpush1.msra.mxu0 0.0
    %5164 = vmatprep.mubr.f32.mxu0 %v4689
    %5165 = vmatmul.mubr.f32.gmra.mrb[0].mxu0 %v4686
    %v5166 = vpop.f32.mrb[0].mxu0
    %v5167 = vadd.f32 %v5096, %v5166
    %v5168 = vpop.f32.mrb[0].mxu0
    %v5169 = vadd.f32 %v5098, %v5168
    %5170 = vdwg.mxu0
    %5171 = vmatprep.subr.mxu0 %v433
    %5172 = vmatpush1.msra.mxu0 %v432
    %5173 = vmatprep.subr.mxu0 %v435
    %5174 = vmatpush1.msra.mxu0 %v434
    %5175 = vmatprep.subr.mxu0 %v437
    %5176 = vmatpush1.msra.mxu0 %v436
    %5177 = vmatprep.subr.mxu0 %v439
    %5178 = vmatpush1.msra.mxu0 %v438
    %5179 = vmatprep.subr.mxu0 %v441
    %5180 = vmatpush1.msra.mxu0 %v440
    %5181 = vmatprep.subr.mxu0 %v443
    %5182 = vmatpush1.msra.mxu0 %v442
    %5183 = vmatprep.subr.mxu0 %v445
    %5184 = vmatpush1.msra.mxu0 %v444
    %5185 = vmatprep.subr.mxu0 %v447
    %5186 = vmatpush1.msra.mxu0 %v446
    %5187 = vmatprep.subr.mxu0 %v449
    %5188 = vmatpush1.msra.mxu0 %v448
    %5189 = vmatprep.subr.mxu0 %v451
    %5190 = vmatpush1.msra.mxu0 %v450
    %5191 = vmatprep.subr.mxu0 %v453
    %5192 = vmatpush1.msra.mxu0 %v452
    %5193 = vmatprep.subr.mxu0 %v455
    %5194 = vmatpush1.msra.mxu0 %v454
    %5195 = vmatprep.subr.mxu0 %v457
    %5196 = vmatpush1.msra.mxu0 %v456
    %5197 = vmatprep.subr.mxu0 %v459
    %5198 = vmatpush1.msra.mxu0 %v458
    %5199 = vmatprep.subr.mxu0 %v461
    %5200 = vmatpush1.msra.mxu0 %v460
    %5201 = vmatprep.subr.mxu0 %v463
    %5202 = vmatpush1.msra.mxu0 %v462
    %5203 = vmatprep.subr.mxu0 %v465
    %5204 = vmatpush1.msra.mxu0 %v464
    %5205 = vmatprep.subr.mxu0 %v467
    %5206 = vmatpush1.msra.mxu0 %v466
    %5207 = vmatprep.subr.mxu0 0.0
    %5208 = vmatpush1.msra.mxu0 0.0
    %5209 = vmatprep.subr.mxu0 0.0
    %5210 = vmatpush1.msra.mxu0 0.0
    %5211 = vmatprep.subr.mxu0 0.0
    %5212 = vmatpush1.msra.mxu0 0.0
    %5213 = vmatprep.subr.mxu0 0.0
    %5214 = vmatpush1.msra.mxu0 0.0
    %5215 = vmatprep.subr.mxu0 0.0
    %5216 = vmatpush1.msra.mxu0 0.0
    %5217 = vmatprep.subr.mxu0 0.0
    %5218 = vmatpush1.msra.mxu0 0.0
    %5219 = vmatprep.subr.mxu0 0.0
    %5220 = vmatpush1.msra.mxu0 0.0
    %5221 = vmatprep.subr.mxu0 0.0
    %5222 = vmatpush1.msra.mxu0 0.0
    %5223 = vmatprep.subr.mxu0 0.0
    %5224 = vmatpush1.msra.mxu0 0.0
    %5225 = vmatprep.subr.mxu0 0.0
    %5226 = vmatpush1.msra.mxu0 0.0
    %5227 = vmatprep.subr.mxu0 0.0
    %5228 = vmatpush1.msra.mxu0 0.0
    %5229 = vmatprep.subr.mxu0 0.0
    %5230 = vmatpush1.msra.mxu0 0.0
    %5231 = vmatprep.subr.mxu0 0.0
    %5232 = vmatpush1.msra.mxu0 0.0
    %5233 = vmatprep.subr.mxu0 0.0
    %5234 = vmatpush1.msra.mxu0 0.0
    %5235 = vmatprep.mubr.f32.mxu0 %v4863
    %5236 = vmatmul.mubr.f32.gmra.mrb[0].mxu0 %v4860
    %v5237 = vpop.f32.mrb[0].mxu0
    %v5238 = vadd.f32 0.0, %v5237
    %v5239 = vpop.f32.mrb[0].mxu0
    %v5240 = vadd.f32 0.0, %v5239
    %5241 = vdwg.mxu0
    %v5242 = vadd.f32 %v5167, %v5238
    %v5243 = vadd.f32 %v5169, %v5240
    %5244 = vmatprep.subr.mxu0 %v557
    %5245 = vmatpush1.msra.mxu0 %v556
    %5246 = vmatprep.subr.mxu0 %v559
    %5247 = vmatpush1.msra.mxu0 %v558
    %5248 = vmatprep.subr.mxu0 %v561
    %5249 = vmatpush1.msra.mxu0 %v560
    %5250 = vmatprep.subr.mxu0 %v563
    %5251 = vmatpush1.msra.mxu0 %v562
    %5252 = vmatprep.subr.mxu0 %v565
    %5253 = vmatpush1.msra.mxu0 %v564
    %5254 = vmatprep.subr.mxu0 %v567
    %5255 = vmatpush1.msra.mxu0 %v566
    %5256 = vmatprep.subr.mxu0 %v569
    %5257 = vmatpush1.msra.mxu0 %v568
    %5258 = vmatprep.subr.mxu0 %v571
    %5259 = vmatpush1.msra.mxu0 %v570
    %5260 = vmatprep.subr.mxu0 %v573
    %5261 = vmatpush1.msra.mxu0 %v572
    %5262 = vmatprep.subr.mxu0 %v575
    %5263 = vmatpush1.msra.mxu0 %v574
    %5264 = vmatprep.subr.mxu0 %v577
    %5265 = vmatpush1.msra.mxu0 %v576
    %5266 = vmatprep.subr.mxu0 %v579
    %5267 = vmatpush1.msra.mxu0 %v578
    %5268 = vmatprep.subr.mxu0 %v581
    %5269 = vmatpush1.msra.mxu0 %v580
    %5270 = vmatprep.subr.mxu0 %v583
    %5271 = vmatpush1.msra.mxu0 %v582
    %5272 = vmatprep.subr.mxu0 %v585
    %5273 = vmatpush1.msra.mxu0 %v584
    %5274 = vmatprep.subr.mxu0 %v587
    %5275 = vmatpush1.msra.mxu0 %v586
    %5276 = vmatprep.subr.mxu0 %v589
    %5277 = vmatpush1.msra.mxu0 %v588
    %5278 = vmatprep.subr.mxu0 %v591
    %5279 = vmatpush1.msra.mxu0 %v590
    %5280 = vmatprep.subr.mxu0 0.0
    %5281 = vmatpush1.msra.mxu0 0.0
    %5282 = vmatprep.subr.mxu0 0.0
    %5283 = vmatpush1.msra.mxu0 0.0
    %5284 = vmatprep.subr.mxu0 0.0
    %5285 = vmatpush1.msra.mxu0 0.0
    %5286 = vmatprep.subr.mxu0 0.0
    %5287 = vmatpush1.msra.mxu0 0.0
    %5288 = vmatprep.subr.mxu0 0.0
    %5289 = vmatpush1.msra.mxu0 0.0
    %5290 = vmatprep.subr.mxu0 0.0
    %5291 = vmatpush1.msra.mxu0 0.0
    %5292 = vmatprep.subr.mxu0 0.0
    %5293 = vmatpush1.msra.mxu0 0.0
    %5294 = vmatprep.subr.mxu0 0.0
    %5295 = vmatpush1.msra.mxu0 0.0
    %5296 = vmatprep.subr.mxu0 0.0
    %5297 = vmatpush1.msra.mxu0 0.0
    %5298 = vmatprep.subr.mxu0 0.0
    %5299 = vmatpush1.msra.mxu0 0.0
    %5300 = vmatprep.subr.mxu0 0.0
    %5301 = vmatpush1.msra.mxu0 0.0
    %5302 = vmatprep.subr.mxu0 0.0
    %5303 = vmatpush1.msra.mxu0 0.0
    %5304 = vmatprep.subr.mxu0 0.0
    %5305 = vmatpush1.msra.mxu0 0.0
    %5306 = vmatprep.subr.mxu0 0.0
    %5307 = vmatpush1.msra.mxu0 0.0
    %5308 = vmatprep.mubr.f32.mxu0 %v4950
    %5309 = vmatmul.mubr.f32.gmra.mrb[0].mxu0 %v4947
    %v5310 = vpop.f32.mrb[0].mxu0
    %v5311 = vadd.f32 0.0, %v5310
    %v5312 = vpop.f32.mrb[0].mxu0
    %v5313 = vadd.f32 0.0, %v5312
    %5314 = vdwg.mxu0
    %v5315 = vadd.f32 %v5242, %v5311
    %v5316 = vadd.f32 %v5243, %v5313
    %s5317 = scalar_lea.vmem %s0, 128
    %v5318 = vld [vmem:[%s5317] sm:$0xf]
    %v5321 = vunpack.c.l.s4 1983009808
    %v5322 = vunpack.c.0.s8 %v5321
    %v5323 = vlaneseq
    %v5324 = vshrl.u32 %v5323, 7
    %v5325 = vsub.s32 %v5322, %v5324
    %v5326 = vrot.slane %v5318, %v5325
    %v5327 = vcombine.high %v5326, %v5326
    %v5329 = vsel %vm272, %v5327, 0
    %5331 = vmatprep.subr.mxu0 %v681
    %5332 = vmatpush1.msra.mxu0 %v680
    %5333 = vmatprep.subr.mxu0 %v683
    %5334 = vmatpush1.msra.mxu0 %v682
    %5335 = vmatprep.subr.mxu0 %v685
    %5336 = vmatpush1.msra.mxu0 %v684
    %5337 = vmatprep.subr.mxu0 %v687
    %5338 = vmatpush1.msra.mxu0 %v686
    %5339 = vmatprep.subr.mxu0 %v689
    %5340 = vmatpush1.msra.mxu0 %v688
    %5341 = vmatprep.subr.mxu0 %v691
    %5342 = vmatpush1.msra.mxu0 %v690
    %5343 = vmatprep.subr.mxu0 %v693
    %5344 = vmatpush1.msra.mxu0 %v692
    %5345 = vmatprep.subr.mxu0 %v695
    %5346 = vmatpush1.msra.mxu0 %v694
    %5347 = vmatprep.subr.mxu0 %v697
    %5348 = vmatpush1.msra.mxu0 %v696
    %5349 = vmatprep.subr.mxu0 %v699
    %5350 = vmatpush1.msra.mxu0 %v698
    %5351 = vmatprep.subr.mxu0 %v701
    %5352 = vmatpush1.msra.mxu0 %v700
    %5353 = vmatprep.subr.mxu0 %v703
    %5354 = vmatpush1.msra.mxu0 %v702
    %5355 = vmatprep.subr.mxu0 %v705
    %5356 = vmatpush1.msra.mxu0 %v704
    %5357 = vmatprep.subr.mxu0 %v707
    %5358 = vmatpush1.msra.mxu0 %v706
    %5359 = vmatprep.subr.mxu0 %v709
    %5360 = vmatpush1.msra.mxu0 %v708
    %5361 = vmatprep.subr.mxu0 %v711
    %5362 = vmatpush1.msra.mxu0 %v710
    %5363 = vmatprep.subr.mxu0 %v713
    %5364 = vmatpush1.msra.mxu0 %v712
    %5365 = vmatprep.subr.mxu0 %v715
    %5366 = vmatpush1.msra.mxu0 %v714
    %5367 = vmatprep.subr.mxu0 0.0
    %5368 = vmatpush1.msra.mxu0 0.0
    %5369 = vmatprep.subr.mxu0 0.0
    %5370 = vmatpush1.msra.mxu0 0.0
    %5371 = vmatprep.subr.mxu0 0.0
    %5372 = vmatpush1.msra.mxu0 0.0
    %5373 = vmatprep.subr.mxu0 0.0
    %5374 = vmatpush1.msra.mxu0 0.0
    %5375 = vmatprep.subr.mxu0 0.0
    %5376 = vmatpush1.msra.mxu0 0.0
    %5377 = vmatprep.subr.mxu0 0.0
    %5378 = vmatpush1.msra.mxu0 0.0
    %5379 = vmatprep.subr.mxu0 0.0
    %5380 = vmatpush1.msra.mxu0 0.0
    %5381 = vmatprep.subr.mxu0 0.0
    %5382 = vmatpush1.msra.mxu0 0.0
    %5383 = vmatprep.subr.mxu0 0.0
    %5384 = vmatpush1.msra.mxu0 0.0
    %5385 = vmatprep.subr.mxu0 0.0
    %5386 = vmatpush1.msra.mxu0 0.0
    %5387 = vmatprep.subr.mxu0 0.0
    %5388 = vmatpush1.msra.mxu0 0.0
    %5389 = vmatprep.subr.mxu0 0.0
    %5390 = vmatpush1.msra.mxu0 0.0
    %5391 = vmatprep.subr.mxu0 0.0
    %5392 = vmatpush1.msra.mxu0 0.0
    %5393 = vmatprep.subr.mxu0 0.0
    %5394 = vmatpush1.msra.mxu0 0.0
    %5395 = vmatprep.mubr.f32.mxu0 %v5329
    %5396 = vmatmul.mubr.f32.gmra.mrb[0].mxu0 %v5326
    %v5397 = vpop.f32.mrb[0].mxu0
    %v5398 = vadd.f32 0.0, %v5397
    %v5399 = vpop.f32.mrb[0].mxu0
    %v5400 = vadd.f32 0.0, %v5399
    %5401 = vdwg.mxu0
    %v5402 = vadd.f32 %v5315, %v5398
    %v5403 = vadd.f32 %v5316, %v5400
    %s5404 = scalar_lea.vmem %s0, 132
    %v5405 = vld [vmem:[%s5404] sm:$0xf]
    %v5408 = vunpack.c.l.s4 1983009808
    %v5409 = vunpack.c.0.s8 %v5408
    %v5410 = vlaneseq
    %v5411 = vshrl.u32 %v5410, 7
    %v5412 = vsub.s32 %v5409, %v5411
    %v5413 = vrot.slane %v5405, %v5412
    %v5414 = vcombine.high %v5413, %v5413
    %v5416 = vsel %vm272, %v5414, 0
    %5418 = vmatprep.subr.mxu0 %v805
    %5419 = vmatpush1.msra.mxu0 %v804
    %5420 = vmatprep.subr.mxu0 %v807
    %5421 = vmatpush1.msra.mxu0 %v806
    %5422 = vmatprep.subr.mxu0 %v809
    %5423 = vmatpush1.msra.mxu0 %v808
    %5424 = vmatprep.subr.mxu0 %v811
    %5425 = vmatpush1.msra.mxu0 %v810
    %5426 = vmatprep.subr.mxu0 %v813
    %5427 = vmatpush1.msra.mxu0 %v812
    %5428 = vmatprep.subr.mxu0 %v815
    %5429 = vmatpush1.msra.mxu0 %v814
    %5430 = vmatprep.subr.mxu0 %v817
    %5431 = vmatpush1.msra.mxu0 %v816
    %5432 = vmatprep.subr.mxu0 %v819
    %5433 = vmatpush1.msra.mxu0 %v818
    %5434 = vmatprep.subr.mxu0 %v821
    %5435 = vmatpush1.msra.mxu0 %v820
    %5436 = vmatprep.subr.mxu0 %v823
    %5437 = vmatpush1.msra.mxu0 %v822
    %5438 = vmatprep.subr.mxu0 %v825
    %5439 = vmatpush1.msra.mxu0 %v824
    %5440 = vmatprep.subr.mxu0 %v827
    %5441 = vmatpush1.msra.mxu0 %v826
    %5442 = vmatprep.subr.mxu0 %v829
    %5443 = vmatpush1.msra.mxu0 %v828
    %5444 = vmatprep.subr.mxu0 %v831
    %5445 = vmatpush1.msra.mxu0 %v830
    %5446 = vmatprep.subr.mxu0 %v833
    %5447 = vmatpush1.msra.mxu0 %v832
    %5448 = vmatprep.subr.mxu0 %v835
    %5449 = vmatpush1.msra.mxu0 %v834
    %5450 = vmatprep.subr.mxu0 %v837
    %5451 = vmatpush1.msra.mxu0 %v836
    %5452 = vmatprep.subr.mxu0 %v839
    %5453 = vmatpush1.msra.mxu0 %v838
    %5454 = vmatprep.subr.mxu0 0.0
    %5455 = vmatpush1.msra.mxu0 0.0
    %5456 = vmatprep.subr.mxu0 0.0
    %5457 = vmatpush1.msra.mxu0 0.0
    %5458 = vmatprep.subr.mxu0 0.0
    %5459 = vmatpush1.msra.mxu0 0.0
    %5460 = vmatprep.subr.mxu0 0.0
    %5461 = vmatpush1.msra.mxu0 0.0
    %5462 = vmatprep.subr.mxu0 0.0
    %5463 = vmatpush1.msra.mxu0 0.0
    %5464 = vmatprep.subr.mxu0 0.0
    %5465 = vmatpush1.msra.mxu0 0.0
    %5466 = vmatprep.subr.mxu0 0.0
    %5467 = vmatpush1.msra.mxu0 0.0
    %5468 = vmatprep.subr.mxu0 0.0
    %5469 = vmatpush1.msra.mxu0 0.0
    %5470 = vmatprep.subr.mxu0 0.0
    %5471 = vmatpush1.msra.mxu0 0.0
    %5472 = vmatprep.subr.mxu0 0.0
    %5473 = vmatpush1.msra.mxu0 0.0
    %5474 = vmatprep.subr.mxu0 0.0
    %5475 = vmatpush1.msra.mxu0 0.0
    %5476 = vmatprep.subr.mxu0 0.0
    %5477 = vmatpush1.msra.mxu0 0.0
    %5478 = vmatprep.subr.mxu0 0.0
    %5479 = vmatpush1.msra.mxu0 0.0
    %5480 = vmatprep.subr.mxu0 0.0
    %5481 = vmatpush1.msra.mxu0 0.0
    %5482 = vmatprep.mubr.f32.mxu0 %v5416
    %5483 = vmatmul.mubr.f32.gmra.mrb[0].mxu0 %v5413
    %v5484 = vpop.f32.mrb[0].mxu0
    %v5485 = vadd.f32 0.0, %v5484
    %v5486 = vpop.f32.mrb[0].mxu0
    %v5487 = vadd.f32 0.0, %v5486
    %5488 = vdwg.mxu0
    %v5489 = vadd.f32 %v5402, %v5485
    %v5490 = vadd.f32 %v5403, %v5487
    %s5491 = scalar_lea.vmem %s0, 136
    %v5492 = vld [vmem:[%s5491] sm:$0xf]
    %v5495 = vunpack.c.l.s4 1983009808
    %v5496 = vunpack.c.0.s8 %v5495
    %v5497 = vlaneseq
    %v5498 = vshrl.u32 %v5497, 7
    %v5499 = vsub.s32 %v5496, %v5498
    %v5500 = vrot.slane %v5492, %v5499
    %v5501 = vcombine.high %v5500, %v5500
    %v5503 = vsel %vm272, %v5501, 0
    %5505 = vmatprep.subr.mxu0 %v929
    %5506 = vmatpush1.msra.mxu0 %v928
    %5507 = vmatprep.subr.mxu0 %v931
    %5508 = vmatpush1.msra.mxu0 %v930
    %5509 = vmatprep.subr.mxu0 %v933
    %5510 = vmatpush1.msra.mxu0 %v932
    %5511 = vmatprep.subr.mxu0 %v935
    %5512 = vmatpush1.msra.mxu0 %v934
    %5513 = vmatprep.subr.mxu0 %v937
    %5514 = vmatpush1.msra.mxu0 %v936
    %5515 = vmatprep.subr.mxu0 %v939
    %5516 = vmatpush1.msra.mxu0 %v938
    %5517 = vmatprep.subr.mxu0 %v941
    %5518 = vmatpush1.msra.mxu0 %v940
    %5519 = vmatprep.subr.mxu0 %v943
    %5520 = vmatpush1.msra.mxu0 %v942
    %5521 = vmatprep.subr.mxu0 %v945
    %5522 = vmatpush1.msra.mxu0 %v944
    %5523 = vmatprep.subr.mxu0 %v947
    %5524 = vmatpush1.msra.mxu0 %v946
    %5525 = vmatprep.subr.mxu0 %v949
    %5526 = vmatpush1.msra.mxu0 %v948
    %5527 = vmatprep.subr.mxu0 %v951
    %5528 = vmatpush1.msra.mxu0 %v950
    %5529 = vmatprep.subr.mxu0 %v953
    %5530 = vmatpush1.msra.mxu0 %v952
    %5531 = vmatprep.subr.mxu0 %v955
    %5532 = vmatpush1.msra.mxu0 %v954
    %5533 = vmatprep.subr.mxu0 %v957
    %5534 = vmatpush1.msra.mxu0 %v956
    %5535 = vmatprep.subr.mxu0 %v959
    %5536 = vmatpush1.msra.mxu0 %v958
    %5537 = vmatprep.subr.mxu0 %v961
    %5538 = vmatpush1.msra.mxu0 %v960
    %5539 = vmatprep.subr.mxu0 %v963
    %5540 = vmatpush1.msra.mxu0 %v962
    %5541 = vmatprep.subr.mxu0 0.0
    %5542 = vmatpush1.msra.mxu0 0.0
    %5543 = vmatprep.subr.mxu0 0.0
    %5544 = vmatpush1.msra.mxu0 0.0
    %5545 = vmatprep.subr.mxu0 0.0
    %5546 = vmatpush1.msra.mxu0 0.0
    %5547 = vmatprep.subr.mxu0 0.0
    %5548 = vmatpush1.msra.mxu0 0.0
    %5549 = vmatprep.subr.mxu0 0.0
    %5550 = vmatpush1.msra.mxu0 0.0
    %5551 = vmatprep.subr.mxu0 0.0
    %5552 = vmatpush1.msra.mxu0 0.0
    %5553 = vmatprep.subr.mxu0 0.0
    %5554 = vmatpush1.msra.mxu0 0.0
    %5555 = vmatprep.subr.mxu0 0.0
    %5556 = vmatpush1.msra.mxu0 0.0
    %5557 = vmatprep.subr.mxu0 0.0
    %5558 = vmatpush1.msra.mxu0 0.0
    %5559 = vmatprep.subr.mxu0 0.0
    %5560 = vmatpush1.msra.mxu0 0.0
    %5561 = vmatprep.subr.mxu0 0.0
    %5562 = vmatpush1.msra.mxu0 0.0
    %5563 = vmatprep.subr.mxu0 0.0
    %5564 = vmatpush1.msra.mxu0 0.0
    %5565 = vmatprep.subr.mxu0 0.0
    %5566 = vmatpush1.msra.mxu0 0.0
    %5567 = vmatprep.subr.mxu0 0.0
    %5568 = vmatpush1.msra.mxu0 0.0
    %5569 = vmatprep.mubr.f32.mxu0 %v5503
    %5570 = vmatmul.mubr.f32.gmra.mrb[0].mxu0 %v5500
    %v5571 = vpop.f32.mrb[0].mxu0
    %v5572 = vadd.f32 0.0, %v5571
    %v5573 = vpop.f32.mrb[0].mxu0
    %v5574 = vadd.f32 0.0, %v5573
    %5575 = vdwg.mxu0
    %v5576 = vadd.f32 %v5489, %v5572
    %v5577 = vadd.f32 %v5490, %v5574
    %s5578 = scalar_lea.vmem %s0, 140
    %v5579 = vld [vmem:[%s5578] sm:$0xf]
    %v5582 = vunpack.c.l.s4 1983009808
    %v5583 = vunpack.c.0.s8 %v5582
    %v5584 = vlaneseq
    %v5585 = vshrl.u32 %v5584, 7
    %v5586 = vsub.s32 %v5583, %v5585
    %v5587 = vrot.slane %v5579, %v5586
    %v5588 = vcombine.high %v5587, %v5587
    %v5590 = vsel %vm272, %v5588, 0
    %5592 = vmatprep.subr.mxu0 %v1053
    %5593 = vmatpush1.msra.mxu0 %v1052
    %5594 = vmatprep.subr.mxu0 %v1055
    %5595 = vmatpush1.msra.mxu0 %v1054
    %5596 = vmatprep.subr.mxu0 %v1057
    %5597 = vmatpush1.msra.mxu0 %v1056
    %5598 = vmatprep.subr.mxu0 %v1059
    %5599 = vmatpush1.msra.mxu0 %v1058
    %5600 = vmatprep.subr.mxu0 %v1061
    %5601 = vmatpush1.msra.mxu0 %v1060
    %5602 = vmatprep.subr.mxu0 %v1063
    %5603 = vmatpush1.msra.mxu0 %v1062
    %5604 = vmatprep.subr.mxu0 %v1065
    %5605 = vmatpush1.msra.mxu0 %v1064
    %5606 = vmatprep.subr.mxu0 %v1067
    %5607 = vmatpush1.msra.mxu0 %v1066
    %5608 = vmatprep.subr.mxu0 %v1069
    %5609 = vmatpush1.msra.mxu0 %v1068
    %5610 = vmatprep.subr.mxu0 %v1071
    %5611 = vmatpush1.msra.mxu0 %v1070
    %5612 = vmatprep.subr.mxu0 %v1073
    %5613 = vmatpush1.msra.mxu0 %v1072
    %5614 = vmatprep.subr.mxu0 %v1075
    %5615 = vmatpush1.msra.mxu0 %v1074
    %5616 = vmatprep.subr.mxu0 %v1077
    %5617 = vmatpush1.msra.mxu0 %v1076
    %5618 = vmatprep.subr.mxu0 %v1079
    %5619 = vmatpush1.msra.mxu0 %v1078
    %5620 = vmatprep.subr.mxu0 %v1081
    %5621 = vmatpush1.msra.mxu0 %v1080
    %5622 = vmatprep.subr.mxu0 %v1083
    %5623 = vmatpush1.msra.mxu0 %v1082
    %5624 = vmatprep.subr.mxu0 %v1085
    %5625 = vmatpush1.msra.mxu0 %v1084
    %5626 = vmatprep.subr.mxu0 %v1087
    %5627 = vmatpush1.msra.mxu0 %v1086
    %5628 = vmatprep.subr.mxu0 0.0
    %5629 = vmatpush1.msra.mxu0 0.0
    %5630 = vmatprep.subr.mxu0 0.0
    %5631 = vmatpush1.msra.mxu0 0.0
    %5632 = vmatprep.subr.mxu0 0.0
    %5633 = vmatpush1.msra.mxu0 0.0
    %5634 = vmatprep.subr.mxu0 0.0
    %5635 = vmatpush1.msra.mxu0 0.0
    %5636 = vmatprep.subr.mxu0 0.0
    %5637 = vmatpush1.msra.mxu0 0.0
    %5638 = vmatprep.subr.mxu0 0.0
    %5639 = vmatpush1.msra.mxu0 0.0
    %5640 = vmatprep.subr.mxu0 0.0
    %5641 = vmatpush1.msra.mxu0 0.0
    %5642 = vmatprep.subr.mxu0 0.0
    %5643 = vmatpush1.msra.mxu0 0.0
    %5644 = vmatprep.subr.mxu0 0.0
    %5645 = vmatpush1.msra.mxu0 0.0
    %5646 = vmatprep.subr.mxu0 0.0
    %5647 = vmatpush1.msra.mxu0 0.0
    %5648 = vmatprep.subr.mxu0 0.0
    %5649 = vmatpush1.msra.mxu0 0.0
    %5650 = vmatprep.subr.mxu0 0.0
    %5651 = vmatpush1.msra.mxu0 0.0
    %5652 = vmatprep.subr.mxu0 0.0
    %5653 = vmatpush1.msra.mxu0 0.0
    %5654 = vmatprep.subr.mxu0 0.0
    %5655 = vmatpush1.msra.mxu0 0.0
    %5656 = vmatprep.mubr.f32.mxu0 %v5590
    %5657 = vmatmul.mubr.f32.gmra.mrb[0].mxu0 %v5587
    %v5658 = vpop.f32.mrb[0].mxu0
    %v5659 = vadd.f32 0.0, %v5658
    %v5660 = vpop.f32.mrb[0].mxu0
    %v5661 = vadd.f32 0.0, %v5660
    %5662 = vdwg.mxu0
    %v5663 = vadd.f32 %v5576, %v5659
    %v5664 = vadd.f32 %v5577, %v5661
    %v5665 = vadd.f32 %v5663, %v1178
    %v5666 = vadd.f32 %v5664, %v1182
    %v5667 = vmax.f32 %v5665, 0.0
    %v5668 = vmax.f32 %v5666, 0.0
    %v5669 = vld [vmem:[#allocation8] sm:$0xff]
    %v5670 = vld [vmem:[#allocation8 + $0x8] sm:$0xff]
    %v5671 = vld [vmem:[#allocation8 + $0x10] sm:$0xff]
    %v5672 = vld [vmem:[#allocation8 + $0x18] sm:$0xff]
    %v5673 = vld [vmem:[#allocation8 + $0x20] sm:$0xff]
    %v5674 = vld [vmem:[#allocation8 + $0x28] sm:$0xff]
    %v5675 = vld [vmem:[#allocation8 + $0x30] sm:$0xff]
    %v5676 = vld [vmem:[#allocation8 + $0x38] sm:$0xff]
    %v5677 = vld [vmem:[#allocation8 + $0x40] sm:$0xff]
    %v5678 = vld [vmem:[#allocation8 + $0x48] sm:$0xff]
    %v5679 = vld [vmem:[#allocation8 + $0x50] sm:$0xff]
    %v5680 = vld [vmem:[#allocation8 + $0x58] sm:$0xff]
    %v5681 = vld [vmem:[#allocation8 + $0x60] sm:$0xff]
    %v5682 = vld [vmem:[#allocation8 + $0x68] sm:$0xff]
    %v5683 = vld [vmem:[#allocation8 + $0x70] sm:$0xff]
    %v5684 = vld [vmem:[#allocation8 + $0x78] sm:$0xff]
    %v5685 = vld [vmem:[#allocation8 + $0x80] sm:$0xff]
    %v5686 = vld [vmem:[#allocation8 + $0x88] sm:$0xff]
    %v5687 = vld [vmem:[#allocation8 + $0x90] sm:$0xff]
    %v5688 = vld [vmem:[#allocation8 + $0x98] sm:$0xff]
    %v5689 = vld [vmem:[#allocation8 + $0xa0] sm:$0xff]
    %v5690 = vld [vmem:[#allocation8 + $0xa8] sm:$0xff]
    %v5691 = vld [vmem:[#allocation8 + $0xb0] sm:$0xff]
    %v5692 = vld [vmem:[#allocation8 + $0xb8] sm:$0xff]
    %v5693 = vld [vmem:[#allocation8 + $0xc0] sm:$0xff]
    %v5694 = vld [vmem:[#allocation8 + $0xc8] sm:$0xff]
    %v5695 = vld [vmem:[#allocation8 + $0xd0] sm:$0xff]
    %v5696 = vld [vmem:[#allocation8 + $0xd8] sm:$0xff]
    %v5697 = vld [vmem:[#allocation8 + $0xe0] sm:$0xff]
    %v5698 = vld [vmem:[#allocation8 + $0xe8] sm:$0xff]
    %v5699 = vld [vmem:[#allocation8 + $0xf0] sm:$0xff]
    %v5700 = vld [vmem:[#allocation8 + $0xf8] sm:$0xff]
    %v5701 = vld [vmem:[#allocation8 + $0x100] sm:$0xff]
    %v5702 = vld [vmem:[#allocation8 + $0x108] sm:$0xff]
    %v5703 = vld [vmem:[#allocation8 + $0x110] sm:$0xff]
    %v5704 = vld [vmem:[#allocation8 + $0x118] sm:$0xff]
    %v5705 = vld [vmem:[#allocation8 + $0x120] sm:$0xff]
    %v5706 = vld [vmem:[#allocation8 + $0x128] sm:$0xff]
    %v5707 = vld [vmem:[#allocation8 + $0x130] sm:$0xff]
    %v5708 = vld [vmem:[#allocation8 + $0x138] sm:$0xff]
    %v5709 = vld [vmem:[#allocation8 + $0x140] sm:$0xff]
    %v5710 = vld [vmem:[#allocation8 + $0x148] sm:$0xff]
    %v5711 = vld [vmem:[#allocation8 + $0x150] sm:$0xff]
    %v5712 = vld [vmem:[#allocation8 + $0x158] sm:$0xff]
    %v5713 = vld [vmem:[#allocation8 + $0x160] sm:$0xff]
    %v5714 = vld [vmem:[#allocation8 + $0x168] sm:$0xff]
    %v5715 = vld [vmem:[#allocation8 + $0x170] sm:$0xff]
    %v5716 = vld [vmem:[#allocation8 + $0x178] sm:$0xff]
    %v5717 = vld [vmem:[#allocation8 + $0x180] sm:$0xff]
    %v5718 = vld [vmem:[#allocation8 + $0x188] sm:$0xff]
    %v5719 = vld [vmem:[#allocation8 + $0x190] sm:$0xff]
    %v5720 = vld [vmem:[#allocation8 + $0x198] sm:$0xff]
    %v5721 = vld [vmem:[#allocation8 + $0x1a0] sm:$0xff]
    %v5722 = vld [vmem:[#allocation8 + $0x1a8] sm:$0xff]
    %v5723 = vld [vmem:[#allocation8 + $0x1b0] sm:$0xff]
    %v5724 = vld [vmem:[#allocation8 + $0x1b8] sm:$0xff]
    %v5725 = vld [vmem:[#allocation8 + $0x1c0] sm:$0xff]
    %v5726 = vld [vmem:[#allocation8 + $0x1c8] sm:$0xff]
    %v5727 = vld [vmem:[#allocation8 + $0x1d0] sm:$0xff]
    %v5728 = vld [vmem:[#allocation8 + $0x1d8] sm:$0xff]
    %v5729 = vld [vmem:[#allocation8 + $0x1e0] sm:$0xff]
    %v5730 = vld [vmem:[#allocation8 + $0x1e8] sm:$0xff]
    %v5731 = vld [vmem:[#allocation8 + $0x1f0] sm:$0xff]
    %v5732 = vld [vmem:[#allocation8 + $0x1f8] sm:$0xff]
    %s5733 = scalar_lea.vmem [#allocation8], 512
    %v5734 = vld [vmem:[%s5733] sm:$0xff]
    %v5735 = vld [vmem:[%s5733 + $0x8] sm:$0xff]
    %v5736 = vld [vmem:[%s5733 + $0x10] sm:$0xff]
    %v5737 = vld [vmem:[%s5733 + $0x18] sm:$0xff]
    %v5738 = vld [vmem:[%s5733 + $0x20] sm:$0xff]
    %v5739 = vld [vmem:[%s5733 + $0x28] sm:$0xff]
    %v5740 = vld [vmem:[%s5733 + $0x30] sm:$0xff]
    %v5741 = vld [vmem:[%s5733 + $0x38] sm:$0xff]
    %v5742 = vld [vmem:[%s5733 + $0x40] sm:$0xff]
    %v5743 = vld [vmem:[%s5733 + $0x48] sm:$0xff]
    %v5744 = vld [vmem:[%s5733 + $0x50] sm:$0xff]
    %v5745 = vld [vmem:[%s5733 + $0x58] sm:$0xff]
    %v5746 = vld [vmem:[%s5733 + $0x60] sm:$0xff]
    %v5747 = vld [vmem:[%s5733 + $0x68] sm:$0xff]
    %v5748 = vld [vmem:[%s5733 + $0x70] sm:$0xff]
    %v5749 = vld [vmem:[%s5733 + $0x78] sm:$0xff]
    %v5750 = vld [vmem:[%s5733 + $0x80] sm:$0xff]
    %v5751 = vld [vmem:[%s5733 + $0x88] sm:$0xff]
    %v5752 = vld [vmem:[%s5733 + $0x90] sm:$0xff]
    %v5753 = vld [vmem:[%s5733 + $0x98] sm:$0xff]
    %v5754 = vld [vmem:[%s5733 + $0xa0] sm:$0xff]
    %v5755 = vld [vmem:[%s5733 + $0xa8] sm:$0xff]
    %v5756 = vld [vmem:[%s5733 + $0xb0] sm:$0xff]
    %v5757 = vld [vmem:[%s5733 + $0xb8] sm:$0xff]
    %v5758 = vld [vmem:[%s5733 + $0xc0] sm:$0xff]
    %v5759 = vld [vmem:[%s5733 + $0xc8] sm:$0xff]
    %v5760 = vld [vmem:[%s5733 + $0xd0] sm:$0xff]
    %v5761 = vld [vmem:[%s5733 + $0xd8] sm:$0xff]
    %v5762 = vld [vmem:[%s5733 + $0xe0] sm:$0xff]
    %v5763 = vld [vmem:[%s5733 + $0xe8] sm:$0xff]
    %v5764 = vld [vmem:[%s5733 + $0xf0] sm:$0xff]
    %v5765 = vld [vmem:[%s5733 + $0xf8] sm:$0xff]
    %v5766 = vld [vmem:[%s5733 + $0x100] sm:$0xff]
    %v5767 = vld [vmem:[%s5733 + $0x108] sm:$0xff]
    %v5768 = vld [vmem:[%s5733 + $0x110] sm:$0xff]
    %v5769 = vld [vmem:[%s5733 + $0x118] sm:$0xff]
    %v5770 = vld [vmem:[%s5733 + $0x120] sm:$0xff]
    %v5771 = vld [vmem:[%s5733 + $0x128] sm:$0xff]
    %v5772 = vld [vmem:[%s5733 + $0x130] sm:$0xff]
    %v5773 = vld [vmem:[%s5733 + $0x138] sm:$0xff]
    %v5774 = vld [vmem:[%s5733 + $0x140] sm:$0xff]
    %v5775 = vld [vmem:[%s5733 + $0x148] sm:$0xff]
    %v5776 = vld [vmem:[%s5733 + $0x150] sm:$0xff]
    %v5777 = vld [vmem:[%s5733 + $0x158] sm:$0xff]
    %v5778 = vld [vmem:[%s5733 + $0x160] sm:$0xff]
    %v5779 = vld [vmem:[%s5733 + $0x168] sm:$0xff]
    %v5780 = vld [vmem:[%s5733 + $0x170] sm:$0xff]
    %v5781 = vld [vmem:[%s5733 + $0x178] sm:$0xff]
    %v5782 = vld [vmem:[%s5733 + $0x180] sm:$0xff]
    %v5783 = vld [vmem:[%s5733 + $0x188] sm:$0xff]
    %v5784 = vld [vmem:[%s5733 + $0x190] sm:$0xff]
    %v5785 = vld [vmem:[%s5733 + $0x198] sm:$0xff]
    %v5786 = vld [vmem:[%s5733 + $0x1a0] sm:$0xff]
    %v5787 = vld [vmem:[%s5733 + $0x1a8] sm:$0xff]
    %v5788 = vld [vmem:[%s5733 + $0x1b0] sm:$0xff]
    %v5789 = vld [vmem:[%s5733 + $0x1b8] sm:$0xff]
    %v5790 = vld [vmem:[%s5733 + $0x1c0] sm:$0xff]
    %v5791 = vld [vmem:[%s5733 + $0x1c8] sm:$0xff]
    %v5792 = vld [vmem:[%s5733 + $0x1d0] sm:$0xff]
    %v5793 = vld [vmem:[%s5733 + $0x1d8] sm:$0xff]
    %v5794 = vld [vmem:[%s5733 + $0x1e0] sm:$0xff]
    %v5795 = vld [vmem:[%s5733 + $0x1e8] sm:$0xff]
    %v5796 = vld [vmem:[%s5733 + $0x1f0] sm:$0xff]
    %v5797 = vld [vmem:[%s5733 + $0x1f8] sm:$0xff]
    %5798 = vmatprep.subr.mxu0 %v5735
    %5799 = vmatpush1.msra.mxu0 %v5734
    %5800 = vmatprep.subr.mxu0 %v5737
    %5801 = vmatpush1.msra.mxu0 %v5736
    %5802 = vmatprep.subr.mxu0 %v5739
    %5803 = vmatpush1.msra.mxu0 %v5738
    %5804 = vmatprep.subr.mxu0 %v5741
    %5805 = vmatpush1.msra.mxu0 %v5740
    %5806 = vmatprep.subr.mxu0 %v5743
    %5807 = vmatpush1.msra.mxu0 %v5742
    %5808 = vmatprep.subr.mxu0 %v5745
    %5809 = vmatpush1.msra.mxu0 %v5744
    %5810 = vmatprep.subr.mxu0 %v5747
    %5811 = vmatpush1.msra.mxu0 %v5746
    %5812 = vmatprep.subr.mxu0 %v5749
    %5813 = vmatpush1.msra.mxu0 %v5748
    %5814 = vmatprep.subr.mxu0 %v5751
    %5815 = vmatpush1.msra.mxu0 %v5750
    %5816 = vmatprep.subr.mxu0 %v5753
    %5817 = vmatpush1.msra.mxu0 %v5752
    %5818 = vmatprep.subr.mxu0 %v5755
    %5819 = vmatpush1.msra.mxu0 %v5754
    %5820 = vmatprep.subr.mxu0 %v5757
    %5821 = vmatpush1.msra.mxu0 %v5756
    %5822 = vmatprep.subr.mxu0 %v5759
    %5823 = vmatpush1.msra.mxu0 %v5758
    %5824 = vmatprep.subr.mxu0 %v5761
    %5825 = vmatpush1.msra.mxu0 %v5760
    %5826 = vmatprep.subr.mxu0 %v5763
    %5827 = vmatpush1.msra.mxu0 %v5762
    %5828 = vmatprep.subr.mxu0 %v5765
    %5829 = vmatpush1.msra.mxu0 %v5764
    %5830 = vmatprep.subr.mxu0 %v5767
    %5831 = vmatpush1.msra.mxu0 %v5766
    %5832 = vmatprep.subr.mxu0 %v5769
    %5833 = vmatpush1.msra.mxu0 %v5768
    %5834 = vmatprep.subr.mxu0 %v5771
    %5835 = vmatpush1.msra.mxu0 %v5770
    %5836 = vmatprep.subr.mxu0 %v5773
    %5837 = vmatpush1.msra.mxu0 %v5772
    %5838 = vmatprep.subr.mxu0 %v5775
    %5839 = vmatpush1.msra.mxu0 %v5774
    %5840 = vmatprep.subr.mxu0 %v5777
    %5841 = vmatpush1.msra.mxu0 %v5776
    %5842 = vmatprep.subr.mxu0 %v5779
    %5843 = vmatpush1.msra.mxu0 %v5778
    %5844 = vmatprep.subr.mxu0 %v5781
    %5845 = vmatpush1.msra.mxu0 %v5780
    %5846 = vmatprep.subr.mxu0 %v5783
    %5847 = vmatpush1.msra.mxu0 %v5782
    %5848 = vmatprep.subr.mxu0 %v5785
    %5849 = vmatpush1.msra.mxu0 %v5784
    %5850 = vmatprep.subr.mxu0 %v5787
    %5851 = vmatpush1.msra.mxu0 %v5786
    %5852 = vmatprep.subr.mxu0 %v5789
    %5853 = vmatpush1.msra.mxu0 %v5788
    %5854 = vmatprep.subr.mxu0 %v5791
    %5855 = vmatpush1.msra.mxu0 %v5790
    %5856 = vmatprep.subr.mxu0 %v5793
    %5857 = vmatpush1.msra.mxu0 %v5792
    %5858 = vmatprep.subr.mxu0 %v5795
    %5859 = vmatpush1.msra.mxu0 %v5794
    %5860 = vmatprep.subr.mxu0 %v5797
    %5861 = vmatpush1.msra.mxu0 %v5796
    %5862 = vmatprep.mubr.f32.mxu0 %v1828
    %5863 = vmatmul.mubr.f32.gmra.mrb[0].mxu0 %v1827
    %v5864 = vpop.f32.mrb[0].mxu0
    %v5865 = vadd.f32 0.0, %v5864
    %v5866 = vpop.f32.mrb[0].mxu0
    %v5867 = vadd.f32 0.0, %v5866
    %5868 = vdwg.mxu0
    %5869 = vmatprep.subr.mxu0 %v5670
    %5870 = vmatpush1.msra.mxu0 %v5669
    %5871 = vmatprep.subr.mxu0 %v5672
    %5872 = vmatpush1.msra.mxu0 %v5671
    %5873 = vmatprep.subr.mxu0 %v5674
    %5874 = vmatpush1.msra.mxu0 %v5673
    %5875 = vmatprep.subr.mxu0 %v5676
    %5876 = vmatpush1.msra.mxu0 %v5675
    %5877 = vmatprep.subr.mxu0 %v5678
    %5878 = vmatpush1.msra.mxu0 %v5677
    %5879 = vmatprep.subr.mxu0 %v5680
    %5880 = vmatpush1.msra.mxu0 %v5679
    %5881 = vmatprep.subr.mxu0 %v5682
    %5882 = vmatpush1.msra.mxu0 %v5681
    %5883 = vmatprep.subr.mxu0 %v5684
    %5884 = vmatpush1.msra.mxu0 %v5683
    %5885 = vmatprep.subr.mxu0 %v5686
    %5886 = vmatpush1.msra.mxu0 %v5685
    %5887 = vmatprep.subr.mxu0 %v5688
    %5888 = vmatpush1.msra.mxu0 %v5687
    %5889 = vmatprep.subr.mxu0 %v5690
    %5890 = vmatpush1.msra.mxu0 %v5689
    %5891 = vmatprep.subr.mxu0 %v5692
    %5892 = vmatpush1.msra.mxu0 %v5691
    %5893 = vmatprep.subr.mxu0 %v5694
    %5894 = vmatpush1.msra.mxu0 %v5693
    %5895 = vmatprep.subr.mxu0 %v5696
    %5896 = vmatpush1.msra.mxu0 %v5695
    %5897 = vmatprep.subr.mxu0 %v5698
    %5898 = vmatpush1.msra.mxu0 %v5697
    %5899 = vmatprep.subr.mxu0 %v5700
    %5900 = vmatpush1.msra.mxu0 %v5699
    %5901 = vmatprep.subr.mxu0 %v5702
    %5902 = vmatpush1.msra.mxu0 %v5701
    %5903 = vmatprep.subr.mxu0 %v5704
    %5904 = vmatpush1.msra.mxu0 %v5703
    %5905 = vmatprep.subr.mxu0 %v5706
    %5906 = vmatpush1.msra.mxu0 %v5705
    %5907 = vmatprep.subr.mxu0 %v5708
    %5908 = vmatpush1.msra.mxu0 %v5707
    %5909 = vmatprep.subr.mxu0 %v5710
    %5910 = vmatpush1.msra.mxu0 %v5709
    %5911 = vmatprep.subr.mxu0 %v5712
    %5912 = vmatpush1.msra.mxu0 %v5711
    %5913 = vmatprep.subr.mxu0 %v5714
    %5914 = vmatpush1.msra.mxu0 %v5713
    %5915 = vmatprep.subr.mxu0 %v5716
    %5916 = vmatpush1.msra.mxu0 %v5715
    %5917 = vmatprep.subr.mxu0 %v5718
    %5918 = vmatpush1.msra.mxu0 %v5717
    %5919 = vmatprep.subr.mxu0 %v5720
    %5920 = vmatpush1.msra.mxu0 %v5719
    %5921 = vmatprep.subr.mxu0 %v5722
    %5922 = vmatpush1.msra.mxu0 %v5721
    %5923 = vmatprep.subr.mxu0 %v5724
    %5924 = vmatpush1.msra.mxu0 %v5723
    %5925 = vmatprep.subr.mxu0 %v5726
    %5926 = vmatpush1.msra.mxu0 %v5725
    %5927 = vmatprep.subr.mxu0 %v5728
    %5928 = vmatpush1.msra.mxu0 %v5727
    %5929 = vmatprep.subr.mxu0 %v5730
    %5930 = vmatpush1.msra.mxu0 %v5729
    %5931 = vmatprep.subr.mxu0 %v5732
    %5932 = vmatpush1.msra.mxu0 %v5731
    %5933 = vmatprep.mubr.f32.mxu0 %v1188
    %5934 = vmatmul.mubr.f32.gmra.mrb[0].mxu0 %v1187
    %v5935 = vpop.f32.mrb[0].mxu0
    %v5936 = vadd.f32 %v5865, %v5935
    %v5937 = vpop.f32.mrb[0].mxu0
    %v5938 = vadd.f32 %v5867, %v5937
    %5939 = vdwg.mxu0
    %s5940 = scalar_lea.vmem [#allocation8], 1024
    %v5941 = vld [vmem:[%s5940] sm:$0xff]
    %v5942 = vld [vmem:[%s5940 + $0x8] sm:$0xff]
    %v5943 = vld [vmem:[%s5940 + $0x10] sm:$0xff]
    %v5944 = vld [vmem:[%s5940 + $0x18] sm:$0xff]
    %v5945 = vld [vmem:[%s5940 + $0x20] sm:$0xff]
    %v5946 = vld [vmem:[%s5940 + $0x28] sm:$0xff]
    %v5947 = vld [vmem:[%s5940 + $0x30] sm:$0xff]
    %v5948 = vld [vmem:[%s5940 + $0x38] sm:$0xff]
    %v5949 = vld [vmem:[%s5940 + $0x40] sm:$0xff]
    %v5950 = vld [vmem:[%s5940 + $0x48] sm:$0xff]
    %v5951 = vld [vmem:[%s5940 + $0x50] sm:$0xff]
    %v5952 = vld [vmem:[%s5940 + $0x58] sm:$0xff]
    %v5953 = vld [vmem:[%s5940 + $0x60] sm:$0xff]
    %v5954 = vld [vmem:[%s5940 + $0x68] sm:$0xff]
    %v5955 = vld [vmem:[%s5940 + $0x70] sm:$0xff]
    %v5956 = vld [vmem:[%s5940 + $0x78] sm:$0xff]
    %v5957 = vld [vmem:[%s5940 + $0x80] sm:$0xff]
    %v5958 = vld [vmem:[%s5940 + $0x88] sm:$0xff]
    %v5959 = vld [vmem:[%s5940 + $0x90] sm:$0xff]
    %v5960 = vld [vmem:[%s5940 + $0x98] sm:$0xff]
    %v5961 = vld [vmem:[%s5940 + $0xa0] sm:$0xff]
    %v5962 = vld [vmem:[%s5940 + $0xa8] sm:$0xff]
    %v5963 = vld [vmem:[%s5940 + $0xb0] sm:$0xff]
    %v5964 = vld [vmem:[%s5940 + $0xb8] sm:$0xff]
    %v5965 = vld [vmem:[%s5940 + $0xc0] sm:$0xff]
    %v5966 = vld [vmem:[%s5940 + $0xc8] sm:$0xff]
    %v5967 = vld [vmem:[%s5940 + $0xd0] sm:$0xff]
    %v5968 = vld [vmem:[%s5940 + $0xd8] sm:$0xff]
    %v5969 = vld [vmem:[%s5940 + $0xe0] sm:$0xff]
    %v5970 = vld [vmem:[%s5940 + $0xe8] sm:$0xff]
    %v5971 = vld [vmem:[%s5940 + $0xf0] sm:$0xff]
    %v5972 = vld [vmem:[%s5940 + $0xf8] sm:$0xff]
    %v5973 = vld [vmem:[%s5940 + $0x100] sm:$0xff]
    %v5974 = vld [vmem:[%s5940 + $0x108] sm:$0xff]
    %v5975 = vld [vmem:[%s5940 + $0x110] sm:$0xff]
    %v5976 = vld [vmem:[%s5940 + $0x118] sm:$0xff]
    %v5977 = vld [vmem:[%s5940 + $0x120] sm:$0xff]
    %v5978 = vld [vmem:[%s5940 + $0x128] sm:$0xff]
    %v5979 = vld [vmem:[%s5940 + $0x130] sm:$0xff]
    %v5980 = vld [vmem:[%s5940 + $0x138] sm:$0xff]
    %v5981 = vld [vmem:[%s5940 + $0x140] sm:$0xff]
    %v5982 = vld [vmem:[%s5940 + $0x148] sm:$0xff]
    %v5983 = vld [vmem:[%s5940 + $0x150] sm:$0xff]
    %v5984 = vld [vmem:[%s5940 + $0x158] sm:$0xff]
    %v5985 = vld [vmem:[%s5940 + $0x160] sm:$0xff]
    %v5986 = vld [vmem:[%s5940 + $0x168] sm:$0xff]
    %v5987 = vld [vmem:[%s5940 + $0x170] sm:$0xff]
    %v5988 = vld [vmem:[%s5940 + $0x178] sm:$0xff]
    %v5989 = vld [vmem:[%s5940 + $0x180] sm:$0xff]
    %v5990 = vld [vmem:[%s5940 + $0x188] sm:$0xff]
    %v5991 = vld [vmem:[%s5940 + $0x190] sm:$0xff]
    %v5992 = vld [vmem:[%s5940 + $0x198] sm:$0xff]
    %v5993 = vld [vmem:[%s5940 + $0x1a0] sm:$0xff]
    %v5994 = vld [vmem:[%s5940 + $0x1a8] sm:$0xff]
    %v5995 = vld [vmem:[%s5940 + $0x1b0] sm:$0xff]
    %v5996 = vld [vmem:[%s5940 + $0x1b8] sm:$0xff]
    %v5997 = vld [vmem:[%s5940 + $0x1c0] sm:$0xff]
    %v5998 = vld [vmem:[%s5940 + $0x1c8] sm:$0xff]
    %v5999 = vld [vmem:[%s5940 + $0x1d0] sm:$0xff]
    %v6000 = vld [vmem:[%s5940 + $0x1d8] sm:$0xff]
    %v6001 = vld [vmem:[%s5940 + $0x1e0] sm:$0xff]
    %v6002 = vld [vmem:[%s5940 + $0x1e8] sm:$0xff]
    %v6003 = vld [vmem:[%s5940 + $0x1f0] sm:$0xff]
    %v6004 = vld [vmem:[%s5940 + $0x1f8] sm:$0xff]
    %6005 = vmatprep.subr.mxu0 %v5942
    %6006 = vmatpush1.msra.mxu0 %v5941
    %6007 = vmatprep.subr.mxu0 %v5944
    %6008 = vmatpush1.msra.mxu0 %v5943
    %6009 = vmatprep.subr.mxu0 %v5946
    %6010 = vmatpush1.msra.mxu0 %v5945
    %6011 = vmatprep.subr.mxu0 %v5948
    %6012 = vmatpush1.msra.mxu0 %v5947
    %6013 = vmatprep.subr.mxu0 %v5950
    %6014 = vmatpush1.msra.mxu0 %v5949
    %6015 = vmatprep.subr.mxu0 %v5952
    %6016 = vmatpush1.msra.mxu0 %v5951
    %6017 = vmatprep.subr.mxu0 %v5954
    %6018 = vmatpush1.msra.mxu0 %v5953
    %6019 = vmatprep.subr.mxu0 %v5956
    %6020 = vmatpush1.msra.mxu0 %v5955
    %6021 = vmatprep.subr.mxu0 %v5958
    %6022 = vmatpush1.msra.mxu0 %v5957
    %6023 = vmatprep.subr.mxu0 %v5960
    %6024 = vmatpush1.msra.mxu0 %v5959
    %6025 = vmatprep.subr.mxu0 %v5962
    %6026 = vmatpush1.msra.mxu0 %v5961
    %6027 = vmatprep.subr.mxu0 %v5964
    %6028 = vmatpush1.msra.mxu0 %v5963
    %6029 = vmatprep.subr.mxu0 %v5966
    %6030 = vmatpush1.msra.mxu0 %v5965
    %6031 = vmatprep.subr.mxu0 %v5968
    %6032 = vmatpush1.msra.mxu0 %v5967
    %6033 = vmatprep.subr.mxu0 %v5970
    %6034 = vmatpush1.msra.mxu0 %v5969
    %6035 = vmatprep.subr.mxu0 %v5972
    %6036 = vmatpush1.msra.mxu0 %v5971
    %6037 = vmatprep.subr.mxu0 %v5974
    %6038 = vmatpush1.msra.mxu0 %v5973
    %6039 = vmatprep.subr.mxu0 %v5976
    %6040 = vmatpush1.msra.mxu0 %v5975
    %6041 = vmatprep.subr.mxu0 %v5978
    %6042 = vmatpush1.msra.mxu0 %v5977
    %6043 = vmatprep.subr.mxu0 %v5980
    %6044 = vmatpush1.msra.mxu0 %v5979
    %6045 = vmatprep.subr.mxu0 %v5982
    %6046 = vmatpush1.msra.mxu0 %v5981
    %6047 = vmatprep.subr.mxu0 %v5984
    %6048 = vmatpush1.msra.mxu0 %v5983
    %6049 = vmatprep.subr.mxu0 %v5986
    %6050 = vmatpush1.msra.mxu0 %v5985
    %6051 = vmatprep.subr.mxu0 %v5988
    %6052 = vmatpush1.msra.mxu0 %v5987
    %6053 = vmatprep.subr.mxu0 %v5990
    %6054 = vmatpush1.msra.mxu0 %v5989
    %6055 = vmatprep.subr.mxu0 %v5992
    %6056 = vmatpush1.msra.mxu0 %v5991
    %6057 = vmatprep.subr.mxu0 %v5994
    %6058 = vmatpush1.msra.mxu0 %v5993
    %6059 = vmatprep.subr.mxu0 %v5996
    %6060 = vmatpush1.msra.mxu0 %v5995
    %6061 = vmatprep.subr.mxu0 %v5998
    %6062 = vmatpush1.msra.mxu0 %v5997
    %6063 = vmatprep.subr.mxu0 %v6000
    %6064 = vmatpush1.msra.mxu0 %v5999
    %6065 = vmatprep.subr.mxu0 %v6002
    %6066 = vmatpush1.msra.mxu0 %v6001
    %6067 = vmatprep.subr.mxu0 %v6004
    %6068 = vmatpush1.msra.mxu0 %v6003
    %6069 = vmatprep.mubr.f32.mxu0 %v2468
    %6070 = vmatmul.mubr.f32.gmra.mrb[0].mxu0 %v2467
    %v6071 = vpop.f32.mrb[0].mxu0
    %v6072 = vadd.f32 0.0, %v6071
    %v6073 = vpop.f32.mrb[0].mxu0
    %v6074 = vadd.f32 0.0, %v6073
    %6075 = vdwg.mxu0
    %v6076 = vadd.f32 %v5936, %v6072
    %v6077 = vadd.f32 %v5938, %v6074
    %s6078 = scalar_lea.vmem [#allocation8], 1536
    %v6079 = vld [vmem:[%s6078] sm:$0xff]
    %v6080 = vld [vmem:[%s6078 + $0x8] sm:$0xff]
    %v6081 = vld [vmem:[%s6078 + $0x10] sm:$0xff]
    %v6082 = vld [vmem:[%s6078 + $0x18] sm:$0xff]
    %v6083 = vld [vmem:[%s6078 + $0x20] sm:$0xff]
    %v6084 = vld [vmem:[%s6078 + $0x28] sm:$0xff]
    %v6085 = vld [vmem:[%s6078 + $0x30] sm:$0xff]
    %v6086 = vld [vmem:[%s6078 + $0x38] sm:$0xff]
    %v6087 = vld [vmem:[%s6078 + $0x40] sm:$0xff]
    %v6088 = vld [vmem:[%s6078 + $0x48] sm:$0xff]
    %v6089 = vld [vmem:[%s6078 + $0x50] sm:$0xff]
    %v6090 = vld [vmem:[%s6078 + $0x58] sm:$0xff]
    %v6091 = vld [vmem:[%s6078 + $0x60] sm:$0xff]
    %v6092 = vld [vmem:[%s6078 + $0x68] sm:$0xff]
    %v6093 = vld [vmem:[%s6078 + $0x70] sm:$0xff]
    %v6094 = vld [vmem:[%s6078 + $0x78] sm:$0xff]
    %v6095 = vld [vmem:[%s6078 + $0x80] sm:$0xff]
    %v6096 = vld [vmem:[%s6078 + $0x88] sm:$0xff]
    %v6097 = vld [vmem:[%s6078 + $0x90] sm:$0xff]
    %v6098 = vld [vmem:[%s6078 + $0x98] sm:$0xff]
    %v6099 = vld [vmem:[%s6078 + $0xa0] sm:$0xff]
    %v6100 = vld [vmem:[%s6078 + $0xa8] sm:$0xff]
    %v6101 = vld [vmem:[%s6078 + $0xb0] sm:$0xff]
    %v6102 = vld [vmem:[%s6078 + $0xb8] sm:$0xff]
    %v6103 = vld [vmem:[%s6078 + $0xc0] sm:$0xff]
    %v6104 = vld [vmem:[%s6078 + $0xc8] sm:$0xff]
    %v6105 = vld [vmem:[%s6078 + $0xd0] sm:$0xff]
    %v6106 = vld [vmem:[%s6078 + $0xd8] sm:$0xff]
    %v6107 = vld [vmem:[%s6078 + $0xe0] sm:$0xff]
    %v6108 = vld [vmem:[%s6078 + $0xe8] sm:$0xff]
    %v6109 = vld [vmem:[%s6078 + $0xf0] sm:$0xff]
    %v6110 = vld [vmem:[%s6078 + $0xf8] sm:$0xff]
    %v6111 = vld [vmem:[%s6078 + $0x100] sm:$0xff]
    %v6112 = vld [vmem:[%s6078 + $0x108] sm:$0xff]
    %v6113 = vld [vmem:[%s6078 + $0x110] sm:$0xff]
    %v6114 = vld [vmem:[%s6078 + $0x118] sm:$0xff]
    %v6115 = vld [vmem:[%s6078 + $0x120] sm:$0xff]
    %v6116 = vld [vmem:[%s6078 + $0x128] sm:$0xff]
    %v6117 = vld [vmem:[%s6078 + $0x130] sm:$0xff]
    %v6118 = vld [vmem:[%s6078 + $0x138] sm:$0xff]
    %v6119 = vld [vmem:[%s6078 + $0x140] sm:$0xff]
    %v6120 = vld [vmem:[%s6078 + $0x148] sm:$0xff]
    %v6121 = vld [vmem:[%s6078 + $0x150] sm:$0xff]
    %v6122 = vld [vmem:[%s6078 + $0x158] sm:$0xff]
    %v6123 = vld [vmem:[%s6078 + $0x160] sm:$0xff]
    %v6124 = vld [vmem:[%s6078 + $0x168] sm:$0xff]
    %v6125 = vld [vmem:[%s6078 + $0x170] sm:$0xff]
    %v6126 = vld [vmem:[%s6078 + $0x178] sm:$0xff]
    %v6127 = vld [vmem:[%s6078 + $0x180] sm:$0xff]
    %v6128 = vld [vmem:[%s6078 + $0x188] sm:$0xff]
    %v6129 = vld [vmem:[%s6078 + $0x190] sm:$0xff]
    %v6130 = vld [vmem:[%s6078 + $0x198] sm:$0xff]
    %v6131 = vld [vmem:[%s6078 + $0x1a0] sm:$0xff]
    %v6132 = vld [vmem:[%s6078 + $0x1a8] sm:$0xff]
    %v6133 = vld [vmem:[%s6078 + $0x1b0] sm:$0xff]
    %v6134 = vld [vmem:[%s6078 + $0x1b8] sm:$0xff]
    %v6135 = vld [vmem:[%s6078 + $0x1c0] sm:$0xff]
    %v6136 = vld [vmem:[%s6078 + $0x1c8] sm:$0xff]
    %v6137 = vld [vmem:[%s6078 + $0x1d0] sm:$0xff]
    %v6138 = vld [vmem:[%s6078 + $0x1d8] sm:$0xff]
    %v6139 = vld [vmem:[%s6078 + $0x1e0] sm:$0xff]
    %v6140 = vld [vmem:[%s6078 + $0x1e8] sm:$0xff]
    %v6141 = vld [vmem:[%s6078 + $0x1f0] sm:$0xff]
    %v6142 = vld [vmem:[%s6078 + $0x1f8] sm:$0xff]
    %6143 = vmatprep.subr.mxu0 %v6080
    %6144 = vmatpush1.msra.mxu0 %v6079
    %6145 = vmatprep.subr.mxu0 %v6082
    %6146 = vmatpush1.msra.mxu0 %v6081
    %6147 = vmatprep.subr.mxu0 %v6084
    %6148 = vmatpush1.msra.mxu0 %v6083
    %6149 = vmatprep.subr.mxu0 %v6086
    %6150 = vmatpush1.msra.mxu0 %v6085
    %6151 = vmatprep.subr.mxu0 %v6088
    %6152 = vmatpush1.msra.mxu0 %v6087
    %6153 = vmatprep.subr.mxu0 %v6090
    %6154 = vmatpush1.msra.mxu0 %v6089
    %6155 = vmatprep.subr.mxu0 %v6092
    %6156 = vmatpush1.msra.mxu0 %v6091
    %6157 = vmatprep.subr.mxu0 %v6094
    %6158 = vmatpush1.msra.mxu0 %v6093
    %6159 = vmatprep.subr.mxu0 %v6096
    %6160 = vmatpush1.msra.mxu0 %v6095
    %6161 = vmatprep.subr.mxu0 %v6098
    %6162 = vmatpush1.msra.mxu0 %v6097
    %6163 = vmatprep.subr.mxu0 %v6100
    %6164 = vmatpush1.msra.mxu0 %v6099
    %6165 = vmatprep.subr.mxu0 %v6102
    %6166 = vmatpush1.msra.mxu0 %v6101
    %6167 = vmatprep.subr.mxu0 %v6104
    %6168 = vmatpush1.msra.mxu0 %v6103
    %6169 = vmatprep.subr.mxu0 %v6106
    %6170 = vmatpush1.msra.mxu0 %v6105
    %6171 = vmatprep.subr.mxu0 %v6108
    %6172 = vmatpush1.msra.mxu0 %v6107
    %6173 = vmatprep.subr.mxu0 %v6110
    %6174 = vmatpush1.msra.mxu0 %v6109
    %6175 = vmatprep.subr.mxu0 %v6112
    %6176 = vmatpush1.msra.mxu0 %v6111
    %6177 = vmatprep.subr.mxu0 %v6114
    %6178 = vmatpush1.msra.mxu0 %v6113
    %6179 = vmatprep.subr.mxu0 %v6116
    %6180 = vmatpush1.msra.mxu0 %v6115
    %6181 = vmatprep.subr.mxu0 %v6118
    %6182 = vmatpush1.msra.mxu0 %v6117
    %6183 = vmatprep.subr.mxu0 %v6120
    %6184 = vmatpush1.msra.mxu0 %v6119
    %6185 = vmatprep.subr.mxu0 %v6122
    %6186 = vmatpush1.msra.mxu0 %v6121
    %6187 = vmatprep.subr.mxu0 %v6124
    %6188 = vmatpush1.msra.mxu0 %v6123
    %6189 = vmatprep.subr.mxu0 %v6126
    %6190 = vmatpush1.msra.mxu0 %v6125
    %6191 = vmatprep.subr.mxu0 %v6128
    %6192 = vmatpush1.msra.mxu0 %v6127
    %6193 = vmatprep.subr.mxu0 %v6130
    %6194 = vmatpush1.msra.mxu0 %v6129
    %6195 = vmatprep.subr.mxu0 %v6132
    %6196 = vmatpush1.msra.mxu0 %v6131
    %6197 = vmatprep.subr.mxu0 %v6134
    %6198 = vmatpush1.msra.mxu0 %v6133
    %6199 = vmatprep.subr.mxu0 %v6136
    %6200 = vmatpush1.msra.mxu0 %v6135
    %6201 = vmatprep.subr.mxu0 %v6138
    %6202 = vmatpush1.msra.mxu0 %v6137
    %6203 = vmatprep.subr.mxu0 %v6140
    %6204 = vmatpush1.msra.mxu0 %v6139
    %6205 = vmatprep.subr.mxu0 %v6142
    %6206 = vmatpush1.msra.mxu0 %v6141
    %6207 = vmatprep.mubr.f32.mxu0 %v3108
    %6208 = vmatmul.mubr.f32.gmra.mrb[0].mxu0 %v3107
    %v6209 = vpop.f32.mrb[0].mxu0
    %v6210 = vadd.f32 0.0, %v6209
    %v6211 = vpop.f32.mrb[0].mxu0
    %v6212 = vadd.f32 0.0, %v6211
    %6213 = vdwg.mxu0
    %v6214 = vadd.f32 %v6076, %v6210
    %v6215 = vadd.f32 %v6077, %v6212
    %v6216 = vld [vmem:[#allocation9] sm:$0x3]
    %v6218 = vlaneseq
    %v6219 = vshrl.u32 %v6218, 7
    %v6220 = vsub.s32 0, %v6219
    %v6221 = vrot.slane %v6216, %v6220
    %v6222 = vlaneseq
    %v6223 = vshrl.u32 %v6222, 7
    %v6224 = vsub.s32 1, %v6223
    %v6225 = vrot.slane %v6216, %v6224
    %v6228 = vadd.f32 %v6214, %v6221
    %v6229 = vadd.f32 %v6215, %v6225
    %v6230 = vmax.f32 %v6228, 0.0
    %v6231 = vmax.f32 %v6229, 0.0
    %6232 = vmatprep.subr.mxu0 %v5735
    %6233 = vmatpush1.msra.mxu0 %v5734
    %6234 = vmatprep.subr.mxu0 %v5737
    %6235 = vmatpush1.msra.mxu0 %v5736
    %6236 = vmatprep.subr.mxu0 %v5739
    %6237 = vmatpush1.msra.mxu0 %v5738
    %6238 = vmatprep.subr.mxu0 %v5741
    %6239 = vmatpush1.msra.mxu0 %v5740
    %6240 = vmatprep.subr.mxu0 %v5743
    %6241 = vmatpush1.msra.mxu0 %v5742
    %6242 = vmatprep.subr.mxu0 %v5745
    %6243 = vmatpush1.msra.mxu0 %v5744
    %6244 = vmatprep.subr.mxu0 %v5747
    %6245 = vmatpush1.msra.mxu0 %v5746
    %6246 = vmatprep.subr.mxu0 %v5749
    %6247 = vmatpush1.msra.mxu0 %v5748
    %6248 = vmatprep.subr.mxu0 %v5751
    %6249 = vmatpush1.msra.mxu0 %v5750
    %6250 = vmatprep.subr.mxu0 %v5753
    %6251 = vmatpush1.msra.mxu0 %v5752
    %6252 = vmatprep.subr.mxu0 %v5755
    %6253 = vmatpush1.msra.mxu0 %v5754
    %6254 = vmatprep.subr.mxu0 %v5757
    %6255 = vmatpush1.msra.mxu0 %v5756
    %6256 = vmatprep.subr.mxu0 %v5759
    %6257 = vmatpush1.msra.mxu0 %v5758
    %6258 = vmatprep.subr.mxu0 %v5761
    %6259 = vmatpush1.msra.mxu0 %v5760
    %6260 = vmatprep.subr.mxu0 %v5763
    %6261 = vmatpush1.msra.mxu0 %v5762
    %6262 = vmatprep.subr.mxu0 %v5765
    %6263 = vmatpush1.msra.mxu0 %v5764
    %6264 = vmatprep.subr.mxu0 %v5767
    %6265 = vmatpush1.msra.mxu0 %v5766
    %6266 = vmatprep.subr.mxu0 %v5769
    %6267 = vmatpush1.msra.mxu0 %v5768
    %6268 = vmatprep.subr.mxu0 %v5771
    %6269 = vmatpush1.msra.mxu0 %v5770
    %6270 = vmatprep.subr.mxu0 %v5773
    %6271 = vmatpush1.msra.mxu0 %v5772
    %6272 = vmatprep.subr.mxu0 %v5775
    %6273 = vmatpush1.msra.mxu0 %v5774
    %6274 = vmatprep.subr.mxu0 %v5777
    %6275 = vmatpush1.msra.mxu0 %v5776
    %6276 = vmatprep.subr.mxu0 %v5779
    %6277 = vmatpush1.msra.mxu0 %v5778
    %6278 = vmatprep.subr.mxu0 %v5781
    %6279 = vmatpush1.msra.mxu0 %v5780
    %6280 = vmatprep.subr.mxu0 %v5783
    %6281 = vmatpush1.msra.mxu0 %v5782
    %6282 = vmatprep.subr.mxu0 %v5785
    %6283 = vmatpush1.msra.mxu0 %v5784
    %6284 = vmatprep.subr.mxu0 %v5787
    %6285 = vmatpush1.msra.mxu0 %v5786
    %6286 = vmatprep.subr.mxu0 %v5789
    %6287 = vmatpush1.msra.mxu0 %v5788
    %6288 = vmatprep.subr.mxu0 %v5791
    %6289 = vmatpush1.msra.mxu0 %v5790
    %6290 = vmatprep.subr.mxu0 %v5793
    %6291 = vmatpush1.msra.mxu0 %v5792
    %6292 = vmatprep.subr.mxu0 %v5795
    %6293 = vmatpush1.msra.mxu0 %v5794
    %6294 = vmatprep.subr.mxu0 %v5797
    %6295 = vmatpush1.msra.mxu0 %v5796
    %6296 = vmatprep.mubr.f32.mxu0 %v3108
    %6297 = vmatmul.mubr.f32.gmra.mrb[0].mxu0 %v3107
    %v6298 = vpop.f32.mrb[0].mxu0
    %v6299 = vadd.f32 0.0, %v6298
    %v6300 = vpop.f32.mrb[0].mxu0
    %v6301 = vadd.f32 0.0, %v6300
    %6302 = vdwg.mxu0
    %6303 = vmatprep.subr.mxu0 %v5670
    %6304 = vmatpush1.msra.mxu0 %v5669
    %6305 = vmatprep.subr.mxu0 %v5672
    %6306 = vmatpush1.msra.mxu0 %v5671
    %6307 = vmatprep.subr.mxu0 %v5674
    %6308 = vmatpush1.msra.mxu0 %v5673
    %6309 = vmatprep.subr.mxu0 %v5676
    %6310 = vmatpush1.msra.mxu0 %v5675
    %6311 = vmatprep.subr.mxu0 %v5678
    %6312 = vmatpush1.msra.mxu0 %v5677
    %6313 = vmatprep.subr.mxu0 %v5680
    %6314 = vmatpush1.msra.mxu0 %v5679
    %6315 = vmatprep.subr.mxu0 %v5682
    %6316 = vmatpush1.msra.mxu0 %v5681
    %6317 = vmatprep.subr.mxu0 %v5684
    %6318 = vmatpush1.msra.mxu0 %v5683
    %6319 = vmatprep.subr.mxu0 %v5686
    %6320 = vmatpush1.msra.mxu0 %v5685
    %6321 = vmatprep.subr.mxu0 %v5688
    %6322 = vmatpush1.msra.mxu0 %v5687
    %6323 = vmatprep.subr.mxu0 %v5690
    %6324 = vmatpush1.msra.mxu0 %v5689
    %6325 = vmatprep.subr.mxu0 %v5692
    %6326 = vmatpush1.msra.mxu0 %v5691
    %6327 = vmatprep.subr.mxu0 %v5694
    %6328 = vmatpush1.msra.mxu0 %v5693
    %6329 = vmatprep.subr.mxu0 %v5696
    %6330 = vmatpush1.msra.mxu0 %v5695
    %6331 = vmatprep.subr.mxu0 %v5698
    %6332 = vmatpush1.msra.mxu0 %v5697
    %6333 = vmatprep.subr.mxu0 %v5700
    %6334 = vmatpush1.msra.mxu0 %v5699
    %6335 = vmatprep.subr.mxu0 %v5702
    %6336 = vmatpush1.msra.mxu0 %v5701
    %6337 = vmatprep.subr.mxu0 %v5704
    %6338 = vmatpush1.msra.mxu0 %v5703
    %6339 = vmatprep.subr.mxu0 %v5706
    %6340 = vmatpush1.msra.mxu0 %v5705
    %6341 = vmatprep.subr.mxu0 %v5708
    %6342 = vmatpush1.msra.mxu0 %v5707
    %6343 = vmatprep.subr.mxu0 %v5710
    %6344 = vmatpush1.msra.mxu0 %v5709
    %6345 = vmatprep.subr.mxu0 %v5712
    %6346 = vmatpush1.msra.mxu0 %v5711
    %6347 = vmatprep.subr.mxu0 %v5714
    %6348 = vmatpush1.msra.mxu0 %v5713
    %6349 = vmatprep.subr.mxu0 %v5716
    %6350 = vmatpush1.msra.mxu0 %v5715
    %6351 = vmatprep.subr.mxu0 %v5718
    %6352 = vmatpush1.msra.mxu0 %v5717
    %6353 = vmatprep.subr.mxu0 %v5720
    %6354 = vmatpush1.msra.mxu0 %v5719
    %6355 = vmatprep.subr.mxu0 %v5722
    %6356 = vmatpush1.msra.mxu0 %v5721
    %6357 = vmatprep.subr.mxu0 %v5724
    %6358 = vmatpush1.msra.mxu0 %v5723
    %6359 = vmatprep.subr.mxu0 %v5726
    %6360 = vmatpush1.msra.mxu0 %v5725
    %6361 = vmatprep.subr.mxu0 %v5728
    %6362 = vmatpush1.msra.mxu0 %v5727
    %6363 = vmatprep.subr.mxu0 %v5730
    %6364 = vmatpush1.msra.mxu0 %v5729
    %6365 = vmatprep.subr.mxu0 %v5732
    %6366 = vmatpush1.msra.mxu0 %v5731
    %6367 = vmatprep.mubr.f32.mxu0 %v2468
    %6368 = vmatmul.mubr.f32.gmra.mrb[0].mxu0 %v2467
    %v6369 = vpop.f32.mrb[0].mxu0
    %v6370 = vadd.f32 %v6299, %v6369
    %v6371 = vpop.f32.mrb[0].mxu0
    %v6372 = vadd.f32 %v6301, %v6371
    %6373 = vdwg.mxu0
    %6374 = vmatprep.subr.mxu0 %v5942
    %6375 = vmatpush1.msra.mxu0 %v5941
    %6376 = vmatprep.subr.mxu0 %v5944
    %6377 = vmatpush1.msra.mxu0 %v5943
    %6378 = vmatprep.subr.mxu0 %v5946
    %6379 = vmatpush1.msra.mxu0 %v5945
    %6380 = vmatprep.subr.mxu0 %v5948
    %6381 = vmatpush1.msra.mxu0 %v5947
    %6382 = vmatprep.subr.mxu0 %v5950
    %6383 = vmatpush1.msra.mxu0 %v5949
    %6384 = vmatprep.subr.mxu0 %v5952
    %6385 = vmatpush1.msra.mxu0 %v5951
    %6386 = vmatprep.subr.mxu0 %v5954
    %6387 = vmatpush1.msra.mxu0 %v5953
    %6388 = vmatprep.subr.mxu0 %v5956
    %6389 = vmatpush1.msra.mxu0 %v5955
    %6390 = vmatprep.subr.mxu0 %v5958
    %6391 = vmatpush1.msra.mxu0 %v5957
    %6392 = vmatprep.subr.mxu0 %v5960
    %6393 = vmatpush1.msra.mxu0 %v5959
    %6394 = vmatprep.subr.mxu0 %v5962
    %6395 = vmatpush1.msra.mxu0 %v5961
    %6396 = vmatprep.subr.mxu0 %v5964
    %6397 = vmatpush1.msra.mxu0 %v5963
    %6398 = vmatprep.subr.mxu0 %v5966
    %6399 = vmatpush1.msra.mxu0 %v5965
    %6400 = vmatprep.subr.mxu0 %v5968
    %6401 = vmatpush1.msra.mxu0 %v5967
    %6402 = vmatprep.subr.mxu0 %v5970
    %6403 = vmatpush1.msra.mxu0 %v5969
    %6404 = vmatprep.subr.mxu0 %v5972
    %6405 = vmatpush1.msra.mxu0 %v5971
    %6406 = vmatprep.subr.mxu0 %v5974
    %6407 = vmatpush1.msra.mxu0 %v5973
    %6408 = vmatprep.subr.mxu0 %v5976
    %6409 = vmatpush1.msra.mxu0 %v5975
    %6410 = vmatprep.subr.mxu0 %v5978
    %6411 = vmatpush1.msra.mxu0 %v5977
    %6412 = vmatprep.subr.mxu0 %v5980
    %6413 = vmatpush1.msra.mxu0 %v5979
    %6414 = vmatprep.subr.mxu0 %v5982
    %6415 = vmatpush1.msra.mxu0 %v5981
    %6416 = vmatprep.subr.mxu0 %v5984
    %6417 = vmatpush1.msra.mxu0 %v5983
    %6418 = vmatprep.subr.mxu0 %v5986
    %6419 = vmatpush1.msra.mxu0 %v5985
    %6420 = vmatprep.subr.mxu0 %v5988
    %6421 = vmatpush1.msra.mxu0 %v5987
    %6422 = vmatprep.subr.mxu0 %v5990
    %6423 = vmatpush1.msra.mxu0 %v5989
    %6424 = vmatprep.subr.mxu0 %v5992
    %6425 = vmatpush1.msra.mxu0 %v5991
    %6426 = vmatprep.subr.mxu0 %v5994
    %6427 = vmatpush1.msra.mxu0 %v5993
    %6428 = vmatprep.subr.mxu0 %v5996
    %6429 = vmatpush1.msra.mxu0 %v5995
    %6430 = vmatprep.subr.mxu0 %v5998
    %6431 = vmatpush1.msra.mxu0 %v5997
    %6432 = vmatprep.subr.mxu0 %v6000
    %6433 = vmatpush1.msra.mxu0 %v5999
    %6434 = vmatprep.subr.mxu0 %v6002
    %6435 = vmatpush1.msra.mxu0 %v6001
    %6436 = vmatprep.subr.mxu0 %v6004
    %6437 = vmatpush1.msra.mxu0 %v6003
    %6438 = vmatprep.mubr.f32.mxu0 %v3748
    %6439 = vmatmul.mubr.f32.gmra.mrb[0].mxu0 %v3747
    %v6440 = vpop.f32.mrb[0].mxu0
    %v6441 = vadd.f32 0.0, %v6440
    %v6442 = vpop.f32.mrb[0].mxu0
    %v6443 = vadd.f32 0.0, %v6442
    %6444 = vdwg.mxu0
    %v6445 = vadd.f32 %v6370, %v6441
    %v6446 = vadd.f32 %v6372, %v6443
    %6447 = vmatprep.subr.mxu0 %v6080
    %6448 = vmatpush1.msra.mxu0 %v6079
    %6449 = vmatprep.subr.mxu0 %v6082
    %6450 = vmatpush1.msra.mxu0 %v6081
    %6451 = vmatprep.subr.mxu0 %v6084
    %6452 = vmatpush1.msra.mxu0 %v6083
    %6453 = vmatprep.subr.mxu0 %v6086
    %6454 = vmatpush1.msra.mxu0 %v6085
    %6455 = vmatprep.subr.mxu0 %v6088
    %6456 = vmatpush1.msra.mxu0 %v6087
    %6457 = vmatprep.subr.mxu0 %v6090
    %6458 = vmatpush1.msra.mxu0 %v6089
    %6459 = vmatprep.subr.mxu0 %v6092
    %6460 = vmatpush1.msra.mxu0 %v6091
    %6461 = vmatprep.subr.mxu0 %v6094
    %6462 = vmatpush1.msra.mxu0 %v6093
    %6463 = vmatprep.subr.mxu0 %v6096
    %6464 = vmatpush1.msra.mxu0 %v6095
    %6465 = vmatprep.subr.mxu0 %v6098
    %6466 = vmatpush1.msra.mxu0 %v6097
    %6467 = vmatprep.subr.mxu0 %v6100
    %6468 = vmatpush1.msra.mxu0 %v6099
    %6469 = vmatprep.subr.mxu0 %v6102
    %6470 = vmatpush1.msra.mxu0 %v6101
    %6471 = vmatprep.subr.mxu0 %v6104
    %6472 = vmatpush1.msra.mxu0 %v6103
    %6473 = vmatprep.subr.mxu0 %v6106
    %6474 = vmatpush1.msra.mxu0 %v6105
    %6475 = vmatprep.subr.mxu0 %v6108
    %6476 = vmatpush1.msra.mxu0 %v6107
    %6477 = vmatprep.subr.mxu0 %v6110
    %6478 = vmatpush1.msra.mxu0 %v6109
    %6479 = vmatprep.subr.mxu0 %v6112
    %6480 = vmatpush1.msra.mxu0 %v6111
    %6481 = vmatprep.subr.mxu0 %v6114
    %6482 = vmatpush1.msra.mxu0 %v6113
    %6483 = vmatprep.subr.mxu0 %v6116
    %6484 = vmatpush1.msra.mxu0 %v6115
    %6485 = vmatprep.subr.mxu0 %v6118
    %6486 = vmatpush1.msra.mxu0 %v6117
    %6487 = vmatprep.subr.mxu0 %v6120
    %6488 = vmatpush1.msra.mxu0 %v6119
    %6489 = vmatprep.subr.mxu0 %v6122
    %6490 = vmatpush1.msra.mxu0 %v6121
    %6491 = vmatprep.subr.mxu0 %v6124
    %6492 = vmatpush1.msra.mxu0 %v6123
    %6493 = vmatprep.subr.mxu0 %v6126
    %6494 = vmatpush1.msra.mxu0 %v6125
    %6495 = vmatprep.subr.mxu0 %v6128
    %6496 = vmatpush1.msra.mxu0 %v6127
    %6497 = vmatprep.subr.mxu0 %v6130
    %6498 = vmatpush1.msra.mxu0 %v6129
    %6499 = vmatprep.subr.mxu0 %v6132
    %6500 = vmatpush1.msra.mxu0 %v6131
    %6501 = vmatprep.subr.mxu0 %v6134
    %6502 = vmatpush1.msra.mxu0 %v6133
    %6503 = vmatprep.subr.mxu0 %v6136
    %6504 = vmatpush1.msra.mxu0 %v6135
    %6505 = vmatprep.subr.mxu0 %v6138
    %6506 = vmatpush1.msra.mxu0 %v6137
    %6507 = vmatprep.subr.mxu0 %v6140
    %6508 = vmatpush1.msra.mxu0 %v6139
    %6509 = vmatprep.subr.mxu0 %v6142
    %6510 = vmatpush1.msra.mxu0 %v6141
    %6511 = vmatprep.mubr.f32.mxu0 %v4388
    %6512 = vmatmul.mubr.f32.gmra.mrb[0].mxu0 %v4387
    %v6513 = vpop.f32.mrb[0].mxu0
    %v6514 = vadd.f32 0.0, %v6513
    %v6515 = vpop.f32.mrb[0].mxu0
    %v6516 = vadd.f32 0.0, %v6515
    %6517 = vdwg.mxu0
    %v6518 = vadd.f32 %v6445, %v6514
    %v6519 = vadd.f32 %v6446, %v6516
    %v6520 = vadd.f32 %v6518, %v6221
    %v6521 = vadd.f32 %v6519, %v6225
    %v6522 = vmax.f32 %v6520, 0.0
    %v6523 = vmax.f32 %v6521, 0.0
    %6524 = vmatprep.subr.mxu0 %v5735
    %6525 = vmatpush1.msra.mxu0 %v5734
    %6526 = vmatprep.subr.mxu0 %v5737
    %6527 = vmatpush1.msra.mxu0 %v5736
    %6528 = vmatprep.subr.mxu0 %v5739
    %6529 = vmatpush1.msra.mxu0 %v5738
    %6530 = vmatprep.subr.mxu0 %v5741
    %6531 = vmatpush1.msra.mxu0 %v5740
    %6532 = vmatprep.subr.mxu0 %v5743
    %6533 = vmatpush1.msra.mxu0 %v5742
    %6534 = vmatprep.subr.mxu0 %v5745
    %6535 = vmatpush1.msra.mxu0 %v5744
    %6536 = vmatprep.subr.mxu0 %v5747
    %6537 = vmatpush1.msra.mxu0 %v5746
    %6538 = vmatprep.subr.mxu0 %v5749
    %6539 = vmatpush1.msra.mxu0 %v5748
    %6540 = vmatprep.subr.mxu0 %v5751
    %6541 = vmatpush1.msra.mxu0 %v5750
    %6542 = vmatprep.subr.mxu0 %v5753
    %6543 = vmatpush1.msra.mxu0 %v5752
    %6544 = vmatprep.subr.mxu0 %v5755
    %6545 = vmatpush1.msra.mxu0 %v5754
    %6546 = vmatprep.subr.mxu0 %v5757
    %6547 = vmatpush1.msra.mxu0 %v5756
    %6548 = vmatprep.subr.mxu0 %v5759
    %6549 = vmatpush1.msra.mxu0 %v5758
    %6550 = vmatprep.subr.mxu0 %v5761
    %6551 = vmatpush1.msra.mxu0 %v5760
    %6552 = vmatprep.subr.mxu0 %v5763
    %6553 = vmatpush1.msra.mxu0 %v5762
    %6554 = vmatprep.subr.mxu0 %v5765
    %6555 = vmatpush1.msra.mxu0 %v5764
    %6556 = vmatprep.subr.mxu0 %v5767
    %6557 = vmatpush1.msra.mxu0 %v5766
    %6558 = vmatprep.subr.mxu0 %v5769
    %6559 = vmatpush1.msra.mxu0 %v5768
    %6560 = vmatprep.subr.mxu0 %v5771
    %6561 = vmatpush1.msra.mxu0 %v5770
    %6562 = vmatprep.subr.mxu0 %v5773
    %6563 = vmatpush1.msra.mxu0 %v5772
    %6564 = vmatprep.subr.mxu0 %v5775
    %6565 = vmatpush1.msra.mxu0 %v5774
    %6566 = vmatprep.subr.mxu0 %v5777
    %6567 = vmatpush1.msra.mxu0 %v5776
    %6568 = vmatprep.subr.mxu0 %v5779
    %6569 = vmatpush1.msra.mxu0 %v5778
    %6570 = vmatprep.subr.mxu0 %v5781
    %6571 = vmatpush1.msra.mxu0 %v5780
    %6572 = vmatprep.subr.mxu0 %v5783
    %6573 = vmatpush1.msra.mxu0 %v5782
    %6574 = vmatprep.subr.mxu0 %v5785
    %6575 = vmatpush1.msra.mxu0 %v5784
    %6576 = vmatprep.subr.mxu0 %v5787
    %6577 = vmatpush1.msra.mxu0 %v5786
    %6578 = vmatprep.subr.mxu0 %v5789
    %6579 = vmatpush1.msra.mxu0 %v5788
    %6580 = vmatprep.subr.mxu0 %v5791
    %6581 = vmatpush1.msra.mxu0 %v5790
    %6582 = vmatprep.subr.mxu0 %v5793
    %6583 = vmatpush1.msra.mxu0 %v5792
    %6584 = vmatprep.subr.mxu0 %v5795
    %6585 = vmatpush1.msra.mxu0 %v5794
    %6586 = vmatprep.subr.mxu0 %v5797
    %6587 = vmatpush1.msra.mxu0 %v5796
    %6588 = vmatprep.mubr.f32.mxu0 %v4388
    %6589 = vmatmul.mubr.f32.gmra.mrb[0].mxu0 %v4387
    %v6590 = vpop.f32.mrb[0].mxu0
    %v6591 = vadd.f32 0.0, %v6590
    %v6592 = vpop.f32.mrb[0].mxu0
    %v6593 = vadd.f32 0.0, %v6592
    %6594 = vdwg.mxu0
    %6595 = vmatprep.subr.mxu0 %v5670
    %6596 = vmatpush1.msra.mxu0 %v5669
    %6597 = vmatprep.subr.mxu0 %v5672
    %6598 = vmatpush1.msra.mxu0 %v5671
    %6599 = vmatprep.subr.mxu0 %v5674
    %6600 = vmatpush1.msra.mxu0 %v5673
    %6601 = vmatprep.subr.mxu0 %v5676
    %6602 = vmatpush1.msra.mxu0 %v5675
    %6603 = vmatprep.subr.mxu0 %v5678
    %6604 = vmatpush1.msra.mxu0 %v5677
    %6605 = vmatprep.subr.mxu0 %v5680
    %6606 = vmatpush1.msra.mxu0 %v5679
    %6607 = vmatprep.subr.mxu0 %v5682
    %6608 = vmatpush1.msra.mxu0 %v5681
    %6609 = vmatprep.subr.mxu0 %v5684
    %6610 = vmatpush1.msra.mxu0 %v5683
    %6611 = vmatprep.subr.mxu0 %v5686
    %6612 = vmatpush1.msra.mxu0 %v5685
    %6613 = vmatprep.subr.mxu0 %v5688
    %6614 = vmatpush1.msra.mxu0 %v5687
    %6615 = vmatprep.subr.mxu0 %v5690
    %6616 = vmatpush1.msra.mxu0 %v5689
    %6617 = vmatprep.subr.mxu0 %v5692
    %6618 = vmatpush1.msra.mxu0 %v5691
    %6619 = vmatprep.subr.mxu0 %v5694
    %6620 = vmatpush1.msra.mxu0 %v5693
    %6621 = vmatprep.subr.mxu0 %v5696
    %6622 = vmatpush1.msra.mxu0 %v5695
    %6623 = vmatprep.subr.mxu0 %v5698
    %6624 = vmatpush1.msra.mxu0 %v5697
    %6625 = vmatprep.subr.mxu0 %v5700
    %6626 = vmatpush1.msra.mxu0 %v5699
    %6627 = vmatprep.subr.mxu0 %v5702
    %6628 = vmatpush1.msra.mxu0 %v5701
    %6629 = vmatprep.subr.mxu0 %v5704
    %6630 = vmatpush1.msra.mxu0 %v5703
    %6631 = vmatprep.subr.mxu0 %v5706
    %6632 = vmatpush1.msra.mxu0 %v5705
    %6633 = vmatprep.subr.mxu0 %v5708
    %6634 = vmatpush1.msra.mxu0 %v5707
    %6635 = vmatprep.subr.mxu0 %v5710
    %6636 = vmatpush1.msra.mxu0 %v5709
    %6637 = vmatprep.subr.mxu0 %v5712
    %6638 = vmatpush1.msra.mxu0 %v5711
    %6639 = vmatprep.subr.mxu0 %v5714
    %6640 = vmatpush1.msra.mxu0 %v5713
    %6641 = vmatprep.subr.mxu0 %v5716
    %6642 = vmatpush1.msra.mxu0 %v5715
    %6643 = vmatprep.subr.mxu0 %v5718
    %6644 = vmatpush1.msra.mxu0 %v5717
    %6645 = vmatprep.subr.mxu0 %v5720
    %6646 = vmatpush1.msra.mxu0 %v5719
    %6647 = vmatprep.subr.mxu0 %v5722
    %6648 = vmatpush1.msra.mxu0 %v5721
    %6649 = vmatprep.subr.mxu0 %v5724
    %6650 = vmatpush1.msra.mxu0 %v5723
    %6651 = vmatprep.subr.mxu0 %v5726
    %6652 = vmatpush1.msra.mxu0 %v5725
    %6653 = vmatprep.subr.mxu0 %v5728
    %6654 = vmatpush1.msra.mxu0 %v5727
    %6655 = vmatprep.subr.mxu0 %v5730
    %6656 = vmatpush1.msra.mxu0 %v5729
    %6657 = vmatprep.subr.mxu0 %v5732
    %6658 = vmatpush1.msra.mxu0 %v5731
    %6659 = vmatprep.mubr.f32.mxu0 %v3748
    %6660 = vmatmul.mubr.f32.gmra.mrb[0].mxu0 %v3747
    %v6661 = vpop.f32.mrb[0].mxu0
    %v6662 = vadd.f32 %v6591, %v6661
    %v6663 = vpop.f32.mrb[0].mxu0
    %v6664 = vadd.f32 %v6593, %v6663
    %6665 = vdwg.mxu0
    %6666 = vmatprep.subr.mxu0 %v5942
    %6667 = vmatpush1.msra.mxu0 %v5941
    %6668 = vmatprep.subr.mxu0 %v5944
    %6669 = vmatpush1.msra.mxu0 %v5943
    %6670 = vmatprep.subr.mxu0 %v5946
    %6671 = vmatpush1.msra.mxu0 %v5945
    %6672 = vmatprep.subr.mxu0 %v5948
    %6673 = vmatpush1.msra.mxu0 %v5947
    %6674 = vmatprep.subr.mxu0 %v5950
    %6675 = vmatpush1.msra.mxu0 %v5949
    %6676 = vmatprep.subr.mxu0 %v5952
    %6677 = vmatpush1.msra.mxu0 %v5951
    %6678 = vmatprep.subr.mxu0 %v5954
    %6679 = vmatpush1.msra.mxu0 %v5953
    %6680 = vmatprep.subr.mxu0 %v5956
    %6681 = vmatpush1.msra.mxu0 %v5955
    %6682 = vmatprep.subr.mxu0 %v5958
    %6683 = vmatpush1.msra.mxu0 %v5957
    %6684 = vmatprep.subr.mxu0 %v5960
    %6685 = vmatpush1.msra.mxu0 %v5959
    %6686 = vmatprep.subr.mxu0 %v5962
    %6687 = vmatpush1.msra.mxu0 %v5961
    %6688 = vmatprep.subr.mxu0 %v5964
    %6689 = vmatpush1.msra.mxu0 %v5963
    %6690 = vmatprep.subr.mxu0 %v5966
    %6691 = vmatpush1.msra.mxu0 %v5965
    %6692 = vmatprep.subr.mxu0 %v5968
    %6693 = vmatpush1.msra.mxu0 %v5967
    %6694 = vmatprep.subr.mxu0 %v5970
    %6695 = vmatpush1.msra.mxu0 %v5969
    %6696 = vmatprep.subr.mxu0 %v5972
    %6697 = vmatpush1.msra.mxu0 %v5971
    %6698 = vmatprep.subr.mxu0 %v5974
    %6699 = vmatpush1.msra.mxu0 %v5973
    %6700 = vmatprep.subr.mxu0 %v5976
    %6701 = vmatpush1.msra.mxu0 %v5975
    %6702 = vmatprep.subr.mxu0 %v5978
    %6703 = vmatpush1.msra.mxu0 %v5977
    %6704 = vmatprep.subr.mxu0 %v5980
    %6705 = vmatpush1.msra.mxu0 %v5979
    %6706 = vmatprep.subr.mxu0 %v5982
    %6707 = vmatpush1.msra.mxu0 %v5981
    %6708 = vmatprep.subr.mxu0 %v5984
    %6709 = vmatpush1.msra.mxu0 %v5983
    %6710 = vmatprep.subr.mxu0 %v5986
    %6711 = vmatpush1.msra.mxu0 %v5985
    %6712 = vmatprep.subr.mxu0 %v5988
    %6713 = vmatpush1.msra.mxu0 %v5987
    %6714 = vmatprep.subr.mxu0 %v5990
    %6715 = vmatpush1.msra.mxu0 %v5989
    %6716 = vmatprep.subr.mxu0 %v5992
    %6717 = vmatpush1.msra.mxu0 %v5991
    %6718 = vmatprep.subr.mxu0 %v5994
    %6719 = vmatpush1.msra.mxu0 %v5993
    %6720 = vmatprep.subr.mxu0 %v5996
    %6721 = vmatpush1.msra.mxu0 %v5995
    %6722 = vmatprep.subr.mxu0 %v5998
    %6723 = vmatpush1.msra.mxu0 %v5997
    %6724 = vmatprep.subr.mxu0 %v6000
    %6725 = vmatpush1.msra.mxu0 %v5999
    %6726 = vmatprep.subr.mxu0 %v6002
    %6727 = vmatpush1.msra.mxu0 %v6001
    %6728 = vmatprep.subr.mxu0 %v6004
    %6729 = vmatpush1.msra.mxu0 %v6003
    %6730 = vmatprep.mubr.f32.mxu0 %v5028
    %6731 = vmatmul.mubr.f32.gmra.mrb[0].mxu0 %v5027
    %v6732 = vpop.f32.mrb[0].mxu0
    %v6733 = vadd.f32 0.0, %v6732
    %v6734 = vpop.f32.mrb[0].mxu0
    %v6735 = vadd.f32 0.0, %v6734
    %6736 = vdwg.mxu0
    %v6737 = vadd.f32 %v6662, %v6733
    %v6738 = vadd.f32 %v6664, %v6735
    %6739 = vmatprep.subr.mxu0 %v6080
    %6740 = vmatpush1.msra.mxu0 %v6079
    %6741 = vmatprep.subr.mxu0 %v6082
    %6742 = vmatpush1.msra.mxu0 %v6081
    %6743 = vmatprep.subr.mxu0 %v6084
    %6744 = vmatpush1.msra.mxu0 %v6083
    %6745 = vmatprep.subr.mxu0 %v6086
    %6746 = vmatpush1.msra.mxu0 %v6085
    %6747 = vmatprep.subr.mxu0 %v6088
    %6748 = vmatpush1.msra.mxu0 %v6087
    %6749 = vmatprep.subr.mxu0 %v6090
    %6750 = vmatpush1.msra.mxu0 %v6089
    %6751 = vmatprep.subr.mxu0 %v6092
    %6752 = vmatpush1.msra.mxu0 %v6091
    %6753 = vmatprep.subr.mxu0 %v6094
    %6754 = vmatpush1.msra.mxu0 %v6093
    %6755 = vmatprep.subr.mxu0 %v6096
    %6756 = vmatpush1.msra.mxu0 %v6095
    %6757 = vmatprep.subr.mxu0 %v6098
    %6758 = vmatpush1.msra.mxu0 %v6097
    %6759 = vmatprep.subr.mxu0 %v6100
    %6760 = vmatpush1.msra.mxu0 %v6099
    %6761 = vmatprep.subr.mxu0 %v6102
    %6762 = vmatpush1.msra.mxu0 %v6101
    %6763 = vmatprep.subr.mxu0 %v6104
    %6764 = vmatpush1.msra.mxu0 %v6103
    %6765 = vmatprep.subr.mxu0 %v6106
    %6766 = vmatpush1.msra.mxu0 %v6105
    %6767 = vmatprep.subr.mxu0 %v6108
    %6768 = vmatpush1.msra.mxu0 %v6107
    %6769 = vmatprep.subr.mxu0 %v6110
    %6770 = vmatpush1.msra.mxu0 %v6109
    %6771 = vmatprep.subr.mxu0 %v6112
    %6772 = vmatpush1.msra.mxu0 %v6111
    %6773 = vmatprep.subr.mxu0 %v6114
    %6774 = vmatpush1.msra.mxu0 %v6113
    %6775 = vmatprep.subr.mxu0 %v6116
    %6776 = vmatpush1.msra.mxu0 %v6115
    %6777 = vmatprep.subr.mxu0 %v6118
    %6778 = vmatpush1.msra.mxu0 %v6117
    %6779 = vmatprep.subr.mxu0 %v6120
    %6780 = vmatpush1.msra.mxu0 %v6119
    %6781 = vmatprep.subr.mxu0 %v6122
    %6782 = vmatpush1.msra.mxu0 %v6121
    %6783 = vmatprep.subr.mxu0 %v6124
    %6784 = vmatpush1.msra.mxu0 %v6123
    %6785 = vmatprep.subr.mxu0 %v6126
    %6786 = vmatpush1.msra.mxu0 %v6125
    %6787 = vmatprep.subr.mxu0 %v6128
    %6788 = vmatpush1.msra.mxu0 %v6127
    %6789 = vmatprep.subr.mxu0 %v6130
    %6790 = vmatpush1.msra.mxu0 %v6129
    %6791 = vmatprep.subr.mxu0 %v6132
    %6792 = vmatpush1.msra.mxu0 %v6131
    %6793 = vmatprep.subr.mxu0 %v6134
    %6794 = vmatpush1.msra.mxu0 %v6133
    %6795 = vmatprep.subr.mxu0 %v6136
    %6796 = vmatpush1.msra.mxu0 %v6135
    %6797 = vmatprep.subr.mxu0 %v6138
    %6798 = vmatpush1.msra.mxu0 %v6137
    %6799 = vmatprep.subr.mxu0 %v6140
    %6800 = vmatpush1.msra.mxu0 %v6139
    %6801 = vmatprep.subr.mxu0 %v6142
    %6802 = vmatpush1.msra.mxu0 %v6141
    %6803 = vmatprep.mubr.f32.mxu0 %v5668
    %6804 = vmatmul.mubr.f32.gmra.mrb[0].mxu0 %v5667
    %v6805 = vpop.f32.mrb[0].mxu0
    %v6806 = vadd.f32 0.0, %v6805
    %v6807 = vpop.f32.mrb[0].mxu0
    %v6808 = vadd.f32 0.0, %v6807
    %6809 = vdwg.mxu0
    %v6810 = vadd.f32 %v6737, %v6806
    %v6811 = vadd.f32 %v6738, %v6808
    %v6812 = vadd.f32 %v6810, %v6221
    %v6813 = vadd.f32 %v6811, %v6225
    %v6814 = vmax.f32 %v6812, 0.0
    %v6815 = vmax.f32 %v6813, 0.0
    %v6816 = vld [vmem:[#allocation11] sm:$0xff]
    %v6817 = vld [vmem:[#allocation11 + $0x8] sm:$0xff]
    %v6818 = vld [vmem:[#allocation11 + $0x10] sm:$0xff]
    %v6819 = vld [vmem:[#allocation11 + $0x18] sm:$0xff]
    %v6820 = vld [vmem:[#allocation11 + $0x20] sm:$0xff]
    %v6821 = vld [vmem:[#allocation11 + $0x28] sm:$0xff]
    %v6822 = vld [vmem:[#allocation11 + $0x30] sm:$0xff]
    %v6823 = vld [vmem:[#allocation11 + $0x38] sm:$0xff]
    %v6824 = vld [vmem:[#allocation11 + $0x40] sm:$0xff]
    %v6825 = vld [vmem:[#allocation11 + $0x48] sm:$0xff]
    %v6826 = vld [vmem:[#allocation11 + $0x50] sm:$0xff]
    %v6827 = vld [vmem:[#allocation11 + $0x58] sm:$0xff]
    %v6828 = vld [vmem:[#allocation11 + $0x60] sm:$0xff]
    %v6829 = vld [vmem:[#allocation11 + $0x68] sm:$0xff]
    %v6830 = vld [vmem:[#allocation11 + $0x70] sm:$0xff]
    %v6831 = vld [vmem:[#allocation11 + $0x78] sm:$0xff]
    %v6832 = vld [vmem:[#allocation11 + $0x80] sm:$0xff]
    %v6833 = vld [vmem:[#allocation11 + $0x88] sm:$0xff]
    %v6834 = vld [vmem:[#allocation11 + $0x90] sm:$0xff]
    %v6835 = vld [vmem:[#allocation11 + $0x98] sm:$0xff]
    %v6836 = vld [vmem:[#allocation11 + $0xa0] sm:$0xff]
    %v6837 = vld [vmem:[#allocation11 + $0xa8] sm:$0xff]
    %v6838 = vld [vmem:[#allocation11 + $0xb0] sm:$0xff]
    %v6839 = vld [vmem:[#allocation11 + $0xb8] sm:$0xff]
    %s6840 = scalar_lea.vmem [#allocation11], 192
    %v6841 = vld [vmem:[%s6840] sm:$0xff]
    %v6842 = vld [vmem:[%s6840 + $0x8] sm:$0xff]
    %v6843 = vld [vmem:[%s6840 + $0x10] sm:$0xff]
    %v6844 = vld [vmem:[%s6840 + $0x18] sm:$0xff]
    %v6845 = vld [vmem:[%s6840 + $0x20] sm:$0xff]
    %v6846 = vld [vmem:[%s6840 + $0x28] sm:$0xff]
    %v6847 = vld [vmem:[%s6840 + $0x30] sm:$0xff]
    %v6848 = vld [vmem:[%s6840 + $0x38] sm:$0xff]
    %v6849 = vld [vmem:[%s6840 + $0x40] sm:$0xff]
    %v6850 = vld [vmem:[%s6840 + $0x48] sm:$0xff]
    %v6851 = vld [vmem:[%s6840 + $0x50] sm:$0xff]
    %v6852 = vld [vmem:[%s6840 + $0x58] sm:$0xff]
    %v6853 = vld [vmem:[%s6840 + $0x60] sm:$0xff]
    %v6854 = vld [vmem:[%s6840 + $0x68] sm:$0xff]
    %v6855 = vld [vmem:[%s6840 + $0x70] sm:$0xff]
    %v6856 = vld [vmem:[%s6840 + $0x78] sm:$0xff]
    %v6857 = vld [vmem:[%s6840 + $0x80] sm:$0xff]
    %v6858 = vld [vmem:[%s6840 + $0x88] sm:$0xff]
    %v6859 = vld [vmem:[%s6840 + $0x90] sm:$0xff]
    %v6860 = vld [vmem:[%s6840 + $0x98] sm:$0xff]
    %v6861 = vld [vmem:[%s6840 + $0xa0] sm:$0xff]
    %v6862 = vld [vmem:[%s6840 + $0xa8] sm:$0xff]
    %v6863 = vld [vmem:[%s6840 + $0xb0] sm:$0xff]
    %v6864 = vld [vmem:[%s6840 + $0xb8] sm:$0xff]
    %vm6865 = vcmask 523264
    %v6867 = vsel %vm6865, %v6523, 0
    %6869 = vmatprep.subr.mxu0 0.0
    %6870 = vmatpush1.msra.mxu0 %v6841
    %6871 = vmatprep.subr.mxu0 0.0
    %6872 = vmatpush1.msra.mxu0 %v6842
    %6873 = vmatprep.subr.mxu0 0.0
    %6874 = vmatpush1.msra.mxu0 %v6843
    %6875 = vmatprep.subr.mxu0 0.0
    %6876 = vmatpush1.msra.mxu0 %v6844
    %6877 = vmatprep.subr.mxu0 0.0
    %6878 = vmatpush1.msra.mxu0 %v6845
    %6879 = vmatprep.subr.mxu0 0.0
    %6880 = vmatpush1.msra.mxu0 %v6846
    %6881 = vmatprep.subr.mxu0 0.0
    %6882 = vmatpush1.msra.mxu0 %v6847
    %6883 = vmatprep.subr.mxu0 0.0
    %6884 = vmatpush1.msra.mxu0 %v6848
    %6885 = vmatprep.subr.mxu0 0.0
    %6886 = vmatpush1.msra.mxu0 %v6849
    %6887 = vmatprep.subr.mxu0 0.0
    %6888 = vmatpush1.msra.mxu0 %v6850
    %6889 = vmatprep.subr.mxu0 0.0
    %6890 = vmatpush1.msra.mxu0 %v6851
    %6891 = vmatprep.subr.mxu0 0.0
    %6892 = vmatpush1.msra.mxu0 %v6852
    %6893 = vmatprep.subr.mxu0 0.0
    %6894 = vmatpush1.msra.mxu0 %v6853
    %6895 = vmatprep.subr.mxu0 0.0
    %6896 = vmatpush1.msra.mxu0 %v6854
    %6897 = vmatprep.subr.mxu0 0.0
    %6898 = vmatpush1.msra.mxu0 %v6855
    %6899 = vmatprep.subr.mxu0 0.0
    %6900 = vmatpush1.msra.mxu0 %v6856
    %6901 = vmatprep.subr.mxu0 0.0
    %6902 = vmatpush1.msra.mxu0 %v6857
    %6903 = vmatprep.subr.mxu0 0.0
    %6904 = vmatpush1.msra.mxu0 %v6858
    %6905 = vmatprep.subr.mxu0 0.0
    %6906 = vmatpush1.msra.mxu0 %v6859
    %6907 = vmatprep.subr.mxu0 0.0
    %6908 = vmatpush1.msra.mxu0 %v6860
    %6909 = vmatprep.subr.mxu0 0.0
    %6910 = vmatpush1.msra.mxu0 %v6861
    %6911 = vmatprep.subr.mxu0 0.0
    %6912 = vmatpush1.msra.mxu0 %v6862
    %6913 = vmatprep.subr.mxu0 0.0
    %6914 = vmatpush1.msra.mxu0 %v6863
    %6915 = vmatprep.subr.mxu0 0.0
    %6916 = vmatpush1.msra.mxu0 %v6864
    %6917 = vmatprep.subr.mxu0 0.0
    %6918 = vmatpush1.msra.mxu0 0.0
    %6919 = vmatprep.subr.mxu0 0.0
    %6920 = vmatpush1.msra.mxu0 0.0
    %6921 = vmatprep.subr.mxu0 0.0
    %6922 = vmatpush1.msra.mxu0 0.0
    %6923 = vmatprep.subr.mxu0 0.0
    %6924 = vmatpush1.msra.mxu0 0.0
    %6925 = vmatprep.subr.mxu0 0.0
    %6926 = vmatpush1.msra.mxu0 0.0
    %6927 = vmatprep.subr.mxu0 0.0
    %6928 = vmatpush1.msra.mxu0 0.0
    %6929 = vmatprep.subr.mxu0 0.0
    %6930 = vmatpush1.msra.mxu0 0.0
    %6931 = vmatprep.subr.mxu0 0.0
    %6932 = vmatpush1.msra.mxu0 0.0
    %6933 = vmatprep.mubr.f32.mxu0 %v6867
    %6934 = vmatmul.mubr.f32.gmra.mrb[0].mxu0 %v6522
    %v6935 = vpop.f32.mrb[0].mxu0
    %v6936 = vadd.f32 0.0, %v6935
    %v6937 = vpop.f32.mrb[0].mxu0
    %6938 = vdwg.mxu0
    %v6940 = vsel %vm6865, %v6231, 0
    %6942 = vmatprep.subr.mxu0 0.0
    %6943 = vmatpush1.msra.mxu0 %v6816
    %6944 = vmatprep.subr.mxu0 0.0
    %6945 = vmatpush1.msra.mxu0 %v6817
    %6946 = vmatprep.subr.mxu0 0.0
    %6947 = vmatpush1.msra.mxu0 %v6818
    %6948 = vmatprep.subr.mxu0 0.0
    %6949 = vmatpush1.msra.mxu0 %v6819
    %6950 = vmatprep.subr.mxu0 0.0
    %6951 = vmatpush1.msra.mxu0 %v6820
    %6952 = vmatprep.subr.mxu0 0.0
    %6953 = vmatpush1.msra.mxu0 %v6821
    %6954 = vmatprep.subr.mxu0 0.0
    %6955 = vmatpush1.msra.mxu0 %v6822
    %6956 = vmatprep.subr.mxu0 0.0
    %6957 = vmatpush1.msra.mxu0 %v6823
    %6958 = vmatprep.subr.mxu0 0.0
    %6959 = vmatpush1.msra.mxu0 %v6824
    %6960 = vmatprep.subr.mxu0 0.0
    %6961 = vmatpush1.msra.mxu0 %v6825
    %6962 = vmatprep.subr.mxu0 0.0
    %6963 = vmatpush1.msra.mxu0 %v6826
    %6964 = vmatprep.subr.mxu0 0.0
    %6965 = vmatpush1.msra.mxu0 %v6827
    %6966 = vmatprep.subr.mxu0 0.0
    %6967 = vmatpush1.msra.mxu0 %v6828
    %6968 = vmatprep.subr.mxu0 0.0
    %6969 = vmatpush1.msra.mxu0 %v6829
    %6970 = vmatprep.subr.mxu0 0.0
    %6971 = vmatpush1.msra.mxu0 %v6830
    %6972 = vmatprep.subr.mxu0 0.0
    %6973 = vmatpush1.msra.mxu0 %v6831
    %6974 = vmatprep.subr.mxu0 0.0
    %6975 = vmatpush1.msra.mxu0 %v6832
    %6976 = vmatprep.subr.mxu0 0.0
    %6977 = vmatpush1.msra.mxu0 %v6833
    %6978 = vmatprep.subr.mxu0 0.0
    %6979 = vmatpush1.msra.mxu0 %v6834
    %6980 = vmatprep.subr.mxu0 0.0
    %6981 = vmatpush1.msra.mxu0 %v6835
    %6982 = vmatprep.subr.mxu0 0.0
    %6983 = vmatpush1.msra.mxu0 %v6836
    %6984 = vmatprep.subr.mxu0 0.0
    %6985 = vmatpush1.msra.mxu0 %v6837
    %6986 = vmatprep.subr.mxu0 0.0
    %6987 = vmatpush1.msra.mxu0 %v6838
    %6988 = vmatprep.subr.mxu0 0.0
    %6989 = vmatpush1.msra.mxu0 %v6839
    %6990 = vmatprep.subr.mxu0 0.0
    %6991 = vmatpush1.msra.mxu0 0.0
    %6992 = vmatprep.subr.mxu0 0.0
    %6993 = vmatpush1.msra.mxu0 0.0
    %6994 = vmatprep.subr.mxu0 0.0
    %6995 = vmatpush1.msra.mxu0 0.0
    %6996 = vmatprep.subr.mxu0 0.0
    %6997 = vmatpush1.msra.mxu0 0.0
    %6998 = vmatprep.subr.mxu0 0.0
    %6999 = vmatpush1.msra.mxu0 0.0
    %7000 = vmatprep.subr.mxu0 0.0
    %7001 = vmatpush1.msra.mxu0 0.0
    %7002 = vmatprep.subr.mxu0 0.0
    %7003 = vmatpush1.msra.mxu0 0.0
    %7004 = vmatprep.subr.mxu0 0.0
    %7005 = vmatpush1.msra.mxu0 0.0
    %7006 = vmatprep.mubr.f32.mxu0 %v6940
    %7007 = vmatmul.mubr.f32.gmra.mrb[0].mxu0 %v6230
    %v7008 = vpop.f32.mrb[0].mxu0
    %v7009 = vadd.f32 %v6936, %v7008
    %v7010 = vpop.f32.mrb[0].mxu0
    %7011 = vdwg.mxu0
    %s7012 = scalar_lea.vmem [#allocation11], 384
    %v7013 = vld [vmem:[%s7012] sm:$0xff]
    %v7014 = vld [vmem:[%s7012 + $0x8] sm:$0xff]
    %v7015 = vld [vmem:[%s7012 + $0x10] sm:$0xff]
    %v7016 = vld [vmem:[%s7012 + $0x18] sm:$0xff]
    %v7017 = vld [vmem:[%s7012 + $0x20] sm:$0xff]
    %v7018 = vld [vmem:[%s7012 + $0x28] sm:$0xff]
    %v7019 = vld [vmem:[%s7012 + $0x30] sm:$0xff]
    %v7020 = vld [vmem:[%s7012 + $0x38] sm:$0xff]
    %v7021 = vld [vmem:[%s7012 + $0x40] sm:$0xff]
    %v7022 = vld [vmem:[%s7012 + $0x48] sm:$0xff]
    %v7023 = vld [vmem:[%s7012 + $0x50] sm:$0xff]
    %v7024 = vld [vmem:[%s7012 + $0x58] sm:$0xff]
    %v7025 = vld [vmem:[%s7012 + $0x60] sm:$0xff]
    %v7026 = vld [vmem:[%s7012 + $0x68] sm:$0xff]
    %v7027 = vld [vmem:[%s7012 + $0x70] sm:$0xff]
    %v7028 = vld [vmem:[%s7012 + $0x78] sm:$0xff]
    %v7029 = vld [vmem:[%s7012 + $0x80] sm:$0xff]
    %v7030 = vld [vmem:[%s7012 + $0x88] sm:$0xff]
    %v7031 = vld [vmem:[%s7012 + $0x90] sm:$0xff]
    %v7032 = vld [vmem:[%s7012 + $0x98] sm:$0xff]
    %v7033 = vld [vmem:[%s7012 + $0xa0] sm:$0xff]
    %v7034 = vld [vmem:[%s7012 + $0xa8] sm:$0xff]
    %v7035 = vld [vmem:[%s7012 + $0xb0] sm:$0xff]
    %v7036 = vld [vmem:[%s7012 + $0xb8] sm:$0xff]
    %v7038 = vsel %vm6865, %v6815, 0
    %7040 = vmatprep.subr.mxu0 0.0
    %7041 = vmatpush1.msra.mxu0 %v7013
    %7042 = vmatprep.subr.mxu0 0.0
    %7043 = vmatpush1.msra.mxu0 %v7014
    %7044 = vmatprep.subr.mxu0 0.0
    %7045 = vmatpush1.msra.mxu0 %v7015
    %7046 = vmatprep.subr.mxu0 0.0
    %7047 = vmatpush1.msra.mxu0 %v7016
    %7048 = vmatprep.subr.mxu0 0.0
    %7049 = vmatpush1.msra.mxu0 %v7017
    %7050 = vmatprep.subr.mxu0 0.0
    %7051 = vmatpush1.msra.mxu0 %v7018
    %7052 = vmatprep.subr.mxu0 0.0
    %7053 = vmatpush1.msra.mxu0 %v7019
    %7054 = vmatprep.subr.mxu0 0.0
    %7055 = vmatpush1.msra.mxu0 %v7020
    %7056 = vmatprep.subr.mxu0 0.0
    %7057 = vmatpush1.msra.mxu0 %v7021
    %7058 = vmatprep.subr.mxu0 0.0
    %7059 = vmatpush1.msra.mxu0 %v7022
    %7060 = vmatprep.subr.mxu0 0.0
    %7061 = vmatpush1.msra.mxu0 %v7023
    %7062 = vmatprep.subr.mxu0 0.0
    %7063 = vmatpush1.msra.mxu0 %v7024
    %7064 = vmatprep.subr.mxu0 0.0
    %7065 = vmatpush1.msra.mxu0 %v7025
    %7066 = vmatprep.subr.mxu0 0.0
    %7067 = vmatpush1.msra.mxu0 %v7026
    %7068 = vmatprep.subr.mxu0 0.0
    %7069 = vmatpush1.msra.mxu0 %v7027
    %7070 = vmatprep.subr.mxu0 0.0
    %7071 = vmatpush1.msra.mxu0 %v7028
    %7072 = vmatprep.subr.mxu0 0.0
    %7073 = vmatpush1.msra.mxu0 %v7029
    %7074 = vmatprep.subr.mxu0 0.0
    %7075 = vmatpush1.msra.mxu0 %v7030
    %7076 = vmatprep.subr.mxu0 0.0
    %7077 = vmatpush1.msra.mxu0 %v7031
    %7078 = vmatprep.subr.mxu0 0.0
    %7079 = vmatpush1.msra.mxu0 %v7032
    %7080 = vmatprep.subr.mxu0 0.0
    %7081 = vmatpush1.msra.mxu0 %v7033
    %7082 = vmatprep.subr.mxu0 0.0
    %7083 = vmatpush1.msra.mxu0 %v7034
    %7084 = vmatprep.subr.mxu0 0.0
    %7085 = vmatpush1.msra.mxu0 %v7035
    %7086 = vmatprep.subr.mxu0 0.0
    %7087 = vmatpush1.msra.mxu0 %v7036
    %7088 = vmatprep.subr.mxu0 0.0
    %7089 = vmatpush1.msra.mxu0 0.0
    %7090 = vmatprep.subr.mxu0 0.0
    %7091 = vmatpush1.msra.mxu0 0.0
    %7092 = vmatprep.subr.mxu0 0.0
    %7093 = vmatpush1.msra.mxu0 0.0
    %7094 = vmatprep.subr.mxu0 0.0
    %7095 = vmatpush1.msra.mxu0 0.0
    %7096 = vmatprep.subr.mxu0 0.0
    %7097 = vmatpush1.msra.mxu0 0.0
    %7098 = vmatprep.subr.mxu0 0.0
    %7099 = vmatpush1.msra.mxu0 0.0
    %7100 = vmatprep.subr.mxu0 0.0
    %7101 = vmatpush1.msra.mxu0 0.0
    %7102 = vmatprep.subr.mxu0 0.0
    %7103 = vmatpush1.msra.mxu0 0.0
    %7104 = vmatprep.mubr.f32.mxu0 %v7038
    %7105 = vmatmul.mubr.f32.gmra.mrb[0].mxu0 %v6814
    %v7106 = vpop.f32.mrb[0].mxu0
    %v7107 = vadd.f32 0.0, %v7106
    %v7108 = vpop.f32.mrb[0].mxu0
    %7109 = vdwg.mxu0
    %v7110 = vadd.f32 %v7009, %v7107
    %v7111 = vld [vmem:[#allocation12] sm:$0x1]
    %v7113 = vlaneseq
    %v7114 = vshrl.u32 %v7113, 7
    %v7115 = vsub.s32 0, %v7114
    %v7116 = vrot.slane %v7111, %v7115
    %v7118 = vadd.f32 %v7110, %v7116
    %v7119 = vmax.f32 %v7118, 0.0
    %v7120 = vld [vmem:[#allocation14] sm:$0xff]
    %v7121 = vld [vmem:[#allocation14 + $0x8] sm:$0xff]
    %v7122 = vld [vmem:[#allocation14 + $0x10] sm:$0xff]
    %v7123 = vld [vmem:[#allocation14 + $0x18] sm:$0xff]
    %v7124 = vld [vmem:[#allocation14 + $0x20] sm:$0xff]
    %v7125 = vld [vmem:[#allocation14 + $0x28] sm:$0xff]
    %v7126 = vld [vmem:[#allocation14 + $0x30] sm:$0xff]
    %v7127 = vld [vmem:[#allocation14 + $0x38] sm:$0xff]
    %v7128 = vld [vmem:[#allocation14 + $0x40] sm:$0xff]
    %v7129 = vld [vmem:[#allocation14 + $0x48] sm:$0xff]
    %v7130 = vld [vmem:[#allocation14 + $0x50] sm:$0xff]
    %v7131 = vld [vmem:[#allocation14 + $0x58] sm:$0xff]
    %v7132 = vld [vmem:[#allocation14 + $0x60] sm:$0xff]
    %v7133 = vld [vmem:[#allocation14 + $0x68] sm:$0xff]
    %v7134 = vld [vmem:[#allocation14 + $0x70] sm:$0xff]
    %v7135 = vld [vmem:[#allocation14 + $0x78] sm:$0xff]
    %v7136 = vld [vmem:[#allocation15] sm:$0x3]
    %v7138 = vlaneseq
    %v7139 = vshrl.u32 %v7138, 7
    %v7140 = vsub.s32 0, %v7139
    %v7141 = vrot.slane %v7136, %v7140
    %v7142 = vlaneseq
    %v7143 = vshrl.u32 %v7142, 7
    %v7144 = vsub.s32 1, %v7143
    %v7145 = vrot.slane %v7136, %v7144
    %v7149 = vsel %vm6865, %v7119, 0
    %7151 = vmatprep.subr.mxu0 %v7121
    %7152 = vmatpush1.msra.mxu0 %v7120
    %7153 = vmatprep.subr.mxu0 %v7123
    %7154 = vmatpush1.msra.mxu0 %v7122
    %7155 = vmatprep.subr.mxu0 %v7125
    %7156 = vmatpush1.msra.mxu0 %v7124
    %7157 = vmatprep.subr.mxu0 %v7127
    %7158 = vmatpush1.msra.mxu0 %v7126
    %7159 = vmatprep.subr.mxu0 %v7129
    %7160 = vmatpush1.msra.mxu0 %v7128
    %7161 = vmatprep.subr.mxu0 %v7131
    %7162 = vmatpush1.msra.mxu0 %v7130
    %7163 = vmatprep.subr.mxu0 %v7133
    %7164 = vmatpush1.msra.mxu0 %v7132
    %7165 = vmatprep.subr.mxu0 %v7135
    %7166 = vmatpush1.msra.mxu0 %v7134
    %7167 = vmatprep.subr.mxu0 0.0
    %7168 = vmatpush1.msra.mxu0 0.0
    %7169 = vmatprep.subr.mxu0 0.0
    %7170 = vmatpush1.msra.mxu0 0.0
    %7171 = vmatprep.subr.mxu0 0.0
    %7172 = vmatpush1.msra.mxu0 0.0
    %7173 = vmatprep.subr.mxu0 0.0
    %7174 = vmatpush1.msra.mxu0 0.0
    %7175 = vmatprep.subr.mxu0 0.0
    %7176 = vmatpush1.msra.mxu0 0.0
    %7177 = vmatprep.subr.mxu0 0.0
    %7178 = vmatpush1.msra.mxu0 0.0
    %7179 = vmatprep.subr.mxu0 0.0
    %7180 = vmatpush1.msra.mxu0 0.0
    %7181 = vmatprep.subr.mxu0 0.0
    %7182 = vmatpush1.msra.mxu0 0.0
    %7183 = vmatprep.subr.mxu0 0.0
    %7184 = vmatpush1.msra.mxu0 0.0
    %7185 = vmatprep.subr.mxu0 0.0
    %7186 = vmatpush1.msra.mxu0 0.0
    %7187 = vmatprep.subr.mxu0 0.0
    %7188 = vmatpush1.msra.mxu0 0.0
    %7189 = vmatprep.subr.mxu0 0.0
    %7190 = vmatpush1.msra.mxu0 0.0
    %7191 = vmatprep.subr.mxu0 0.0
    %7192 = vmatpush1.msra.mxu0 0.0
    %7193 = vmatprep.subr.mxu0 0.0
    %7194 = vmatpush1.msra.mxu0 0.0
    %7195 = vmatprep.subr.mxu0 0.0
    %7196 = vmatpush1.msra.mxu0 0.0
    %7197 = vmatprep.subr.mxu0 0.0
    %7198 = vmatpush1.msra.mxu0 0.0
    %7199 = vmatprep.subr.mxu0 0.0
    %7200 = vmatpush1.msra.mxu0 0.0
    %7201 = vmatprep.subr.mxu0 0.0
    %7202 = vmatpush1.msra.mxu0 0.0
    %7203 = vmatprep.subr.mxu0 0.0
    %7204 = vmatpush1.msra.mxu0 0.0
    %7205 = vmatprep.subr.mxu0 0.0
    %7206 = vmatpush1.msra.mxu0 0.0
    %7207 = vmatprep.subr.mxu0 0.0
    %7208 = vmatpush1.msra.mxu0 0.0
    %7209 = vmatprep.subr.mxu0 0.0
    %7210 = vmatpush1.msra.mxu0 0.0
    %7211 = vmatprep.subr.mxu0 0.0
    %7212 = vmatpush1.msra.mxu0 0.0
    %7213 = vmatprep.subr.mxu0 0.0
    %7214 = vmatpush1.msra.mxu0 0.0
    %7215 = vmatprep.mubr.f32.mxu0 0.0
    %7216 = vmatmul.mubr.f32.gmra.mrb[0].mxu0 %v7149
    %v7217 = vpop.f32.mrb[0].mxu0
    %v7218 = vadd.f32 %v7141, %v7217
    %v7219 = vpop.f32.mrb[0].mxu0
    %v7220 = vadd.f32 %v7145, %v7219
    %7221 = vdwg.mxu0
    %v7222 = vmax.f32 %v7218, 0.0
    %v7223 = vmax.f32 %v7220, 0.0
    %v7224 = vld [vmem:[#allocation17] sm:$0xff]
    %v7225 = vld [vmem:[#allocation17 + $0x8] sm:$0xff]
    %v7226 = vld [vmem:[#allocation17 + $0x10] sm:$0xff]
    %v7227 = vld [vmem:[#allocation17 + $0x18] sm:$0xff]
    %v7228 = vld [vmem:[#allocation17 + $0x20] sm:$0xff]
    %v7229 = vld [vmem:[#allocation17 + $0x28] sm:$0xff]
    %v7230 = vld [vmem:[#allocation17 + $0x30] sm:$0xff]
    %v7231 = vld [vmem:[#allocation17 + $0x38] sm:$0xff]
    %v7232 = vld [vmem:[#allocation17 + $0x40] sm:$0xff]
    %v7233 = vld [vmem:[#allocation17 + $0x48] sm:$0xff]
    %v7234 = vld [vmem:[#allocation17 + $0x50] sm:$0xff]
    %v7235 = vld [vmem:[#allocation17 + $0x58] sm:$0xff]
    %v7236 = vld [vmem:[#allocation17 + $0x60] sm:$0xff]
    %v7237 = vld [vmem:[#allocation17 + $0x68] sm:$0xff]
    %v7238 = vld [vmem:[#allocation17 + $0x70] sm:$0xff]
    %v7239 = vld [vmem:[#allocation17 + $0x78] sm:$0xff]
    %v7240 = vld [vmem:[#allocation18] sm:$0x1]
    %v7242 = vlaneseq
    %v7243 = vshrl.u32 %v7242, 7
    %v7244 = vsub.s32 0, %v7243
    %v7245 = vrot.slane %v7240, %v7244
    %7247 = vmatprep.subr.mxu0 0.0
    %7248 = vmatpush1.msra.mxu0 %v7224
    %7249 = vmatprep.subr.mxu0 0.0
    %7250 = vmatpush1.msra.mxu0 %v7225
    %7251 = vmatprep.subr.mxu0 0.0
    %7252 = vmatpush1.msra.mxu0 %v7226
    %7253 = vmatprep.subr.mxu0 0.0
    %7254 = vmatpush1.msra.mxu0 %v7227
    %7255 = vmatprep.subr.mxu0 0.0
    %7256 = vmatpush1.msra.mxu0 %v7228
    %7257 = vmatprep.subr.mxu0 0.0
    %7258 = vmatpush1.msra.mxu0 %v7229
    %7259 = vmatprep.subr.mxu0 0.0
    %7260 = vmatpush1.msra.mxu0 %v7230
    %7261 = vmatprep.subr.mxu0 0.0
    %7262 = vmatpush1.msra.mxu0 %v7231
    %7263 = vmatprep.subr.mxu0 0.0
    %7264 = vmatpush1.msra.mxu0 %v7232
    %7265 = vmatprep.subr.mxu0 0.0
    %7266 = vmatpush1.msra.mxu0 %v7233
    %7267 = vmatprep.subr.mxu0 0.0
    %7268 = vmatpush1.msra.mxu0 %v7234
    %7269 = vmatprep.subr.mxu0 0.0
    %7270 = vmatpush1.msra.mxu0 %v7235
    %7271 = vmatprep.subr.mxu0 0.0
    %7272 = vmatpush1.msra.mxu0 %v7236
    %7273 = vmatprep.subr.mxu0 0.0
    %7274 = vmatpush1.msra.mxu0 %v7237
    %7275 = vmatprep.subr.mxu0 0.0
    %7276 = vmatpush1.msra.mxu0 %v7238
    %7277 = vmatprep.subr.mxu0 0.0
    %7278 = vmatpush1.msra.mxu0 %v7239
    %7279 = vmatprep.subr.mxu0 0.0
    %7280 = vmatpush1.msra.mxu0 0.0
    %7281 = vmatprep.subr.mxu0 0.0
    %7282 = vmatpush1.msra.mxu0 0.0
    %7283 = vmatprep.subr.mxu0 0.0
    %7284 = vmatpush1.msra.mxu0 0.0
    %7285 = vmatprep.subr.mxu0 0.0
    %7286 = vmatpush1.msra.mxu0 0.0
    %7287 = vmatprep.subr.mxu0 0.0
    %7288 = vmatpush1.msra.mxu0 0.0
    %7289 = vmatprep.subr.mxu0 0.0
    %7290 = vmatpush1.msra.mxu0 0.0
    %7291 = vmatprep.subr.mxu0 0.0
    %7292 = vmatpush1.msra.mxu0 0.0
    %7293 = vmatprep.subr.mxu0 0.0
    %7294 = vmatpush1.msra.mxu0 0.0
    %7295 = vmatprep.subr.mxu0 0.0
    %7296 = vmatpush1.msra.mxu0 0.0
    %7297 = vmatprep.subr.mxu0 0.0
    %7298 = vmatpush1.msra.mxu0 0.0
    %7299 = vmatprep.subr.mxu0 0.0
    %7300 = vmatpush1.msra.mxu0 0.0
    %7301 = vmatprep.subr.mxu0 0.0
    %7302 = vmatpush1.msra.mxu0 0.0
    %7303 = vmatprep.subr.mxu0 0.0
    %7304 = vmatpush1.msra.mxu0 0.0
    %7305 = vmatprep.subr.mxu0 0.0
    %7306 = vmatpush1.msra.mxu0 0.0
    %7307 = vmatprep.subr.mxu0 0.0
    %7308 = vmatpush1.msra.mxu0 0.0
    %7309 = vmatprep.subr.mxu0 0.0
    %7310 = vmatpush1.msra.mxu0 0.0
    %7311 = vmatprep.mubr.f32.mxu0 0.0
    %7312 = vmatmul.mubr.f32.gmra.mrb[0].mxu0 %v7222
    %v7313 = vpop.f32.mrb[0].mxu0
    %v7314 = vadd.f32 %v7245, %v7313
    %v7315 = vpop.f32.mrb[0].mxu0
    %7316 = vdwg.mxu0
    %v7317 = vld [vmem:[#allocation20] sm:$0xff]
    %v7318 = vld [vmem:[#allocation20 + $0x8] sm:$0xff]
    %v7319 = vld [vmem:[#allocation20 + $0x10] sm:$0xff]
    %v7320 = vld [vmem:[#allocation20 + $0x18] sm:$0xff]
    %v7321 = vld [vmem:[#allocation20 + $0x20] sm:$0xff]
    %v7322 = vld [vmem:[#allocation20 + $0x28] sm:$0xff]
    %v7323 = vld [vmem:[#allocation20 + $0x30] sm:$0xff]
    %v7324 = vld [vmem:[#allocation20 + $0x38] sm:$0xff]
    %v7325 = vld [vmem:[#allocation20 + $0x40] sm:$0xff]
    %v7326 = vld [vmem:[#allocation20 + $0x48] sm:$0xff]
    %v7327 = vld [vmem:[#allocation20 + $0x50] sm:$0xff]
    %v7328 = vld [vmem:[#allocation20 + $0x58] sm:$0xff]
    %v7329 = vld [vmem:[#allocation20 + $0x60] sm:$0xff]
    %v7330 = vld [vmem:[#allocation20 + $0x68] sm:$0xff]
    %v7331 = vld [vmem:[#allocation20 + $0x70] sm:$0xff]
    %v7332 = vld [vmem:[#allocation20 + $0x78] sm:$0xff]
    %v7333 = vld [vmem:[#allocation2] sm:$0x1]
    %v7335 = vlaneseq
    %v7336 = vshrl.u32 %v7335, 7
    %v7337 = vsub.s32 0, %v7336
    %v7338 = vrot.slane %v7333, %v7337
    %7340 = vmatprep.subr.mxu0 0.0
    %7341 = vmatpush1.msra.mxu0 %v7317
    %7342 = vmatprep.subr.mxu0 0.0
    %7343 = vmatpush1.msra.mxu0 %v7318
    %7344 = vmatprep.subr.mxu0 0.0
    %7345 = vmatpush1.msra.mxu0 %v7319
    %7346 = vmatprep.subr.mxu0 0.0
    %7347 = vmatpush1.msra.mxu0 %v7320
    %7348 = vmatprep.subr.mxu0 0.0
    %7349 = vmatpush1.msra.mxu0 %v7321
    %7350 = vmatprep.subr.mxu0 0.0
    %7351 = vmatpush1.msra.mxu0 %v7322
    %7352 = vmatprep.subr.mxu0 0.0
    %7353 = vmatpush1.msra.mxu0 %v7323
    %7354 = vmatprep.subr.mxu0 0.0
    %7355 = vmatpush1.msra.mxu0 %v7324
    %7356 = vmatprep.subr.mxu0 0.0
    %7357 = vmatpush1.msra.mxu0 %v7325
    %7358 = vmatprep.subr.mxu0 0.0
    %7359 = vmatpush1.msra.mxu0 %v7326
    %7360 = vmatprep.subr.mxu0 0.0
    %7361 = vmatpush1.msra.mxu0 %v7327
    %7362 = vmatprep.subr.mxu0 0.0
    %7363 = vmatpush1.msra.mxu0 %v7328
    %7364 = vmatprep.subr.mxu0 0.0
    %7365 = vmatpush1.msra.mxu0 %v7329
    %7366 = vmatprep.subr.mxu0 0.0
    %7367 = vmatpush1.msra.mxu0 %v7330
    %7368 = vmatprep.subr.mxu0 0.0
    %7369 = vmatpush1.msra.mxu0 %v7331
    %7370 = vmatprep.subr.mxu0 0.0
    %7371 = vmatpush1.msra.mxu0 %v7332
    %7372 = vmatprep.subr.mxu0 0.0
    %7373 = vmatpush1.msra.mxu0 0.0
    %7374 = vmatprep.subr.mxu0 0.0
    %7375 = vmatpush1.msra.mxu0 0.0
    %7376 = vmatprep.subr.mxu0 0.0
    %7377 = vmatpush1.msra.mxu0 0.0
    %7378 = vmatprep.subr.mxu0 0.0
    %7379 = vmatpush1.msra.mxu0 0.0
    %7380 = vmatprep.subr.mxu0 0.0
    %7381 = vmatpush1.msra.mxu0 0.0
    %7382 = vmatprep.subr.mxu0 0.0
    %7383 = vmatpush1.msra.mxu0 0.0
    %7384 = vmatprep.subr.mxu0 0.0
    %7385 = vmatpush1.msra.mxu0 0.0
    %7386 = vmatprep.subr.mxu0 0.0
    %7387 = vmatpush1.msra.mxu0 0.0
    %7388 = vmatprep.subr.mxu0 0.0
    %7389 = vmatpush1.msra.mxu0 0.0
    %7390 = vmatprep.subr.mxu0 0.0
    %7391 = vmatpush1.msra.mxu0 0.0
    %7392 = vmatprep.subr.mxu0 0.0
    %7393 = vmatpush1.msra.mxu0 0.0
    %7394 = vmatprep.subr.mxu0 0.0
    %7395 = vmatpush1.msra.mxu0 0.0
    %7396 = vmatprep.subr.mxu0 0.0
    %7397 = vmatpush1.msra.mxu0 0.0
    %7398 = vmatprep.subr.mxu0 0.0
    %7399 = vmatpush1.msra.mxu0 0.0
    %7400 = vmatprep.subr.mxu0 0.0
    %7401 = vmatpush1.msra.mxu0 0.0
    %7402 = vmatprep.subr.mxu0 0.0
    %7403 = vmatpush1.msra.mxu0 0.0
    %7404 = vmatprep.mubr.f32.mxu0 0.0
    %7405 = vmatmul.mubr.f32.gmra.mrb[0].mxu0 %v7223
    %v7406 = vpop.f32.mrb[0].mxu0
    %v7407 = vadd.f32 %v7338, %v7406
    %v7408 = vpop.f32.mrb[0].mxu0
    %7409 = vdwg.mxu0
    %7411 = vset.pattern.permute.xlu0 0
    %7412 = vperm.xlu0 %7411, %v7407
    %v7413 = vpop.permute.xlu0 %7412
    %v7415 = vadd.f32 %v7413, %v7314
    %vm7416 = vcmask 41984
    %v7417 = vsel %vm7416, %v7314, 0.0
    %7418 = vadd.xlane.f32.xlu0 %v7417
    %v7419 = vpop.xlane.xlu0 %7418
    %v7420 = vrcp.pop 6.0
    %v7421 = vmul.f32 %v7419, %v7420
    %v7422 = vsub.f32 %v7415, %v7421
    %7423 = vst.msk [vmem:[#allocation21] sm:$0x3] %vm7416, %v7422
    // Predicated region
    $region98: #{_lambda_.1} parent=1 // pred_check
      _
    $region99: #{_lambda_.1} parent=1 // pred_check_branch
      %7425 = sbr.rel (0) target = $region101
    $region100: #{_lambda_.1} parent=1 // pred_region
      %s7427 = ssub.s32 32, 32
      %7428 = vsyncadd [#allocation5], %s7427
      %s7430 = sshll.u32 [#allocation21], 4
      %s7431 = int_to_ptr.vmem [resolvable:$true] %s7430
      %7433 = dma.vmem_to_hbm [thread:$0]  %s7431, 32, %s13, [#allocation5]
    $region101: #{_lambda_.1} parent=1 // pred_fallthru
      _
    // Predicated region
    $region102: #{_lambda_.1} parent=1 // pred_check
      _
    $region103: #{_lambda_.1} parent=1 // pred_check_branch
      %7435 = sbr.rel (0) target = $region105
    $region104: #{_lambda_.1} parent=1 // pred_region
      %7436 = dma.done [#allocation5], 32
    $region105: #{_lambda_.1} parent=1 // pred_fallthru
      _
    %7437 = vsyncpa [#allocation4], 1
    %7438 = vsyncpa [#allocation7], 1
    %7439 = vsyncpa [#allocation10], 1
    %7440 = vsyncpa [#allocation13], 1
    %7441 = vsyncpa [#allocation16], 1
    %7442 = vsyncpa [#allocation19], 1
    %7443 = vsyncpa [#allocation5], 1

</llo_original>
